<compile_context>
chip_gen: v6e
topology: v6e:2x2x1
jax: 0.10.0
libtpu: 0.0.40
codegen_flags: <defaults>
</compile_context>

<pallas_src>
import functools

import jax
import jax.numpy as jnp
from jax.experimental import pallas as pl
from jax.experimental.pallas import tpu as pltpu

EPS = 1e-5


# ----------------------------------------------------------------------------
# Shared conv body: 9 statically-shifted (L, C) taps -> accumulated MXU dots,
# bf16 conv output, masked BN partial statistics from the f32 accumulator.
# Output row q = h*(W+2) + w; columns W, W+1 of each row are wrap-around junk
# that is masked out of the statistics and zeroed / sliced off downstream.
# ----------------------------------------------------------------------------
def _taps_and_stats(read_tap, w_ref, z_ref, s_ref, q_ref, *, H, W):
    Wp = W + 2
    L = H * Wp
    Cout = w_ref.shape[-1]

    # TODO(synk): on v6e/v7x, once the HBM-traffic items dominate no longer,
    # build the (L, 9*C) im2col operand in VMEM and issue a single K=9*C dot
    # (or drive the MXU explicitly on v7x so the 9 taps accumulate in the MRB).
    acc = jnp.zeros((L, Cout), jnp.float32)
    for t in range(9):
        dh, dw = divmod(t, 3)
        off = dh * Wp + dw                                   # static offset
        acc = acc + jnp.dot(read_tap(off, L), w_ref[t],
                            preferred_element_type=jnp.float32)

    # TODO(synk): paired-pixel (L/2, 128) lane-dense output store once the
    # kernel is no longer bandwidth-limited.
    z_ref[0] = acc.astype(z_ref.dtype)                       # bf16 conv output

    # BN partial stats over *valid* pixels only (mask the 2 junk columns),
    # reduced from the f32 accumulator before the bf16 downcast.
    col = jax.lax.broadcasted_iota(jnp.int32, (L, 1), 0) % Wp
    valid = (col < W).astype(jnp.float32)                    # (L, 1)
    av = acc * valid
    s_ref[0] = jnp.sum(av, axis=0, keepdims=True)            # sum(x)
    q_ref[0] = jnp.sum(av * acc, axis=0, keepdims=True)      # sum(x^2)


# Kernel 1: layer-1 conv. Input is the zero-padded bf16 image, flattened (P, C).
def conv_stats_kernel(xp_ref, w_ref, z_ref, s_ref, q_ref, *, H, W):
    read = lambda off, l: xp_ref[0, pl.ds(off, l), :]
    _taps_and_stats(read, w_ref, z_ref, s_ref, q_ref, H=H, W=W)


# Kernel 2: fused BN-normalize + activation + zero re-padding + layer-2 conv.
# Input is the *previous* layer's raw bf16 conv output z1 (junk columns incl.);
# the padded activation image is built in a VMEM staging buffer.
def bnact_conv_stats_kernel(zin_ref, sc_ref, sh_ref, w_ref,
                            z_ref, s_ref, q_ref, xp_s, *, H, W, leaky):
    Wp = W + 2
    L = H * Wp

    # BN + activation of the previous layer on the freshly loaded tile.
    a = zin_ref[0].astype(jnp.float32) * sc_ref[...] + sh_ref[...]
    a = jnp.where(a > 0, a, 0.2 * a) if leaky else jnp.maximum(a, 0.0)
    # Junk columns -> 0 so the constant-offset flat scatter below lands zeros
    # exactly on the right-pad column / left-pad column of the next row.
    col = jax.lax.broadcasted_iota(jnp.int32, (L, 1), 0) % Wp
    a = jnp.where(col < W, a, 0.0)

    xp_s[...] = jnp.zeros_like(xp_s)                         # halo rows
    # Flat map: valid pixel (h, w) of z1 sits at h*Wp + w and must land at
    # (h+1)*Wp + (w+1) in the padded image -> constant offset Wp + 1.
    xp_s[pl.ds(Wp + 1, L), :] = a.astype(xp_s.dtype)

    read = lambda off, l: xp_s[pl.ds(off, l), :]
    _taps_and_stats(read, w_ref, z_ref, s_ref, q_ref, H=H, W=W)


# Kernel 3: final BN-normalize + activation, lane-dense (rows, 128) view.
def bn_act_kernel(x_ref, sc_ref, sh_ref, o_ref, *, leaky):
    y = x_ref[...].astype(jnp.float32) * sc_ref[...] + sh_ref[...]
    if leaky:
        o_ref[...] = jnp.where(y > 0, y, 0.2 * y)
    else:
        o_ref[...] = jnp.maximum(y, 0.0)


# ----------------------------------------------------------------------------
# Wrappers
# ----------------------------------------------------------------------------
def _conv_out_shapes(N, L, Cout):
    return (
        jax.ShapeDtypeStruct((N, L, Cout), jnp.bfloat16),    # z (bf16)
        jax.ShapeDtypeStruct((N, 1, Cout), jnp.float32),     # sum(x)
        jax.ShapeDtypeStruct((N, 1, Cout), jnp.float32),     # sum(x^2)
    )


def _conv_out_specs():
    return (
        pl.BlockSpec((1, None, None), lambda n: (n, 0, 0)),
        pl.BlockSpec((1, 1, None), lambda n: (n, 0, 0)),
        pl.BlockSpec((1, 1, None), lambda n: (n, 0, 0)),
    )


def conv1_pallas(x_nhwc, w9):
    """Layer-1 3x3 conv (stride 1, pad 1) + per-image BN partial stats."""
    N, H, W, C = x_nhwc.shape
    Cout = w9.shape[-1]
    Wp = W + 2
    L = H * Wp
    P = (H + 3) * Wp
    # bf16 pad + flatten in one XLA op (halves the kernel's input DMA bytes).
    # TODO(synk): fold this zero-padding into the kernel (halo-aware staging
    # buffer like layer 2) to drop the extra HBM pass over the layer-1 input.
    # TODO(synk): add an intra-image row-tile grid axis (2-row halo) for very
    # large images so whole-image blocks never exceed VMEM (v7x: 64 MiB).
    xp = jnp.pad(x_nhwc.astype(jnp.bfloat16),
                 ((0, 0), (1, 2), (1, 1), (0, 0))).reshape(N, P, C)

    return pl.pallas_call(
        functools.partial(conv_stats_kernel, H=H, W=W),
        out_shape=_conv_out_shapes(N, L, Cout),
        grid=(N,),
        in_specs=[
            pl.BlockSpec((1, P, C), lambda n: (n, 0, 0)),        # padded image
            pl.BlockSpec((9, C, Cout), lambda n: (0, 0, 0)),     # weights
        ],
        out_specs=(
            pl.BlockSpec((1, L, Cout), lambda n: (n, 0, 0)),
            pl.BlockSpec((1, 1, Cout), lambda n: (n, 0, 0)),
            pl.BlockSpec((1, 1, Cout), lambda n: (n, 0, 0)),
        ),
        compiler_params=pltpu.CompilerParams(
            dimension_semantics=("parallel",),
            vmem_limit_bytes=64 * 1024 * 1024),
    )(xp, w9)


def bnact_conv2_pallas(z1, scale1, shift1, w9, activation, H, W):
    """Fused BN1-normalize + activation + re-pad + layer-2 conv + BN2 stats."""
    N, L, C = z1.shape
    Cout = w9.shape[-1]
    Wp = W + 2
    P = (H + 3) * Wp

    return pl.pallas_call(
        functools.partial(bnact_conv_stats_kernel, H=H, W=W,
                          leaky=(activation == "leaky")),
        out_shape=_conv_out_shapes(N, L, Cout),
        grid=(N,),
        in_specs=[
            pl.BlockSpec((1, L, C), lambda n: (n, 0, 0)),        # z1 (bf16)
            pl.BlockSpec((1, C), lambda n: (0, 0)),              # BN1 scale
            pl.BlockSpec((1, C), lambda n: (0, 0)),              # BN1 shift
            pl.BlockSpec((9, C, Cout), lambda n: (0, 0, 0)),     # weights
        ],
        out_specs=(
            pl.BlockSpec((1, L, Cout), lambda n: (n, 0, 0)),
            pl.BlockSpec((1, 1, Cout), lambda n: (n, 0, 0)),
            pl.BlockSpec((1, 1, Cout), lambda n: (n, 0, 0)),
        ),
        scratch_shapes=[pltpu.VMEM((P, C), jnp.bfloat16)],       # padded a1
        compiler_params=pltpu.CompilerParams(
            dimension_semantics=("parallel",),
            vmem_limit_bytes=64 * 1024 * 1024),
    )(z1, scale1, shift1, w9)


def _bn_scale_shift(s_part, q_part, gamma, beta, n_valid):
    """Per-channel scale/shift from the fused-conv partial sums (f32)."""
    s = jnp.sum(s_part, axis=0).reshape(-1)
    q = jnp.sum(q_part, axis=0).reshape(-1)
    mean = s / n_valid
    # TODO(synk): switch to a shifted / Welford reduction if activations ever
    # acquire large per-channel means (E[x^2]-E[x]^2 cancellation).
    var = q / n_valid - mean * mean
    scale = gamma / jnp.sqrt(var + EPS)
    shift = beta - mean * scale
    return (scale.reshape(1, -1).astype(jnp.float32),
            shift.reshape(1, -1).astype(jnp.float32))


def _row_tile(rows, target=4096):
    """Full array if small; else the largest multiple-of-16 divisor <= target."""
    if rows <= target:
        return rows
    t = (target // 16) * 16
    while t >= 16:
        if rows % t == 0:
            return t
        t -= 16
    return (target // 16) * 16   # fallback: Pallas masks the boundary block


def bn_act_final_pallas(z2, scale, shift, activation, N, H, W):
    """Final BN-normalize + activation on bf16 z2, lane-dense, f32 output."""
    _, L, C = z2.shape
    Wp = W + 2

    T = N * L * C
    if T % 128 == 0 and 128 % C == 0:
        lanes = 128                                   # lane-dense layout
        rep = 128 // C
        scale_l = jnp.tile(scale.reshape(-1), rep).reshape(1, lanes)
        shift_l = jnp.tile(shift.reshape(-1), rep).reshape(1, lanes)
    else:                                             # fallback: channels-last
        lanes = C
        scale_l = scale.reshape(1, C)
        shift_l = shift.reshape(1, C)
    rows = T // lanes
    zf = z2.reshape(rows, lanes)                      # contiguous, free reshape

    tile = _row_tile(rows)
    grid = pl.cdiv(rows, tile)
    out = pl.pallas_call(
        functools.partial(bn_act_kernel, leaky=(activation == "leaky")),
        out_shape=jax.ShapeDtypeStruct((rows, lanes), jnp.float32),
        grid=(grid,),
        in_specs=[
            pl.BlockSpec((tile, lanes), lambda i: (i, 0)),
            pl.BlockSpec((1, lanes), lambda i: (0, 0)),
            pl.BlockSpec((1, lanes), lambda i: (0, 0)),
        ],
        out_specs=pl.BlockSpec((tile, lanes), lambda i: (i, 0)),
        compiler_params=pltpu.CompilerParams(
            dimension_semantics=("parallel",),
            vmem_limit_bytes=64 * 1024 * 1024),
    )(zf, scale_l, shift_l)
    return out.reshape(N, H, Wp, C)[:, :, :W, :]      # drop junk columns


def prepare_params(p):
    """One-time weight re-layout, hoisted out of the forward path.

    Conv OIHW -> (kh*kw, Cin, Cout) bf16 for the MXU.  The conv bias is
    dropped entirely: under training-mode BN it cancels exactly in (x - mean)."""
    def conv_w(w):
        cout, cin, kh, kw = w.shape
        return (jnp.transpose(w, (2, 3, 1, 0))
                .reshape(kh * kw, cin, cout).astype(jnp.bfloat16))
    return {
        "w1": conv_w(p["w1"]),
        "g1": p["g1"].astype(jnp.float32), "be1": p["be1"].astype(jnp.float32),
        "w2": conv_w(p["w2"]),
        "g2": p["g2"].astype(jnp.float32), "be2": p["be2"].astype(jnp.float32),
    }


def embedding_forward(x_nchw, params, activation="relu"):
    """Forward pass of Embedding. Input/output NCHW (PyTorch convention).

    `params` must come from prepare_params()."""
    assert activation in ("relu", "leaky")
    N, C, H, W = x_nchw.shape
    n_valid = N * H * W
    x = jnp.transpose(x_nchw, (0, 2, 3, 1))             # NCHW -> NHWC

    # Layer 1: conv + BN1 partial stats (bf16 z1 stays in HBM only once).
    z1, s1, q1 = conv1_pallas(x, params["w1"])
    sc1, sh1 = _bn_scale_shift(s1, q1, params["g1"], params["be1"], n_valid)

    # Layer 2: BN1 + act + re-pad fused into the conv's load path.
    z2, s2, q2 = bnact_conv2_pallas(z1, sc1, sh1, params["w2"], activation, H, W)
    sc2, sh2 = _bn_scale_shift(s2, q2, params["g2"], params["be2"], n_valid)

    # Final BN2 + activation (standalone, lane-dense).
    a2 = bn_act_final_pallas(z2, sc2, sh2, activation, N, H, W)

    return jnp.transpose(a2, (0, 3, 1, 2))              # NHWC -> NCHW


# ----------------------------------------------------------------------------
# Pure-JAX reference (sanity check of the Pallas path)
# ----------------------------------------------------------------------------
def _ref_forward(x_nchw, p, activation="relu"):
    def conv(x, w, b):
        y = jax.lax.conv_general_dilated(
            x, w, window_strides=(1, 1), padding=((1, 1), (1, 1)),
            dimension_numbers=("NCHW", "OIHW", "NCHW"))
        return y + b.reshape(1, -1, 1, 1)

    def bn_act(y, g, be):
        mean = jnp.mean(y, axis=(0, 2, 3), keepdims=True)
        var = jnp.mean((y - mean) ** 2, axis=(0, 2, 3), keepdims=True)
        z = (y - mean) / jnp.sqrt(var + EPS) * g.reshape(1, -1, 1, 1) + be.reshape(1, -1, 1, 1)
        return jnp.maximum(z, 0.0) if activation == "relu" else jnp.where(z > 0, z, 0.2 * z)

    y = bn_act(conv(x_nchw, p["w1"], p["b1"]), p["g1"], p["be1"])
    return bn_act(conv(y, p["w2"], p["b2"]), p["g2"], p["be2"])


# ----------------------------------------------------------------------------
if __name__ == "__main__":
    key = jax.random.PRNGKey(0)
    k_x, k_w1, k_b1, k_w2, k_b2 = jax.random.split(key, 5)

    Cin = Cout = 64                  # fixed by the module: Conv2d(64, 64, 3, 1, 1)
    N, H, W = 2, 16, 16

    raw = {
        "w1": jax.random.normal(k_w1, (Cout, Cin, 3, 3), jnp.float32) * 0.05,
        "b1": jax.random.normal(k_b1, (Cout,), jnp.float32) * 0.01,
        "g1": jnp.ones((Cout,), jnp.float32),
        "be1": jnp.zeros((Cout,), jnp.float32),
        "w2": jax.random.normal(k_w2, (Cout, Cin, 3, 3), jnp.float32) * 0.05,
        "b2": jax.random.normal(k_b2, (Cout,), jnp.float32) * 0.01,
        "g2": jnp.ones((Cout,), jnp.float32),
        "be2": jnp.zeros((Cout,), jnp.float32),
    }
    params = prepare_params(raw)
    x = jax.random.normal(k_x, (N, Cin, H, W), jnp.float32)

    for act in ("relu", "leaky"):
        out = jax.jit(lambda xx, a=act: embedding_forward(xx, params, a))(x)
        out = jax.block_until_ready(out)
        assert out.shape == (N, Cout, H, W), out.shape
        ref = _ref_forward(x, raw, act)
        # bf16 MXU operands + bf16 intermediate z (f32 accumulation and f32 BN
        # stats) => a few-percent-of-unit agreement with the all-f32 reference.
        err = float(jnp.max(jnp.abs(out - ref)))
        assert jnp.allclose(out, ref, rtol=3e-2, atol=3e-2), err

    print("KERNEL_OK")
</pallas_src>

<mosaic_0001>
module attributes {stable_mosaic.version = 11 : i64} {
  func.func @conv_stats_kernel(%arg0: i32, %arg1: memref<1x342x64xbf16, #tpu.memory_space<vmem>>, %arg2: memref<9x64x64xbf16, #tpu.memory_space<vmem>>, %arg3: memref<1x288x64xbf16, #tpu.memory_space<vmem>>, %arg4: memref<1x1x64xf32, #tpu.memory_space<vmem>>, %arg5: memref<1x1x64xf32, #tpu.memory_space<vmem>>) attributes {dimension_semantics = [#tpu.dimension_semantics<parallel>], iteration_bounds = array<i64: 2>, scalar_prefetch = 0 : i64, scratch_operands = 0 : i64, tpu.core_type = #tpu.core_type<tc>, window_params = [{transform_indices = @transform_0, window_bounds = array<i64: 1, 342, 64>}, {pipeline_mode = #tpu.pipeline_mode<synchronous>, transform_indices = @transform_1, window_bounds = array<i64: 9, 64, 64>}, {transform_indices = @transform_2, window_bounds = array<i64: 1, 288, 64>}, {transform_indices = @transform_3, window_bounds = array<i64: 1, 1, 64>}, {transform_indices = @transform_4, window_bounds = array<i64: 1, 1, 64>}]} {
    %cst = arith.constant 0.000000e+00 : f32
    %0 = vector.broadcast %cst : f32 to vector<288x64xf32>
    %c0 = arith.constant 0 : index
    %c0_0 = arith.constant 0 : index
    %c0_1 = arith.constant 0 : index
    %1 = vector.load %arg1[%c0, %c0_0, %c0_1] : memref<1x342x64xbf16, #tpu.memory_space<vmem>>, vector<1x288x64xbf16>
    %2 = vector.shape_cast %1 : vector<1x288x64xbf16> to vector<288x64xbf16>
    %c0_2 = arith.constant 0 : index
    %c0_3 = arith.constant 0 : index
    %c0_4 = arith.constant 0 : index
    %3 = vector.load %arg2[%c0_2, %c0_3, %c0_4] : memref<9x64x64xbf16, #tpu.memory_space<vmem>>, vector<1x64x64xbf16>
    %4 = vector.shape_cast %3 : vector<1x64x64xbf16> to vector<64x64xbf16>
    %cst_5 = arith.constant dense<0.000000e+00> : vector<288x64xf32>
    %5 = tpu.matmul %2, %4, %cst_5 {dimension_numbers = #tpu.dot_dimension_numbers<[1], [0], [0], [1], [0, 0, 1, 1], [], []>} : vector<288x64xbf16>, vector<64x64xbf16>, vector<288x64xf32> -> vector<288x64xf32>
    %6 = arith.addf %0, %5 : vector<288x64xf32>
    %c0_6 = arith.constant 0 : index
    %c1 = arith.constant 1 : index
    %c0_7 = arith.constant 0 : index
    %7 = vector.load %arg1[%c0_6, %c1, %c0_7] : memref<1x342x64xbf16, #tpu.memory_space<vmem>>, vector<1x288x64xbf16>
    %8 = vector.shape_cast %7 : vector<1x288x64xbf16> to vector<288x64xbf16>
    %c1_8 = arith.constant 1 : index
    %c0_9 = arith.constant 0 : index
    %c0_10 = arith.constant 0 : index
    %9 = vector.load %arg2[%c1_8, %c0_9, %c0_10] : memref<9x64x64xbf16, #tpu.memory_space<vmem>>, vector<1x64x64xbf16>
    %10 = vector.shape_cast %9 : vector<1x64x64xbf16> to vector<64x64xbf16>
    %cst_11 = arith.constant dense<0.000000e+00> : vector<288x64xf32>
    %11 = tpu.matmul %8, %10, %cst_11 {dimension_numbers = #tpu.dot_dimension_numbers<[1], [0], [0], [1], [0, 0, 1, 1], [], []>} : vector<288x64xbf16>, vector<64x64xbf16>, vector<288x64xf32> -> vector<288x64xf32>
    %12 = arith.addf %6, %11 : vector<288x64xf32>
    %c0_12 = arith.constant 0 : index
    %c2 = arith.constant 2 : index
    %c0_13 = arith.constant 0 : index
    %13 = vector.load %arg1[%c0_12, %c2, %c0_13] : memref<1x342x64xbf16, #tpu.memory_space<vmem>>, vector<1x288x64xbf16>
    %14 = vector.shape_cast %13 : vector<1x288x64xbf16> to vector<288x64xbf16>
    %c2_14 = arith.constant 2 : index
    %c0_15 = arith.constant 0 : index
    %c0_16 = arith.constant 0 : index
    %15 = vector.load %arg2[%c2_14, %c0_15, %c0_16] : memref<9x64x64xbf16, #tpu.memory_space<vmem>>, vector<1x64x64xbf16>
    %16 = vector.shape_cast %15 : vector<1x64x64xbf16> to vector<64x64xbf16>
    %cst_17 = arith.constant dense<0.000000e+00> : vector<288x64xf32>
    %17 = tpu.matmul %14, %16, %cst_17 {dimension_numbers = #tpu.dot_dimension_numbers<[1], [0], [0], [1], [0, 0, 1, 1], [], []>} : vector<288x64xbf16>, vector<64x64xbf16>, vector<288x64xf32> -> vector<288x64xf32>
    %18 = arith.addf %12, %17 : vector<288x64xf32>
    %c0_18 = arith.constant 0 : index
    %c18 = arith.constant 18 : index
    %c0_19 = arith.constant 0 : index
    %19 = vector.load %arg1[%c0_18, %c18, %c0_19] : memref<1x342x64xbf16, #tpu.memory_space<vmem>>, vector<1x288x64xbf16>
    %20 = vector.shape_cast %19 : vector<1x288x64xbf16> to vector<288x64xbf16>
    %c3 = arith.constant 3 : index
    %c0_20 = arith.constant 0 : index
    %c0_21 = arith.constant 0 : index
    %21 = vector.load %arg2[%c3, %c0_20, %c0_21] : memref<9x64x64xbf16, #tpu.memory_space<vmem>>, vector<1x64x64xbf16>
    %22 = vector.shape_cast %21 : vector<1x64x64xbf16> to vector<64x64xbf16>
    %cst_22 = arith.constant dense<0.000000e+00> : vector<288x64xf32>
    %23 = tpu.matmul %20, %22, %cst_22 {dimension_numbers = #tpu.dot_dimension_numbers<[1], [0], [0], [1], [0, 0, 1, 1], [], []>} : vector<288x64xbf16>, vector<64x64xbf16>, vector<288x64xf32> -> vector<288x64xf32>
    %24 = arith.addf %18, %23 : vector<288x64xf32>
    %c0_23 = arith.constant 0 : index
    %c19 = arith.constant 19 : index
    %c0_24 = arith.constant 0 : index
    %25 = vector.load %arg1[%c0_23, %c19, %c0_24] : memref<1x342x64xbf16, #tpu.memory_space<vmem>>, vector<1x288x64xbf16>
    %26 = vector.shape_cast %25 : vector<1x288x64xbf16> to vector<288x64xbf16>
    %c4 = arith.constant 4 : index
    %c0_25 = arith.constant 0 : index
    %c0_26 = arith.constant 0 : index
    %27 = vector.load %arg2[%c4, %c0_25, %c0_26] : memref<9x64x64xbf16, #tpu.memory_space<vmem>>, vector<1x64x64xbf16>
    %28 = vector.shape_cast %27 : vector<1x64x64xbf16> to vector<64x64xbf16>
    %cst_27 = arith.constant dense<0.000000e+00> : vector<288x64xf32>
    %29 = tpu.matmul %26, %28, %cst_27 {dimension_numbers = #tpu.dot_dimension_numbers<[1], [0], [0], [1], [0, 0, 1, 1], [], []>} : vector<288x64xbf16>, vector<64x64xbf16>, vector<288x64xf32> -> vector<288x64xf32>
    %30 = arith.addf %24, %29 : vector<288x64xf32>
    %c0_28 = arith.constant 0 : index
    %c20 = arith.constant 20 : index
    %c0_29 = arith.constant 0 : index
    %31 = vector.load %arg1[%c0_28, %c20, %c0_29] : memref<1x342x64xbf16, #tpu.memory_space<vmem>>, vector<1x288x64xbf16>
    %32 = vector.shape_cast %31 : vector<1x288x64xbf16> to vector<288x64xbf16>
    %c5 = arith.constant 5 : index
    %c0_30 = arith.constant 0 : index
    %c0_31 = arith.constant 0 : index
    %33 = vector.load %arg2[%c5, %c0_30, %c0_31] : memref<9x64x64xbf16, #tpu.memory_space<vmem>>, vector<1x64x64xbf16>
    %34 = vector.shape_cast %33 : vector<1x64x64xbf16> to vector<64x64xbf16>
    %cst_32 = arith.constant dense<0.000000e+00> : vector<288x64xf32>
    %35 = tpu.matmul %32, %34, %cst_32 {dimension_numbers = #tpu.dot_dimension_numbers<[1], [0], [0], [1], [0, 0, 1, 1], [], []>} : vector<288x64xbf16>, vector<64x64xbf16>, vector<288x64xf32> -> vector<288x64xf32>
    %36 = arith.addf %30, %35 : vector<288x64xf32>
    %c0_33 = arith.constant 0 : index
    %c36 = arith.constant 36 : index
    %c0_34 = arith.constant 0 : index
    %37 = vector.load %arg1[%c0_33, %c36, %c0_34] : memref<1x342x64xbf16, #tpu.memory_space<vmem>>, vector<1x288x64xbf16>
    %38 = vector.shape_cast %37 : vector<1x288x64xbf16> to vector<288x64xbf16>
    %c6 = arith.constant 6 : index
    %c0_35 = arith.constant 0 : index
    %c0_36 = arith.constant 0 : index
    %39 = vector.load %arg2[%c6, %c0_35, %c0_36] : memref<9x64x64xbf16, #tpu.memory_space<vmem>>, vector<1x64x64xbf16>
    %40 = vector.shape_cast %39 : vector<1x64x64xbf16> to vector<64x64xbf16>
    %cst_37 = arith.constant dense<0.000000e+00> : vector<288x64xf32>
    %41 = tpu.matmul %38, %40, %cst_37 {dimension_numbers = #tpu.dot_dimension_numbers<[1], [0], [0], [1], [0, 0, 1, 1], [], []>} : vector<288x64xbf16>, vector<64x64xbf16>, vector<288x64xf32> -> vector<288x64xf32>
    %42 = arith.addf %36, %41 : vector<288x64xf32>
    %c0_38 = arith.constant 0 : index
    %c37 = arith.constant 37 : index
    %c0_39 = arith.constant 0 : index
    %43 = vector.load %arg1[%c0_38, %c37, %c0_39] : memref<1x342x64xbf16, #tpu.memory_space<vmem>>, vector<1x288x64xbf16>
    %44 = vector.shape_cast %43 : vector<1x288x64xbf16> to vector<288x64xbf16>
    %c7 = arith.constant 7 : index
    %c0_40 = arith.constant 0 : index
    %c0_41 = arith.constant 0 : index
    %45 = vector.load %arg2[%c7, %c0_40, %c0_41] : memref<9x64x64xbf16, #tpu.memory_space<vmem>>, vector<1x64x64xbf16>
    %46 = vector.shape_cast %45 : vector<1x64x64xbf16> to vector<64x64xbf16>
    %cst_42 = arith.constant dense<0.000000e+00> : vector<288x64xf32>
    %47 = tpu.matmul %44, %46, %cst_42 {dimension_numbers = #tpu.dot_dimension_numbers<[1], [0], [0], [1], [0, 0, 1, 1], [], []>} : vector<288x64xbf16>, vector<64x64xbf16>, vector<288x64xf32> -> vector<288x64xf32>
    %48 = arith.addf %42, %47 : vector<288x64xf32>
    %c0_43 = arith.constant 0 : index
    %c38 = arith.constant 38 : index
    %c0_44 = arith.constant 0 : index
    %49 = vector.load %arg1[%c0_43, %c38, %c0_44] : memref<1x342x64xbf16, #tpu.memory_space<vmem>>, vector<1x288x64xbf16>
    %50 = vector.shape_cast %49 : vector<1x288x64xbf16> to vector<288x64xbf16>
    %c8 = arith.constant 8 : index
    %c0_45 = arith.constant 0 : index
    %c0_46 = arith.constant 0 : index
    %51 = vector.load %arg2[%c8, %c0_45, %c0_46] : memref<9x64x64xbf16, #tpu.memory_space<vmem>>, vector<1x64x64xbf16>
    %52 = vector.shape_cast %51 : vector<1x64x64xbf16> to vector<64x64xbf16>
    %cst_47 = arith.constant dense<0.000000e+00> : vector<288x64xf32>
    %53 = tpu.matmul %50, %52, %cst_47 {dimension_numbers = #tpu.dot_dimension_numbers<[1], [0], [0], [1], [0, 0, 1, 1], [], []>} : vector<288x64xbf16>, vector<64x64xbf16>, vector<288x64xf32> -> vector<288x64xf32>
    %54 = arith.addf %48, %53 : vector<288x64xf32>
    %55 = arith.truncf %54 : vector<288x64xf32> to vector<288x64xbf16>
    %c0_48 = arith.constant 0 : index
    %c0_49 = arith.constant 0 : index
    %c0_50 = arith.constant 0 : index
    %56 = vector.load %arg3[%c0_48, %c0_49, %c0_50] : memref<1x288x64xbf16, #tpu.memory_space<vmem>>, vector<1x288x64xbf16>
    %57 = vector.shape_cast %56 : vector<1x288x64xbf16> to vector<288x64xbf16>
    %58 = vector.shape_cast %55 : vector<288x64xbf16> to vector<1x288x64xbf16>
    tpu.vector_store %arg3[%c0_48, %c0_49, %c0_50], %58 {strides = array<i32>} : memref<1x288x64xbf16, #tpu.memory_space<vmem>>, vector<1x288x64xbf16>,
    %59 = tpu.iota {dimensions = array<i32: 0>} : vector<288x1xi32>
    %c18_i32 = arith.constant 18 : i32
    %c0_i32 = arith.constant 0 : i32
    %60 = arith.cmpi eq, %c18_i32, %c0_i32 : i32
    %c1_i32 = arith.constant 1 : i32
    %61 = arith.select %60, %c1_i32, %c18_i32 : i32
    %62 = vector.broadcast %61 : i32 to vector<288x1xi32>
    %63 = arith.remsi %59, %62 : vector<288x1xi32>
    %c0_i32_51 = arith.constant 0 : i32
    %64 = vector.broadcast %c0_i32_51 : i32 to vector<288x1xi32>
    %65 = arith.cmpi ne, %63, %64 : vector<288x1xi32>
    %c0_i32_52 = arith.constant 0 : i32
    %66 = vector.broadcast %c0_i32_52 : i32 to vector<288x1xi32>
    %67 = arith.cmpi slt, %63, %66 : vector<288x1xi32>
    %c0_i32_53 = arith.constant 0 : i32
    %68 = arith.cmpi slt, %61, %c0_i32_53 : i32
    %69 = vector.broadcast %68 : i1 to vector<288x1xi1>
    %70 = vector.broadcast %69 : vector<288x1xi1> to vector<288x1xi1>
    %71 = arith.xori %67, %70 : vector<288x1xi1>
    %72 = arith.andi %71, %65 : vector<288x1xi1>
    %73 = vector.broadcast %61 : i32 to vector<288x1xi32>
    %74 = arith.addi %63, %73 : vector<288x1xi32>
    %75 = arith.select %72, %74, %63 : vector<288x1xi1>, vector<288x1xi32>
    %c16_i32 = arith.constant 16 : i32
    %76 = vector.broadcast %c16_i32 : i32 to vector<288x1xi32>
    %77 = arith.cmpi slt, %75, %76 : vector<288x1xi32>
    %78 = arith.extui %77 : vector<288x1xi1> to vector<288x1xi32>
    %79 = arith.sitofp %78 : vector<288x1xi32> to vector<288x1xf32>
    %80 = vector.broadcast %79 : vector<288x1xf32> to vector<288x64xf32>
    %81 = arith.mulf %54, %80 : vector<288x64xf32>
    %cst_54 = arith.constant dense<0.000000e+00> : vector<64xf32>
    %82 = vector.multi_reduction <add>, %81, %cst_54 [0] : vector<288x64xf32> to vector<64xf32>
    %83 = vector.shape_cast %82 : vector<64xf32> to vector<1x64xf32>
    %c0_55 = arith.constant 0 : index
    %c0_56 = arith.constant 0 : index
    %c0_57 = arith.constant 0 : index
    %84 = vector.load %arg4[%c0_55, %c0_56, %c0_57] : memref<1x1x64xf32, #tpu.memory_space<vmem>>, vector<1x1x64xf32>
    %85 = vector.shape_cast %84 : vector<1x1x64xf32> to vector<1x64xf32>
    %86 = vector.shape_cast %83 : vector<1x64xf32> to vector<1x1x64xf32>
    tpu.vector_store %arg4[%c0_55, %c0_56, %c0_57], %86 {strides = array<i32>} : memref<1x1x64xf32, #tpu.memory_space<vmem>>, vector<1x1x64xf32>,
    %87 = arith.mulf %81, %54 : vector<288x64xf32>
    %cst_58 = arith.constant dense<0.000000e+00> : vector<64xf32>
    %88 = vector.multi_reduction <add>, %87, %cst_58 [0] : vector<288x64xf32> to vector<64xf32>
    %89 = vector.shape_cast %88 : vector<64xf32> to vector<1x64xf32>
    %c0_59 = arith.constant 0 : index
    %c0_60 = arith.constant 0 : index
    %c0_61 = arith.constant 0 : index
    %90 = vector.load %arg5[%c0_59, %c0_60, %c0_61] : memref<1x1x64xf32, #tpu.memory_space<vmem>>, vector<1x1x64xf32>
    %91 = vector.shape_cast %90 : vector<1x1x64xf32> to vector<1x64xf32>
    %92 = vector.shape_cast %89 : vector<1x64xf32> to vector<1x1x64xf32>
    tpu.vector_store %arg5[%c0_59, %c0_60, %c0_61], %92 {strides = array<i32>} : memref<1x1x64xf32, #tpu.memory_space<vmem>>, vector<1x1x64xf32>,
    return
  }
  func.func @transform_0(%arg0: i32) -> (i32, i32, i32) {
    %c0_i32 = arith.constant 0 : i32
    %c0_i32_0 = arith.constant 0 : i32
    %c0_i32_1 = arith.constant 0 : i32
    return %arg0, %c0_i32, %c0_i32_0 : i32, i32, i32
  }
  func.func @transform_1(%arg0: i32) -> (i32, i32, i32) {
    %c0_i32 = arith.constant 0 : i32
    %c0_i32_0 = arith.constant 0 : i32
    %c0_i32_1 = arith.constant 0 : i32
    %c0_i32_2 = arith.constant 0 : i32
    return %c0_i32, %c0_i32_0, %c0_i32_1 : i32, i32, i32
  }
  func.func @transform_2(%arg0: i32) -> (i32, i32, i32) {
    %c0_i32 = arith.constant 0 : i32
    %c0_i32_0 = arith.constant 0 : i32
    %c0_i32_1 = arith.constant 0 : i32
    return %arg0, %c0_i32, %c0_i32_0 : i32, i32, i32
  }
  func.func @transform_3(%arg0: i32) -> (i32, i32, i32) {
    %c0_i32 = arith.constant 0 : i32
    %c0_i32_0 = arith.constant 0 : i32
    %c0_i32_1 = arith.constant 0 : i32
    return %arg0, %c0_i32, %c0_i32_0 : i32, i32, i32
  }
  func.func @transform_4(%arg0: i32) -> (i32, i32, i32) {
    %c0_i32 = arith.constant 0 : i32
    %c0_i32_0 = arith.constant 0 : i32
    %c0_i32_1 = arith.constant 0 : i32
    return %arg0, %c0_i32, %c0_i32_0 : i32, i32, i32
  }
}

module attributes {stable_mosaic.version = 11 : i64} {
  func.func @bnact_conv_stats_kernel(%arg0: i32, %arg1: memref<1x288x64xbf16, #tpu.memory_space<vmem>>, %arg2: memref<1x64xf32, #tpu.memory_space<vmem>>, %arg3: memref<1x64xf32, #tpu.memory_space<vmem>>, %arg4: memref<9x64x64xbf16, #tpu.memory_space<vmem>>, %arg5: memref<1x288x64xbf16, #tpu.memory_space<vmem>>, %arg6: memref<1x1x64xf32, #tpu.memory_space<vmem>>, %arg7: memref<1x1x64xf32, #tpu.memory_space<vmem>>, %arg8: memref<342x64xbf16, #tpu.memory_space<vmem>>) attributes {dimension_semantics = [#tpu.dimension_semantics<parallel>], iteration_bounds = array<i64: 2>, scalar_prefetch = 0 : i64, scratch_operands = 1 : i64, tpu.core_type = #tpu.core_type<tc>, window_params = [{transform_indices = @transform_0, window_bounds = array<i64: 1, 288, 64>}, {pipeline_mode = #tpu.pipeline_mode<synchronous>, transform_indices = @transform_1, window_bounds = array<i64: 1, 64>}, {pipeline_mode = #tpu.pipeline_mode<synchronous>, transform_indices = @transform_2, window_bounds = array<i64: 1, 64>}, {pipeline_mode = #tpu.pipeline_mode<synchronous>, transform_indices = @transform_3, window_bounds = array<i64: 9, 64, 64>}, {transform_indices = @transform_4, window_bounds = array<i64: 1, 288, 64>}, {transform_indices = @transform_5, window_bounds = array<i64: 1, 1, 64>}, {transform_indices = @transform_6, window_bounds = array<i64: 1, 1, 64>}]} {
    %c0 = arith.constant 0 : index
    %c0_0 = arith.constant 0 : index
    %c0_1 = arith.constant 0 : index
    %0 = vector.load %arg1[%c0, %c0_0, %c0_1] : memref<1x288x64xbf16, #tpu.memory_space<vmem>>, vector<1x288x64xbf16>
    %1 = vector.shape_cast %0 : vector<1x288x64xbf16> to vector<288x64xbf16>
    %2 = arith.extf %1 : vector<288x64xbf16> to vector<288x64xf32>
    %c0_2 = arith.constant 0 : index
    %c0_3 = arith.constant 0 : index
    %3 = vector.load %arg2[%c0_2, %c0_3] : memref<1x64xf32, #tpu.memory_space<vmem>>, vector<1x64xf32>
    %4 = vector.broadcast %3 : vector<1x64xf32> to vector<288x64xf32>
    %5 = arith.mulf %2, %4 : vector<288x64xf32>
    %c0_4 = arith.constant 0 : index
    %c0_5 = arith.constant 0 : index
    %6 = vector.load %arg3[%c0_4, %c0_5] : memref<1x64xf32, #tpu.memory_space<vmem>>, vector<1x64xf32>
    %7 = vector.broadcast %6 : vector<1x64xf32> to vector<288x64xf32>
    %8 = arith.addf %5, %7 : vector<288x64xf32>
    %cst = arith.constant 0.000000e+00 : f32
    %9 = vector.broadcast %cst : f32 to vector<288x64xf32>
    %10 = arith.maximumf %8, %9 : vector<288x64xf32>
    %11 = tpu.iota {dimensions = array<i32: 0>} : vector<288x1xi32>
    %c18_i32 = arith.constant 18 : i32
    %c0_i32 = arith.constant 0 : i32
    %12 = arith.cmpi eq, %c18_i32, %c0_i32 : i32
    %c1_i32 = arith.constant 1 : i32
    %13 = arith.select %12, %c1_i32, %c18_i32 : i32
    %14 = vector.broadcast %13 : i32 to vector<288x1xi32>
    %15 = arith.remsi %11, %14 : vector<288x1xi32>
    %c0_i32_6 = arith.constant 0 : i32
    %16 = vector.broadcast %c0_i32_6 : i32 to vector<288x1xi32>
    %17 = arith.cmpi ne, %15, %16 : vector<288x1xi32>
    %c0_i32_7 = arith.constant 0 : i32
    %18 = vector.broadcast %c0_i32_7 : i32 to vector<288x1xi32>
    %19 = arith.cmpi slt, %15, %18 : vector<288x1xi32>
    %c0_i32_8 = arith.constant 0 : i32
    %20 = arith.cmpi slt, %13, %c0_i32_8 : i32
    %21 = vector.broadcast %20 : i1 to vector<288x1xi1>
    %22 = vector.broadcast %21 : vector<288x1xi1> to vector<288x1xi1>
    %23 = arith.xori %19, %22 : vector<288x1xi1>
    %24 = arith.andi %23, %17 : vector<288x1xi1>
    %25 = vector.broadcast %13 : i32 to vector<288x1xi32>
    %26 = arith.addi %15, %25 : vector<288x1xi32>
    %27 = arith.select %24, %26, %15 : vector<288x1xi1>, vector<288x1xi32>
    %c16_i32 = arith.constant 16 : i32
    %28 = vector.broadcast %c16_i32 : i32 to vector<288x1xi32>
    %29 = arith.cmpi slt, %27, %28 : vector<288x1xi32>
    %cst_9 = arith.constant 0.000000e+00 : f32
    %30 = vector.shape_cast %29 : vector<288x1xi1> to vector<288x1xi1>
    %31 = vector.broadcast %30 : vector<288x1xi1> to vector<288x64xi1>
    %32 = vector.broadcast %cst_9 : f32 to vector<288x64xf32>
    %33 = arith.select %31, %10, %32 : vector<288x64xi1>, vector<288x64xf32>
    %cst_10 = arith.constant 0.000000e+00 : bf16
    %34 = vector.broadcast %cst_10 : bf16 to vector<342x64xbf16>
    %c0_11 = arith.constant 0 : index
    %c0_12 = arith.constant 0 : index
    %35 = vector.load %arg8[%c0_11, %c0_12] : memref<342x64xbf16, #tpu.memory_space<vmem>>, vector<342x64xbf16>
    tpu.vector_store %arg8[%c0_11, %c0_12], %34 {strides = array<i32>} : memref<342x64xbf16, #tpu.memory_space<vmem>>, vector<342x64xbf16>,
    %36 = arith.truncf %33 : vector<288x64xf32> to vector<288x64xbf16>
    %c19 = arith.constant 19 : index
    %c0_13 = arith.constant 0 : index
    %37 = vector.load %arg8[%c19, %c0_13] : memref<342x64xbf16, #tpu.memory_space<vmem>>, vector<288x64xbf16>
    tpu.vector_store %arg8[%c19, %c0_13], %36 {strides = array<i32>} : memref<342x64xbf16, #tpu.memory_space<vmem>>, vector<288x64xbf16>,
    %cst_14 = arith.constant 0.000000e+00 : f32
    %38 = vector.broadcast %cst_14 : f32 to vector<288x64xf32>
    %c0_15 = arith.constant 0 : index
    %c0_16 = arith.constant 0 : index
    %39 = vector.load %arg8[%c0_15, %c0_16] : memref<342x64xbf16, #tpu.memory_space<vmem>>, vector<288x64xbf16>
    %c0_17 = arith.constant 0 : index
    %c0_18 = arith.constant 0 : index
    %c0_19 = arith.constant 0 : index
    %40 = vector.load %arg4[%c0_17, %c0_18, %c0_19] : memref<9x64x64xbf16, #tpu.memory_space<vmem>>, vector<1x64x64xbf16>
    %41 = vector.shape_cast %40 : vector<1x64x64xbf16> to vector<64x64xbf16>
    %cst_20 = arith.constant dense<0.000000e+00> : vector<288x64xf32>
    %42 = tpu.matmul %39, %41, %cst_20 {dimension_numbers = #tpu.dot_dimension_numbers<[1], [0], [0], [1], [0, 0, 1, 1], [], []>} : vector<288x64xbf16>, vector<64x64xbf16>, vector<288x64xf32> -> vector<288x64xf32>
    %43 = arith.addf %38, %42 : vector<288x64xf32>
    %c1 = arith.constant 1 : index
    %c0_21 = arith.constant 0 : index
    %44 = vector.load %arg8[%c1, %c0_21] : memref<342x64xbf16, #tpu.memory_space<vmem>>, vector<288x64xbf16>
    %c1_22 = arith.constant 1 : index
    %c0_23 = arith.constant 0 : index
    %c0_24 = arith.constant 0 : index
    %45 = vector.load %arg4[%c1_22, %c0_23, %c0_24] : memref<9x64x64xbf16, #tpu.memory_space<vmem>>, vector<1x64x64xbf16>
    %46 = vector.shape_cast %45 : vector<1x64x64xbf16> to vector<64x64xbf16>
    %cst_25 = arith.constant dense<0.000000e+00> : vector<288x64xf32>
    %47 = tpu.matmul %44, %46, %cst_25 {dimension_numbers = #tpu.dot_dimension_numbers<[1], [0], [0], [1], [0, 0, 1, 1], [], []>} : vector<288x64xbf16>, vector<64x64xbf16>, vector<288x64xf32> -> vector<288x64xf32>
    %48 = arith.addf %43, %47 : vector<288x64xf32>
    %c2 = arith.constant 2 : index
    %c0_26 = arith.constant 0 : index
    %49 = vector.load %arg8[%c2, %c0_26] : memref<342x64xbf16, #tpu.memory_space<vmem>>, vector<288x64xbf16>
    %c2_27 = arith.constant 2 : index
    %c0_28 = arith.constant 0 : index
    %c0_29 = arith.constant 0 : index
    %50 = vector.load %arg4[%c2_27, %c0_28, %c0_29] : memref<9x64x64xbf16, #tpu.memory_space<vmem>>, vector<1x64x64xbf16>
    %51 = vector.shape_cast %50 : vector<1x64x64xbf16> to vector<64x64xbf16>
    %cst_30 = arith.constant dense<0.000000e+00> : vector<288x64xf32>
    %52 = tpu.matmul %49, %51, %cst_30 {dimension_numbers = #tpu.dot_dimension_numbers<[1], [0], [0], [1], [0, 0, 1, 1], [], []>} : vector<288x64xbf16>, vector<64x64xbf16>, vector<288x64xf32> -> vector<288x64xf32>
    %53 = arith.addf %48, %52 : vector<288x64xf32>
    %c18 = arith.constant 18 : index
    %c0_31 = arith.constant 0 : index
    %54 = vector.load %arg8[%c18, %c0_31] : memref<342x64xbf16, #tpu.memory_space<vmem>>, vector<288x64xbf16>
    %c3 = arith.constant 3 : index
    %c0_32 = arith.constant 0 : index
    %c0_33 = arith.constant 0 : index
    %55 = vector.load %arg4[%c3, %c0_32, %c0_33] : memref<9x64x64xbf16, #tpu.memory_space<vmem>>, vector<1x64x64xbf16>
    %56 = vector.shape_cast %55 : vector<1x64x64xbf16> to vector<64x64xbf16>
    %cst_34 = arith.constant dense<0.000000e+00> : vector<288x64xf32>
    %57 = tpu.matmul %54, %56, %cst_34 {dimension_numbers = #tpu.dot_dimension_numbers<[1], [0], [0], [1], [0, 0, 1, 1], [], []>} : vector<288x64xbf16>, vector<64x64xbf16>, vector<288x64xf32> -> vector<288x64xf32>
    %58 = arith.addf %53, %57 : vector<288x64xf32>
    %c19_35 = arith.constant 19 : index
    %c0_36 = arith.constant 0 : index
    %59 = vector.load %arg8[%c19_35, %c0_36] : memref<342x64xbf16, #tpu.memory_space<vmem>>, vector<288x64xbf16>
    %c4 = arith.constant 4 : index
    %c0_37 = arith.constant 0 : index
    %c0_38 = arith.constant 0 : index
    %60 = vector.load %arg4[%c4, %c0_37, %c0_38] : memref<9x64x64xbf16, #tpu.memory_space<vmem>>, vector<1x64x64xbf16>
    %61 = vector.shape_cast %60 : vector<1x64x64xbf16> to vector<64x64xbf16>
    %cst_39 = arith.constant dense<0.000000e+00> : vector<288x64xf32>
    %62 = tpu.matmul %59, %61, %cst_39 {dimension_numbers = #tpu.dot_dimension_numbers<[1], [0], [0], [1], [0, 0, 1, 1], [], []>} : vector<288x64xbf16>, vector<64x64xbf16>, vector<288x64xf32> -> vector<288x64xf32>
    %63 = arith.addf %58, %62 : vector<288x64xf32>
    %c20 = arith.constant 20 : index
    %c0_40 = arith.constant 0 : index
    %64 = vector.load %arg8[%c20, %c0_40] : memref<342x64xbf16, #tpu.memory_space<vmem>>, vector<288x64xbf16>
    %c5 = arith.constant 5 : index
    %c0_41 = arith.constant 0 : index
    %c0_42 = arith.constant 0 : index
    %65 = vector.load %arg4[%c5, %c0_41, %c0_42] : memref<9x64x64xbf16, #tpu.memory_space<vmem>>, vector<1x64x64xbf16>
    %66 = vector.shape_cast %65 : vector<1x64x64xbf16> to vector<64x64xbf16>
    %cst_43 = arith.constant dense<0.000000e+00> : vector<288x64xf32>
    %67 = tpu.matmul %64, %66, %cst_43 {dimension_numbers = #tpu.dot_dimension_numbers<[1], [0], [0], [1], [0, 0, 1, 1], [], []>} : vector<288x64xbf16>, vector<64x64xbf16>, vector<288x64xf32> -> vector<288x64xf32>
    %68 = arith.addf %63, %67 : vector<288x64xf32>
    %c36 = arith.constant 36 : index
    %c0_44 = arith.constant 0 : index
    %69 = vector.load %arg8[%c36, %c0_44] : memref<342x64xbf16, #tpu.memory_space<vmem>>, vector<288x64xbf16>
    %c6 = arith.constant 6 : index
    %c0_45 = arith.constant 0 : index
    %c0_46 = arith.constant 0 : index
    %70 = vector.load %arg4[%c6, %c0_45, %c0_46] : memref<9x64x64xbf16, #tpu.memory_space<vmem>>, vector<1x64x64xbf16>
    %71 = vector.shape_cast %70 : vector<1x64x64xbf16> to vector<64x64xbf16>
    %cst_47 = arith.constant dense<0.000000e+00> : vector<288x64xf32>
    %72 = tpu.matmul %69, %71, %cst_47 {dimension_numbers = #tpu.dot_dimension_numbers<[1], [0], [0], [1], [0, 0, 1, 1], [], []>} : vector<288x64xbf16>, vector<64x64xbf16>, vector<288x64xf32> -> vector<288x64xf32>
    %73 = arith.addf %68, %72 : vector<288x64xf32>
    %c37 = arith.constant 37 : index
    %c0_48 = arith.constant 0 : index
    %74 = vector.load %arg8[%c37, %c0_48] : memref<342x64xbf16, #tpu.memory_space<vmem>>, vector<288x64xbf16>
    %c7 = arith.constant 7 : index
    %c0_49 = arith.constant 0 : index
    %c0_50 = arith.constant 0 : index
    %75 = vector.load %arg4[%c7, %c0_49, %c0_50] : memref<9x64x64xbf16, #tpu.memory_space<vmem>>, vector<1x64x64xbf16>
    %76 = vector.shape_cast %75 : vector<1x64x64xbf16> to vector<64x64xbf16>
    %cst_51 = arith.constant dense<0.000000e+00> : vector<288x64xf32>
    %77 = tpu.matmul %74, %76, %cst_51 {dimension_numbers = #tpu.dot_dimension_numbers<[1], [0], [0], [1], [0, 0, 1, 1], [], []>} : vector<288x64xbf16>, vector<64x64xbf16>, vector<288x64xf32> -> vector<288x64xf32>
    %78 = arith.addf %73, %77 : vector<288x64xf32>
    %c38 = arith.constant 38 : index
    %c0_52 = arith.constant 0 : index
    %79 = vector.load %arg8[%c38, %c0_52] : memref<342x64xbf16, #tpu.memory_space<vmem>>, vector<288x64xbf16>
    %c8 = arith.constant 8 : index
    %c0_53 = arith.constant 0 : index
    %c0_54 = arith.constant 0 : index
    %80 = vector.load %arg4[%c8, %c0_53, %c0_54] : memref<9x64x64xbf16, #tpu.memory_space<vmem>>, vector<1x64x64xbf16>
    %81 = vector.shape_cast %80 : vector<1x64x64xbf16> to vector<64x64xbf16>
    %cst_55 = arith.constant dense<0.000000e+00> : vector<288x64xf32>
    %82 = tpu.matmul %79, %81, %cst_55 {dimension_numbers = #tpu.dot_dimension_numbers<[1], [0], [0], [1], [0, 0, 1, 1], [], []>} : vector<288x64xbf16>, vector<64x64xbf16>, vector<288x64xf32> -> vector<288x64xf32>
    %83 = arith.addf %78, %82 : vector<288x64xf32>
    %84 = arith.truncf %83 : vector<288x64xf32> to vector<288x64xbf16>
    %c0_56 = arith.constant 0 : index
    %c0_57 = arith.constant 0 : index
    %c0_58 = arith.constant 0 : index
    %85 = vector.load %arg5[%c0_56, %c0_57, %c0_58] : memref<1x288x64xbf16, #tpu.memory_space<vmem>>, vector<1x288x64xbf16>
    %86 = vector.shape_cast %85 : vector<1x288x64xbf16> to vector<288x64xbf16>
    %87 = vector.shape_cast %84 : vector<288x64xbf16> to vector<1x288x64xbf16>
    tpu.vector_store %arg5[%c0_56, %c0_57, %c0_58], %87 {strides = array<i32>} : memref<1x288x64xbf16, #tpu.memory_space<vmem>>, vector<1x288x64xbf16>,
    %88 = tpu.iota {dimensions = array<i32: 0>} : vector<288x1xi32>
    %c18_i32_59 = arith.constant 18 : i32
    %c0_i32_60 = arith.constant 0 : i32
    %89 = arith.cmpi eq, %c18_i32_59, %c0_i32_60 : i32
    %c1_i32_61 = arith.constant 1 : i32
    %90 = arith.select %89, %c1_i32_61, %c18_i32_59 : i32
    %91 = vector.broadcast %90 : i32 to vector<288x1xi32>
    %92 = arith.remsi %88, %91 : vector<288x1xi32>
    %c0_i32_62 = arith.constant 0 : i32
    %93 = vector.broadcast %c0_i32_62 : i32 to vector<288x1xi32>
    %94 = arith.cmpi ne, %92, %93 : vector<288x1xi32>
    %c0_i32_63 = arith.constant 0 : i32
    %95 = vector.broadcast %c0_i32_63 : i32 to vector<288x1xi32>
    %96 = arith.cmpi slt, %92, %95 : vector<288x1xi32>
    %c0_i32_64 = arith.constant 0 : i32
    %97 = arith.cmpi slt, %90, %c0_i32_64 : i32
    %98 = vector.broadcast %97 : i1 to vector<288x1xi1>
    %99 = vector.broadcast %98 : vector<288x1xi1> to vector<288x1xi1>
    %100 = arith.xori %96, %99 : vector<288x1xi1>
    %101 = arith.andi %100, %94 : vector<288x1xi1>
    %102 = vector.broadcast %90 : i32 to vector<288x1xi32>
    %103 = arith.addi %92, %102 : vector<288x1xi32>
    %104 = arith.select %101, %103, %92 : vector<288x1xi1>, vector<288x1xi32>
    %c16_i32_65 = arith.constant 16 : i32
    %105 = vector.broadcast %c16_i32_65 : i32 to vector<288x1xi32>
    %106 = arith.cmpi slt, %104, %105 : vector<288x1xi32>
    %107 = arith.extui %106 : vector<288x1xi1> to vector<288x1xi32>
    %108 = arith.sitofp %107 : vector<288x1xi32> to vector<288x1xf32>
    %109 = vector.broadcast %108 : vector<288x1xf32> to vector<288x64xf32>
    %110 = arith.mulf %83, %109 : vector<288x64xf32>
    %cst_66 = arith.constant dense<0.000000e+00> : vector<64xf32>
    %111 = vector.multi_reduction <add>, %110, %cst_66 [0] : vector<288x64xf32> to vector<64xf32>
    %112 = vector.shape_cast %111 : vector<64xf32> to vector<1x64xf32>
    %c0_67 = arith.constant 0 : index
    %c0_68 = arith.constant 0 : index
    %c0_69 = arith.constant 0 : index
    %113 = vector.load %arg6[%c0_67, %c0_68, %c0_69] : memref<1x1x64xf32, #tpu.memory_space<vmem>>, vector<1x1x64xf32>
    %114 = vector.shape_cast %113 : vector<1x1x64xf32> to vector<1x64xf32>
    %115 = vector.shape_cast %112 : vector<1x64xf32> to vector<1x1x64xf32>
    tpu.vector_store %arg6[%c0_67, %c0_68, %c0_69], %115 {strides = array<i32>} : memref<1x1x64xf32, #tpu.memory_space<vmem>>, vector<1x1x64xf32>,
    %116 = arith.mulf %110, %83 : vector<288x64xf32>
    %cst_70 = arith.constant dense<0.000000e+00> : vector<64xf32>
    %117 = vector.multi_reduction <add>, %116, %cst_70 [0] : vector<288x64xf32> to vector<64xf32>
    %118 = vector.shape_cast %117 : vector<64xf32> to vector<1x64xf32>
    %c0_71 = arith.constant 0 : index
    %c0_72 = arith.constant 0 : index
    %c0_73 = arith.constant 0 : index
    %119 = vector.load %arg7[%c0_71, %c0_72, %c0_73] : memref<1x1x64xf32, #tpu.memory_space<vmem>>, vector<1x1x64xf32>
    %120 = vector.shape_cast %119 : vector<1x1x64xf32> to vector<1x64xf32>
    %121 = vector.shape_cast %118 : vector<1x64xf32> to vector<1x1x64xf32>
    tpu.vector_store %arg7[%c0_71, %c0_72, %c0_73], %121 {strides = array<i32>} : memref<1x1x64xf32, #tpu.memory_space<vmem>>, vector<1x1x64xf32>,
    return
  }
  func.func @transform_0(%arg0: i32) -> (i32, i32, i32) {
    %c0_i32 = arith.constant 0 : i32
    %c0_i32_0 = arith.constant 0 : i32
    %c0_i32_1 = arith.constant 0 : i32
    return %arg0, %c0_i32, %c0_i32_0 : i32, i32, i32
  }
  func.func @transform_1(%arg0: i32) -> (i32, i32) {
    %c0_i32 = arith.constant 0 : i32
    %c0_i32_0 = arith.constant 0 : i32
    %c0_i32_1 = arith.constant 0 : i32
    return %c0_i32, %c0_i32_0 : i32, i32
  }
  func.func @transform_2(%arg0: i32) -> (i32, i32) {
    %c0_i32 = arith.constant 0 : i32
    %c0_i32_0 = arith.constant 0 : i32
    %c0_i32_1 = arith.constant 0 : i32
    return %c0_i32, %c0_i32_0 : i32, i32
  }
  func.func @transform_3(%arg0: i32) -> (i32, i32, i32) {
    %c0_i32 = arith.constant 0 : i32
    %c0_i32_0 = arith.constant 0 : i32
    %c0_i32_1 = arith.constant 0 : i32
    %c0_i32_2 = arith.constant 0 : i32
    return %c0_i32, %c0_i32_0, %c0_i32_1 : i32, i32, i32
  }
  func.func @transform_4(%arg0: i32) -> (i32, i32, i32) {
    %c0_i32 = arith.constant 0 : i32
    %c0_i32_0 = arith.constant 0 : i32
    %c0_i32_1 = arith.constant 0 : i32
    return %arg0, %c0_i32, %c0_i32_0 : i32, i32, i32
  }
  func.func @transform_5(%arg0: i32) -> (i32, i32, i32) {
    %c0_i32 = arith.constant 0 : i32
    %c0_i32_0 = arith.constant 0 : i32
    %c0_i32_1 = arith.constant 0 : i32
    return %arg0, %c0_i32, %c0_i32_0 : i32, i32, i32
  }
  func.func @transform_6(%arg0: i32) -> (i32, i32, i32) {
    %c0_i32 = arith.constant 0 : i32
    %c0_i32_0 = arith.constant 0 : i32
    %c0_i32_1 = arith.constant 0 : i32
    return %arg0, %c0_i32, %c0_i32_0 : i32, i32, i32
  }
}

module attributes {stable_mosaic.version = 11 : i64} {
  func.func @bn_act_kernel(%arg0: i32, %arg1: memref<288x128xbf16, #tpu.memory_space<vmem>>, %arg2: memref<1x128xf32, #tpu.memory_space<vmem>>, %arg3: memref<1x128xf32, #tpu.memory_space<vmem>>, %arg4: memref<288x128xf32, #tpu.memory_space<vmem>>) attributes {dimension_semantics = [#tpu.dimension_semantics<parallel>], iteration_bounds = array<i64: 1>, scalar_prefetch = 0 : i64, scratch_operands = 0 : i64, tpu.core_type = #tpu.core_type<tc>, window_params = [{transform_indices = @transform_0, window_bounds = array<i64: 288, 128>}, {pipeline_mode = #tpu.pipeline_mode<synchronous>, transform_indices = @transform_1, window_bounds = array<i64: 1, 128>}, {pipeline_mode = #tpu.pipeline_mode<synchronous>, transform_indices = @transform_2, window_bounds = array<i64: 1, 128>}, {transform_indices = @transform_3, window_bounds = array<i64: 288, 128>}]} {
    %c0 = arith.constant 0 : index
    %c0_0 = arith.constant 0 : index
    %0 = vector.load %arg1[%c0, %c0_0] : memref<288x128xbf16, #tpu.memory_space<vmem>>, vector<288x128xbf16>
    %1 = arith.extf %0 : vector<288x128xbf16> to vector<288x128xf32>
    %c0_1 = arith.constant 0 : index
    %c0_2 = arith.constant 0 : index
    %2 = vector.load %arg2[%c0_1, %c0_2] : memref<1x128xf32, #tpu.memory_space<vmem>>, vector<1x128xf32>
    %3 = vector.broadcast %2 : vector<1x128xf32> to vector<288x128xf32>
    %4 = arith.mulf %1, %3 : vector<288x128xf32>
    %c0_3 = arith.constant 0 : index
    %c0_4 = arith.constant 0 : index
    %5 = vector.load %arg3[%c0_3, %c0_4] : memref<1x128xf32, #tpu.memory_space<vmem>>, vector<1x128xf32>
    %6 = vector.broadcast %5 : vector<1x128xf32> to vector<288x128xf32>
    %7 = arith.addf %4, %6 : vector<288x128xf32>
    %cst = arith.constant 0.000000e+00 : f32
    %8 = vector.broadcast %cst : f32 to vector<288x128xf32>
    %9 = arith.maximumf %7, %8 : vector<288x128xf32>
    %c0_5 = arith.constant 0 : index
    %c0_6 = arith.constant 0 : index
    %10 = vector.load %arg4[%c0_5, %c0_6] : memref<288x128xf32, #tpu.memory_space<vmem>>, vector<288x128xf32>
    tpu.vector_store %arg4[%c0_5, %c0_6], %9 {strides = array<i32>} : memref<288x128xf32, #tpu.memory_space<vmem>>, vector<288x128xf32>,
    return
  }
  func.func @transform_0(%arg0: i32) -> (i32, i32) {
    %c0_i32 = arith.constant 0 : i32
    %c0_i32_0 = arith.constant 0 : i32
    return %arg0, %c0_i32 : i32, i32
  }
  func.func @transform_1(%arg0: i32) -> (i32, i32) {
    %c0_i32 = arith.constant 0 : i32
    %c0_i32_0 = arith.constant 0 : i32
    %c0_i32_1 = arith.constant 0 : i32
    return %c0_i32, %c0_i32_0 : i32, i32
  }
  func.func @transform_2(%arg0: i32) -> (i32, i32) {
    %c0_i32 = arith.constant 0 : i32
    %c0_i32_0 = arith.constant 0 : i32
    %c0_i32_1 = arith.constant 0 : i32
    return %c0_i32, %c0_i32_0 : i32, i32
  }
  func.func @transform_3(%arg0: i32) -> (i32, i32) {
    %c0_i32 = arith.constant 0 : i32
    %c0_i32_0 = arith.constant 0 : i32
    return %arg0, %c0_i32 : i32, i32
  }
}

</mosaic_0001>

<llo_original>
// kernel: tile.14
$region0: #{tile.14}
  #allocation0 [shape = 's32[1]{0}', space=sflag, size = 0x4, scoped, tag = 'scoped memory for tile.14']
  %s0 = inlined_call_operand.vmem [shape: f32[64], index: 0, kind: input, shape index: {}]
  %s1 = inlined_call_operand.vmem [shape: f32[2,64], index: 1, kind: output, shape index: {}]
  // Predicated region
  $region2: #{tile.14} parent=0 // pred_check
    _
  $region3: #{tile.14} parent=0 // pred_check_branch
    %3 = sbr.rel (0) target = $region5
  $region4: #{tile.14} parent=0 // pred_region
    _
  $region5: #{tile.14} parent=0 // pred_fallthru
    _
  %v4 = vld [vmem:[%s0] ss:$0 sm:$0xff]
  %5 = vst [vmem:[%s1] sm:$0x3] %v4

// kernel: tile.15
$region0: #{tile.15}
  %s0 = inlined_call_operand.vmem [shape: f32[2,64], index: 0, kind: input, shape index: {}]
  %s1 = inlined_call_operand.vmem [shape: f32[1,128], index: 1, kind: output, shape index: {}]
  $region1: #{tile.15} parent=0
    #allocation0 [shape = 'u8[4096]{0}', space=vmem, size = 0x1000, scoped, tag = 'scoped mem for output reshape']
    #allocation1 [shape = 'u8[4096]{0}', space=vmem, size = 0x1000, scoped, tag = 'scoped mem for input reshape']
    %s3 = sshll.u32 1, 2
    %s4 = ssub.s32 %s3, 1
    %v5 = vld [vmem:[%s0] sm:%s4]
    %6 = vst [vmem:[#allocation1] sm:%s4] %v5
    %v7 = vld [vmem:[#allocation1] sm:$0x1]
    %vm8 = vcmask 523264
    %9 = vst.msk [vmem:[#allocation0] sm:$0x1] %vm8, %v7
    %s10 = scalar_lea.vmem [#allocation1], 1
    %v11 = vld [vmem:[%s10] sm:$0x1]
    %12 = vrot.lane.b32.xlu0 %v11, 64
    %v13 = vpop.permute.xlu0 %12
    %vm14 = vcmask 1048064
    %15 = vst.msk [vmem:[#allocation0] sm:$0x1] %vm14, %v13
    %s17 = sshll.u32 1, 1
    %s18 = ssub.s32 %s17, 1
    %v20 = vld [vmem:[#allocation0] sm:%s18]
    %s21 = sshll.u32 1, 1
    %s22 = ssub.s32 %s21, 1
    %23 = vst [vmem:[%s1] sm:%s22] %v20

// kernel: _lambda_.5
$region0: #{_lambda_.5}
  #allocation0 [shape = 'u32[]', space=smem, size = 0x4, offset = 0x4, fixed_abs, tag = 'smem constant byte address 0x4 - core index']
  #allocation1 [shape = 'u32[144,128]{1,0:T(1,128)}', space=vmem, size = 0x12000, scoped, tag = 'internal scratch']
  %s0 = inlined_call_operand.vmem [shape: bf16[288,128], index: 0, kind: input, shape index: {}]
  %s1 = inlined_call_operand.vmem [shape: f32[1,128], index: 1, kind: input, shape index: {}]
  %s2 = inlined_call_operand.vmem [shape: f32[1,128], index: 2, kind: input, shape index: {}]
  %s3 = inlined_call_operand.vmem [shape: f32[288,128], index: 3, kind: output, shape index: {}]
  %s4 = sld [smem:[#allocation0]]
  $region22: #{_lambda_.5} parent=0
    _
  %s6 = ssub.s32 1, %s4
  %s7 = scalar_select 0, %s6, %s4
  // Predicated region
  $region2: #{_lambda_.5} parent=0 // pred_check
    _
  $region3: #{_lambda_.5} parent=0 // pred_check_branch
    %9 = sbr.rel (0) target = $region5
  $region4: #{_lambda_.5} parent=0 // pred_region
    _
  $region5: #{_lambda_.5} parent=0 // pred_fallthru
    _
  // Predicated region
  $region6: #{_lambda_.5} parent=0 // pred_check
    _
  $region7: #{_lambda_.5} parent=0 // pred_check_branch
    %11 = sbr.rel (0) target = $region9
  $region8: #{_lambda_.5} parent=0 // pred_region
    _
  $region9: #{_lambda_.5} parent=0 // pred_fallthru
    _
  // Predicated region
  $region10: #{_lambda_.5} parent=0 // pred_check
    _
  $region11: #{_lambda_.5} parent=0 // pred_check_branch
    %13 = sbr.rel (0) target = $region13
  $region12: #{_lambda_.5} parent=0 // pred_region
    _
  $region13: #{_lambda_.5} parent=0 // pred_fallthru
    _
  %v14 = vld [vmem:[%s0] sm:$0xf]
  %v15 = vld [vmem:[%s0 + $0x4] sm:$0xf]
  %v16 = vld [vmem:[%s0 + $0x8] sm:$0xf]
  %v17 = vld [vmem:[%s0 + $0xc] sm:$0xf]
  %v18 = vld [vmem:[%s0 + $0x10] sm:$0xf]
  %v19 = vld [vmem:[%s0 + $0x14] sm:$0xf]
  %v20 = vld [vmem:[%s0 + $0x18] sm:$0xf]
  %v21 = vld [vmem:[%s0 + $0x1c] sm:$0xf]
  %v22 = vld [vmem:[%s0 + $0x20] sm:$0xf]
  %v23 = vld [vmem:[%s0 + $0x24] sm:$0xf]
  %v24 = vld [vmem:[%s0 + $0x28] sm:$0xf]
  %v25 = vld [vmem:[%s0 + $0x2c] sm:$0xf]
  %v26 = vld [vmem:[%s0 + $0x30] sm:$0xf]
  %v27 = vld [vmem:[%s0 + $0x34] sm:$0xf]
  %v28 = vld [vmem:[%s0 + $0x38] sm:$0xf]
  %v29 = vld [vmem:[%s0 + $0x3c] sm:$0xf]
  %v30 = vld [vmem:[%s0 + $0x40] sm:$0xf]
  %v31 = vld [vmem:[%s0 + $0x44] sm:$0xf]
  %v32 = vld [vmem:[%s0 + $0x48] sm:$0xf]
  %v33 = vld [vmem:[%s0 + $0x4c] sm:$0xf]
  %v34 = vld [vmem:[%s0 + $0x50] sm:$0xf]
  %v35 = vld [vmem:[%s0 + $0x54] sm:$0xf]
  %v36 = vld [vmem:[%s0 + $0x58] sm:$0xf]
  %v37 = vld [vmem:[%s0 + $0x5c] sm:$0xf]
  %v38 = vld [vmem:[%s0 + $0x60] sm:$0xf]
  %v39 = vld [vmem:[%s0 + $0x64] sm:$0xf]
  %v40 = vld [vmem:[%s0 + $0x68] sm:$0xf]
  %v41 = vld [vmem:[%s0 + $0x6c] sm:$0xf]
  %v42 = vld [vmem:[%s0 + $0x70] sm:$0xf]
  %v43 = vld [vmem:[%s0 + $0x74] sm:$0xf]
  %v44 = vld [vmem:[%s0 + $0x78] sm:$0xf]
  %v45 = vld [vmem:[%s0 + $0x7c] sm:$0xf]
  %v46 = vld [vmem:[%s0 + $0x80] sm:$0xf]
  %v47 = vld [vmem:[%s0 + $0x84] sm:$0xf]
  %v48 = vld [vmem:[%s0 + $0x88] sm:$0xf]
  %v49 = vld [vmem:[%s0 + $0x8c] sm:$0xf]
  %v50 = vunpack.c.l.bf16 %v14
  %v51 = vunpack.c.l.bf16 %v15
  %v52 = vunpack.c.l.bf16 %v16
  %v53 = vunpack.c.l.bf16 %v17
  %v54 = vunpack.c.l.bf16 %v18
  %v55 = vunpack.c.l.bf16 %v19
  %v56 = vunpack.c.l.bf16 %v20
  %v57 = vunpack.c.l.bf16 %v21
  %v58 = vunpack.c.l.bf16 %v22
  %v59 = vunpack.c.l.bf16 %v23
  %v60 = vunpack.c.l.bf16 %v24
  %v61 = vunpack.c.l.bf16 %v25
  %v62 = vunpack.c.l.bf16 %v26
  %v63 = vunpack.c.l.bf16 %v27
  %v64 = vunpack.c.l.bf16 %v28
  %v65 = vunpack.c.l.bf16 %v29
  %v66 = vunpack.c.l.bf16 %v30
  %v67 = vunpack.c.l.bf16 %v31
  %v68 = vunpack.c.l.bf16 %v32
  %v69 = vunpack.c.l.bf16 %v33
  %v70 = vunpack.c.l.bf16 %v34
  %v71 = vunpack.c.l.bf16 %v35
  %v72 = vunpack.c.l.bf16 %v36
  %v73 = vunpack.c.l.bf16 %v37
  %v74 = vunpack.c.l.bf16 %v38
  %v75 = vunpack.c.l.bf16 %v39
  %v76 = vunpack.c.l.bf16 %v40
  %v77 = vunpack.c.l.bf16 %v41
  %v78 = vunpack.c.l.bf16 %v42
  %v79 = vunpack.c.l.bf16 %v43
  %v80 = vunpack.c.l.bf16 %v44
  %v81 = vunpack.c.l.bf16 %v45
  %v82 = vunpack.c.l.bf16 %v46
  %v83 = vunpack.c.l.bf16 %v47
  %v84 = vunpack.c.l.bf16 %v48
  %v85 = vunpack.c.l.bf16 %v49
  %v86 = vld [vmem:[%s1] sm:$0x1]
  %v88 = vlaneseq
  %v89 = vshrl.u32 %v88, 7
  %v90 = vsub.s32 0, %v89
  %v91 = vrot.slane %v86, %v90
  %v93 = vmul.f32 %v50, %v91
  %v94 = vmul.f32 %v51, %v91
  %v95 = vmul.f32 %v52, %v91
  %v96 = vmul.f32 %v53, %v91
  %v97 = vmul.f32 %v54, %v91
  %v98 = vmul.f32 %v55, %v91
  %v99 = vmul.f32 %v56, %v91
  %v100 = vmul.f32 %v57, %v91
  %v101 = vmul.f32 %v58, %v91
  %v102 = vmul.f32 %v59, %v91
  %v103 = vmul.f32 %v60, %v91
  %v104 = vmul.f32 %v61, %v91
  %v105 = vmul.f32 %v62, %v91
  %v106 = vmul.f32 %v63, %v91
  %v107 = vmul.f32 %v64, %v91
  %v108 = vmul.f32 %v65, %v91
  %v109 = vmul.f32 %v66, %v91
  %v110 = vmul.f32 %v67, %v91
  %v111 = vmul.f32 %v68, %v91
  %v112 = vmul.f32 %v69, %v91
  %v113 = vmul.f32 %v70, %v91
  %v114 = vmul.f32 %v71, %v91
  %v115 = vmul.f32 %v72, %v91
  %v116 = vmul.f32 %v73, %v91
  %v117 = vmul.f32 %v74, %v91
  %v118 = vmul.f32 %v75, %v91
  %v119 = vmul.f32 %v76, %v91
  %v120 = vmul.f32 %v77, %v91
  %v121 = vmul.f32 %v78, %v91
  %v122 = vmul.f32 %v79, %v91
  %v123 = vmul.f32 %v80, %v91
  %v124 = vmul.f32 %v81, %v91
  %v125 = vmul.f32 %v82, %v91
  %v126 = vmul.f32 %v83, %v91
  %v127 = vmul.f32 %v84, %v91
  %v128 = vmul.f32 %v85, %v91
  %v129 = vld [vmem:[%s2] sm:$0x1]
  %v131 = vlaneseq
  %v132 = vshrl.u32 %v131, 7
  %v133 = vsub.s32 0, %v132
  %v134 = vrot.slane %v129, %v133
  %v136 = vadd.f32 %v93, %v134
  %v137 = vadd.f32 %v94, %v134
  %v138 = vadd.f32 %v95, %v134
  %v139 = vadd.f32 %v96, %v134
  %v140 = vadd.f32 %v97, %v134
  %v141 = vadd.f32 %v98, %v134
  %v142 = vadd.f32 %v99, %v134
  %v143 = vadd.f32 %v100, %v134
  %v144 = vadd.f32 %v101, %v134
  %v145 = vadd.f32 %v102, %v134
  %v146 = vadd.f32 %v103, %v134
  %v147 = vadd.f32 %v104, %v134
  %v148 = vadd.f32 %v105, %v134
  %v149 = vadd.f32 %v106, %v134
  %v150 = vadd.f32 %v107, %v134
  %v151 = vadd.f32 %v108, %v134
  %v152 = vadd.f32 %v109, %v134
  %v153 = vadd.f32 %v110, %v134
  %v154 = vadd.f32 %v111, %v134
  %v155 = vadd.f32 %v112, %v134
  %v156 = vadd.f32 %v113, %v134
  %v157 = vadd.f32 %v114, %v134
  %v158 = vadd.f32 %v115, %v134
  %v159 = vadd.f32 %v116, %v134
  %v160 = vadd.f32 %v117, %v134
  %v161 = vadd.f32 %v118, %v134
  %v162 = vadd.f32 %v119, %v134
  %v163 = vadd.f32 %v120, %v134
  %v164 = vadd.f32 %v121, %v134
  %v165 = vadd.f32 %v122, %v134
  %v166 = vadd.f32 %v123, %v134
  %v167 = vadd.f32 %v124, %v134
  %v168 = vadd.f32 %v125, %v134
  %v169 = vadd.f32 %v126, %v134
  %v170 = vadd.f32 %v127, %v134
  %v171 = vadd.f32 %v128, %v134
  %v172 = vmax.f32 %v136, 0.0
  %v173 = vmax.f32 %v137, 0.0
  %v174 = vmax.f32 %v138, 0.0
  %v175 = vmax.f32 %v139, 0.0
  %v176 = vmax.f32 %v140, 0.0
  %v177 = vmax.f32 %v141, 0.0
  %v178 = vmax.f32 %v142, 0.0
  %v179 = vmax.f32 %v143, 0.0
  %v180 = vmax.f32 %v144, 0.0
  %v181 = vmax.f32 %v145, 0.0
  %v182 = vmax.f32 %v146, 0.0
  %v183 = vmax.f32 %v147, 0.0
  %v184 = vmax.f32 %v148, 0.0
  %v185 = vmax.f32 %v149, 0.0
  %v186 = vmax.f32 %v150, 0.0
  %v187 = vmax.f32 %v151, 0.0
  %v188 = vmax.f32 %v152, 0.0
  %v189 = vmax.f32 %v153, 0.0
  %v190 = vmax.f32 %v154, 0.0
  %v191 = vmax.f32 %v155, 0.0
  %v192 = vmax.f32 %v156, 0.0
  %v193 = vmax.f32 %v157, 0.0
  %v194 = vmax.f32 %v158, 0.0
  %v195 = vmax.f32 %v159, 0.0
  %v196 = vmax.f32 %v160, 0.0
  %v197 = vmax.f32 %v161, 0.0
  %v198 = vmax.f32 %v162, 0.0
  %v199 = vmax.f32 %v163, 0.0
  %v200 = vmax.f32 %v164, 0.0
  %v201 = vmax.f32 %v165, 0.0
  %v202 = vmax.f32 %v166, 0.0
  %v203 = vmax.f32 %v167, 0.0
  %v204 = vmax.f32 %v168, 0.0
  %v205 = vmax.f32 %v169, 0.0
  %v206 = vmax.f32 %v170, 0.0
  %v207 = vmax.f32 %v171, 0.0
  %208 = vst [vmem:[%s3] sm:$0xff] %v172
  %209 = vst [vmem:[%s3 + $0x8] sm:$0xff] %v173
  %210 = vst [vmem:[%s3 + $0x10] sm:$0xff] %v174
  %211 = vst [vmem:[%s3 + $0x18] sm:$0xff] %v175
  %212 = vst [vmem:[%s3 + $0x20] sm:$0xff] %v176
  %213 = vst [vmem:[%s3 + $0x28] sm:$0xff] %v177
  %214 = vst [vmem:[%s3 + $0x30] sm:$0xff] %v178
  %215 = vst [vmem:[%s3 + $0x38] sm:$0xff] %v179
  %216 = vst [vmem:[%s3 + $0x40] sm:$0xff] %v180
  %217 = vst [vmem:[%s3 + $0x48] sm:$0xff] %v181
  %218 = vst [vmem:[%s3 + $0x50] sm:$0xff] %v182
  %219 = vst [vmem:[%s3 + $0x58] sm:$0xff] %v183
  %220 = vst [vmem:[%s3 + $0x60] sm:$0xff] %v184
  %221 = vst [vmem:[%s3 + $0x68] sm:$0xff] %v185
  %222 = vst [vmem:[%s3 + $0x70] sm:$0xff] %v186
  %223 = vst [vmem:[%s3 + $0x78] sm:$0xff] %v187
  %224 = vst [vmem:[%s3 + $0x80] sm:$0xff] %v188
  %225 = vst [vmem:[%s3 + $0x88] sm:$0xff] %v189
  %226 = vst [vmem:[%s3 + $0x90] sm:$0xff] %v190
  %227 = vst [vmem:[%s3 + $0x98] sm:$0xff] %v191
  %228 = vst [vmem:[%s3 + $0xa0] sm:$0xff] %v192
  %229 = vst [vmem:[%s3 + $0xa8] sm:$0xff] %v193
  %230 = vst [vmem:[%s3 + $0xb0] sm:$0xff] %v194
  %231 = vst [vmem:[%s3 + $0xb8] sm:$0xff] %v195
  %232 = vst [vmem:[%s3 + $0xc0] sm:$0xff] %v196
  %233 = vst [vmem:[%s3 + $0xc8] sm:$0xff] %v197
  %234 = vst [vmem:[%s3 + $0xd0] sm:$0xff] %v198
  %235 = vst [vmem:[%s3 + $0xd8] sm:$0xff] %v199
  %236 = vst [vmem:[%s3 + $0xe0] sm:$0xff] %v200
  %237 = vst [vmem:[%s3 + $0xe8] sm:$0xff] %v201
  %238 = vst [vmem:[%s3 + $0xf0] sm:$0xff] %v202
  %239 = vst [vmem:[%s3 + $0xf8] sm:$0xff] %v203
  %240 = vst [vmem:[%s3 + $0x100] sm:$0xff] %v204
  %241 = vst [vmem:[%s3 + $0x108] sm:$0xff] %v205
  %242 = vst [vmem:[%s3 + $0x110] sm:$0xff] %v206
  %243 = vst [vmem:[%s3 + $0x118] sm:$0xff] %v207
  // Predicated region
  $region14: #{_lambda_.5} parent=0 // pred_check
    _
  $region15: #{_lambda_.5} parent=0 // pred_check_branch
    %245 = sbr.rel (0) target = $region17
  $region16: #{_lambda_.5} parent=0 // pred_region
    _
  $region17: #{_lambda_.5} parent=0 // pred_fallthru
    _
  // Predicated region
  $region18: #{_lambda_.5} parent=0 // pred_check
    _
  $region19: #{_lambda_.5} parent=0 // pred_check_branch
    %247 = sbr.rel (0) target = $region21
  $region20: #{_lambda_.5} parent=0 // pred_region
    _
  $region21: #{_lambda_.5} parent=0 // pred_fallthru
    _

// kernel: _lambda_.3
$region0: #{_lambda_.3}
  #allocation0 [shape = 'u32[]', space=smem, size = 0x4, offset = 0x4, fixed_abs, tag = 'smem constant byte address 0x4 - core index']
  #allocation1 [shape = 'u32[144,128]{1,0:T(1,128)}', space=vmem, size = 0x12000, scoped, tag = 'internal scratch']
  %s0 = inlined_call_operand.vmem [shape: bf16[2,342,64], index: 0, kind: input, shape index: {}]
  %s1 = inlined_call_operand.vmem [shape: bf16[9,64,64], index: 1, kind: input, shape index: {}]
  %s2 = inlined_call_operand.vmem [shape: bf16[2,288,64], index: 2, kind: output, shape index: {0}]
  %s3 = inlined_call_operand.vmem [shape: f32[2,1,64], index: 3, kind: output, shape index: {1}]
  %s4 = inlined_call_operand.vmem [shape: f32[2,1,64], index: 4, kind: output, shape index: {2}]
  %5 = xla_tuple %s2, %s3, %s4
  %s6 = sld [smem:[#allocation0]]
  $region57: #{_lambda_.3} parent=0
    _
  %s8 = ssub.s32 1, %s6
  %s9 = scalar_select 0, %s8, %s6
  loop: start=0, step=1, limit=4
  $region2: #{_lambda_.3} parent=0 // loop_pre_header
    _
  $region3: #{_lambda_.3} parent=0 // loop_header
    %s11 = sphi 0, %s15
    %p12 = scmp.ge.s32.totalorder %s11, 4
    %s21 = sphi 0, %s23
    %s24 = sphi 0, %s21
    %s25 = sphi 0, %s24
    %s41 = sphi 0, %s25
    %s45 = sphi 0, %s45
    %s47 = sphi 0, %s45
    %s48 = sphi 0, %s47
    %s62 = sphi 0, %s48
    %s68 = sphi 0, %s70
    %s71 = sphi 0, %s68
    %s72 = sphi 0, %s71
    %s88 = sphi 0, %s72
    %s94 = sphi 0, %s96
    %s97 = sphi 0, %s94
    %s98 = sphi 0, %s97
    %s114 = sphi 0, %s98
    %s120 = sphi 0, %s122
    %s123 = sphi 0, %s120
    %s124 = sphi 0, %s123
    %s140 = sphi 0, %s124
  $region4: #{_lambda_.3} parent=0 // loop_header_branch
    %14 = sbr.rel (%p12) target = $region8
  $region5: #{_lambda_.3} parent=0 // loop_body
    %s16 = ssub.s32 %s11, 1
    %s17 = ssub.s32 %s11, 2
    %s18 = sadd.s32 %s11, 1
    %s19 = ssub.s32 %s11, %s18
    %p20 = scmp.eq.s32.totalorder %s19, 0
    %s22 = sadd.s32 %s21, 1
    %s23 = scalar_select %p20, %s21, %s22
    %p26 = pneg %p20
    %p27 = scmp.eq.s32.totalorder %s11, 1
    %p28 = por %p26, %p27
    %p29 = scmp.ne.s32.totalorder %s21, %s24
    %p30 = scmp.eq.s32.totalorder %s11, 0
    %p31 = por %p29, %p30
    %p32 = scmp.ne.s32.totalorder %s21, %s24
    %p33 = scmp.eq.s32.totalorder %s16, 1
    %p34 = por %p32, %p33
    %p35 = scmp.ne.s32.totalorder %s24, %s25
    %p36 = scmp.eq.s32.totalorder %s16, 0
    %p37 = por %p35, %p36
    %p38 = scmp.ne.s32.totalorder %s24, %s25
    %p39 = scmp.eq.s32.totalorder %s17, 1
    %p40 = por %p38, %p39
    %p42 = scmp.ne.s32.totalorder %s25, %s41
    %p43 = scmp.eq.s32.totalorder %s17, 0
    %p44 = por %p42, %p43
    %s46 = sadd.s32 %s45, 1
    %p49 = scmp.eq.s32.totalorder %s11, 1
    %p50 = scmp.ne.s32.totalorder %s45, %s47
    %p51 = scmp.eq.s32.totalorder %s11, 0
    %p52 = por %p50, %p51
    %p53 = scmp.ne.s32.totalorder %s45, %s47
    %p54 = scmp.eq.s32.totalorder %s16, 1
    %p55 = por %p53, %p54
    %p56 = scmp.ne.s32.totalorder %s47, %s48
    %p57 = scmp.eq.s32.totalorder %s16, 0
    %p58 = por %p56, %p57
    %p59 = scmp.ne.s32.totalorder %s47, %s48
    %p60 = scmp.eq.s32.totalorder %s17, 1
    %p61 = por %p59, %p60
    %p63 = scmp.ne.s32.totalorder %s48, %s62
    %p64 = scmp.eq.s32.totalorder %s17, 0
    %p65 = por %p63, %p64
    %s66 = ssub.s32 %s11, %s18
    %p67 = scmp.eq.s32.totalorder %s66, 0
    %s69 = sadd.s32 %s68, 1
    %s70 = scalar_select %p67, %s68, %s69
    %p73 = pneg %p67
    %p74 = scmp.eq.s32.totalorder %s11, 1
    %p75 = por %p73, %p74
    %p76 = scmp.ne.s32.totalorder %s68, %s71
    %p77 = scmp.eq.s32.totalorder %s11, 0
    %p78 = por %p76, %p77
    %p79 = scmp.ne.s32.totalorder %s68, %s71
    %p80 = scmp.eq.s32.totalorder %s16, 1
    %p81 = por %p79, %p80
    %p82 = scmp.ne.s32.totalorder %s71, %s72
    %p83 = scmp.eq.s32.totalorder %s16, 0
    %p84 = por %p82, %p83
    %p85 = scmp.ne.s32.totalorder %s71, %s72
    %p86 = scmp.eq.s32.totalorder %s17, 1
    %p87 = por %p85, %p86
    %p89 = scmp.ne.s32.totalorder %s72, %s88
    %p90 = scmp.eq.s32.totalorder %s17, 0
    %p91 = por %p89, %p90
    %s92 = ssub.s32 %s11, %s18
    %p93 = scmp.eq.s32.totalorder %s92, 0
    %s95 = sadd.s32 %s94, 1
    %s96 = scalar_select %p93, %s94, %s95
    %p99 = pneg %p93
    %p100 = scmp.eq.s32.totalorder %s11, 1
    %p101 = por %p99, %p100
    %p102 = scmp.ne.s32.totalorder %s94, %s97
    %p103 = scmp.eq.s32.totalorder %s11, 0
    %p104 = por %p102, %p103
    %p105 = scmp.ne.s32.totalorder %s94, %s97
    %p106 = scmp.eq.s32.totalorder %s16, 1
    %p107 = por %p105, %p106
    %p108 = scmp.ne.s32.totalorder %s97, %s98
    %p109 = scmp.eq.s32.totalorder %s16, 0
    %p110 = por %p108, %p109
    %p111 = scmp.ne.s32.totalorder %s97, %s98
    %p112 = scmp.eq.s32.totalorder %s17, 1
    %p113 = por %p111, %p112
    %p115 = scmp.ne.s32.totalorder %s98, %s114
    %p116 = scmp.eq.s32.totalorder %s17, 0
    %p117 = por %p115, %p116
    %s118 = ssub.s32 %s11, %s18
    %p119 = scmp.eq.s32.totalorder %s118, 0
    %s121 = sadd.s32 %s120, 1
    %s122 = scalar_select %p119, %s120, %s121
    %p125 = pneg %p119
    %p126 = scmp.eq.s32.totalorder %s11, 1
    %p127 = por %p125, %p126
    %p128 = scmp.ne.s32.totalorder %s120, %s123
    %p129 = scmp.eq.s32.totalorder %s11, 0
    %p130 = por %p128, %p129
    %p131 = scmp.ne.s32.totalorder %s120, %s123
    %p132 = scmp.eq.s32.totalorder %s16, 1
    %p133 = por %p131, %p132
    %p134 = scmp.ne.s32.totalorder %s123, %s124
    %p135 = scmp.eq.s32.totalorder %s16, 0
    %p136 = por %p134, %p135
    %p137 = scmp.ne.s32.totalorder %s123, %s124
    %p138 = scmp.eq.s32.totalorder %s17, 1
    %p139 = por %p137, %p138
    %p141 = scmp.ne.s32.totalorder %s124, %s140
    %p142 = scmp.eq.s32.totalorder %s17, 0
    %p143 = por %p141, %p142
    %p144 = scmp.le.s32.totalorder 1, %s11
    %p145 = scmp.lt.s32.totalorder %s11, 3
    %p146 = pnand %p144, %p145
    %p147 = pneg %p146
    // Predicated region
    $region9: #{_lambda_.3} parent=5 // pred_check
      _
    $region10: #{_lambda_.3} parent=5 // pred_check_branch
      %149 = sbr.rel (%p146) target = $region12
    $region11: #{_lambda_.3} parent=5 // pred_region
      %s150 = ssub.s32 %s11, 1
      // Predicated region
      $region13: #{_lambda_.3} parent=11 // pred_check
        %p151 = pneg %p58
      $region14: #{_lambda_.3} parent=11 // pred_check_branch
        %153 = sbr.rel (%p151) target = $region16
      $region15: #{_lambda_.3} parent=11 // pred_region
        _
      $region16: #{_lambda_.3} parent=11 // pred_fallthru
        _
    $region12: #{_lambda_.3} parent=5 // pred_fallthru
      _
    %p154 = scmp.lt.s32.totalorder %s11, 2
    // Predicated region
    $region17: #{_lambda_.3} parent=5 // pred_check
      %p155 = pneg %p154
    $region18: #{_lambda_.3} parent=5 // pred_check_branch
      %157 = sbr.rel (%p155) target = $region20
    $region19: #{_lambda_.3} parent=5 // pred_region
      // Predicated region
      $region21: #{_lambda_.3} parent=19 // pred_check
        %p158 = pneg %p31
      $region22: #{_lambda_.3} parent=19 // pred_check_branch
        %160 = sbr.rel (%p158) target = $region24
      $region23: #{_lambda_.3} parent=19 // pred_region
        %p161 = scmp.lt.s32.totalorder %s11, 1
        %s162 = scalar_select %p161, %s11, 1
        %s163 = smul.addr %s162, 43
        %s164 = smul.addr %s163, 4
        %s165 = scalar_lea.vmem %s0, %s164
      $region24: #{_lambda_.3} parent=19 // pred_fallthru
        _
    $region20: #{_lambda_.3} parent=5 // pred_fallthru
      _
    %p166 = scmp.le.s32.totalorder 1, %s11
    %p167 = scmp.lt.s32.totalorder %s11, 3
    %p168 = pnand %p166, %p167
    %p169 = pneg %p168
    // Predicated region
    $region25: #{_lambda_.3} parent=5 // pred_check
      _
    $region26: #{_lambda_.3} parent=5 // pred_check_branch
      %171 = sbr.rel (%p168) target = $region28
    $region27: #{_lambda_.3} parent=5 // pred_region
      %s172 = ssub.s32 %s11, 1
      %p173 = scmp.lt.s32.totalorder %s16, 1
      %s174 = scalar_select %p173, %s16, 1
      %s175 = smul.addr %s174, 43
      %s176 = smul.addr %s175, 4
      %s177 = scalar_lea.vmem %s0, %s176
      %p178 = pneg %p37
      %p179 = pneg %p34
      %p180 = pneg %p58
      %p181 = pneg %p55
      %p182 = pneg %p84
      %p183 = pneg %p81
      %p184 = scmp.lt.s32.totalorder %s16, 1
      %s185 = scalar_select %p184, %s16, 1
      %s186 = smul.addr %s185, 36
      %s187 = smul.addr %s186, 4
      %s188 = scalar_lea.vmem %s2, %s187
      %p189 = pneg %p110
      %p190 = pneg %p107
      %p191 = scmp.lt.s32.totalorder %s16, 1
      %s192 = scalar_select %p191, %s16, 1
      %s193 = scalar_lea.vmem %s3, %s192
      %p194 = pneg %p136
      %p195 = pneg %p133
      %p196 = scmp.lt.s32.totalorder %s16, 1
      %s197 = scalar_select %p196, %s16, 1
      %s198 = scalar_lea.vmem %s4, %s197
      %p199 = scmp.lt.s32.totalorder %s16, 1
      %s200 = scalar_select %p199, %s16, 1
      %s201 = smul.addr %s200, 43
      %s202 = smul.addr %s201, 4
      %s203 = scalar_lea.vmem %s0, %s202
      %p204 = scmp.lt.s32.totalorder %s16, 1
      %s205 = scalar_select %p204, %s16, 1
      %s206 = smul.addr %s205, 36
      %s207 = smul.addr %s206, 4
      %s208 = scalar_lea.vmem %s2, %s207
      %p209 = scmp.lt.s32.totalorder %s16, 1
      %s210 = scalar_select %p209, %s16, 1
      %s211 = scalar_lea.vmem %s3, %s210
      %p212 = scmp.lt.s32.totalorder %s16, 1
      %s213 = scalar_select %p212, %s16, 1
      %s214 = scalar_lea.vmem %s4, %s213
      %v216 = vld [vmem:[%s203] sm:$0xf]
      %v217 = vld [vmem:[%s203 + $0x4] sm:$0xf]
      %v218 = vld [vmem:[%s203 + $0x8] sm:$0xf]
      %v219 = vld [vmem:[%s203 + $0xc] sm:$0xf]
      %v220 = vld [vmem:[%s203 + $0x10] sm:$0xf]
      %v221 = vld [vmem:[%s203 + $0x14] sm:$0xf]
      %v222 = vld [vmem:[%s203 + $0x18] sm:$0xf]
      %v223 = vld [vmem:[%s203 + $0x1c] sm:$0xf]
      %v224 = vld [vmem:[%s203 + $0x20] sm:$0xf]
      %v225 = vld [vmem:[%s203 + $0x24] sm:$0xf]
      %v226 = vld [vmem:[%s203 + $0x28] sm:$0xf]
      %v227 = vld [vmem:[%s203 + $0x2c] sm:$0xf]
      %v228 = vld [vmem:[%s203 + $0x30] sm:$0xf]
      %v229 = vld [vmem:[%s203 + $0x34] sm:$0xf]
      %v230 = vld [vmem:[%s203 + $0x38] sm:$0xf]
      %v231 = vld [vmem:[%s203 + $0x3c] sm:$0xf]
      %v232 = vld [vmem:[%s203 + $0x40] sm:$0xf]
      %v233 = vld [vmem:[%s203 + $0x44] sm:$0xf]
      %v234 = vld [vmem:[%s203 + $0x48] sm:$0xf]
      %v235 = vld [vmem:[%s203 + $0x4c] sm:$0xf]
      %v236 = vld [vmem:[%s203 + $0x50] sm:$0xf]
      %v237 = vld [vmem:[%s203 + $0x54] sm:$0xf]
      %v238 = vld [vmem:[%s203 + $0x58] sm:$0xf]
      %v239 = vld [vmem:[%s203 + $0x5c] sm:$0xf]
      %v240 = vld [vmem:[%s203 + $0x60] sm:$0xf]
      %v241 = vld [vmem:[%s203 + $0x64] sm:$0xf]
      %v242 = vld [vmem:[%s203 + $0x68] sm:$0xf]
      %v243 = vld [vmem:[%s203 + $0x6c] sm:$0xf]
      %v244 = vld [vmem:[%s203 + $0x70] sm:$0xf]
      %v245 = vld [vmem:[%s203 + $0x74] sm:$0xf]
      %v246 = vld [vmem:[%s203 + $0x78] sm:$0xf]
      %v247 = vld [vmem:[%s203 + $0x7c] sm:$0xf]
      %v248 = vld [vmem:[%s203 + $0x80] sm:$0xf]
      %v249 = vld [vmem:[%s203 + $0x84] sm:$0xf]
      %v250 = vld [vmem:[%s203 + $0x88] sm:$0xf]
      %v251 = vld [vmem:[%s203 + $0x8c] sm:$0xf]
      %v252 = vld [vmem:[%s1] sm:$0xf]
      %v253 = vld [vmem:[%s1 + $0x4] sm:$0xf]
      %v254 = vld [vmem:[%s1 + $0x8] sm:$0xf]
      %v255 = vld [vmem:[%s1 + $0xc] sm:$0xf]
      %v256 = vld [vmem:[%s1 + $0x10] sm:$0xf]
      %v257 = vld [vmem:[%s1 + $0x14] sm:$0xf]
      %v258 = vld [vmem:[%s1 + $0x18] sm:$0xf]
      %v259 = vld [vmem:[%s1 + $0x1c] sm:$0xf]
      %v260 = vld [vmem:[%s203 + $0x90] sm:$0x1]
      %s261 = scalar_lea.vmem %s1, 32
      %v262 = vld [vmem:[%s261] sm:$0xf]
      %v263 = vld [vmem:[%s261 + $0x4] sm:$0xf]
      %v264 = vld [vmem:[%s261 + $0x8] sm:$0xf]
      %v265 = vld [vmem:[%s261 + $0xc] sm:$0xf]
      %v266 = vld [vmem:[%s261 + $0x10] sm:$0xf]
      %v267 = vld [vmem:[%s261 + $0x14] sm:$0xf]
      %v268 = vld [vmem:[%s261 + $0x18] sm:$0xf]
      %v269 = vld [vmem:[%s261 + $0x1c] sm:$0xf]
      %v307 = vunpack.c.l.b16 %v216
      %v308 = vunpack.c.l.b16 %v217
      %v309 = vunpack.c.l.b16 %v218
      %v310 = vunpack.c.l.b16 %v219
      %v311 = vunpack.c.l.b16 %v220
      %v312 = vunpack.c.l.b16 %v221
      %v313 = vunpack.c.l.b16 %v222
      %v314 = vunpack.c.l.b16 %v223
      %v315 = vunpack.c.l.b16 %v224
      %v316 = vunpack.c.l.b16 %v225
      %v317 = vunpack.c.l.b16 %v226
      %v318 = vunpack.c.l.b16 %v227
      %v319 = vunpack.c.l.b16 %v228
      %v320 = vunpack.c.l.b16 %v229
      %v321 = vunpack.c.l.b16 %v230
      %v322 = vunpack.c.l.b16 %v231
      %v323 = vunpack.c.l.b16 %v232
      %v324 = vunpack.c.l.b16 %v233
      %v325 = vunpack.c.l.b16 %v234
      %v326 = vunpack.c.l.b16 %v235
      %v327 = vunpack.c.l.b16 %v236
      %v328 = vunpack.c.l.b16 %v237
      %v329 = vunpack.c.l.b16 %v238
      %v330 = vunpack.c.l.b16 %v239
      %v331 = vunpack.c.l.b16 %v240
      %v332 = vunpack.c.l.b16 %v241
      %v333 = vunpack.c.l.b16 %v242
      %v334 = vunpack.c.l.b16 %v243
      %v335 = vunpack.c.l.b16 %v244
      %v336 = vunpack.c.l.b16 %v245
      %v337 = vunpack.c.l.b16 %v246
      %v338 = vunpack.c.l.b16 %v247
      %v339 = vunpack.c.l.b16 %v248
      %v340 = vunpack.c.l.b16 %v249
      %v341 = vunpack.c.l.b16 %v250
      %v342 = vunpack.c.l.b16 %v251
      %v343 = vunpack.c.l.b16 %v260
      %v344 = vpack.c.b16 %v308, %v307
      %v345 = vpack.c.b16 %v310, %v309
      %v346 = vpack.c.b16 %v312, %v311
      %v347 = vpack.c.b16 %v314, %v313
      %v348 = vpack.c.b16 %v316, %v315
      %v349 = vpack.c.b16 %v318, %v317
      %v350 = vpack.c.b16 %v320, %v319
      %v351 = vpack.c.b16 %v322, %v321
      %v352 = vpack.c.b16 %v324, %v323
      %v353 = vpack.c.b16 %v326, %v325
      %v354 = vpack.c.b16 %v328, %v327
      %v355 = vpack.c.b16 %v330, %v329
      %v356 = vpack.c.b16 %v332, %v331
      %v357 = vpack.c.b16 %v334, %v333
      %v358 = vpack.c.b16 %v336, %v335
      %v359 = vpack.c.b16 %v338, %v337
      %v360 = vpack.c.b16 %v340, %v339
      %v361 = vpack.c.b16 %v342, %v341
      %v362 = vpack.c.b16 %v343, %v343
      %vm363 = vsmask.f32 7424
      %v365 = vshrl.u32 %v344, 16
      %v367 = vshll.u32 %v344, 16
      %v369 = vrot.slane %v367, 1
      %v370 = vor.u32 %v365, %v369
      %v372 = vshll.u32 %v345, 16
      %v374 = vrot.slane %v372, 1
      %v375 = vsel %vm363, %v370, %v374
      %v376 = vshrl.u32 %v345, 16
      %v378 = vor.u32 %v376, %v374
      %v380 = vshll.u32 %v346, 16
      %v382 = vrot.slane %v380, 1
      %v383 = vsel %vm363, %v378, %v382
      %v384 = vshrl.u32 %v346, 16
      %v386 = vor.u32 %v384, %v382
      %v388 = vshll.u32 %v347, 16
      %v390 = vrot.slane %v388, 1
      %v391 = vsel %vm363, %v386, %v390
      %v392 = vshrl.u32 %v347, 16
      %v394 = vor.u32 %v392, %v390
      %v396 = vshll.u32 %v348, 16
      %v398 = vrot.slane %v396, 1
      %v399 = vsel %vm363, %v394, %v398
      %v400 = vshrl.u32 %v348, 16
      %v402 = vor.u32 %v400, %v398
      %v404 = vshll.u32 %v349, 16
      %v406 = vrot.slane %v404, 1
      %v407 = vsel %vm363, %v402, %v406
      %v408 = vshrl.u32 %v349, 16
      %v410 = vor.u32 %v408, %v406
      %v412 = vshll.u32 %v350, 16
      %v414 = vrot.slane %v412, 1
      %v415 = vsel %vm363, %v410, %v414
      %v416 = vshrl.u32 %v350, 16
      %v418 = vor.u32 %v416, %v414
      %v420 = vshll.u32 %v351, 16
      %v422 = vrot.slane %v420, 1
      %v423 = vsel %vm363, %v418, %v422
      %v424 = vshrl.u32 %v351, 16
      %v426 = vor.u32 %v424, %v422
      %v428 = vshll.u32 %v352, 16
      %v430 = vrot.slane %v428, 1
      %v431 = vsel %vm363, %v426, %v430
      %v432 = vshrl.u32 %v352, 16
      %v434 = vor.u32 %v432, %v430
      %v436 = vshll.u32 %v353, 16
      %v438 = vrot.slane %v436, 1
      %v439 = vsel %vm363, %v434, %v438
      %v440 = vshrl.u32 %v353, 16
      %v442 = vor.u32 %v440, %v438
      %v444 = vshll.u32 %v354, 16
      %v446 = vrot.slane %v444, 1
      %v447 = vsel %vm363, %v442, %v446
      %v448 = vshrl.u32 %v354, 16
      %v450 = vor.u32 %v448, %v446
      %v452 = vshll.u32 %v355, 16
      %v454 = vrot.slane %v452, 1
      %v455 = vsel %vm363, %v450, %v454
      %v456 = vshrl.u32 %v355, 16
      %v458 = vor.u32 %v456, %v454
      %v460 = vshll.u32 %v356, 16
      %v462 = vrot.slane %v460, 1
      %v463 = vsel %vm363, %v458, %v462
      %v464 = vshrl.u32 %v356, 16
      %v466 = vor.u32 %v464, %v462
      %v468 = vshll.u32 %v357, 16
      %v470 = vrot.slane %v468, 1
      %v471 = vsel %vm363, %v466, %v470
      %v472 = vshrl.u32 %v357, 16
      %v474 = vor.u32 %v472, %v470
      %v476 = vshll.u32 %v358, 16
      %v478 = vrot.slane %v476, 1
      %v479 = vsel %vm363, %v474, %v478
      %v480 = vshrl.u32 %v358, 16
      %v482 = vor.u32 %v480, %v478
      %v484 = vshll.u32 %v359, 16
      %v486 = vrot.slane %v484, 1
      %v487 = vsel %vm363, %v482, %v486
      %v488 = vshrl.u32 %v359, 16
      %v490 = vor.u32 %v488, %v486
      %v492 = vshll.u32 %v360, 16
      %v494 = vrot.slane %v492, 1
      %v495 = vsel %vm363, %v490, %v494
      %v496 = vshrl.u32 %v360, 16
      %v498 = vor.u32 %v496, %v494
      %v500 = vshll.u32 %v361, 16
      %v502 = vrot.slane %v500, 1
      %v503 = vsel %vm363, %v498, %v502
      %v504 = vshrl.u32 %v361, 16
      %v506 = vor.u32 %v504, %v502
      %v508 = vshll.u32 %v362, 16
      %v510 = vrot.slane %v508, 1
      %v511 = vsel %vm363, %v506, %v510
      %v520 = vunpack.c.l.b16 %v262
      %v521 = vunpack.c.l.b16 %v263
      %v522 = vunpack.c.l.b16 %v264
      %v523 = vunpack.c.l.b16 %v265
      %v524 = vunpack.c.l.b16 %v266
      %v525 = vunpack.c.l.b16 %v267
      %v526 = vunpack.c.l.b16 %v268
      %v527 = vunpack.c.l.b16 %v269
      %v528 = vpack.c.b16 %v521, %v520
      %v529 = vpack.c.b16 %v523, %v522
      %v530 = vpack.c.b16 %v525, %v524
      %v531 = vpack.c.b16 %v527, %v526
      %vm536 = vcmask 523264
      %v538 = vsel %vm536, %v375, 0
      %v541 = vsel %vm536, %v383, 0
      %v544 = vsel %vm536, %v391, 0
      %v547 = vsel %vm536, %v399, 0
      %v550 = vsel %vm536, %v407, 0
      %v553 = vsel %vm536, %v415, 0
      %v556 = vsel %vm536, %v423, 0
      %v559 = vsel %vm536, %v431, 0
      %v562 = vsel %vm536, %v439, 0
      %v565 = vsel %vm536, %v447, 0
      %v568 = vsel %vm536, %v455, 0
      %v571 = vsel %vm536, %v463, 0
      %v574 = vsel %vm536, %v471, 0
      %v577 = vsel %vm536, %v479, 0
      %v580 = vsel %vm536, %v487, 0
      %v583 = vsel %vm536, %v495, 0
      %v586 = vsel %vm536, %v503, 0
      %v589 = vsel %vm536, %v511, 0
      %591 = vmatprep.subr.bf16.mxu0 0
      %592 = vmatpush1.bf16.msra.mxu0 0
      %593 = vmatprep.subr.bf16.mxu0 0
      %594 = vmatpush1.bf16.msra.mxu0 0
      %595 = vmatprep.subr.bf16.mxu0 0
      %596 = vmatpush1.bf16.msra.mxu0 0
      %597 = vmatprep.subr.bf16.mxu0 0
      %598 = vmatpush1.bf16.msra.mxu0 0
      %599 = vmatprep.subr.bf16.mxu0 0
      %600 = vmatpush1.bf16.msra.mxu0 %v531
      %601 = vmatprep.subr.bf16.mxu0 0
      %602 = vmatpush1.bf16.msra.mxu0 %v530
      %603 = vmatprep.subr.bf16.mxu0 0
      %604 = vmatpush1.bf16.msra.mxu0 %v529
      %605 = vmatprep.subr.bf16.mxu0 0
      %606 = vmatpush1.bf16.msra.mxu0 %v528
      %607 = vmatprep.subr.bf16.mxu0 0
      %608 = vmatpush2.bf16.msra.mxu0 0
      %609 = vmatprep.subr.bf16.mxu0 0
      %610 = vmatpush2.bf16.msra.mxu0 0
      %611 = vmatprep.subr.bf16.mxu0 0
      %612 = vmatpush2.bf16.msra.mxu0 0
      %613 = vmatprep.subr.bf16.mxu0 0
      %614 = vmatpush2.bf16.msra.mxu0 0
      %615 = vmatprep.subr.bf16.mxu0 0
      %616 = vmatpush2.bf16.msra.mxu0 0
      %617 = vmatprep.subr.bf16.mxu0 0
      %618 = vmatpush2.bf16.msra.mxu0 0
      %619 = vmatprep.subr.bf16.mxu0 0
      %620 = vmatpush2.bf16.msra.mxu0 0
      %621 = vmatprep.subr.bf16.mxu0 0
      %622 = vmatpush2.bf16.msra.mxu0 0
      %623 = vmatprep.mubr.bf16.mxu0 0
      %624 = vmatmul.mubr.bf16.gmra.mxu0 %v538
      %v625 = vpop.f32.mrf.mxu0
      %v626 = vadd.f32 0.0, %v625
      %v627 = vpop.f32.mrf.mxu0
      %v628 = vpop.f32.mrf.mxu0
      %v629 = vadd.f32 0.0, %v628
      %v630 = vpop.f32.mrf.mxu0
      %631 = vmatprep.mubr.bf16.mxu0 0
      %632 = vmatmul.mubr.bf16.gmra.mxu0 %v541
      %v633 = vpop.f32.mrf.mxu0
      %v634 = vadd.f32 0.0, %v633
      %v635 = vpop.f32.mrf.mxu0
      %v636 = vpop.f32.mrf.mxu0
      %v637 = vadd.f32 0.0, %v636
      %v638 = vpop.f32.mrf.mxu0
      %639 = vmatprep.mubr.bf16.mxu0 0
      %640 = vmatmul.mubr.bf16.gmra.mxu0 %v544
      %v641 = vpop.f32.mrf.mxu0
      %v642 = vadd.f32 0.0, %v641
      %v643 = vpop.f32.mrf.mxu0
      %v644 = vpop.f32.mrf.mxu0
      %v645 = vadd.f32 0.0, %v644
      %v646 = vpop.f32.mrf.mxu0
      %647 = vmatprep.mubr.bf16.mxu0 0
      %648 = vmatmul.mubr.bf16.gmra.mxu0 %v547
      %v649 = vpop.f32.mrf.mxu0
      %v650 = vadd.f32 0.0, %v649
      %v651 = vpop.f32.mrf.mxu0
      %v652 = vpop.f32.mrf.mxu0
      %v653 = vadd.f32 0.0, %v652
      %v654 = vpop.f32.mrf.mxu0
      %655 = vmatprep.mubr.bf16.mxu0 0
      %656 = vmatmul.mubr.bf16.gmra.mxu0 %v550
      %v657 = vpop.f32.mrf.mxu0
      %v658 = vadd.f32 0.0, %v657
      %v659 = vpop.f32.mrf.mxu0
      %v660 = vpop.f32.mrf.mxu0
      %v661 = vadd.f32 0.0, %v660
      %v662 = vpop.f32.mrf.mxu0
      %663 = vmatprep.mubr.bf16.mxu0 0
      %664 = vmatmul.mubr.bf16.gmra.mxu0 %v553
      %v665 = vpop.f32.mrf.mxu0
      %v666 = vadd.f32 0.0, %v665
      %v667 = vpop.f32.mrf.mxu0
      %v668 = vpop.f32.mrf.mxu0
      %v669 = vadd.f32 0.0, %v668
      %v670 = vpop.f32.mrf.mxu0
      %671 = vmatprep.mubr.bf16.mxu0 0
      %672 = vmatmul.mubr.bf16.gmra.mxu0 %v556
      %v673 = vpop.f32.mrf.mxu0
      %v674 = vadd.f32 0.0, %v673
      %v675 = vpop.f32.mrf.mxu0
      %v676 = vpop.f32.mrf.mxu0
      %v677 = vadd.f32 0.0, %v676
      %v678 = vpop.f32.mrf.mxu0
      %679 = vmatprep.mubr.bf16.mxu0 0
      %680 = vmatmul.mubr.bf16.gmra.mxu0 %v559
      %v681 = vpop.f32.mrf.mxu0
      %v682 = vadd.f32 0.0, %v681
      %v683 = vpop.f32.mrf.mxu0
      %v684 = vpop.f32.mrf.mxu0
      %v685 = vadd.f32 0.0, %v684
      %v686 = vpop.f32.mrf.mxu0
      %687 = vmatprep.mubr.bf16.mxu0 0
      %688 = vmatmul.mubr.bf16.gmra.mxu0 %v562
      %v689 = vpop.f32.mrf.mxu0
      %v690 = vadd.f32 0.0, %v689
      %v691 = vpop.f32.mrf.mxu0
      %v692 = vpop.f32.mrf.mxu0
      %v693 = vadd.f32 0.0, %v692
      %v694 = vpop.f32.mrf.mxu0
      %695 = vmatprep.mubr.bf16.mxu0 0
      %696 = vmatmul.mubr.bf16.gmra.mxu0 %v565
      %v697 = vpop.f32.mrf.mxu0
      %v698 = vadd.f32 0.0, %v697
      %v699 = vpop.f32.mrf.mxu0
      %v700 = vpop.f32.mrf.mxu0
      %v701 = vadd.f32 0.0, %v700
      %v702 = vpop.f32.mrf.mxu0
      %703 = vmatprep.mubr.bf16.mxu0 0
      %704 = vmatmul.mubr.bf16.gmra.mxu0 %v568
      %v705 = vpop.f32.mrf.mxu0
      %v706 = vadd.f32 0.0, %v705
      %v707 = vpop.f32.mrf.mxu0
      %v708 = vpop.f32.mrf.mxu0
      %v709 = vadd.f32 0.0, %v708
      %v710 = vpop.f32.mrf.mxu0
      %711 = vmatprep.mubr.bf16.mxu0 0
      %712 = vmatmul.mubr.bf16.gmra.mxu0 %v571
      %v713 = vpop.f32.mrf.mxu0
      %v714 = vadd.f32 0.0, %v713
      %v715 = vpop.f32.mrf.mxu0
      %v716 = vpop.f32.mrf.mxu0
      %v717 = vadd.f32 0.0, %v716
      %v718 = vpop.f32.mrf.mxu0
      %719 = vmatprep.mubr.bf16.mxu0 0
      %720 = vmatmul.mubr.bf16.gmra.mxu0 %v574
      %v721 = vpop.f32.mrf.mxu0
      %v722 = vadd.f32 0.0, %v721
      %v723 = vpop.f32.mrf.mxu0
      %v724 = vpop.f32.mrf.mxu0
      %v725 = vadd.f32 0.0, %v724
      %v726 = vpop.f32.mrf.mxu0
      %727 = vmatprep.mubr.bf16.mxu0 0
      %728 = vmatmul.mubr.bf16.gmra.mxu0 %v577
      %v729 = vpop.f32.mrf.mxu0
      %v730 = vadd.f32 0.0, %v729
      %v731 = vpop.f32.mrf.mxu0
      %v732 = vpop.f32.mrf.mxu0
      %v733 = vadd.f32 0.0, %v732
      %v734 = vpop.f32.mrf.mxu0
      %735 = vmatprep.mubr.bf16.mxu0 0
      %736 = vmatmul.mubr.bf16.gmra.mxu0 %v580
      %v737 = vpop.f32.mrf.mxu0
      %v738 = vadd.f32 0.0, %v737
      %v739 = vpop.f32.mrf.mxu0
      %v740 = vpop.f32.mrf.mxu0
      %v741 = vadd.f32 0.0, %v740
      %v742 = vpop.f32.mrf.mxu0
      %743 = vmatprep.mubr.bf16.mxu0 0
      %744 = vmatmul.mubr.bf16.gmra.mxu0 %v583
      %v745 = vpop.f32.mrf.mxu0
      %v746 = vadd.f32 0.0, %v745
      %v747 = vpop.f32.mrf.mxu0
      %v748 = vpop.f32.mrf.mxu0
      %v749 = vadd.f32 0.0, %v748
      %v750 = vpop.f32.mrf.mxu0
      %751 = vmatprep.mubr.bf16.mxu0 0
      %752 = vmatmul.mubr.bf16.gmra.mxu0 %v586
      %v753 = vpop.f32.mrf.mxu0
      %v754 = vadd.f32 0.0, %v753
      %v755 = vpop.f32.mrf.mxu0
      %v756 = vpop.f32.mrf.mxu0
      %v757 = vadd.f32 0.0, %v756
      %v758 = vpop.f32.mrf.mxu0
      %759 = vmatprep.mubr.bf16.mxu0 0
      %760 = vmatmul.mubr.bf16.gmra.mxu0 %v589
      %v761 = vpop.f32.mrf.mxu0
      %v762 = vadd.f32 0.0, %v761
      %v763 = vpop.f32.mrf.mxu0
      %v764 = vpop.f32.mrf.mxu0
      %v765 = vadd.f32 0.0, %v764
      %v766 = vpop.f32.mrf.mxu0
      %767 = vdwg.mxu0
      %v776 = vunpack.c.l.b16 %v252
      %v777 = vunpack.c.l.b16 %v253
      %v778 = vunpack.c.l.b16 %v254
      %v779 = vunpack.c.l.b16 %v255
      %v780 = vunpack.c.l.b16 %v256
      %v781 = vunpack.c.l.b16 %v257
      %v782 = vunpack.c.l.b16 %v258
      %v783 = vunpack.c.l.b16 %v259
      %v784 = vpack.c.b16 %v777, %v776
      %v785 = vpack.c.b16 %v779, %v778
      %v786 = vpack.c.b16 %v781, %v780
      %v787 = vpack.c.b16 %v783, %v782
      %v792 = vsel %vm536, %v344, 0
      %v794 = vsel %vm536, %v345, 0
      %v796 = vsel %vm536, %v346, 0
      %v798 = vsel %vm536, %v347, 0
      %v800 = vsel %vm536, %v348, 0
      %v802 = vsel %vm536, %v349, 0
      %v804 = vsel %vm536, %v350, 0
      %v806 = vsel %vm536, %v351, 0
      %v808 = vsel %vm536, %v352, 0
      %v810 = vsel %vm536, %v353, 0
      %v812 = vsel %vm536, %v354, 0
      %v814 = vsel %vm536, %v355, 0
      %v816 = vsel %vm536, %v356, 0
      %v818 = vsel %vm536, %v357, 0
      %v820 = vsel %vm536, %v358, 0
      %v822 = vsel %vm536, %v359, 0
      %v824 = vsel %vm536, %v360, 0
      %v826 = vsel %vm536, %v361, 0
      %828 = vmatprep.subr.bf16.mxu0 0
      %829 = vmatpush1.bf16.msra.mxu0 0
      %830 = vmatprep.subr.bf16.mxu0 0
      %831 = vmatpush1.bf16.msra.mxu0 0
      %832 = vmatprep.subr.bf16.mxu0 0
      %833 = vmatpush1.bf16.msra.mxu0 0
      %834 = vmatprep.subr.bf16.mxu0 0
      %835 = vmatpush1.bf16.msra.mxu0 0
      %836 = vmatprep.subr.bf16.mxu0 0
      %837 = vmatpush1.bf16.msra.mxu0 %v787
      %838 = vmatprep.subr.bf16.mxu0 0
      %839 = vmatpush1.bf16.msra.mxu0 %v786
      %840 = vmatprep.subr.bf16.mxu0 0
      %841 = vmatpush1.bf16.msra.mxu0 %v785
      %842 = vmatprep.subr.bf16.mxu0 0
      %843 = vmatpush1.bf16.msra.mxu0 %v784
      %844 = vmatprep.subr.bf16.mxu0 0
      %845 = vmatpush2.bf16.msra.mxu0 0
      %846 = vmatprep.subr.bf16.mxu0 0
      %847 = vmatpush2.bf16.msra.mxu0 0
      %848 = vmatprep.subr.bf16.mxu0 0
      %849 = vmatpush2.bf16.msra.mxu0 0
      %850 = vmatprep.subr.bf16.mxu0 0
      %851 = vmatpush2.bf16.msra.mxu0 0
      %852 = vmatprep.subr.bf16.mxu0 0
      %853 = vmatpush2.bf16.msra.mxu0 0
      %854 = vmatprep.subr.bf16.mxu0 0
      %855 = vmatpush2.bf16.msra.mxu0 0
      %856 = vmatprep.subr.bf16.mxu0 0
      %857 = vmatpush2.bf16.msra.mxu0 0
      %858 = vmatprep.subr.bf16.mxu0 0
      %859 = vmatpush2.bf16.msra.mxu0 0
      %860 = vmatprep.mubr.bf16.mxu0 0
      %861 = vmatmul.mubr.bf16.gmra.mxu0 %v792
      %v862 = vpop.f32.mrf.mxu0
      %v863 = vadd.f32 %v626, %v862
      %v864 = vpop.f32.mrf.mxu0
      %v865 = vpop.f32.mrf.mxu0
      %v866 = vadd.f32 %v629, %v865
      %v867 = vpop.f32.mrf.mxu0
      %868 = vmatprep.mubr.bf16.mxu0 0
      %869 = vmatmul.mubr.bf16.gmra.mxu0 %v794
      %v870 = vpop.f32.mrf.mxu0
      %v871 = vadd.f32 %v634, %v870
      %v872 = vpop.f32.mrf.mxu0
      %v873 = vpop.f32.mrf.mxu0
      %v874 = vadd.f32 %v637, %v873
      %v875 = vpop.f32.mrf.mxu0
      %876 = vmatprep.mubr.bf16.mxu0 0
      %877 = vmatmul.mubr.bf16.gmra.mxu0 %v796
      %v878 = vpop.f32.mrf.mxu0
      %v879 = vadd.f32 %v642, %v878
      %v880 = vpop.f32.mrf.mxu0
      %v881 = vpop.f32.mrf.mxu0
      %v882 = vadd.f32 %v645, %v881
      %v883 = vpop.f32.mrf.mxu0
      %884 = vmatprep.mubr.bf16.mxu0 0
      %885 = vmatmul.mubr.bf16.gmra.mxu0 %v798
      %v886 = vpop.f32.mrf.mxu0
      %v887 = vadd.f32 %v650, %v886
      %v888 = vpop.f32.mrf.mxu0
      %v889 = vpop.f32.mrf.mxu0
      %v890 = vadd.f32 %v653, %v889
      %v891 = vpop.f32.mrf.mxu0
      %892 = vmatprep.mubr.bf16.mxu0 0
      %893 = vmatmul.mubr.bf16.gmra.mxu0 %v800
      %v894 = vpop.f32.mrf.mxu0
      %v895 = vadd.f32 %v658, %v894
      %v896 = vpop.f32.mrf.mxu0
      %v897 = vpop.f32.mrf.mxu0
      %v898 = vadd.f32 %v661, %v897
      %v899 = vpop.f32.mrf.mxu0
      %900 = vmatprep.mubr.bf16.mxu0 0
      %901 = vmatmul.mubr.bf16.gmra.mxu0 %v802
      %v902 = vpop.f32.mrf.mxu0
      %v903 = vadd.f32 %v666, %v902
      %v904 = vpop.f32.mrf.mxu0
      %v905 = vpop.f32.mrf.mxu0
      %v906 = vadd.f32 %v669, %v905
      %v907 = vpop.f32.mrf.mxu0
      %908 = vmatprep.mubr.bf16.mxu0 0
      %909 = vmatmul.mubr.bf16.gmra.mxu0 %v804
      %v910 = vpop.f32.mrf.mxu0
      %v911 = vadd.f32 %v674, %v910
      %v912 = vpop.f32.mrf.mxu0
      %v913 = vpop.f32.mrf.mxu0
      %v914 = vadd.f32 %v677, %v913
      %v915 = vpop.f32.mrf.mxu0
      %916 = vmatprep.mubr.bf16.mxu0 0
      %917 = vmatmul.mubr.bf16.gmra.mxu0 %v806
      %v918 = vpop.f32.mrf.mxu0
      %v919 = vadd.f32 %v682, %v918
      %v920 = vpop.f32.mrf.mxu0
      %v921 = vpop.f32.mrf.mxu0
      %v922 = vadd.f32 %v685, %v921
      %v923 = vpop.f32.mrf.mxu0
      %924 = vmatprep.mubr.bf16.mxu0 0
      %925 = vmatmul.mubr.bf16.gmra.mxu0 %v808
      %v926 = vpop.f32.mrf.mxu0
      %v927 = vadd.f32 %v690, %v926
      %v928 = vpop.f32.mrf.mxu0
      %v929 = vpop.f32.mrf.mxu0
      %v930 = vadd.f32 %v693, %v929
      %v931 = vpop.f32.mrf.mxu0
      %932 = vmatprep.mubr.bf16.mxu0 0
      %933 = vmatmul.mubr.bf16.gmra.mxu0 %v810
      %v934 = vpop.f32.mrf.mxu0
      %v935 = vadd.f32 %v698, %v934
      %v936 = vpop.f32.mrf.mxu0
      %v937 = vpop.f32.mrf.mxu0
      %v938 = vadd.f32 %v701, %v937
      %v939 = vpop.f32.mrf.mxu0
      %940 = vmatprep.mubr.bf16.mxu0 0
      %941 = vmatmul.mubr.bf16.gmra.mxu0 %v812
      %v942 = vpop.f32.mrf.mxu0
      %v943 = vadd.f32 %v706, %v942
      %v944 = vpop.f32.mrf.mxu0
      %v945 = vpop.f32.mrf.mxu0
      %v946 = vadd.f32 %v709, %v945
      %v947 = vpop.f32.mrf.mxu0
      %948 = vmatprep.mubr.bf16.mxu0 0
      %949 = vmatmul.mubr.bf16.gmra.mxu0 %v814
      %v950 = vpop.f32.mrf.mxu0
      %v951 = vadd.f32 %v714, %v950
      %v952 = vpop.f32.mrf.mxu0
      %v953 = vpop.f32.mrf.mxu0
      %v954 = vadd.f32 %v717, %v953
      %v955 = vpop.f32.mrf.mxu0
      %956 = vmatprep.mubr.bf16.mxu0 0
      %957 = vmatmul.mubr.bf16.gmra.mxu0 %v816
      %v958 = vpop.f32.mrf.mxu0
      %v959 = vadd.f32 %v722, %v958
      %v960 = vpop.f32.mrf.mxu0
      %v961 = vpop.f32.mrf.mxu0
      %v962 = vadd.f32 %v725, %v961
      %v963 = vpop.f32.mrf.mxu0
      %964 = vmatprep.mubr.bf16.mxu0 0
      %965 = vmatmul.mubr.bf16.gmra.mxu0 %v818
      %v966 = vpop.f32.mrf.mxu0
      %v967 = vadd.f32 %v730, %v966
      %v968 = vpop.f32.mrf.mxu0
      %v969 = vpop.f32.mrf.mxu0
      %v970 = vadd.f32 %v733, %v969
      %v971 = vpop.f32.mrf.mxu0
      %972 = vmatprep.mubr.bf16.mxu0 0
      %973 = vmatmul.mubr.bf16.gmra.mxu0 %v820
      %v974 = vpop.f32.mrf.mxu0
      %v975 = vadd.f32 %v738, %v974
      %v976 = vpop.f32.mrf.mxu0
      %v977 = vpop.f32.mrf.mxu0
      %v978 = vadd.f32 %v741, %v977
      %v979 = vpop.f32.mrf.mxu0
      %980 = vmatprep.mubr.bf16.mxu0 0
      %981 = vmatmul.mubr.bf16.gmra.mxu0 %v822
      %v982 = vpop.f32.mrf.mxu0
      %v983 = vadd.f32 %v746, %v982
      %v984 = vpop.f32.mrf.mxu0
      %v985 = vpop.f32.mrf.mxu0
      %v986 = vadd.f32 %v749, %v985
      %v987 = vpop.f32.mrf.mxu0
      %988 = vmatprep.mubr.bf16.mxu0 0
      %989 = vmatmul.mubr.bf16.gmra.mxu0 %v824
      %v990 = vpop.f32.mrf.mxu0
      %v991 = vadd.f32 %v754, %v990
      %v992 = vpop.f32.mrf.mxu0
      %v993 = vpop.f32.mrf.mxu0
      %v994 = vadd.f32 %v757, %v993
      %v995 = vpop.f32.mrf.mxu0
      %996 = vmatprep.mubr.bf16.mxu0 0
      %997 = vmatmul.mubr.bf16.gmra.mxu0 %v826
      %v998 = vpop.f32.mrf.mxu0
      %v999 = vadd.f32 %v762, %v998
      %v1000 = vpop.f32.mrf.mxu0
      %v1001 = vpop.f32.mrf.mxu0
      %v1002 = vadd.f32 %v765, %v1001
      %v1003 = vpop.f32.mrf.mxu0
      %1004 = vdwg.mxu0
      %v1005 = vld [vmem:[%s203] sm:$0xe]
      %s1006 = scalar_lea.vmem %s1, 64
      %v1007 = vld [vmem:[%s1006] sm:$0xf]
      %v1008 = vld [vmem:[%s1006 + $0x4] sm:$0xf]
      %v1009 = vld [vmem:[%s1006 + $0x8] sm:$0xf]
      %v1010 = vld [vmem:[%s1006 + $0xc] sm:$0xf]
      %v1011 = vld [vmem:[%s1006 + $0x10] sm:$0xf]
      %v1012 = vld [vmem:[%s1006 + $0x14] sm:$0xf]
      %v1013 = vld [vmem:[%s1006 + $0x18] sm:$0xf]
      %v1014 = vld [vmem:[%s1006 + $0x1c] sm:$0xf]
      %v1016 = vunpack.c.l.b16 %v1005
      %v1017 = vpack.c.b16 %v308, %v1016
      %vm1018 = vcmask 1046528
      %v1019 = vrot.slane %v1017, 1
      %v1020 = vrot.slane %v345, 1
      %v1021 = vsel %vm1018, %v1019, %v1020
      %v1022 = vrot.slane %v346, 1
      %v1023 = vsel %vm1018, %v1020, %v1022
      %v1024 = vrot.slane %v347, 1
      %v1025 = vsel %vm1018, %v1022, %v1024
      %v1026 = vrot.slane %v348, 1
      %v1027 = vsel %vm1018, %v1024, %v1026
      %v1028 = vrot.slane %v349, 1
      %v1029 = vsel %vm1018, %v1026, %v1028
      %v1030 = vrot.slane %v350, 1
      %v1031 = vsel %vm1018, %v1028, %v1030
      %v1032 = vrot.slane %v351, 1
      %v1033 = vsel %vm1018, %v1030, %v1032
      %v1034 = vrot.slane %v352, 1
      %v1035 = vsel %vm1018, %v1032, %v1034
      %v1036 = vrot.slane %v353, 1
      %v1037 = vsel %vm1018, %v1034, %v1036
      %v1038 = vrot.slane %v354, 1
      %v1039 = vsel %vm1018, %v1036, %v1038
      %v1040 = vrot.slane %v355, 1
      %v1041 = vsel %vm1018, %v1038, %v1040
      %v1042 = vrot.slane %v356, 1
      %v1043 = vsel %vm1018, %v1040, %v1042
      %v1044 = vrot.slane %v357, 1
      %v1045 = vsel %vm1018, %v1042, %v1044
      %v1046 = vrot.slane %v358, 1
      %v1047 = vsel %vm1018, %v1044, %v1046
      %v1048 = vrot.slane %v359, 1
      %v1049 = vsel %vm1018, %v1046, %v1048
      %v1050 = vrot.slane %v360, 1
      %v1051 = vsel %vm1018, %v1048, %v1050
      %v1052 = vrot.slane %v361, 1
      %v1053 = vsel %vm1018, %v1050, %v1052
      %v1054 = vrot.slane %v362, 1
      %v1055 = vsel %vm1018, %v1052, %v1054
      %v1064 = vunpack.c.l.b16 %v1007
      %v1065 = vunpack.c.l.b16 %v1008
      %v1066 = vunpack.c.l.b16 %v1009
      %v1067 = vunpack.c.l.b16 %v1010
      %v1068 = vunpack.c.l.b16 %v1011
      %v1069 = vunpack.c.l.b16 %v1012
      %v1070 = vunpack.c.l.b16 %v1013
      %v1071 = vunpack.c.l.b16 %v1014
      %v1072 = vpack.c.b16 %v1065, %v1064
      %v1073 = vpack.c.b16 %v1067, %v1066
      %v1074 = vpack.c.b16 %v1069, %v1068
      %v1075 = vpack.c.b16 %v1071, %v1070
      %v1081 = vsel %vm536, %v1021, 0
      %v1084 = vsel %vm536, %v1023, 0
      %v1087 = vsel %vm536, %v1025, 0
      %v1090 = vsel %vm536, %v1027, 0
      %v1093 = vsel %vm536, %v1029, 0
      %v1096 = vsel %vm536, %v1031, 0
      %v1099 = vsel %vm536, %v1033, 0
      %v1102 = vsel %vm536, %v1035, 0
      %v1105 = vsel %vm536, %v1037, 0
      %v1108 = vsel %vm536, %v1039, 0
      %v1111 = vsel %vm536, %v1041, 0
      %v1114 = vsel %vm536, %v1043, 0
      %v1117 = vsel %vm536, %v1045, 0
      %v1120 = vsel %vm536, %v1047, 0
      %v1123 = vsel %vm536, %v1049, 0
      %v1126 = vsel %vm536, %v1051, 0
      %v1129 = vsel %vm536, %v1053, 0
      %v1132 = vsel %vm536, %v1055, 0
      %1134 = vmatprep.subr.bf16.mxu0 0
      %1135 = vmatpush1.bf16.msra.mxu0 0
      %1136 = vmatprep.subr.bf16.mxu0 0
      %1137 = vmatpush1.bf16.msra.mxu0 0
      %1138 = vmatprep.subr.bf16.mxu0 0
      %1139 = vmatpush1.bf16.msra.mxu0 0
      %1140 = vmatprep.subr.bf16.mxu0 0
      %1141 = vmatpush1.bf16.msra.mxu0 0
      %1142 = vmatprep.subr.bf16.mxu0 0
      %1143 = vmatpush1.bf16.msra.mxu0 %v1075
      %1144 = vmatprep.subr.bf16.mxu0 0
      %1145 = vmatpush1.bf16.msra.mxu0 %v1074
      %1146 = vmatprep.subr.bf16.mxu0 0
      %1147 = vmatpush1.bf16.msra.mxu0 %v1073
      %1148 = vmatprep.subr.bf16.mxu0 0
      %1149 = vmatpush1.bf16.msra.mxu0 %v1072
      %1150 = vmatprep.subr.bf16.mxu0 0
      %1151 = vmatpush2.bf16.msra.mxu0 0
      %1152 = vmatprep.subr.bf16.mxu0 0
      %1153 = vmatpush2.bf16.msra.mxu0 0
      %1154 = vmatprep.subr.bf16.mxu0 0
      %1155 = vmatpush2.bf16.msra.mxu0 0
      %1156 = vmatprep.subr.bf16.mxu0 0
      %1157 = vmatpush2.bf16.msra.mxu0 0
      %1158 = vmatprep.subr.bf16.mxu0 0
      %1159 = vmatpush2.bf16.msra.mxu0 0
      %1160 = vmatprep.subr.bf16.mxu0 0
      %1161 = vmatpush2.bf16.msra.mxu0 0
      %1162 = vmatprep.subr.bf16.mxu0 0
      %1163 = vmatpush2.bf16.msra.mxu0 0
      %1164 = vmatprep.subr.bf16.mxu0 0
      %1165 = vmatpush2.bf16.msra.mxu0 0
      %1166 = vmatprep.mubr.bf16.mxu0 0
      %1167 = vmatmul.mubr.bf16.gmra.mxu0 %v1081
      %v1168 = vpop.f32.mrf.mxu0
      %v1169 = vadd.f32 0.0, %v1168
      %v1170 = vpop.f32.mrf.mxu0
      %v1171 = vpop.f32.mrf.mxu0
      %v1172 = vadd.f32 0.0, %v1171
      %v1173 = vpop.f32.mrf.mxu0
      %1174 = vmatprep.mubr.bf16.mxu0 0
      %1175 = vmatmul.mubr.bf16.gmra.mxu0 %v1084
      %v1176 = vpop.f32.mrf.mxu0
      %v1177 = vadd.f32 0.0, %v1176
      %v1178 = vpop.f32.mrf.mxu0
      %v1179 = vpop.f32.mrf.mxu0
      %v1180 = vadd.f32 0.0, %v1179
      %v1181 = vpop.f32.mrf.mxu0
      %1182 = vmatprep.mubr.bf16.mxu0 0
      %1183 = vmatmul.mubr.bf16.gmra.mxu0 %v1087
      %v1184 = vpop.f32.mrf.mxu0
      %v1185 = vadd.f32 0.0, %v1184
      %v1186 = vpop.f32.mrf.mxu0
      %v1187 = vpop.f32.mrf.mxu0
      %v1188 = vadd.f32 0.0, %v1187
      %v1189 = vpop.f32.mrf.mxu0
      %1190 = vmatprep.mubr.bf16.mxu0 0
      %1191 = vmatmul.mubr.bf16.gmra.mxu0 %v1090
      %v1192 = vpop.f32.mrf.mxu0
      %v1193 = vadd.f32 0.0, %v1192
      %v1194 = vpop.f32.mrf.mxu0
      %v1195 = vpop.f32.mrf.mxu0
      %v1196 = vadd.f32 0.0, %v1195
      %v1197 = vpop.f32.mrf.mxu0
      %1198 = vmatprep.mubr.bf16.mxu0 0
      %1199 = vmatmul.mubr.bf16.gmra.mxu0 %v1093
      %v1200 = vpop.f32.mrf.mxu0
      %v1201 = vadd.f32 0.0, %v1200
      %v1202 = vpop.f32.mrf.mxu0
      %v1203 = vpop.f32.mrf.mxu0
      %v1204 = vadd.f32 0.0, %v1203
      %v1205 = vpop.f32.mrf.mxu0
      %1206 = vmatprep.mubr.bf16.mxu0 0
      %1207 = vmatmul.mubr.bf16.gmra.mxu0 %v1096
      %v1208 = vpop.f32.mrf.mxu0
      %v1209 = vadd.f32 0.0, %v1208
      %v1210 = vpop.f32.mrf.mxu0
      %v1211 = vpop.f32.mrf.mxu0
      %v1212 = vadd.f32 0.0, %v1211
      %v1213 = vpop.f32.mrf.mxu0
      %1214 = vmatprep.mubr.bf16.mxu0 0
      %1215 = vmatmul.mubr.bf16.gmra.mxu0 %v1099
      %v1216 = vpop.f32.mrf.mxu0
      %v1217 = vadd.f32 0.0, %v1216
      %v1218 = vpop.f32.mrf.mxu0
      %v1219 = vpop.f32.mrf.mxu0
      %v1220 = vadd.f32 0.0, %v1219
      %v1221 = vpop.f32.mrf.mxu0
      %1222 = vmatprep.mubr.bf16.mxu0 0
      %1223 = vmatmul.mubr.bf16.gmra.mxu0 %v1102
      %v1224 = vpop.f32.mrf.mxu0
      %v1225 = vadd.f32 0.0, %v1224
      %v1226 = vpop.f32.mrf.mxu0
      %v1227 = vpop.f32.mrf.mxu0
      %v1228 = vadd.f32 0.0, %v1227
      %v1229 = vpop.f32.mrf.mxu0
      %1230 = vmatprep.mubr.bf16.mxu0 0
      %1231 = vmatmul.mubr.bf16.gmra.mxu0 %v1105
      %v1232 = vpop.f32.mrf.mxu0
      %v1233 = vadd.f32 0.0, %v1232
      %v1234 = vpop.f32.mrf.mxu0
      %v1235 = vpop.f32.mrf.mxu0
      %v1236 = vadd.f32 0.0, %v1235
      %v1237 = vpop.f32.mrf.mxu0
      %1238 = vmatprep.mubr.bf16.mxu0 0
      %1239 = vmatmul.mubr.bf16.gmra.mxu0 %v1108
      %v1240 = vpop.f32.mrf.mxu0
      %v1241 = vadd.f32 0.0, %v1240
      %v1242 = vpop.f32.mrf.mxu0
      %v1243 = vpop.f32.mrf.mxu0
      %v1244 = vadd.f32 0.0, %v1243
      %v1245 = vpop.f32.mrf.mxu0
      %1246 = vmatprep.mubr.bf16.mxu0 0
      %1247 = vmatmul.mubr.bf16.gmra.mxu0 %v1111
      %v1248 = vpop.f32.mrf.mxu0
      %v1249 = vadd.f32 0.0, %v1248
      %v1250 = vpop.f32.mrf.mxu0
      %v1251 = vpop.f32.mrf.mxu0
      %v1252 = vadd.f32 0.0, %v1251
      %v1253 = vpop.f32.mrf.mxu0
      %1254 = vmatprep.mubr.bf16.mxu0 0
      %1255 = vmatmul.mubr.bf16.gmra.mxu0 %v1114
      %v1256 = vpop.f32.mrf.mxu0
      %v1257 = vadd.f32 0.0, %v1256
      %v1258 = vpop.f32.mrf.mxu0
      %v1259 = vpop.f32.mrf.mxu0
      %v1260 = vadd.f32 0.0, %v1259
      %v1261 = vpop.f32.mrf.mxu0
      %1262 = vmatprep.mubr.bf16.mxu0 0
      %1263 = vmatmul.mubr.bf16.gmra.mxu0 %v1117
      %v1264 = vpop.f32.mrf.mxu0
      %v1265 = vadd.f32 0.0, %v1264
      %v1266 = vpop.f32.mrf.mxu0
      %v1267 = vpop.f32.mrf.mxu0
      %v1268 = vadd.f32 0.0, %v1267
      %v1269 = vpop.f32.mrf.mxu0
      %1270 = vmatprep.mubr.bf16.mxu0 0
      %1271 = vmatmul.mubr.bf16.gmra.mxu0 %v1120
      %v1272 = vpop.f32.mrf.mxu0
      %v1273 = vadd.f32 0.0, %v1272
      %v1274 = vpop.f32.mrf.mxu0
      %v1275 = vpop.f32.mrf.mxu0
      %v1276 = vadd.f32 0.0, %v1275
      %v1277 = vpop.f32.mrf.mxu0
      %1278 = vmatprep.mubr.bf16.mxu0 0
      %1279 = vmatmul.mubr.bf16.gmra.mxu0 %v1123
      %v1280 = vpop.f32.mrf.mxu0
      %v1281 = vadd.f32 0.0, %v1280
      %v1282 = vpop.f32.mrf.mxu0
      %v1283 = vpop.f32.mrf.mxu0
      %v1284 = vadd.f32 0.0, %v1283
      %v1285 = vpop.f32.mrf.mxu0
      %1286 = vmatprep.mubr.bf16.mxu0 0
      %1287 = vmatmul.mubr.bf16.gmra.mxu0 %v1126
      %v1288 = vpop.f32.mrf.mxu0
      %v1289 = vadd.f32 0.0, %v1288
      %v1290 = vpop.f32.mrf.mxu0
      %v1291 = vpop.f32.mrf.mxu0
      %v1292 = vadd.f32 0.0, %v1291
      %v1293 = vpop.f32.mrf.mxu0
      %1294 = vmatprep.mubr.bf16.mxu0 0
      %1295 = vmatmul.mubr.bf16.gmra.mxu0 %v1129
      %v1296 = vpop.f32.mrf.mxu0
      %v1297 = vadd.f32 0.0, %v1296
      %v1298 = vpop.f32.mrf.mxu0
      %v1299 = vpop.f32.mrf.mxu0
      %v1300 = vadd.f32 0.0, %v1299
      %v1301 = vpop.f32.mrf.mxu0
      %1302 = vmatprep.mubr.bf16.mxu0 0
      %1303 = vmatmul.mubr.bf16.gmra.mxu0 %v1132
      %v1304 = vpop.f32.mrf.mxu0
      %v1305 = vadd.f32 0.0, %v1304
      %v1306 = vpop.f32.mrf.mxu0
      %v1307 = vpop.f32.mrf.mxu0
      %v1308 = vadd.f32 0.0, %v1307
      %v1309 = vpop.f32.mrf.mxu0
      %1310 = vdwg.mxu0
      %v1311 = vadd.f32 %v863, %v1169
      %v1312 = vadd.f32 %v866, %v1172
      %v1313 = vadd.f32 %v871, %v1177
      %v1314 = vadd.f32 %v874, %v1180
      %v1315 = vadd.f32 %v879, %v1185
      %v1316 = vadd.f32 %v882, %v1188
      %v1317 = vadd.f32 %v887, %v1193
      %v1318 = vadd.f32 %v890, %v1196
      %v1319 = vadd.f32 %v895, %v1201
      %v1320 = vadd.f32 %v898, %v1204
      %v1321 = vadd.f32 %v903, %v1209
      %v1322 = vadd.f32 %v906, %v1212
      %v1323 = vadd.f32 %v911, %v1217
      %v1324 = vadd.f32 %v914, %v1220
      %v1325 = vadd.f32 %v919, %v1225
      %v1326 = vadd.f32 %v922, %v1228
      %v1327 = vadd.f32 %v927, %v1233
      %v1328 = vadd.f32 %v930, %v1236
      %v1329 = vadd.f32 %v935, %v1241
      %v1330 = vadd.f32 %v938, %v1244
      %v1331 = vadd.f32 %v943, %v1249
      %v1332 = vadd.f32 %v946, %v1252
      %v1333 = vadd.f32 %v951, %v1257
      %v1334 = vadd.f32 %v954, %v1260
      %v1335 = vadd.f32 %v959, %v1265
      %v1336 = vadd.f32 %v962, %v1268
      %v1337 = vadd.f32 %v967, %v1273
      %v1338 = vadd.f32 %v970, %v1276
      %v1339 = vadd.f32 %v975, %v1281
      %v1340 = vadd.f32 %v978, %v1284
      %v1341 = vadd.f32 %v983, %v1289
      %v1342 = vadd.f32 %v986, %v1292
      %v1343 = vadd.f32 %v991, %v1297
      %v1344 = vadd.f32 %v994, %v1300
      %v1345 = vadd.f32 %v999, %v1305
      %v1346 = vadd.f32 %v1002, %v1308
      %v1347 = vld [vmem:[%s203 + $0x8] sm:$0xe]
      %v1348 = vld [vmem:[%s203 + $0xc] sm:$0xf]
      %v1349 = vld [vmem:[%s203 + $0x10] sm:$0xf]
      %v1350 = vld [vmem:[%s203 + $0x14] sm:$0xf]
      %v1351 = vld [vmem:[%s203 + $0x18] sm:$0xf]
      %v1352 = vld [vmem:[%s203 + $0x1c] sm:$0xf]
      %v1353 = vld [vmem:[%s203 + $0x20] sm:$0xf]
      %v1354 = vld [vmem:[%s203 + $0x24] sm:$0xf]
      %v1355 = vld [vmem:[%s203 + $0x28] sm:$0xf]
      %v1356 = vld [vmem:[%s203 + $0x2c] sm:$0xf]
      %v1357 = vld [vmem:[%s203 + $0x30] sm:$0xf]
      %v1358 = vld [vmem:[%s203 + $0x34] sm:$0xf]
      %v1359 = vld [vmem:[%s203 + $0x38] sm:$0xf]
      %v1360 = vld [vmem:[%s203 + $0x3c] sm:$0xf]
      %v1361 = vld [vmem:[%s203 + $0x40] sm:$0xf]
      %v1362 = vld [vmem:[%s203 + $0x44] sm:$0xf]
      %v1363 = vld [vmem:[%s203 + $0x48] sm:$0xf]
      %v1364 = vld [vmem:[%s203 + $0x4c] sm:$0xf]
      %v1365 = vld [vmem:[%s203 + $0x50] sm:$0xf]
      %v1366 = vld [vmem:[%s203 + $0x54] sm:$0xf]
      %v1367 = vld [vmem:[%s203 + $0x58] sm:$0xf]
      %v1368 = vld [vmem:[%s203 + $0x5c] sm:$0xf]
      %v1369 = vld [vmem:[%s203 + $0x60] sm:$0xf]
      %v1370 = vld [vmem:[%s203 + $0x64] sm:$0xf]
      %v1371 = vld [vmem:[%s203 + $0x68] sm:$0xf]
      %v1372 = vld [vmem:[%s203 + $0x6c] sm:$0xf]
      %v1373 = vld [vmem:[%s203 + $0x70] sm:$0xf]
      %v1374 = vld [vmem:[%s203 + $0x74] sm:$0xf]
      %v1375 = vld [vmem:[%s203 + $0x78] sm:$0xf]
      %v1376 = vld [vmem:[%s203 + $0x7c] sm:$0xf]
      %v1377 = vld [vmem:[%s203 + $0x80] sm:$0xf]
      %v1378 = vld [vmem:[%s203 + $0x84] sm:$0xf]
      %v1379 = vld [vmem:[%s203 + $0x88] sm:$0xf]
      %v1380 = vld [vmem:[%s203 + $0x8c] sm:$0xf]
      %v1381 = vld [vmem:[%s203 + $0x90] sm:$0xf]
      %v1382 = vld [vmem:[%s203 + $0x94] sm:$0xf]
      %v1383 = vld [vmem:[%s203 + $0x98] sm:$0x1]
      %s1384 = scalar_lea.vmem %s1, 96
      %v1385 = vld [vmem:[%s1384] sm:$0xf]
      %v1386 = vld [vmem:[%s1384 + $0x4] sm:$0xf]
      %v1387 = vld [vmem:[%s1384 + $0x8] sm:$0xf]
      %v1388 = vld [vmem:[%s1384 + $0xc] sm:$0xf]
      %v1389 = vld [vmem:[%s1384 + $0x10] sm:$0xf]
      %v1390 = vld [vmem:[%s1384 + $0x14] sm:$0xf]
      %v1391 = vld [vmem:[%s1384 + $0x18] sm:$0xf]
      %v1392 = vld [vmem:[%s1384 + $0x1c] sm:$0xf]
      %v1430 = vunpack.c.l.b16 %v1347
      %v1431 = vunpack.c.l.b16 %v1348
      %v1432 = vunpack.c.l.b16 %v1349
      %v1433 = vunpack.c.l.b16 %v1350
      %v1434 = vunpack.c.l.b16 %v1351
      %v1435 = vunpack.c.l.b16 %v1352
      %v1436 = vunpack.c.l.b16 %v1353
      %v1437 = vunpack.c.l.b16 %v1354
      %v1438 = vunpack.c.l.b16 %v1355
      %v1439 = vunpack.c.l.b16 %v1356
      %v1440 = vunpack.c.l.b16 %v1357
      %v1441 = vunpack.c.l.b16 %v1358
      %v1442 = vunpack.c.l.b16 %v1359
      %v1443 = vunpack.c.l.b16 %v1360
      %v1444 = vunpack.c.l.b16 %v1361
      %v1445 = vunpack.c.l.b16 %v1362
      %v1446 = vunpack.c.l.b16 %v1363
      %v1447 = vunpack.c.l.b16 %v1364
      %v1448 = vunpack.c.l.b16 %v1365
      %v1449 = vunpack.c.l.b16 %v1366
      %v1450 = vunpack.c.l.b16 %v1367
      %v1451 = vunpack.c.l.b16 %v1368
      %v1452 = vunpack.c.l.b16 %v1369
      %v1453 = vunpack.c.l.b16 %v1370
      %v1454 = vunpack.c.l.b16 %v1371
      %v1455 = vunpack.c.l.b16 %v1372
      %v1456 = vunpack.c.l.b16 %v1373
      %v1457 = vunpack.c.l.b16 %v1374
      %v1458 = vunpack.c.l.b16 %v1375
      %v1459 = vunpack.c.l.b16 %v1376
      %v1460 = vunpack.c.l.b16 %v1377
      %v1461 = vunpack.c.l.b16 %v1378
      %v1462 = vunpack.c.l.b16 %v1379
      %v1463 = vunpack.c.l.b16 %v1380
      %v1464 = vunpack.c.l.b16 %v1381
      %v1465 = vunpack.c.l.b16 %v1382
      %v1466 = vunpack.c.l.b16 %v1383
      %v1467 = vpack.c.b16 %v1431, %v1430
      %v1468 = vpack.c.b16 %v1433, %v1432
      %v1469 = vpack.c.b16 %v1435, %v1434
      %v1470 = vpack.c.b16 %v1437, %v1436
      %v1471 = vpack.c.b16 %v1439, %v1438
      %v1472 = vpack.c.b16 %v1441, %v1440
      %v1473 = vpack.c.b16 %v1443, %v1442
      %v1474 = vpack.c.b16 %v1445, %v1444
      %v1475 = vpack.c.b16 %v1447, %v1446
      %v1476 = vpack.c.b16 %v1449, %v1448
      %v1477 = vpack.c.b16 %v1451, %v1450
      %v1478 = vpack.c.b16 %v1453, %v1452
      %v1479 = vpack.c.b16 %v1455, %v1454
      %v1480 = vpack.c.b16 %v1457, %v1456
      %v1481 = vpack.c.b16 %v1459, %v1458
      %v1482 = vpack.c.b16 %v1461, %v1460
      %v1483 = vpack.c.b16 %v1463, %v1462
      %v1484 = vpack.c.b16 %v1465, %v1464
      %v1485 = vpack.c.b16 %v1466, %v1466
      %v1486 = vrot.slane %v1467, 1
      %v1487 = vrot.slane %v1468, 1
      %v1488 = vsel %vm1018, %v1486, %v1487
      %v1489 = vrot.slane %v1469, 1
      %v1490 = vsel %vm1018, %v1487, %v1489
      %v1491 = vrot.slane %v1470, 1
      %v1492 = vsel %vm1018, %v1489, %v1491
      %v1493 = vrot.slane %v1471, 1
      %v1494 = vsel %vm1018, %v1491, %v1493
      %v1495 = vrot.slane %v1472, 1
      %v1496 = vsel %vm1018, %v1493, %v1495
      %v1497 = vrot.slane %v1473, 1
      %v1498 = vsel %vm1018, %v1495, %v1497
      %v1499 = vrot.slane %v1474, 1
      %v1500 = vsel %vm1018, %v1497, %v1499
      %v1501 = vrot.slane %v1475, 1
      %v1502 = vsel %vm1018, %v1499, %v1501
      %v1503 = vrot.slane %v1476, 1
      %v1504 = vsel %vm1018, %v1501, %v1503
      %v1505 = vrot.slane %v1477, 1
      %v1506 = vsel %vm1018, %v1503, %v1505
      %v1507 = vrot.slane %v1478, 1
      %v1508 = vsel %vm1018, %v1505, %v1507
      %v1509 = vrot.slane %v1479, 1
      %v1510 = vsel %vm1018, %v1507, %v1509
      %v1511 = vrot.slane %v1480, 1
      %v1512 = vsel %vm1018, %v1509, %v1511
      %v1513 = vrot.slane %v1481, 1
      %v1514 = vsel %vm1018, %v1511, %v1513
      %v1515 = vrot.slane %v1482, 1
      %v1516 = vsel %vm1018, %v1513, %v1515
      %v1517 = vrot.slane %v1483, 1
      %v1518 = vsel %vm1018, %v1515, %v1517
      %v1519 = vrot.slane %v1484, 1
      %v1520 = vsel %vm1018, %v1517, %v1519
      %v1521 = vrot.slane %v1485, 1
      %v1522 = vsel %vm1018, %v1519, %v1521
      %v1531 = vunpack.c.l.b16 %v1385
      %v1532 = vunpack.c.l.b16 %v1386
      %v1533 = vunpack.c.l.b16 %v1387
      %v1534 = vunpack.c.l.b16 %v1388
      %v1535 = vunpack.c.l.b16 %v1389
      %v1536 = vunpack.c.l.b16 %v1390
      %v1537 = vunpack.c.l.b16 %v1391
      %v1538 = vunpack.c.l.b16 %v1392
      %v1539 = vpack.c.b16 %v1532, %v1531
      %v1540 = vpack.c.b16 %v1534, %v1533
      %v1541 = vpack.c.b16 %v1536, %v1535
      %v1542 = vpack.c.b16 %v1538, %v1537
      %v1548 = vsel %vm536, %v1488, 0
      %v1551 = vsel %vm536, %v1490, 0
      %v1554 = vsel %vm536, %v1492, 0
      %v1557 = vsel %vm536, %v1494, 0
      %v1560 = vsel %vm536, %v1496, 0
      %v1563 = vsel %vm536, %v1498, 0
      %v1566 = vsel %vm536, %v1500, 0
      %v1569 = vsel %vm536, %v1502, 0
      %v1572 = vsel %vm536, %v1504, 0
      %v1575 = vsel %vm536, %v1506, 0
      %v1578 = vsel %vm536, %v1508, 0
      %v1581 = vsel %vm536, %v1510, 0
      %v1584 = vsel %vm536, %v1512, 0
      %v1587 = vsel %vm536, %v1514, 0
      %v1590 = vsel %vm536, %v1516, 0
      %v1593 = vsel %vm536, %v1518, 0
      %v1596 = vsel %vm536, %v1520, 0
      %v1599 = vsel %vm536, %v1522, 0
      %1601 = vmatprep.subr.bf16.mxu0 0
      %1602 = vmatpush1.bf16.msra.mxu0 0
      %1603 = vmatprep.subr.bf16.mxu0 0
      %1604 = vmatpush1.bf16.msra.mxu0 0
      %1605 = vmatprep.subr.bf16.mxu0 0
      %1606 = vmatpush1.bf16.msra.mxu0 0
      %1607 = vmatprep.subr.bf16.mxu0 0
      %1608 = vmatpush1.bf16.msra.mxu0 0
      %1609 = vmatprep.subr.bf16.mxu0 0
      %1610 = vmatpush1.bf16.msra.mxu0 %v1542
      %1611 = vmatprep.subr.bf16.mxu0 0
      %1612 = vmatpush1.bf16.msra.mxu0 %v1541
      %1613 = vmatprep.subr.bf16.mxu0 0
      %1614 = vmatpush1.bf16.msra.mxu0 %v1540
      %1615 = vmatprep.subr.bf16.mxu0 0
      %1616 = vmatpush1.bf16.msra.mxu0 %v1539
      %1617 = vmatprep.subr.bf16.mxu0 0
      %1618 = vmatpush2.bf16.msra.mxu0 0
      %1619 = vmatprep.subr.bf16.mxu0 0
      %1620 = vmatpush2.bf16.msra.mxu0 0
      %1621 = vmatprep.subr.bf16.mxu0 0
      %1622 = vmatpush2.bf16.msra.mxu0 0
      %1623 = vmatprep.subr.bf16.mxu0 0
      %1624 = vmatpush2.bf16.msra.mxu0 0
      %1625 = vmatprep.subr.bf16.mxu0 0
      %1626 = vmatpush2.bf16.msra.mxu0 0
      %1627 = vmatprep.subr.bf16.mxu0 0
      %1628 = vmatpush2.bf16.msra.mxu0 0
      %1629 = vmatprep.subr.bf16.mxu0 0
      %1630 = vmatpush2.bf16.msra.mxu0 0
      %1631 = vmatprep.subr.bf16.mxu0 0
      %1632 = vmatpush2.bf16.msra.mxu0 0
      %1633 = vmatprep.mubr.bf16.mxu0 0
      %1634 = vmatmul.mubr.bf16.gmra.mxu0 %v1548
      %v1635 = vpop.f32.mrf.mxu0
      %v1636 = vadd.f32 0.0, %v1635
      %v1637 = vpop.f32.mrf.mxu0
      %v1638 = vpop.f32.mrf.mxu0
      %v1639 = vadd.f32 0.0, %v1638
      %v1640 = vpop.f32.mrf.mxu0
      %1641 = vmatprep.mubr.bf16.mxu0 0
      %1642 = vmatmul.mubr.bf16.gmra.mxu0 %v1551
      %v1643 = vpop.f32.mrf.mxu0
      %v1644 = vadd.f32 0.0, %v1643
      %v1645 = vpop.f32.mrf.mxu0
      %v1646 = vpop.f32.mrf.mxu0
      %v1647 = vadd.f32 0.0, %v1646
      %v1648 = vpop.f32.mrf.mxu0
      %1649 = vmatprep.mubr.bf16.mxu0 0
      %1650 = vmatmul.mubr.bf16.gmra.mxu0 %v1554
      %v1651 = vpop.f32.mrf.mxu0
      %v1652 = vadd.f32 0.0, %v1651
      %v1653 = vpop.f32.mrf.mxu0
      %v1654 = vpop.f32.mrf.mxu0
      %v1655 = vadd.f32 0.0, %v1654
      %v1656 = vpop.f32.mrf.mxu0
      %1657 = vmatprep.mubr.bf16.mxu0 0
      %1658 = vmatmul.mubr.bf16.gmra.mxu0 %v1557
      %v1659 = vpop.f32.mrf.mxu0
      %v1660 = vadd.f32 0.0, %v1659
      %v1661 = vpop.f32.mrf.mxu0
      %v1662 = vpop.f32.mrf.mxu0
      %v1663 = vadd.f32 0.0, %v1662
      %v1664 = vpop.f32.mrf.mxu0
      %1665 = vmatprep.mubr.bf16.mxu0 0
      %1666 = vmatmul.mubr.bf16.gmra.mxu0 %v1560
      %v1667 = vpop.f32.mrf.mxu0
      %v1668 = vadd.f32 0.0, %v1667
      %v1669 = vpop.f32.mrf.mxu0
      %v1670 = vpop.f32.mrf.mxu0
      %v1671 = vadd.f32 0.0, %v1670
      %v1672 = vpop.f32.mrf.mxu0
      %1673 = vmatprep.mubr.bf16.mxu0 0
      %1674 = vmatmul.mubr.bf16.gmra.mxu0 %v1563
      %v1675 = vpop.f32.mrf.mxu0
      %v1676 = vadd.f32 0.0, %v1675
      %v1677 = vpop.f32.mrf.mxu0
      %v1678 = vpop.f32.mrf.mxu0
      %v1679 = vadd.f32 0.0, %v1678
      %v1680 = vpop.f32.mrf.mxu0
      %1681 = vmatprep.mubr.bf16.mxu0 0
      %1682 = vmatmul.mubr.bf16.gmra.mxu0 %v1566
      %v1683 = vpop.f32.mrf.mxu0
      %v1684 = vadd.f32 0.0, %v1683
      %v1685 = vpop.f32.mrf.mxu0
      %v1686 = vpop.f32.mrf.mxu0
      %v1687 = vadd.f32 0.0, %v1686
      %v1688 = vpop.f32.mrf.mxu0
      %1689 = vmatprep.mubr.bf16.mxu0 0
      %1690 = vmatmul.mubr.bf16.gmra.mxu0 %v1569
      %v1691 = vpop.f32.mrf.mxu0
      %v1692 = vadd.f32 0.0, %v1691
      %v1693 = vpop.f32.mrf.mxu0
      %v1694 = vpop.f32.mrf.mxu0
      %v1695 = vadd.f32 0.0, %v1694
      %v1696 = vpop.f32.mrf.mxu0
      %1697 = vmatprep.mubr.bf16.mxu0 0
      %1698 = vmatmul.mubr.bf16.gmra.mxu0 %v1572
      %v1699 = vpop.f32.mrf.mxu0
      %v1700 = vadd.f32 0.0, %v1699
      %v1701 = vpop.f32.mrf.mxu0
      %v1702 = vpop.f32.mrf.mxu0
      %v1703 = vadd.f32 0.0, %v1702
      %v1704 = vpop.f32.mrf.mxu0
      %1705 = vmatprep.mubr.bf16.mxu0 0
      %1706 = vmatmul.mubr.bf16.gmra.mxu0 %v1575
      %v1707 = vpop.f32.mrf.mxu0
      %v1708 = vadd.f32 0.0, %v1707
      %v1709 = vpop.f32.mrf.mxu0
      %v1710 = vpop.f32.mrf.mxu0
      %v1711 = vadd.f32 0.0, %v1710
      %v1712 = vpop.f32.mrf.mxu0
      %1713 = vmatprep.mubr.bf16.mxu0 0
      %1714 = vmatmul.mubr.bf16.gmra.mxu0 %v1578
      %v1715 = vpop.f32.mrf.mxu0
      %v1716 = vadd.f32 0.0, %v1715
      %v1717 = vpop.f32.mrf.mxu0
      %v1718 = vpop.f32.mrf.mxu0
      %v1719 = vadd.f32 0.0, %v1718
      %v1720 = vpop.f32.mrf.mxu0
      %1721 = vmatprep.mubr.bf16.mxu0 0
      %1722 = vmatmul.mubr.bf16.gmra.mxu0 %v1581
      %v1723 = vpop.f32.mrf.mxu0
      %v1724 = vadd.f32 0.0, %v1723
      %v1725 = vpop.f32.mrf.mxu0
      %v1726 = vpop.f32.mrf.mxu0
      %v1727 = vadd.f32 0.0, %v1726
      %v1728 = vpop.f32.mrf.mxu0
      %1729 = vmatprep.mubr.bf16.mxu0 0
      %1730 = vmatmul.mubr.bf16.gmra.mxu0 %v1584
      %v1731 = vpop.f32.mrf.mxu0
      %v1732 = vadd.f32 0.0, %v1731
      %v1733 = vpop.f32.mrf.mxu0
      %v1734 = vpop.f32.mrf.mxu0
      %v1735 = vadd.f32 0.0, %v1734
      %v1736 = vpop.f32.mrf.mxu0
      %1737 = vmatprep.mubr.bf16.mxu0 0
      %1738 = vmatmul.mubr.bf16.gmra.mxu0 %v1587
      %v1739 = vpop.f32.mrf.mxu0
      %v1740 = vadd.f32 0.0, %v1739
      %v1741 = vpop.f32.mrf.mxu0
      %v1742 = vpop.f32.mrf.mxu0
      %v1743 = vadd.f32 0.0, %v1742
      %v1744 = vpop.f32.mrf.mxu0
      %1745 = vmatprep.mubr.bf16.mxu0 0
      %1746 = vmatmul.mubr.bf16.gmra.mxu0 %v1590
      %v1747 = vpop.f32.mrf.mxu0
      %v1748 = vadd.f32 0.0, %v1747
      %v1749 = vpop.f32.mrf.mxu0
      %v1750 = vpop.f32.mrf.mxu0
      %v1751 = vadd.f32 0.0, %v1750
      %v1752 = vpop.f32.mrf.mxu0
      %1753 = vmatprep.mubr.bf16.mxu0 0
      %1754 = vmatmul.mubr.bf16.gmra.mxu0 %v1593
      %v1755 = vpop.f32.mrf.mxu0
      %v1756 = vadd.f32 0.0, %v1755
      %v1757 = vpop.f32.mrf.mxu0
      %v1758 = vpop.f32.mrf.mxu0
      %v1759 = vadd.f32 0.0, %v1758
      %v1760 = vpop.f32.mrf.mxu0
      %1761 = vmatprep.mubr.bf16.mxu0 0
      %1762 = vmatmul.mubr.bf16.gmra.mxu0 %v1596
      %v1763 = vpop.f32.mrf.mxu0
      %v1764 = vadd.f32 0.0, %v1763
      %v1765 = vpop.f32.mrf.mxu0
      %v1766 = vpop.f32.mrf.mxu0
      %v1767 = vadd.f32 0.0, %v1766
      %v1768 = vpop.f32.mrf.mxu0
      %1769 = vmatprep.mubr.bf16.mxu0 0
      %1770 = vmatmul.mubr.bf16.gmra.mxu0 %v1599
      %v1771 = vpop.f32.mrf.mxu0
      %v1772 = vadd.f32 0.0, %v1771
      %v1773 = vpop.f32.mrf.mxu0
      %v1774 = vpop.f32.mrf.mxu0
      %v1775 = vadd.f32 0.0, %v1774
      %v1776 = vpop.f32.mrf.mxu0
      %1777 = vdwg.mxu0
      %v1778 = vadd.f32 %v1311, %v1636
      %v1779 = vadd.f32 %v1312, %v1639
      %v1780 = vadd.f32 %v1313, %v1644
      %v1781 = vadd.f32 %v1314, %v1647
      %v1782 = vadd.f32 %v1315, %v1652
      %v1783 = vadd.f32 %v1316, %v1655
      %v1784 = vadd.f32 %v1317, %v1660
      %v1785 = vadd.f32 %v1318, %v1663
      %v1786 = vadd.f32 %v1319, %v1668
      %v1787 = vadd.f32 %v1320, %v1671
      %v1788 = vadd.f32 %v1321, %v1676
      %v1789 = vadd.f32 %v1322, %v1679
      %v1790 = vadd.f32 %v1323, %v1684
      %v1791 = vadd.f32 %v1324, %v1687
      %v1792 = vadd.f32 %v1325, %v1692
      %v1793 = vadd.f32 %v1326, %v1695
      %v1794 = vadd.f32 %v1327, %v1700
      %v1795 = vadd.f32 %v1328, %v1703
      %v1796 = vadd.f32 %v1329, %v1708
      %v1797 = vadd.f32 %v1330, %v1711
      %v1798 = vadd.f32 %v1331, %v1716
      %v1799 = vadd.f32 %v1332, %v1719
      %v1800 = vadd.f32 %v1333, %v1724
      %v1801 = vadd.f32 %v1334, %v1727
      %v1802 = vadd.f32 %v1335, %v1732
      %v1803 = vadd.f32 %v1336, %v1735
      %v1804 = vadd.f32 %v1337, %v1740
      %v1805 = vadd.f32 %v1338, %v1743
      %v1806 = vadd.f32 %v1339, %v1748
      %v1807 = vadd.f32 %v1340, %v1751
      %v1808 = vadd.f32 %v1341, %v1756
      %v1809 = vadd.f32 %v1342, %v1759
      %v1810 = vadd.f32 %v1343, %v1764
      %v1811 = vadd.f32 %v1344, %v1767
      %v1812 = vadd.f32 %v1345, %v1772
      %v1813 = vadd.f32 %v1346, %v1775
      %v1814 = vld [vmem:[%s203 + $0x98] sm:$0x3]
      %s1815 = scalar_lea.vmem %s1, 128
      %v1816 = vld [vmem:[%s1815] sm:$0xf]
      %v1817 = vld [vmem:[%s1815 + $0x4] sm:$0xf]
      %v1818 = vld [vmem:[%s1815 + $0x8] sm:$0xf]
      %v1819 = vld [vmem:[%s1815 + $0xc] sm:$0xf]
      %v1820 = vld [vmem:[%s1815 + $0x10] sm:$0xf]
      %v1821 = vld [vmem:[%s1815 + $0x14] sm:$0xf]
      %v1822 = vld [vmem:[%s1815 + $0x18] sm:$0xf]
      %v1823 = vld [vmem:[%s1815 + $0x1c] sm:$0xf]
      %v1825 = vunpack.c.l.b16 %v1814
      %v1826 = vpack.c.b16 %v1825, %v1825
      %vm1827 = vsmask.f32 6400
      %v1829 = vshrl.u32 %v1467, 16
      %v1831 = vrot.slane %v1829, 1
      %v1832 = vshll.u32 %v1467, 16
      %v1834 = vrot.slane %v1832, 2
      %v1835 = vor.u32 %v1831, %v1834
      %v1837 = vshrl.u32 %v1468, 16
      %v1839 = vrot.slane %v1837, 1
      %v1840 = vshll.u32 %v1468, 16
      %v1842 = vrot.slane %v1840, 2
      %v1843 = vor.u32 %v1839, %v1842
      %v1844 = vsel %vm1827, %v1835, %v1843
      %v1846 = vshrl.u32 %v1469, 16
      %v1848 = vrot.slane %v1846, 1
      %v1849 = vshll.u32 %v1469, 16
      %v1851 = vrot.slane %v1849, 2
      %v1852 = vor.u32 %v1848, %v1851
      %v1853 = vsel %vm1827, %v1843, %v1852
      %v1855 = vshrl.u32 %v1470, 16
      %v1857 = vrot.slane %v1855, 1
      %v1858 = vshll.u32 %v1470, 16
      %v1860 = vrot.slane %v1858, 2
      %v1861 = vor.u32 %v1857, %v1860
      %v1862 = vsel %vm1827, %v1852, %v1861
      %v1864 = vshrl.u32 %v1471, 16
      %v1866 = vrot.slane %v1864, 1
      %v1867 = vshll.u32 %v1471, 16
      %v1869 = vrot.slane %v1867, 2
      %v1870 = vor.u32 %v1866, %v1869
      %v1871 = vsel %vm1827, %v1861, %v1870
      %v1873 = vshrl.u32 %v1472, 16
      %v1875 = vrot.slane %v1873, 1
      %v1876 = vshll.u32 %v1472, 16
      %v1878 = vrot.slane %v1876, 2
      %v1879 = vor.u32 %v1875, %v1878
      %v1880 = vsel %vm1827, %v1870, %v1879
      %v1882 = vshrl.u32 %v1473, 16
      %v1884 = vrot.slane %v1882, 1
      %v1885 = vshll.u32 %v1473, 16
      %v1887 = vrot.slane %v1885, 2
      %v1888 = vor.u32 %v1884, %v1887
      %v1889 = vsel %vm1827, %v1879, %v1888
      %v1891 = vshrl.u32 %v1474, 16
      %v1893 = vrot.slane %v1891, 1
      %v1894 = vshll.u32 %v1474, 16
      %v1896 = vrot.slane %v1894, 2
      %v1897 = vor.u32 %v1893, %v1896
      %v1898 = vsel %vm1827, %v1888, %v1897
      %v1900 = vshrl.u32 %v1475, 16
      %v1902 = vrot.slane %v1900, 1
      %v1903 = vshll.u32 %v1475, 16
      %v1905 = vrot.slane %v1903, 2
      %v1906 = vor.u32 %v1902, %v1905
      %v1907 = vsel %vm1827, %v1897, %v1906
      %v1909 = vshrl.u32 %v1476, 16
      %v1911 = vrot.slane %v1909, 1
      %v1912 = vshll.u32 %v1476, 16
      %v1914 = vrot.slane %v1912, 2
      %v1915 = vor.u32 %v1911, %v1914
      %v1916 = vsel %vm1827, %v1906, %v1915
      %v1918 = vshrl.u32 %v1477, 16
      %v1920 = vrot.slane %v1918, 1
      %v1921 = vshll.u32 %v1477, 16
      %v1923 = vrot.slane %v1921, 2
      %v1924 = vor.u32 %v1920, %v1923
      %v1925 = vsel %vm1827, %v1915, %v1924
      %v1927 = vshrl.u32 %v1478, 16
      %v1929 = vrot.slane %v1927, 1
      %v1930 = vshll.u32 %v1478, 16
      %v1932 = vrot.slane %v1930, 2
      %v1933 = vor.u32 %v1929, %v1932
      %v1934 = vsel %vm1827, %v1924, %v1933
      %v1936 = vshrl.u32 %v1479, 16
      %v1938 = vrot.slane %v1936, 1
      %v1939 = vshll.u32 %v1479, 16
      %v1941 = vrot.slane %v1939, 2
      %v1942 = vor.u32 %v1938, %v1941
      %v1943 = vsel %vm1827, %v1933, %v1942
      %v1945 = vshrl.u32 %v1480, 16
      %v1947 = vrot.slane %v1945, 1
      %v1948 = vshll.u32 %v1480, 16
      %v1950 = vrot.slane %v1948, 2
      %v1951 = vor.u32 %v1947, %v1950
      %v1952 = vsel %vm1827, %v1942, %v1951
      %v1954 = vshrl.u32 %v1481, 16
      %v1956 = vrot.slane %v1954, 1
      %v1957 = vshll.u32 %v1481, 16
      %v1959 = vrot.slane %v1957, 2
      %v1960 = vor.u32 %v1956, %v1959
      %v1961 = vsel %vm1827, %v1951, %v1960
      %v1963 = vshrl.u32 %v1482, 16
      %v1965 = vrot.slane %v1963, 1
      %v1966 = vshll.u32 %v1482, 16
      %v1968 = vrot.slane %v1966, 2
      %v1969 = vor.u32 %v1965, %v1968
      %v1970 = vsel %vm1827, %v1960, %v1969
      %v1972 = vshrl.u32 %v1483, 16
      %v1974 = vrot.slane %v1972, 1
      %v1975 = vshll.u32 %v1483, 16
      %v1977 = vrot.slane %v1975, 2
      %v1978 = vor.u32 %v1974, %v1977
      %v1979 = vsel %vm1827, %v1969, %v1978
      %v1981 = vshrl.u32 %v1484, 16
      %v1983 = vrot.slane %v1981, 1
      %v1984 = vshll.u32 %v1484, 16
      %v1986 = vrot.slane %v1984, 2
      %v1987 = vor.u32 %v1983, %v1986
      %v1988 = vsel %vm1827, %v1978, %v1987
      %v1990 = vshrl.u32 %v1826, 16
      %v1992 = vrot.slane %v1990, 1
      %v1993 = vshll.u32 %v1826, 16
      %v1995 = vrot.slane %v1993, 2
      %v1996 = vor.u32 %v1992, %v1995
      %v1997 = vsel %vm1827, %v1987, %v1996
      %v2006 = vunpack.c.l.b16 %v1816
      %v2007 = vunpack.c.l.b16 %v1817
      %v2008 = vunpack.c.l.b16 %v1818
      %v2009 = vunpack.c.l.b16 %v1819
      %v2010 = vunpack.c.l.b16 %v1820
      %v2011 = vunpack.c.l.b16 %v1821
      %v2012 = vunpack.c.l.b16 %v1822
      %v2013 = vunpack.c.l.b16 %v1823
      %v2014 = vpack.c.b16 %v2007, %v2006
      %v2015 = vpack.c.b16 %v2009, %v2008
      %v2016 = vpack.c.b16 %v2011, %v2010
      %v2017 = vpack.c.b16 %v2013, %v2012
      %v2023 = vsel %vm536, %v1844, 0
      %v2026 = vsel %vm536, %v1853, 0
      %v2029 = vsel %vm536, %v1862, 0
      %v2032 = vsel %vm536, %v1871, 0
      %v2035 = vsel %vm536, %v1880, 0
      %v2038 = vsel %vm536, %v1889, 0
      %v2041 = vsel %vm536, %v1898, 0
      %v2044 = vsel %vm536, %v1907, 0
      %v2047 = vsel %vm536, %v1916, 0
      %v2050 = vsel %vm536, %v1925, 0
      %v2053 = vsel %vm536, %v1934, 0
      %v2056 = vsel %vm536, %v1943, 0
      %v2059 = vsel %vm536, %v1952, 0
      %v2062 = vsel %vm536, %v1961, 0
      %v2065 = vsel %vm536, %v1970, 0
      %v2068 = vsel %vm536, %v1979, 0
      %v2071 = vsel %vm536, %v1988, 0
      %v2074 = vsel %vm536, %v1997, 0
      %2076 = vmatprep.subr.bf16.mxu0 0
      %2077 = vmatpush1.bf16.msra.mxu0 0
      %2078 = vmatprep.subr.bf16.mxu0 0
      %2079 = vmatpush1.bf16.msra.mxu0 0
      %2080 = vmatprep.subr.bf16.mxu0 0
      %2081 = vmatpush1.bf16.msra.mxu0 0
      %2082 = vmatprep.subr.bf16.mxu0 0
      %2083 = vmatpush1.bf16.msra.mxu0 0
      %2084 = vmatprep.subr.bf16.mxu0 0
      %2085 = vmatpush1.bf16.msra.mxu0 %v2017
      %2086 = vmatprep.subr.bf16.mxu0 0
      %2087 = vmatpush1.bf16.msra.mxu0 %v2016
      %2088 = vmatprep.subr.bf16.mxu0 0
      %2089 = vmatpush1.bf16.msra.mxu0 %v2015
      %2090 = vmatprep.subr.bf16.mxu0 0
      %2091 = vmatpush1.bf16.msra.mxu0 %v2014
      %2092 = vmatprep.subr.bf16.mxu0 0
      %2093 = vmatpush2.bf16.msra.mxu0 0
      %2094 = vmatprep.subr.bf16.mxu0 0
      %2095 = vmatpush2.bf16.msra.mxu0 0
      %2096 = vmatprep.subr.bf16.mxu0 0
      %2097 = vmatpush2.bf16.msra.mxu0 0
      %2098 = vmatprep.subr.bf16.mxu0 0
      %2099 = vmatpush2.bf16.msra.mxu0 0
      %2100 = vmatprep.subr.bf16.mxu0 0
      %2101 = vmatpush2.bf16.msra.mxu0 0
      %2102 = vmatprep.subr.bf16.mxu0 0
      %2103 = vmatpush2.bf16.msra.mxu0 0
      %2104 = vmatprep.subr.bf16.mxu0 0
      %2105 = vmatpush2.bf16.msra.mxu0 0
      %2106 = vmatprep.subr.bf16.mxu0 0
      %2107 = vmatpush2.bf16.msra.mxu0 0
      %2108 = vmatprep.mubr.bf16.mxu0 0
      %2109 = vmatmul.mubr.bf16.gmra.mxu0 %v2023
      %v2110 = vpop.f32.mrf.mxu0
      %v2111 = vadd.f32 0.0, %v2110
      %v2112 = vpop.f32.mrf.mxu0
      %v2113 = vpop.f32.mrf.mxu0
      %v2114 = vadd.f32 0.0, %v2113
      %v2115 = vpop.f32.mrf.mxu0
      %2116 = vmatprep.mubr.bf16.mxu0 0
      %2117 = vmatmul.mubr.bf16.gmra.mxu0 %v2026
      %v2118 = vpop.f32.mrf.mxu0
      %v2119 = vadd.f32 0.0, %v2118
      %v2120 = vpop.f32.mrf.mxu0
      %v2121 = vpop.f32.mrf.mxu0
      %v2122 = vadd.f32 0.0, %v2121
      %v2123 = vpop.f32.mrf.mxu0
      %2124 = vmatprep.mubr.bf16.mxu0 0
      %2125 = vmatmul.mubr.bf16.gmra.mxu0 %v2029
      %v2126 = vpop.f32.mrf.mxu0
      %v2127 = vadd.f32 0.0, %v2126
      %v2128 = vpop.f32.mrf.mxu0
      %v2129 = vpop.f32.mrf.mxu0
      %v2130 = vadd.f32 0.0, %v2129
      %v2131 = vpop.f32.mrf.mxu0
      %2132 = vmatprep.mubr.bf16.mxu0 0
      %2133 = vmatmul.mubr.bf16.gmra.mxu0 %v2032
      %v2134 = vpop.f32.mrf.mxu0
      %v2135 = vadd.f32 0.0, %v2134
      %v2136 = vpop.f32.mrf.mxu0
      %v2137 = vpop.f32.mrf.mxu0
      %v2138 = vadd.f32 0.0, %v2137
      %v2139 = vpop.f32.mrf.mxu0
      %2140 = vmatprep.mubr.bf16.mxu0 0
      %2141 = vmatmul.mubr.bf16.gmra.mxu0 %v2035
      %v2142 = vpop.f32.mrf.mxu0
      %v2143 = vadd.f32 0.0, %v2142
      %v2144 = vpop.f32.mrf.mxu0
      %v2145 = vpop.f32.mrf.mxu0
      %v2146 = vadd.f32 0.0, %v2145
      %v2147 = vpop.f32.mrf.mxu0
      %2148 = vmatprep.mubr.bf16.mxu0 0
      %2149 = vmatmul.mubr.bf16.gmra.mxu0 %v2038
      %v2150 = vpop.f32.mrf.mxu0
      %v2151 = vadd.f32 0.0, %v2150
      %v2152 = vpop.f32.mrf.mxu0
      %v2153 = vpop.f32.mrf.mxu0
      %v2154 = vadd.f32 0.0, %v2153
      %v2155 = vpop.f32.mrf.mxu0
      %2156 = vmatprep.mubr.bf16.mxu0 0
      %2157 = vmatmul.mubr.bf16.gmra.mxu0 %v2041
      %v2158 = vpop.f32.mrf.mxu0
      %v2159 = vadd.f32 0.0, %v2158
      %v2160 = vpop.f32.mrf.mxu0
      %v2161 = vpop.f32.mrf.mxu0
      %v2162 = vadd.f32 0.0, %v2161
      %v2163 = vpop.f32.mrf.mxu0
      %2164 = vmatprep.mubr.bf16.mxu0 0
      %2165 = vmatmul.mubr.bf16.gmra.mxu0 %v2044
      %v2166 = vpop.f32.mrf.mxu0
      %v2167 = vadd.f32 0.0, %v2166
      %v2168 = vpop.f32.mrf.mxu0
      %v2169 = vpop.f32.mrf.mxu0
      %v2170 = vadd.f32 0.0, %v2169
      %v2171 = vpop.f32.mrf.mxu0
      %2172 = vmatprep.mubr.bf16.mxu0 0
      %2173 = vmatmul.mubr.bf16.gmra.mxu0 %v2047
      %v2174 = vpop.f32.mrf.mxu0
      %v2175 = vadd.f32 0.0, %v2174
      %v2176 = vpop.f32.mrf.mxu0
      %v2177 = vpop.f32.mrf.mxu0
      %v2178 = vadd.f32 0.0, %v2177
      %v2179 = vpop.f32.mrf.mxu0
      %2180 = vmatprep.mubr.bf16.mxu0 0
      %2181 = vmatmul.mubr.bf16.gmra.mxu0 %v2050
      %v2182 = vpop.f32.mrf.mxu0
      %v2183 = vadd.f32 0.0, %v2182
      %v2184 = vpop.f32.mrf.mxu0
      %v2185 = vpop.f32.mrf.mxu0
      %v2186 = vadd.f32 0.0, %v2185
      %v2187 = vpop.f32.mrf.mxu0
      %2188 = vmatprep.mubr.bf16.mxu0 0
      %2189 = vmatmul.mubr.bf16.gmra.mxu0 %v2053
      %v2190 = vpop.f32.mrf.mxu0
      %v2191 = vadd.f32 0.0, %v2190
      %v2192 = vpop.f32.mrf.mxu0
      %v2193 = vpop.f32.mrf.mxu0
      %v2194 = vadd.f32 0.0, %v2193
      %v2195 = vpop.f32.mrf.mxu0
      %2196 = vmatprep.mubr.bf16.mxu0 0
      %2197 = vmatmul.mubr.bf16.gmra.mxu0 %v2056
      %v2198 = vpop.f32.mrf.mxu0
      %v2199 = vadd.f32 0.0, %v2198
      %v2200 = vpop.f32.mrf.mxu0
      %v2201 = vpop.f32.mrf.mxu0
      %v2202 = vadd.f32 0.0, %v2201
      %v2203 = vpop.f32.mrf.mxu0
      %2204 = vmatprep.mubr.bf16.mxu0 0
      %2205 = vmatmul.mubr.bf16.gmra.mxu0 %v2059
      %v2206 = vpop.f32.mrf.mxu0
      %v2207 = vadd.f32 0.0, %v2206
      %v2208 = vpop.f32.mrf.mxu0
      %v2209 = vpop.f32.mrf.mxu0
      %v2210 = vadd.f32 0.0, %v2209
      %v2211 = vpop.f32.mrf.mxu0
      %2212 = vmatprep.mubr.bf16.mxu0 0
      %2213 = vmatmul.mubr.bf16.gmra.mxu0 %v2062
      %v2214 = vpop.f32.mrf.mxu0
      %v2215 = vadd.f32 0.0, %v2214
      %v2216 = vpop.f32.mrf.mxu0
      %v2217 = vpop.f32.mrf.mxu0
      %v2218 = vadd.f32 0.0, %v2217
      %v2219 = vpop.f32.mrf.mxu0
      %2220 = vmatprep.mubr.bf16.mxu0 0
      %2221 = vmatmul.mubr.bf16.gmra.mxu0 %v2065
      %v2222 = vpop.f32.mrf.mxu0
      %v2223 = vadd.f32 0.0, %v2222
      %v2224 = vpop.f32.mrf.mxu0
      %v2225 = vpop.f32.mrf.mxu0
      %v2226 = vadd.f32 0.0, %v2225
      %v2227 = vpop.f32.mrf.mxu0
      %2228 = vmatprep.mubr.bf16.mxu0 0
      %2229 = vmatmul.mubr.bf16.gmra.mxu0 %v2068
      %v2230 = vpop.f32.mrf.mxu0
      %v2231 = vadd.f32 0.0, %v2230
      %v2232 = vpop.f32.mrf.mxu0
      %v2233 = vpop.f32.mrf.mxu0
      %v2234 = vadd.f32 0.0, %v2233
      %v2235 = vpop.f32.mrf.mxu0
      %2236 = vmatprep.mubr.bf16.mxu0 0
      %2237 = vmatmul.mubr.bf16.gmra.mxu0 %v2071
      %v2238 = vpop.f32.mrf.mxu0
      %v2239 = vadd.f32 0.0, %v2238
      %v2240 = vpop.f32.mrf.mxu0
      %v2241 = vpop.f32.mrf.mxu0
      %v2242 = vadd.f32 0.0, %v2241
      %v2243 = vpop.f32.mrf.mxu0
      %2244 = vmatprep.mubr.bf16.mxu0 0
      %2245 = vmatmul.mubr.bf16.gmra.mxu0 %v2074
      %v2246 = vpop.f32.mrf.mxu0
      %v2247 = vadd.f32 0.0, %v2246
      %v2248 = vpop.f32.mrf.mxu0
      %v2249 = vpop.f32.mrf.mxu0
      %v2250 = vadd.f32 0.0, %v2249
      %v2251 = vpop.f32.mrf.mxu0
      %2252 = vdwg.mxu0
      %v2253 = vadd.f32 %v1778, %v2111
      %v2254 = vadd.f32 %v1779, %v2114
      %v2255 = vadd.f32 %v1780, %v2119
      %v2256 = vadd.f32 %v1781, %v2122
      %v2257 = vadd.f32 %v1782, %v2127
      %v2258 = vadd.f32 %v1783, %v2130
      %v2259 = vadd.f32 %v1784, %v2135
      %v2260 = vadd.f32 %v1785, %v2138
      %v2261 = vadd.f32 %v1786, %v2143
      %v2262 = vadd.f32 %v1787, %v2146
      %v2263 = vadd.f32 %v1788, %v2151
      %v2264 = vadd.f32 %v1789, %v2154
      %v2265 = vadd.f32 %v1790, %v2159
      %v2266 = vadd.f32 %v1791, %v2162
      %v2267 = vadd.f32 %v1792, %v2167
      %v2268 = vadd.f32 %v1793, %v2170
      %v2269 = vadd.f32 %v1794, %v2175
      %v2270 = vadd.f32 %v1795, %v2178
      %v2271 = vadd.f32 %v1796, %v2183
      %v2272 = vadd.f32 %v1797, %v2186
      %v2273 = vadd.f32 %v1798, %v2191
      %v2274 = vadd.f32 %v1799, %v2194
      %v2275 = vadd.f32 %v1800, %v2199
      %v2276 = vadd.f32 %v1801, %v2202
      %v2277 = vadd.f32 %v1802, %v2207
      %v2278 = vadd.f32 %v1803, %v2210
      %v2279 = vadd.f32 %v1804, %v2215
      %v2280 = vadd.f32 %v1805, %v2218
      %v2281 = vadd.f32 %v1806, %v2223
      %v2282 = vadd.f32 %v1807, %v2226
      %v2283 = vadd.f32 %v1808, %v2231
      %v2284 = vadd.f32 %v1809, %v2234
      %v2285 = vadd.f32 %v1810, %v2239
      %v2286 = vadd.f32 %v1811, %v2242
      %v2287 = vadd.f32 %v1812, %v2247
      %v2288 = vadd.f32 %v1813, %v2250
      %v2289 = vld [vmem:[%s203 + $0x8] sm:$0xc]
      %s2290 = scalar_lea.vmem %s1, 160
      %v2291 = vld [vmem:[%s2290] sm:$0xf]
      %v2292 = vld [vmem:[%s2290 + $0x4] sm:$0xf]
      %v2293 = vld [vmem:[%s2290 + $0x8] sm:$0xf]
      %v2294 = vld [vmem:[%s2290 + $0xc] sm:$0xf]
      %v2295 = vld [vmem:[%s2290 + $0x10] sm:$0xf]
      %v2296 = vld [vmem:[%s2290 + $0x14] sm:$0xf]
      %v2297 = vld [vmem:[%s2290 + $0x18] sm:$0xf]
      %v2298 = vld [vmem:[%s2290 + $0x1c] sm:$0xf]
      %v2300 = vunpack.c.l.b16 %v2289
      %v2301 = vpack.c.b16 %v1431, %v2300
      %vm2302 = vcmask 1045504
      %v2303 = vrot.slane %v2301, 2
      %v2304 = vrot.slane %v1468, 2
      %v2305 = vsel %vm2302, %v2303, %v2304
      %v2306 = vrot.slane %v1469, 2
      %v2307 = vsel %vm2302, %v2304, %v2306
      %v2308 = vrot.slane %v1470, 2
      %v2309 = vsel %vm2302, %v2306, %v2308
      %v2310 = vrot.slane %v1471, 2
      %v2311 = vsel %vm2302, %v2308, %v2310
      %v2312 = vrot.slane %v1472, 2
      %v2313 = vsel %vm2302, %v2310, %v2312
      %v2314 = vrot.slane %v1473, 2
      %v2315 = vsel %vm2302, %v2312, %v2314
      %v2316 = vrot.slane %v1474, 2
      %v2317 = vsel %vm2302, %v2314, %v2316
      %v2318 = vrot.slane %v1475, 2
      %v2319 = vsel %vm2302, %v2316, %v2318
      %v2320 = vrot.slane %v1476, 2
      %v2321 = vsel %vm2302, %v2318, %v2320
      %v2322 = vrot.slane %v1477, 2
      %v2323 = vsel %vm2302, %v2320, %v2322
      %v2324 = vrot.slane %v1478, 2
      %v2325 = vsel %vm2302, %v2322, %v2324
      %v2326 = vrot.slane %v1479, 2
      %v2327 = vsel %vm2302, %v2324, %v2326
      %v2328 = vrot.slane %v1480, 2
      %v2329 = vsel %vm2302, %v2326, %v2328
      %v2330 = vrot.slane %v1481, 2
      %v2331 = vsel %vm2302, %v2328, %v2330
      %v2332 = vrot.slane %v1482, 2
      %v2333 = vsel %vm2302, %v2330, %v2332
      %v2334 = vrot.slane %v1483, 2
      %v2335 = vsel %vm2302, %v2332, %v2334
      %v2336 = vrot.slane %v1484, 2
      %v2337 = vsel %vm2302, %v2334, %v2336
      %v2338 = vrot.slane %v1826, 2
      %v2339 = vsel %vm2302, %v2336, %v2338
      %v2348 = vunpack.c.l.b16 %v2291
      %v2349 = vunpack.c.l.b16 %v2292
      %v2350 = vunpack.c.l.b16 %v2293
      %v2351 = vunpack.c.l.b16 %v2294
      %v2352 = vunpack.c.l.b16 %v2295
      %v2353 = vunpack.c.l.b16 %v2296
      %v2354 = vunpack.c.l.b16 %v2297
      %v2355 = vunpack.c.l.b16 %v2298
      %v2356 = vpack.c.b16 %v2349, %v2348
      %v2357 = vpack.c.b16 %v2351, %v2350
      %v2358 = vpack.c.b16 %v2353, %v2352
      %v2359 = vpack.c.b16 %v2355, %v2354
      %v2365 = vsel %vm536, %v2305, 0
      %v2368 = vsel %vm536, %v2307, 0
      %v2371 = vsel %vm536, %v2309, 0
      %v2374 = vsel %vm536, %v2311, 0
      %v2377 = vsel %vm536, %v2313, 0
      %v2380 = vsel %vm536, %v2315, 0
      %v2383 = vsel %vm536, %v2317, 0
      %v2386 = vsel %vm536, %v2319, 0
      %v2389 = vsel %vm536, %v2321, 0
      %v2392 = vsel %vm536, %v2323, 0
      %v2395 = vsel %vm536, %v2325, 0
      %v2398 = vsel %vm536, %v2327, 0
      %v2401 = vsel %vm536, %v2329, 0
      %v2404 = vsel %vm536, %v2331, 0
      %v2407 = vsel %vm536, %v2333, 0
      %v2410 = vsel %vm536, %v2335, 0
      %v2413 = vsel %vm536, %v2337, 0
      %v2416 = vsel %vm536, %v2339, 0
      %2418 = vmatprep.subr.bf16.mxu0 0
      %2419 = vmatpush1.bf16.msra.mxu0 0
      %2420 = vmatprep.subr.bf16.mxu0 0
      %2421 = vmatpush1.bf16.msra.mxu0 0
      %2422 = vmatprep.subr.bf16.mxu0 0
      %2423 = vmatpush1.bf16.msra.mxu0 0
      %2424 = vmatprep.subr.bf16.mxu0 0
      %2425 = vmatpush1.bf16.msra.mxu0 0
      %2426 = vmatprep.subr.bf16.mxu0 0
      %2427 = vmatpush1.bf16.msra.mxu0 %v2359
      %2428 = vmatprep.subr.bf16.mxu0 0
      %2429 = vmatpush1.bf16.msra.mxu0 %v2358
      %2430 = vmatprep.subr.bf16.mxu0 0
      %2431 = vmatpush1.bf16.msra.mxu0 %v2357
      %2432 = vmatprep.subr.bf16.mxu0 0
      %2433 = vmatpush1.bf16.msra.mxu0 %v2356
      %2434 = vmatprep.subr.bf16.mxu0 0
      %2435 = vmatpush2.bf16.msra.mxu0 0
      %2436 = vmatprep.subr.bf16.mxu0 0
      %2437 = vmatpush2.bf16.msra.mxu0 0
      %2438 = vmatprep.subr.bf16.mxu0 0
      %2439 = vmatpush2.bf16.msra.mxu0 0
      %2440 = vmatprep.subr.bf16.mxu0 0
      %2441 = vmatpush2.bf16.msra.mxu0 0
      %2442 = vmatprep.subr.bf16.mxu0 0
      %2443 = vmatpush2.bf16.msra.mxu0 0
      %2444 = vmatprep.subr.bf16.mxu0 0
      %2445 = vmatpush2.bf16.msra.mxu0 0
      %2446 = vmatprep.subr.bf16.mxu0 0
      %2447 = vmatpush2.bf16.msra.mxu0 0
      %2448 = vmatprep.subr.bf16.mxu0 0
      %2449 = vmatpush2.bf16.msra.mxu0 0
      %2450 = vmatprep.mubr.bf16.mxu0 0
      %2451 = vmatmul.mubr.bf16.gmra.mxu0 %v2365
      %v2452 = vpop.f32.mrf.mxu0
      %v2453 = vadd.f32 0.0, %v2452
      %v2454 = vpop.f32.mrf.mxu0
      %v2455 = vpop.f32.mrf.mxu0
      %v2456 = vadd.f32 0.0, %v2455
      %v2457 = vpop.f32.mrf.mxu0
      %2458 = vmatprep.mubr.bf16.mxu0 0
      %2459 = vmatmul.mubr.bf16.gmra.mxu0 %v2368
      %v2460 = vpop.f32.mrf.mxu0
      %v2461 = vadd.f32 0.0, %v2460
      %v2462 = vpop.f32.mrf.mxu0
      %v2463 = vpop.f32.mrf.mxu0
      %v2464 = vadd.f32 0.0, %v2463
      %v2465 = vpop.f32.mrf.mxu0
      %2466 = vmatprep.mubr.bf16.mxu0 0
      %2467 = vmatmul.mubr.bf16.gmra.mxu0 %v2371
      %v2468 = vpop.f32.mrf.mxu0
      %v2469 = vadd.f32 0.0, %v2468
      %v2470 = vpop.f32.mrf.mxu0
      %v2471 = vpop.f32.mrf.mxu0
      %v2472 = vadd.f32 0.0, %v2471
      %v2473 = vpop.f32.mrf.mxu0
      %2474 = vmatprep.mubr.bf16.mxu0 0
      %2475 = vmatmul.mubr.bf16.gmra.mxu0 %v2374
      %v2476 = vpop.f32.mrf.mxu0
      %v2477 = vadd.f32 0.0, %v2476
      %v2478 = vpop.f32.mrf.mxu0
      %v2479 = vpop.f32.mrf.mxu0
      %v2480 = vadd.f32 0.0, %v2479
      %v2481 = vpop.f32.mrf.mxu0
      %2482 = vmatprep.mubr.bf16.mxu0 0
      %2483 = vmatmul.mubr.bf16.gmra.mxu0 %v2377
      %v2484 = vpop.f32.mrf.mxu0
      %v2485 = vadd.f32 0.0, %v2484
      %v2486 = vpop.f32.mrf.mxu0
      %v2487 = vpop.f32.mrf.mxu0
      %v2488 = vadd.f32 0.0, %v2487
      %v2489 = vpop.f32.mrf.mxu0
      %2490 = vmatprep.mubr.bf16.mxu0 0
      %2491 = vmatmul.mubr.bf16.gmra.mxu0 %v2380
      %v2492 = vpop.f32.mrf.mxu0
      %v2493 = vadd.f32 0.0, %v2492
      %v2494 = vpop.f32.mrf.mxu0
      %v2495 = vpop.f32.mrf.mxu0
      %v2496 = vadd.f32 0.0, %v2495
      %v2497 = vpop.f32.mrf.mxu0
      %2498 = vmatprep.mubr.bf16.mxu0 0
      %2499 = vmatmul.mubr.bf16.gmra.mxu0 %v2383
      %v2500 = vpop.f32.mrf.mxu0
      %v2501 = vadd.f32 0.0, %v2500
      %v2502 = vpop.f32.mrf.mxu0
      %v2503 = vpop.f32.mrf.mxu0
      %v2504 = vadd.f32 0.0, %v2503
      %v2505 = vpop.f32.mrf.mxu0
      %2506 = vmatprep.mubr.bf16.mxu0 0
      %2507 = vmatmul.mubr.bf16.gmra.mxu0 %v2386
      %v2508 = vpop.f32.mrf.mxu0
      %v2509 = vadd.f32 0.0, %v2508
      %v2510 = vpop.f32.mrf.mxu0
      %v2511 = vpop.f32.mrf.mxu0
      %v2512 = vadd.f32 0.0, %v2511
      %v2513 = vpop.f32.mrf.mxu0
      %2514 = vmatprep.mubr.bf16.mxu0 0
      %2515 = vmatmul.mubr.bf16.gmra.mxu0 %v2389
      %v2516 = vpop.f32.mrf.mxu0
      %v2517 = vadd.f32 0.0, %v2516
      %v2518 = vpop.f32.mrf.mxu0
      %v2519 = vpop.f32.mrf.mxu0
      %v2520 = vadd.f32 0.0, %v2519
      %v2521 = vpop.f32.mrf.mxu0
      %2522 = vmatprep.mubr.bf16.mxu0 0
      %2523 = vmatmul.mubr.bf16.gmra.mxu0 %v2392
      %v2524 = vpop.f32.mrf.mxu0
      %v2525 = vadd.f32 0.0, %v2524
      %v2526 = vpop.f32.mrf.mxu0
      %v2527 = vpop.f32.mrf.mxu0
      %v2528 = vadd.f32 0.0, %v2527
      %v2529 = vpop.f32.mrf.mxu0
      %2530 = vmatprep.mubr.bf16.mxu0 0
      %2531 = vmatmul.mubr.bf16.gmra.mxu0 %v2395
      %v2532 = vpop.f32.mrf.mxu0
      %v2533 = vadd.f32 0.0, %v2532
      %v2534 = vpop.f32.mrf.mxu0
      %v2535 = vpop.f32.mrf.mxu0
      %v2536 = vadd.f32 0.0, %v2535
      %v2537 = vpop.f32.mrf.mxu0
      %2538 = vmatprep.mubr.bf16.mxu0 0
      %2539 = vmatmul.mubr.bf16.gmra.mxu0 %v2398
      %v2540 = vpop.f32.mrf.mxu0
      %v2541 = vadd.f32 0.0, %v2540
      %v2542 = vpop.f32.mrf.mxu0
      %v2543 = vpop.f32.mrf.mxu0
      %v2544 = vadd.f32 0.0, %v2543
      %v2545 = vpop.f32.mrf.mxu0
      %2546 = vmatprep.mubr.bf16.mxu0 0
      %2547 = vmatmul.mubr.bf16.gmra.mxu0 %v2401
      %v2548 = vpop.f32.mrf.mxu0
      %v2549 = vadd.f32 0.0, %v2548
      %v2550 = vpop.f32.mrf.mxu0
      %v2551 = vpop.f32.mrf.mxu0
      %v2552 = vadd.f32 0.0, %v2551
      %v2553 = vpop.f32.mrf.mxu0
      %2554 = vmatprep.mubr.bf16.mxu0 0
      %2555 = vmatmul.mubr.bf16.gmra.mxu0 %v2404
      %v2556 = vpop.f32.mrf.mxu0
      %v2557 = vadd.f32 0.0, %v2556
      %v2558 = vpop.f32.mrf.mxu0
      %v2559 = vpop.f32.mrf.mxu0
      %v2560 = vadd.f32 0.0, %v2559
      %v2561 = vpop.f32.mrf.mxu0
      %2562 = vmatprep.mubr.bf16.mxu0 0
      %2563 = vmatmul.mubr.bf16.gmra.mxu0 %v2407
      %v2564 = vpop.f32.mrf.mxu0
      %v2565 = vadd.f32 0.0, %v2564
      %v2566 = vpop.f32.mrf.mxu0
      %v2567 = vpop.f32.mrf.mxu0
      %v2568 = vadd.f32 0.0, %v2567
      %v2569 = vpop.f32.mrf.mxu0
      %2570 = vmatprep.mubr.bf16.mxu0 0
      %2571 = vmatmul.mubr.bf16.gmra.mxu0 %v2410
      %v2572 = vpop.f32.mrf.mxu0
      %v2573 = vadd.f32 0.0, %v2572
      %v2574 = vpop.f32.mrf.mxu0
      %v2575 = vpop.f32.mrf.mxu0
      %v2576 = vadd.f32 0.0, %v2575
      %v2577 = vpop.f32.mrf.mxu0
      %2578 = vmatprep.mubr.bf16.mxu0 0
      %2579 = vmatmul.mubr.bf16.gmra.mxu0 %v2413
      %v2580 = vpop.f32.mrf.mxu0
      %v2581 = vadd.f32 0.0, %v2580
      %v2582 = vpop.f32.mrf.mxu0
      %v2583 = vpop.f32.mrf.mxu0
      %v2584 = vadd.f32 0.0, %v2583
      %v2585 = vpop.f32.mrf.mxu0
      %2586 = vmatprep.mubr.bf16.mxu0 0
      %2587 = vmatmul.mubr.bf16.gmra.mxu0 %v2416
      %v2588 = vpop.f32.mrf.mxu0
      %v2589 = vadd.f32 0.0, %v2588
      %v2590 = vpop.f32.mrf.mxu0
      %v2591 = vpop.f32.mrf.mxu0
      %v2592 = vadd.f32 0.0, %v2591
      %v2593 = vpop.f32.mrf.mxu0
      %2594 = vdwg.mxu0
      %v2595 = vadd.f32 %v2253, %v2453
      %v2596 = vadd.f32 %v2254, %v2456
      %v2597 = vadd.f32 %v2255, %v2461
      %v2598 = vadd.f32 %v2256, %v2464
      %v2599 = vadd.f32 %v2257, %v2469
      %v2600 = vadd.f32 %v2258, %v2472
      %v2601 = vadd.f32 %v2259, %v2477
      %v2602 = vadd.f32 %v2260, %v2480
      %v2603 = vadd.f32 %v2261, %v2485
      %v2604 = vadd.f32 %v2262, %v2488
      %v2605 = vadd.f32 %v2263, %v2493
      %v2606 = vadd.f32 %v2264, %v2496
      %v2607 = vadd.f32 %v2265, %v2501
      %v2608 = vadd.f32 %v2266, %v2504
      %v2609 = vadd.f32 %v2267, %v2509
      %v2610 = vadd.f32 %v2268, %v2512
      %v2611 = vadd.f32 %v2269, %v2517
      %v2612 = vadd.f32 %v2270, %v2520
      %v2613 = vadd.f32 %v2271, %v2525
      %v2614 = vadd.f32 %v2272, %v2528
      %v2615 = vadd.f32 %v2273, %v2533
      %v2616 = vadd.f32 %v2274, %v2536
      %v2617 = vadd.f32 %v2275, %v2541
      %v2618 = vadd.f32 %v2276, %v2544
      %v2619 = vadd.f32 %v2277, %v2549
      %v2620 = vadd.f32 %v2278, %v2552
      %v2621 = vadd.f32 %v2279, %v2557
      %v2622 = vadd.f32 %v2280, %v2560
      %v2623 = vadd.f32 %v2281, %v2565
      %v2624 = vadd.f32 %v2282, %v2568
      %v2625 = vadd.f32 %v2283, %v2573
      %v2626 = vadd.f32 %v2284, %v2576
      %v2627 = vadd.f32 %v2285, %v2581
      %v2628 = vadd.f32 %v2286, %v2584
      %v2629 = vadd.f32 %v2287, %v2589
      %v2630 = vadd.f32 %v2288, %v2592
      %v2631 = vld [vmem:[%s203 + $0x10] sm:$0xc]
      %v2632 = vld [vmem:[%s203 + $0x14] sm:$0xf]
      %v2633 = vld [vmem:[%s203 + $0x18] sm:$0xf]
      %v2634 = vld [vmem:[%s203 + $0x1c] sm:$0xf]
      %v2635 = vld [vmem:[%s203 + $0x20] sm:$0xf]
      %v2636 = vld [vmem:[%s203 + $0x24] sm:$0xf]
      %v2637 = vld [vmem:[%s203 + $0x28] sm:$0xf]
      %v2638 = vld [vmem:[%s203 + $0x2c] sm:$0xf]
      %v2639 = vld [vmem:[%s203 + $0x30] sm:$0xf]
      %v2640 = vld [vmem:[%s203 + $0x34] sm:$0xf]
      %v2641 = vld [vmem:[%s203 + $0x38] sm:$0xf]
      %v2642 = vld [vmem:[%s203 + $0x3c] sm:$0xf]
      %v2643 = vld [vmem:[%s203 + $0x40] sm:$0xf]
      %v2644 = vld [vmem:[%s203 + $0x44] sm:$0xf]
      %v2645 = vld [vmem:[%s203 + $0x48] sm:$0xf]
      %v2646 = vld [vmem:[%s203 + $0x4c] sm:$0xf]
      %v2647 = vld [vmem:[%s203 + $0x50] sm:$0xf]
      %v2648 = vld [vmem:[%s203 + $0x54] sm:$0xf]
      %v2649 = vld [vmem:[%s203 + $0x58] sm:$0xf]
      %v2650 = vld [vmem:[%s203 + $0x5c] sm:$0xf]
      %v2651 = vld [vmem:[%s203 + $0x60] sm:$0xf]
      %v2652 = vld [vmem:[%s203 + $0x64] sm:$0xf]
      %v2653 = vld [vmem:[%s203 + $0x68] sm:$0xf]
      %v2654 = vld [vmem:[%s203 + $0x6c] sm:$0xf]
      %v2655 = vld [vmem:[%s203 + $0x70] sm:$0xf]
      %v2656 = vld [vmem:[%s203 + $0x74] sm:$0xf]
      %v2657 = vld [vmem:[%s203 + $0x78] sm:$0xf]
      %v2658 = vld [vmem:[%s203 + $0x7c] sm:$0xf]
      %v2659 = vld [vmem:[%s203 + $0x80] sm:$0xf]
      %v2660 = vld [vmem:[%s203 + $0x84] sm:$0xf]
      %v2661 = vld [vmem:[%s203 + $0x88] sm:$0xf]
      %v2662 = vld [vmem:[%s203 + $0x8c] sm:$0xf]
      %v2663 = vld [vmem:[%s203 + $0x90] sm:$0xf]
      %v2664 = vld [vmem:[%s203 + $0x94] sm:$0xf]
      %v2665 = vld [vmem:[%s203 + $0x98] sm:$0xf]
      %v2666 = vld [vmem:[%s203 + $0x9c] sm:$0xf]
      %v2667 = vld [vmem:[%s203 + $0xa0] sm:$0x3]
      %s2668 = scalar_lea.vmem %s1, 192
      %v2669 = vld [vmem:[%s2668] sm:$0xf]
      %v2670 = vld [vmem:[%s2668 + $0x4] sm:$0xf]
      %v2671 = vld [vmem:[%s2668 + $0x8] sm:$0xf]
      %v2672 = vld [vmem:[%s2668 + $0xc] sm:$0xf]
      %v2673 = vld [vmem:[%s2668 + $0x10] sm:$0xf]
      %v2674 = vld [vmem:[%s2668 + $0x14] sm:$0xf]
      %v2675 = vld [vmem:[%s2668 + $0x18] sm:$0xf]
      %v2676 = vld [vmem:[%s2668 + $0x1c] sm:$0xf]
      %v2714 = vunpack.c.l.b16 %v2631
      %v2715 = vunpack.c.l.b16 %v2632
      %v2716 = vunpack.c.l.b16 %v2633
      %v2717 = vunpack.c.l.b16 %v2634
      %v2718 = vunpack.c.l.b16 %v2635
      %v2719 = vunpack.c.l.b16 %v2636
      %v2720 = vunpack.c.l.b16 %v2637
      %v2721 = vunpack.c.l.b16 %v2638
      %v2722 = vunpack.c.l.b16 %v2639
      %v2723 = vunpack.c.l.b16 %v2640
      %v2724 = vunpack.c.l.b16 %v2641
      %v2725 = vunpack.c.l.b16 %v2642
      %v2726 = vunpack.c.l.b16 %v2643
      %v2727 = vunpack.c.l.b16 %v2644
      %v2728 = vunpack.c.l.b16 %v2645
      %v2729 = vunpack.c.l.b16 %v2646
      %v2730 = vunpack.c.l.b16 %v2647
      %v2731 = vunpack.c.l.b16 %v2648
      %v2732 = vunpack.c.l.b16 %v2649
      %v2733 = vunpack.c.l.b16 %v2650
      %v2734 = vunpack.c.l.b16 %v2651
      %v2735 = vunpack.c.l.b16 %v2652
      %v2736 = vunpack.c.l.b16 %v2653
      %v2737 = vunpack.c.l.b16 %v2654
      %v2738 = vunpack.c.l.b16 %v2655
      %v2739 = vunpack.c.l.b16 %v2656
      %v2740 = vunpack.c.l.b16 %v2657
      %v2741 = vunpack.c.l.b16 %v2658
      %v2742 = vunpack.c.l.b16 %v2659
      %v2743 = vunpack.c.l.b16 %v2660
      %v2744 = vunpack.c.l.b16 %v2661
      %v2745 = vunpack.c.l.b16 %v2662
      %v2746 = vunpack.c.l.b16 %v2663
      %v2747 = vunpack.c.l.b16 %v2664
      %v2748 = vunpack.c.l.b16 %v2665
      %v2749 = vunpack.c.l.b16 %v2666
      %v2750 = vunpack.c.l.b16 %v2667
      %v2751 = vpack.c.b16 %v2715, %v2714
      %v2752 = vpack.c.b16 %v2717, %v2716
      %v2753 = vpack.c.b16 %v2719, %v2718
      %v2754 = vpack.c.b16 %v2721, %v2720
      %v2755 = vpack.c.b16 %v2723, %v2722
      %v2756 = vpack.c.b16 %v2725, %v2724
      %v2757 = vpack.c.b16 %v2727, %v2726
      %v2758 = vpack.c.b16 %v2729, %v2728
      %v2759 = vpack.c.b16 %v2731, %v2730
      %v2760 = vpack.c.b16 %v2733, %v2732
      %v2761 = vpack.c.b16 %v2735, %v2734
      %v2762 = vpack.c.b16 %v2737, %v2736
      %v2763 = vpack.c.b16 %v2739, %v2738
      %v2764 = vpack.c.b16 %v2741, %v2740
      %v2765 = vpack.c.b16 %v2743, %v2742
      %v2766 = vpack.c.b16 %v2745, %v2744
      %v2767 = vpack.c.b16 %v2747, %v2746
      %v2768 = vpack.c.b16 %v2749, %v2748
      %v2769 = vpack.c.b16 %v2750, %v2750
      %v2770 = vrot.slane %v2751, 2
      %v2771 = vrot.slane %v2752, 2
      %v2772 = vsel %vm2302, %v2770, %v2771
      %v2773 = vrot.slane %v2753, 2
      %v2774 = vsel %vm2302, %v2771, %v2773
      %v2775 = vrot.slane %v2754, 2
      %v2776 = vsel %vm2302, %v2773, %v2775
      %v2777 = vrot.slane %v2755, 2
      %v2778 = vsel %vm2302, %v2775, %v2777
      %v2779 = vrot.slane %v2756, 2
      %v2780 = vsel %vm2302, %v2777, %v2779
      %v2781 = vrot.slane %v2757, 2
      %v2782 = vsel %vm2302, %v2779, %v2781
      %v2783 = vrot.slane %v2758, 2
      %v2784 = vsel %vm2302, %v2781, %v2783
      %v2785 = vrot.slane %v2759, 2
      %v2786 = vsel %vm2302, %v2783, %v2785
      %v2787 = vrot.slane %v2760, 2
      %v2788 = vsel %vm2302, %v2785, %v2787
      %v2789 = vrot.slane %v2761, 2
      %v2790 = vsel %vm2302, %v2787, %v2789
      %v2791 = vrot.slane %v2762, 2
      %v2792 = vsel %vm2302, %v2789, %v2791
      %v2793 = vrot.slane %v2763, 2
      %v2794 = vsel %vm2302, %v2791, %v2793
      %v2795 = vrot.slane %v2764, 2
      %v2796 = vsel %vm2302, %v2793, %v2795
      %v2797 = vrot.slane %v2765, 2
      %v2798 = vsel %vm2302, %v2795, %v2797
      %v2799 = vrot.slane %v2766, 2
      %v2800 = vsel %vm2302, %v2797, %v2799
      %v2801 = vrot.slane %v2767, 2
      %v2802 = vsel %vm2302, %v2799, %v2801
      %v2803 = vrot.slane %v2768, 2
      %v2804 = vsel %vm2302, %v2801, %v2803
      %v2805 = vrot.slane %v2769, 2
      %v2806 = vsel %vm2302, %v2803, %v2805
      %v2815 = vunpack.c.l.b16 %v2669
      %v2816 = vunpack.c.l.b16 %v2670
      %v2817 = vunpack.c.l.b16 %v2671
      %v2818 = vunpack.c.l.b16 %v2672
      %v2819 = vunpack.c.l.b16 %v2673
      %v2820 = vunpack.c.l.b16 %v2674
      %v2821 = vunpack.c.l.b16 %v2675
      %v2822 = vunpack.c.l.b16 %v2676
      %v2823 = vpack.c.b16 %v2816, %v2815
      %v2824 = vpack.c.b16 %v2818, %v2817
      %v2825 = vpack.c.b16 %v2820, %v2819
      %v2826 = vpack.c.b16 %v2822, %v2821
      %v2832 = vsel %vm536, %v2772, 0
      %v2835 = vsel %vm536, %v2774, 0
      %v2838 = vsel %vm536, %v2776, 0
      %v2841 = vsel %vm536, %v2778, 0
      %v2844 = vsel %vm536, %v2780, 0
      %v2847 = vsel %vm536, %v2782, 0
      %v2850 = vsel %vm536, %v2784, 0
      %v2853 = vsel %vm536, %v2786, 0
      %v2856 = vsel %vm536, %v2788, 0
      %v2859 = vsel %vm536, %v2790, 0
      %v2862 = vsel %vm536, %v2792, 0
      %v2865 = vsel %vm536, %v2794, 0
      %v2868 = vsel %vm536, %v2796, 0
      %v2871 = vsel %vm536, %v2798, 0
      %v2874 = vsel %vm536, %v2800, 0
      %v2877 = vsel %vm536, %v2802, 0
      %v2880 = vsel %vm536, %v2804, 0
      %v2883 = vsel %vm536, %v2806, 0
      %2885 = vmatprep.subr.bf16.mxu0 0
      %2886 = vmatpush1.bf16.msra.mxu0 0
      %2887 = vmatprep.subr.bf16.mxu0 0
      %2888 = vmatpush1.bf16.msra.mxu0 0
      %2889 = vmatprep.subr.bf16.mxu0 0
      %2890 = vmatpush1.bf16.msra.mxu0 0
      %2891 = vmatprep.subr.bf16.mxu0 0
      %2892 = vmatpush1.bf16.msra.mxu0 0
      %2893 = vmatprep.subr.bf16.mxu0 0
      %2894 = vmatpush1.bf16.msra.mxu0 %v2826
      %2895 = vmatprep.subr.bf16.mxu0 0
      %2896 = vmatpush1.bf16.msra.mxu0 %v2825
      %2897 = vmatprep.subr.bf16.mxu0 0
      %2898 = vmatpush1.bf16.msra.mxu0 %v2824
      %2899 = vmatprep.subr.bf16.mxu0 0
      %2900 = vmatpush1.bf16.msra.mxu0 %v2823
      %2901 = vmatprep.subr.bf16.mxu0 0
      %2902 = vmatpush2.bf16.msra.mxu0 0
      %2903 = vmatprep.subr.bf16.mxu0 0
      %2904 = vmatpush2.bf16.msra.mxu0 0
      %2905 = vmatprep.subr.bf16.mxu0 0
      %2906 = vmatpush2.bf16.msra.mxu0 0
      %2907 = vmatprep.subr.bf16.mxu0 0
      %2908 = vmatpush2.bf16.msra.mxu0 0
      %2909 = vmatprep.subr.bf16.mxu0 0
      %2910 = vmatpush2.bf16.msra.mxu0 0
      %2911 = vmatprep.subr.bf16.mxu0 0
      %2912 = vmatpush2.bf16.msra.mxu0 0
      %2913 = vmatprep.subr.bf16.mxu0 0
      %2914 = vmatpush2.bf16.msra.mxu0 0
      %2915 = vmatprep.subr.bf16.mxu0 0
      %2916 = vmatpush2.bf16.msra.mxu0 0
      %2917 = vmatprep.mubr.bf16.mxu0 0
      %2918 = vmatmul.mubr.bf16.gmra.mxu0 %v2832
      %v2919 = vpop.f32.mrf.mxu0
      %v2920 = vadd.f32 0.0, %v2919
      %v2921 = vpop.f32.mrf.mxu0
      %v2922 = vpop.f32.mrf.mxu0
      %v2923 = vadd.f32 0.0, %v2922
      %v2924 = vpop.f32.mrf.mxu0
      %2925 = vmatprep.mubr.bf16.mxu0 0
      %2926 = vmatmul.mubr.bf16.gmra.mxu0 %v2835
      %v2927 = vpop.f32.mrf.mxu0
      %v2928 = vadd.f32 0.0, %v2927
      %v2929 = vpop.f32.mrf.mxu0
      %v2930 = vpop.f32.mrf.mxu0
      %v2931 = vadd.f32 0.0, %v2930
      %v2932 = vpop.f32.mrf.mxu0
      %2933 = vmatprep.mubr.bf16.mxu0 0
      %2934 = vmatmul.mubr.bf16.gmra.mxu0 %v2838
      %v2935 = vpop.f32.mrf.mxu0
      %v2936 = vadd.f32 0.0, %v2935
      %v2937 = vpop.f32.mrf.mxu0
      %v2938 = vpop.f32.mrf.mxu0
      %v2939 = vadd.f32 0.0, %v2938
      %v2940 = vpop.f32.mrf.mxu0
      %2941 = vmatprep.mubr.bf16.mxu0 0
      %2942 = vmatmul.mubr.bf16.gmra.mxu0 %v2841
      %v2943 = vpop.f32.mrf.mxu0
      %v2944 = vadd.f32 0.0, %v2943
      %v2945 = vpop.f32.mrf.mxu0
      %v2946 = vpop.f32.mrf.mxu0
      %v2947 = vadd.f32 0.0, %v2946
      %v2948 = vpop.f32.mrf.mxu0
      %2949 = vmatprep.mubr.bf16.mxu0 0
      %2950 = vmatmul.mubr.bf16.gmra.mxu0 %v2844
      %v2951 = vpop.f32.mrf.mxu0
      %v2952 = vadd.f32 0.0, %v2951
      %v2953 = vpop.f32.mrf.mxu0
      %v2954 = vpop.f32.mrf.mxu0
      %v2955 = vadd.f32 0.0, %v2954
      %v2956 = vpop.f32.mrf.mxu0
      %2957 = vmatprep.mubr.bf16.mxu0 0
      %2958 = vmatmul.mubr.bf16.gmra.mxu0 %v2847
      %v2959 = vpop.f32.mrf.mxu0
      %v2960 = vadd.f32 0.0, %v2959
      %v2961 = vpop.f32.mrf.mxu0
      %v2962 = vpop.f32.mrf.mxu0
      %v2963 = vadd.f32 0.0, %v2962
      %v2964 = vpop.f32.mrf.mxu0
      %2965 = vmatprep.mubr.bf16.mxu0 0
      %2966 = vmatmul.mubr.bf16.gmra.mxu0 %v2850
      %v2967 = vpop.f32.mrf.mxu0
      %v2968 = vadd.f32 0.0, %v2967
      %v2969 = vpop.f32.mrf.mxu0
      %v2970 = vpop.f32.mrf.mxu0
      %v2971 = vadd.f32 0.0, %v2970
      %v2972 = vpop.f32.mrf.mxu0
      %2973 = vmatprep.mubr.bf16.mxu0 0
      %2974 = vmatmul.mubr.bf16.gmra.mxu0 %v2853
      %v2975 = vpop.f32.mrf.mxu0
      %v2976 = vadd.f32 0.0, %v2975
      %v2977 = vpop.f32.mrf.mxu0
      %v2978 = vpop.f32.mrf.mxu0
      %v2979 = vadd.f32 0.0, %v2978
      %v2980 = vpop.f32.mrf.mxu0
      %2981 = vmatprep.mubr.bf16.mxu0 0
      %2982 = vmatmul.mubr.bf16.gmra.mxu0 %v2856
      %v2983 = vpop.f32.mrf.mxu0
      %v2984 = vadd.f32 0.0, %v2983
      %v2985 = vpop.f32.mrf.mxu0
      %v2986 = vpop.f32.mrf.mxu0
      %v2987 = vadd.f32 0.0, %v2986
      %v2988 = vpop.f32.mrf.mxu0
      %2989 = vmatprep.mubr.bf16.mxu0 0
      %2990 = vmatmul.mubr.bf16.gmra.mxu0 %v2859
      %v2991 = vpop.f32.mrf.mxu0
      %v2992 = vadd.f32 0.0, %v2991
      %v2993 = vpop.f32.mrf.mxu0
      %v2994 = vpop.f32.mrf.mxu0
      %v2995 = vadd.f32 0.0, %v2994
      %v2996 = vpop.f32.mrf.mxu0
      %2997 = vmatprep.mubr.bf16.mxu0 0
      %2998 = vmatmul.mubr.bf16.gmra.mxu0 %v2862
      %v2999 = vpop.f32.mrf.mxu0
      %v3000 = vadd.f32 0.0, %v2999
      %v3001 = vpop.f32.mrf.mxu0
      %v3002 = vpop.f32.mrf.mxu0
      %v3003 = vadd.f32 0.0, %v3002
      %v3004 = vpop.f32.mrf.mxu0
      %3005 = vmatprep.mubr.bf16.mxu0 0
      %3006 = vmatmul.mubr.bf16.gmra.mxu0 %v2865
      %v3007 = vpop.f32.mrf.mxu0
      %v3008 = vadd.f32 0.0, %v3007
      %v3009 = vpop.f32.mrf.mxu0
      %v3010 = vpop.f32.mrf.mxu0
      %v3011 = vadd.f32 0.0, %v3010
      %v3012 = vpop.f32.mrf.mxu0
      %3013 = vmatprep.mubr.bf16.mxu0 0
      %3014 = vmatmul.mubr.bf16.gmra.mxu0 %v2868
      %v3015 = vpop.f32.mrf.mxu0
      %v3016 = vadd.f32 0.0, %v3015
      %v3017 = vpop.f32.mrf.mxu0
      %v3018 = vpop.f32.mrf.mxu0
      %v3019 = vadd.f32 0.0, %v3018
      %v3020 = vpop.f32.mrf.mxu0
      %3021 = vmatprep.mubr.bf16.mxu0 0
      %3022 = vmatmul.mubr.bf16.gmra.mxu0 %v2871
      %v3023 = vpop.f32.mrf.mxu0
      %v3024 = vadd.f32 0.0, %v3023
      %v3025 = vpop.f32.mrf.mxu0
      %v3026 = vpop.f32.mrf.mxu0
      %v3027 = vadd.f32 0.0, %v3026
      %v3028 = vpop.f32.mrf.mxu0
      %3029 = vmatprep.mubr.bf16.mxu0 0
      %3030 = vmatmul.mubr.bf16.gmra.mxu0 %v2874
      %v3031 = vpop.f32.mrf.mxu0
      %v3032 = vadd.f32 0.0, %v3031
      %v3033 = vpop.f32.mrf.mxu0
      %v3034 = vpop.f32.mrf.mxu0
      %v3035 = vadd.f32 0.0, %v3034
      %v3036 = vpop.f32.mrf.mxu0
      %3037 = vmatprep.mubr.bf16.mxu0 0
      %3038 = vmatmul.mubr.bf16.gmra.mxu0 %v2877
      %v3039 = vpop.f32.mrf.mxu0
      %v3040 = vadd.f32 0.0, %v3039
      %v3041 = vpop.f32.mrf.mxu0
      %v3042 = vpop.f32.mrf.mxu0
      %v3043 = vadd.f32 0.0, %v3042
      %v3044 = vpop.f32.mrf.mxu0
      %3045 = vmatprep.mubr.bf16.mxu0 0
      %3046 = vmatmul.mubr.bf16.gmra.mxu0 %v2880
      %v3047 = vpop.f32.mrf.mxu0
      %v3048 = vadd.f32 0.0, %v3047
      %v3049 = vpop.f32.mrf.mxu0
      %v3050 = vpop.f32.mrf.mxu0
      %v3051 = vadd.f32 0.0, %v3050
      %v3052 = vpop.f32.mrf.mxu0
      %3053 = vmatprep.mubr.bf16.mxu0 0
      %3054 = vmatmul.mubr.bf16.gmra.mxu0 %v2883
      %v3055 = vpop.f32.mrf.mxu0
      %v3056 = vadd.f32 0.0, %v3055
      %v3057 = vpop.f32.mrf.mxu0
      %v3058 = vpop.f32.mrf.mxu0
      %v3059 = vadd.f32 0.0, %v3058
      %v3060 = vpop.f32.mrf.mxu0
      %3061 = vdwg.mxu0
      %v3062 = vadd.f32 %v2595, %v2920
      %v3063 = vadd.f32 %v2596, %v2923
      %v3064 = vadd.f32 %v2597, %v2928
      %v3065 = vadd.f32 %v2598, %v2931
      %v3066 = vadd.f32 %v2599, %v2936
      %v3067 = vadd.f32 %v2600, %v2939
      %v3068 = vadd.f32 %v2601, %v2944
      %v3069 = vadd.f32 %v2602, %v2947
      %v3070 = vadd.f32 %v2603, %v2952
      %v3071 = vadd.f32 %v2604, %v2955
      %v3072 = vadd.f32 %v2605, %v2960
      %v3073 = vadd.f32 %v2606, %v2963
      %v3074 = vadd.f32 %v2607, %v2968
      %v3075 = vadd.f32 %v2608, %v2971
      %v3076 = vadd.f32 %v2609, %v2976
      %v3077 = vadd.f32 %v2610, %v2979
      %v3078 = vadd.f32 %v2611, %v2984
      %v3079 = vadd.f32 %v2612, %v2987
      %v3080 = vadd.f32 %v2613, %v2992
      %v3081 = vadd.f32 %v2614, %v2995
      %v3082 = vadd.f32 %v2615, %v3000
      %v3083 = vadd.f32 %v2616, %v3003
      %v3084 = vadd.f32 %v2617, %v3008
      %v3085 = vadd.f32 %v2618, %v3011
      %v3086 = vadd.f32 %v2619, %v3016
      %v3087 = vadd.f32 %v2620, %v3019
      %v3088 = vadd.f32 %v2621, %v3024
      %v3089 = vadd.f32 %v2622, %v3027
      %v3090 = vadd.f32 %v2623, %v3032
      %v3091 = vadd.f32 %v2624, %v3035
      %v3092 = vadd.f32 %v2625, %v3040
      %v3093 = vadd.f32 %v2626, %v3043
      %v3094 = vadd.f32 %v2627, %v3048
      %v3095 = vadd.f32 %v2628, %v3051
      %v3096 = vadd.f32 %v2629, %v3056
      %v3097 = vadd.f32 %v2630, %v3059
      %v3098 = vld [vmem:[%s203 + $0xa0] sm:$0x7]
      %s3099 = scalar_lea.vmem %s1, 224
      %v3100 = vld [vmem:[%s3099] sm:$0xf]
      %v3101 = vld [vmem:[%s3099 + $0x4] sm:$0xf]
      %v3102 = vld [vmem:[%s3099 + $0x8] sm:$0xf]
      %v3103 = vld [vmem:[%s3099 + $0xc] sm:$0xf]
      %v3104 = vld [vmem:[%s3099 + $0x10] sm:$0xf]
      %v3105 = vld [vmem:[%s3099 + $0x14] sm:$0xf]
      %v3106 = vld [vmem:[%s3099 + $0x18] sm:$0xf]
      %v3107 = vld [vmem:[%s3099 + $0x1c] sm:$0xf]
      %v3109 = vunpack.c.l.b16 %v3098
      %v3110 = vpack.c.b16 %v3109, %v3109
      %vm3111 = vsmask.f32 5376
      %v3113 = vshrl.u32 %v2751, 16
      %v3115 = vrot.slane %v3113, 2
      %v3116 = vshll.u32 %v2751, 16
      %v3118 = vrot.slane %v3116, 3
      %v3119 = vor.u32 %v3115, %v3118
      %v3121 = vshrl.u32 %v2752, 16
      %v3123 = vrot.slane %v3121, 2
      %v3124 = vshll.u32 %v2752, 16
      %v3126 = vrot.slane %v3124, 3
      %v3127 = vor.u32 %v3123, %v3126
      %v3128 = vsel %vm3111, %v3119, %v3127
      %v3130 = vshrl.u32 %v2753, 16
      %v3132 = vrot.slane %v3130, 2
      %v3133 = vshll.u32 %v2753, 16
      %v3135 = vrot.slane %v3133, 3
      %v3136 = vor.u32 %v3132, %v3135
      %v3137 = vsel %vm3111, %v3127, %v3136
      %v3139 = vshrl.u32 %v2754, 16
      %v3141 = vrot.slane %v3139, 2
      %v3142 = vshll.u32 %v2754, 16
      %v3144 = vrot.slane %v3142, 3
      %v3145 = vor.u32 %v3141, %v3144
      %v3146 = vsel %vm3111, %v3136, %v3145
      %v3148 = vshrl.u32 %v2755, 16
      %v3150 = vrot.slane %v3148, 2
      %v3151 = vshll.u32 %v2755, 16
      %v3153 = vrot.slane %v3151, 3
      %v3154 = vor.u32 %v3150, %v3153
      %v3155 = vsel %vm3111, %v3145, %v3154
      %v3157 = vshrl.u32 %v2756, 16
      %v3159 = vrot.slane %v3157, 2
      %v3160 = vshll.u32 %v2756, 16
      %v3162 = vrot.slane %v3160, 3
      %v3163 = vor.u32 %v3159, %v3162
      %v3164 = vsel %vm3111, %v3154, %v3163
      %v3166 = vshrl.u32 %v2757, 16
      %v3168 = vrot.slane %v3166, 2
      %v3169 = vshll.u32 %v2757, 16
      %v3171 = vrot.slane %v3169, 3
      %v3172 = vor.u32 %v3168, %v3171
      %v3173 = vsel %vm3111, %v3163, %v3172
      %v3175 = vshrl.u32 %v2758, 16
      %v3177 = vrot.slane %v3175, 2
      %v3178 = vshll.u32 %v2758, 16
      %v3180 = vrot.slane %v3178, 3
      %v3181 = vor.u32 %v3177, %v3180
      %v3182 = vsel %vm3111, %v3172, %v3181
      %v3184 = vshrl.u32 %v2759, 16
      %v3186 = vrot.slane %v3184, 2
      %v3187 = vshll.u32 %v2759, 16
      %v3189 = vrot.slane %v3187, 3
      %v3190 = vor.u32 %v3186, %v3189
      %v3191 = vsel %vm3111, %v3181, %v3190
      %v3193 = vshrl.u32 %v2760, 16
      %v3195 = vrot.slane %v3193, 2
      %v3196 = vshll.u32 %v2760, 16
      %v3198 = vrot.slane %v3196, 3
      %v3199 = vor.u32 %v3195, %v3198
      %v3200 = vsel %vm3111, %v3190, %v3199
      %v3202 = vshrl.u32 %v2761, 16
      %v3204 = vrot.slane %v3202, 2
      %v3205 = vshll.u32 %v2761, 16
      %v3207 = vrot.slane %v3205, 3
      %v3208 = vor.u32 %v3204, %v3207
      %v3209 = vsel %vm3111, %v3199, %v3208
      %v3211 = vshrl.u32 %v2762, 16
      %v3213 = vrot.slane %v3211, 2
      %v3214 = vshll.u32 %v2762, 16
      %v3216 = vrot.slane %v3214, 3
      %v3217 = vor.u32 %v3213, %v3216
      %v3218 = vsel %vm3111, %v3208, %v3217
      %v3220 = vshrl.u32 %v2763, 16
      %v3222 = vrot.slane %v3220, 2
      %v3223 = vshll.u32 %v2763, 16
      %v3225 = vrot.slane %v3223, 3
      %v3226 = vor.u32 %v3222, %v3225
      %v3227 = vsel %vm3111, %v3217, %v3226
      %v3229 = vshrl.u32 %v2764, 16
      %v3231 = vrot.slane %v3229, 2
      %v3232 = vshll.u32 %v2764, 16
      %v3234 = vrot.slane %v3232, 3
      %v3235 = vor.u32 %v3231, %v3234
      %v3236 = vsel %vm3111, %v3226, %v3235
      %v3238 = vshrl.u32 %v2765, 16
      %v3240 = vrot.slane %v3238, 2
      %v3241 = vshll.u32 %v2765, 16
      %v3243 = vrot.slane %v3241, 3
      %v3244 = vor.u32 %v3240, %v3243
      %v3245 = vsel %vm3111, %v3235, %v3244
      %v3247 = vshrl.u32 %v2766, 16
      %v3249 = vrot.slane %v3247, 2
      %v3250 = vshll.u32 %v2766, 16
      %v3252 = vrot.slane %v3250, 3
      %v3253 = vor.u32 %v3249, %v3252
      %v3254 = vsel %vm3111, %v3244, %v3253
      %v3256 = vshrl.u32 %v2767, 16
      %v3258 = vrot.slane %v3256, 2
      %v3259 = vshll.u32 %v2767, 16
      %v3261 = vrot.slane %v3259, 3
      %v3262 = vor.u32 %v3258, %v3261
      %v3263 = vsel %vm3111, %v3253, %v3262
      %v3265 = vshrl.u32 %v2768, 16
      %v3267 = vrot.slane %v3265, 2
      %v3268 = vshll.u32 %v2768, 16
      %v3270 = vrot.slane %v3268, 3
      %v3271 = vor.u32 %v3267, %v3270
      %v3272 = vsel %vm3111, %v3262, %v3271
      %v3274 = vshrl.u32 %v3110, 16
      %v3276 = vrot.slane %v3274, 2
      %v3277 = vshll.u32 %v3110, 16
      %v3279 = vrot.slane %v3277, 3
      %v3280 = vor.u32 %v3276, %v3279
      %v3281 = vsel %vm3111, %v3271, %v3280
      %v3290 = vunpack.c.l.b16 %v3100
      %v3291 = vunpack.c.l.b16 %v3101
      %v3292 = vunpack.c.l.b16 %v3102
      %v3293 = vunpack.c.l.b16 %v3103
      %v3294 = vunpack.c.l.b16 %v3104
      %v3295 = vunpack.c.l.b16 %v3105
      %v3296 = vunpack.c.l.b16 %v3106
      %v3297 = vunpack.c.l.b16 %v3107
      %v3298 = vpack.c.b16 %v3291, %v3290
      %v3299 = vpack.c.b16 %v3293, %v3292
      %v3300 = vpack.c.b16 %v3295, %v3294
      %v3301 = vpack.c.b16 %v3297, %v3296
      %v3307 = vsel %vm536, %v3128, 0
      %v3310 = vsel %vm536, %v3137, 0
      %v3313 = vsel %vm536, %v3146, 0
      %v3316 = vsel %vm536, %v3155, 0
      %v3319 = vsel %vm536, %v3164, 0
      %v3322 = vsel %vm536, %v3173, 0
      %v3325 = vsel %vm536, %v3182, 0
      %v3328 = vsel %vm536, %v3191, 0
      %v3331 = vsel %vm536, %v3200, 0
      %v3334 = vsel %vm536, %v3209, 0
      %v3337 = vsel %vm536, %v3218, 0
      %v3340 = vsel %vm536, %v3227, 0
      %v3343 = vsel %vm536, %v3236, 0
      %v3346 = vsel %vm536, %v3245, 0
      %v3349 = vsel %vm536, %v3254, 0
      %v3352 = vsel %vm536, %v3263, 0
      %v3355 = vsel %vm536, %v3272, 0
      %v3358 = vsel %vm536, %v3281, 0
      %3360 = vmatprep.subr.bf16.mxu0 0
      %3361 = vmatpush1.bf16.msra.mxu0 0
      %3362 = vmatprep.subr.bf16.mxu0 0
      %3363 = vmatpush1.bf16.msra.mxu0 0
      %3364 = vmatprep.subr.bf16.mxu0 0
      %3365 = vmatpush1.bf16.msra.mxu0 0
      %3366 = vmatprep.subr.bf16.mxu0 0
      %3367 = vmatpush1.bf16.msra.mxu0 0
      %3368 = vmatprep.subr.bf16.mxu0 0
      %3369 = vmatpush1.bf16.msra.mxu0 %v3301
      %3370 = vmatprep.subr.bf16.mxu0 0
      %3371 = vmatpush1.bf16.msra.mxu0 %v3300
      %3372 = vmatprep.subr.bf16.mxu0 0
      %3373 = vmatpush1.bf16.msra.mxu0 %v3299
      %3374 = vmatprep.subr.bf16.mxu0 0
      %3375 = vmatpush1.bf16.msra.mxu0 %v3298
      %3376 = vmatprep.subr.bf16.mxu0 0
      %3377 = vmatpush2.bf16.msra.mxu0 0
      %3378 = vmatprep.subr.bf16.mxu0 0
      %3379 = vmatpush2.bf16.msra.mxu0 0
      %3380 = vmatprep.subr.bf16.mxu0 0
      %3381 = vmatpush2.bf16.msra.mxu0 0
      %3382 = vmatprep.subr.bf16.mxu0 0
      %3383 = vmatpush2.bf16.msra.mxu0 0
      %3384 = vmatprep.subr.bf16.mxu0 0
      %3385 = vmatpush2.bf16.msra.mxu0 0
      %3386 = vmatprep.subr.bf16.mxu0 0
      %3387 = vmatpush2.bf16.msra.mxu0 0
      %3388 = vmatprep.subr.bf16.mxu0 0
      %3389 = vmatpush2.bf16.msra.mxu0 0
      %3390 = vmatprep.subr.bf16.mxu0 0
      %3391 = vmatpush2.bf16.msra.mxu0 0
      %3392 = vmatprep.mubr.bf16.mxu0 0
      %3393 = vmatmul.mubr.bf16.gmra.mxu0 %v3307
      %v3394 = vpop.f32.mrf.mxu0
      %v3395 = vadd.f32 0.0, %v3394
      %v3396 = vpop.f32.mrf.mxu0
      %v3397 = vpop.f32.mrf.mxu0
      %v3398 = vadd.f32 0.0, %v3397
      %v3399 = vpop.f32.mrf.mxu0
      %3400 = vmatprep.mubr.bf16.mxu0 0
      %3401 = vmatmul.mubr.bf16.gmra.mxu0 %v3310
      %v3402 = vpop.f32.mrf.mxu0
      %v3403 = vadd.f32 0.0, %v3402
      %v3404 = vpop.f32.mrf.mxu0
      %v3405 = vpop.f32.mrf.mxu0
      %v3406 = vadd.f32 0.0, %v3405
      %v3407 = vpop.f32.mrf.mxu0
      %3408 = vmatprep.mubr.bf16.mxu0 0
      %3409 = vmatmul.mubr.bf16.gmra.mxu0 %v3313
      %v3410 = vpop.f32.mrf.mxu0
      %v3411 = vadd.f32 0.0, %v3410
      %v3412 = vpop.f32.mrf.mxu0
      %v3413 = vpop.f32.mrf.mxu0
      %v3414 = vadd.f32 0.0, %v3413
      %v3415 = vpop.f32.mrf.mxu0
      %3416 = vmatprep.mubr.bf16.mxu0 0
      %3417 = vmatmul.mubr.bf16.gmra.mxu0 %v3316
      %v3418 = vpop.f32.mrf.mxu0
      %v3419 = vadd.f32 0.0, %v3418
      %v3420 = vpop.f32.mrf.mxu0
      %v3421 = vpop.f32.mrf.mxu0
      %v3422 = vadd.f32 0.0, %v3421
      %v3423 = vpop.f32.mrf.mxu0
      %3424 = vmatprep.mubr.bf16.mxu0 0
      %3425 = vmatmul.mubr.bf16.gmra.mxu0 %v3319
      %v3426 = vpop.f32.mrf.mxu0
      %v3427 = vadd.f32 0.0, %v3426
      %v3428 = vpop.f32.mrf.mxu0
      %v3429 = vpop.f32.mrf.mxu0
      %v3430 = vadd.f32 0.0, %v3429
      %v3431 = vpop.f32.mrf.mxu0
      %3432 = vmatprep.mubr.bf16.mxu0 0
      %3433 = vmatmul.mubr.bf16.gmra.mxu0 %v3322
      %v3434 = vpop.f32.mrf.mxu0
      %v3435 = vadd.f32 0.0, %v3434
      %v3436 = vpop.f32.mrf.mxu0
      %v3437 = vpop.f32.mrf.mxu0
      %v3438 = vadd.f32 0.0, %v3437
      %v3439 = vpop.f32.mrf.mxu0
      %3440 = vmatprep.mubr.bf16.mxu0 0
      %3441 = vmatmul.mubr.bf16.gmra.mxu0 %v3325
      %v3442 = vpop.f32.mrf.mxu0
      %v3443 = vadd.f32 0.0, %v3442
      %v3444 = vpop.f32.mrf.mxu0
      %v3445 = vpop.f32.mrf.mxu0
      %v3446 = vadd.f32 0.0, %v3445
      %v3447 = vpop.f32.mrf.mxu0
      %3448 = vmatprep.mubr.bf16.mxu0 0
      %3449 = vmatmul.mubr.bf16.gmra.mxu0 %v3328
      %v3450 = vpop.f32.mrf.mxu0
      %v3451 = vadd.f32 0.0, %v3450
      %v3452 = vpop.f32.mrf.mxu0
      %v3453 = vpop.f32.mrf.mxu0
      %v3454 = vadd.f32 0.0, %v3453
      %v3455 = vpop.f32.mrf.mxu0
      %3456 = vmatprep.mubr.bf16.mxu0 0
      %3457 = vmatmul.mubr.bf16.gmra.mxu0 %v3331
      %v3458 = vpop.f32.mrf.mxu0
      %v3459 = vadd.f32 0.0, %v3458
      %v3460 = vpop.f32.mrf.mxu0
      %v3461 = vpop.f32.mrf.mxu0
      %v3462 = vadd.f32 0.0, %v3461
      %v3463 = vpop.f32.mrf.mxu0
      %3464 = vmatprep.mubr.bf16.mxu0 0
      %3465 = vmatmul.mubr.bf16.gmra.mxu0 %v3334
      %v3466 = vpop.f32.mrf.mxu0
      %v3467 = vadd.f32 0.0, %v3466
      %v3468 = vpop.f32.mrf.mxu0
      %v3469 = vpop.f32.mrf.mxu0
      %v3470 = vadd.f32 0.0, %v3469
      %v3471 = vpop.f32.mrf.mxu0
      %3472 = vmatprep.mubr.bf16.mxu0 0
      %3473 = vmatmul.mubr.bf16.gmra.mxu0 %v3337
      %v3474 = vpop.f32.mrf.mxu0
      %v3475 = vadd.f32 0.0, %v3474
      %v3476 = vpop.f32.mrf.mxu0
      %v3477 = vpop.f32.mrf.mxu0
      %v3478 = vadd.f32 0.0, %v3477
      %v3479 = vpop.f32.mrf.mxu0
      %3480 = vmatprep.mubr.bf16.mxu0 0
      %3481 = vmatmul.mubr.bf16.gmra.mxu0 %v3340
      %v3482 = vpop.f32.mrf.mxu0
      %v3483 = vadd.f32 0.0, %v3482
      %v3484 = vpop.f32.mrf.mxu0
      %v3485 = vpop.f32.mrf.mxu0
      %v3486 = vadd.f32 0.0, %v3485
      %v3487 = vpop.f32.mrf.mxu0
      %3488 = vmatprep.mubr.bf16.mxu0 0
      %3489 = vmatmul.mubr.bf16.gmra.mxu0 %v3343
      %v3490 = vpop.f32.mrf.mxu0
      %v3491 = vadd.f32 0.0, %v3490
      %v3492 = vpop.f32.mrf.mxu0
      %v3493 = vpop.f32.mrf.mxu0
      %v3494 = vadd.f32 0.0, %v3493
      %v3495 = vpop.f32.mrf.mxu0
      %3496 = vmatprep.mubr.bf16.mxu0 0
      %3497 = vmatmul.mubr.bf16.gmra.mxu0 %v3346
      %v3498 = vpop.f32.mrf.mxu0
      %v3499 = vadd.f32 0.0, %v3498
      %v3500 = vpop.f32.mrf.mxu0
      %v3501 = vpop.f32.mrf.mxu0
      %v3502 = vadd.f32 0.0, %v3501
      %v3503 = vpop.f32.mrf.mxu0
      %3504 = vmatprep.mubr.bf16.mxu0 0
      %3505 = vmatmul.mubr.bf16.gmra.mxu0 %v3349
      %v3506 = vpop.f32.mrf.mxu0
      %v3507 = vadd.f32 0.0, %v3506
      %v3508 = vpop.f32.mrf.mxu0
      %v3509 = vpop.f32.mrf.mxu0
      %v3510 = vadd.f32 0.0, %v3509
      %v3511 = vpop.f32.mrf.mxu0
      %3512 = vmatprep.mubr.bf16.mxu0 0
      %3513 = vmatmul.mubr.bf16.gmra.mxu0 %v3352
      %v3514 = vpop.f32.mrf.mxu0
      %v3515 = vadd.f32 0.0, %v3514
      %v3516 = vpop.f32.mrf.mxu0
      %v3517 = vpop.f32.mrf.mxu0
      %v3518 = vadd.f32 0.0, %v3517
      %v3519 = vpop.f32.mrf.mxu0
      %3520 = vmatprep.mubr.bf16.mxu0 0
      %3521 = vmatmul.mubr.bf16.gmra.mxu0 %v3355
      %v3522 = vpop.f32.mrf.mxu0
      %v3523 = vadd.f32 0.0, %v3522
      %v3524 = vpop.f32.mrf.mxu0
      %v3525 = vpop.f32.mrf.mxu0
      %v3526 = vadd.f32 0.0, %v3525
      %v3527 = vpop.f32.mrf.mxu0
      %3528 = vmatprep.mubr.bf16.mxu0 0
      %3529 = vmatmul.mubr.bf16.gmra.mxu0 %v3358
      %v3530 = vpop.f32.mrf.mxu0
      %v3531 = vadd.f32 0.0, %v3530
      %v3532 = vpop.f32.mrf.mxu0
      %v3533 = vpop.f32.mrf.mxu0
      %v3534 = vadd.f32 0.0, %v3533
      %v3535 = vpop.f32.mrf.mxu0
      %3536 = vdwg.mxu0
      %v3537 = vadd.f32 %v3062, %v3395
      %v3538 = vadd.f32 %v3063, %v3398
      %v3539 = vadd.f32 %v3064, %v3403
      %v3540 = vadd.f32 %v3065, %v3406
      %v3541 = vadd.f32 %v3066, %v3411
      %v3542 = vadd.f32 %v3067, %v3414
      %v3543 = vadd.f32 %v3068, %v3419
      %v3544 = vadd.f32 %v3069, %v3422
      %v3545 = vadd.f32 %v3070, %v3427
      %v3546 = vadd.f32 %v3071, %v3430
      %v3547 = vadd.f32 %v3072, %v3435
      %v3548 = vadd.f32 %v3073, %v3438
      %v3549 = vadd.f32 %v3074, %v3443
      %v3550 = vadd.f32 %v3075, %v3446
      %v3551 = vadd.f32 %v3076, %v3451
      %v3552 = vadd.f32 %v3077, %v3454
      %v3553 = vadd.f32 %v3078, %v3459
      %v3554 = vadd.f32 %v3079, %v3462
      %v3555 = vadd.f32 %v3080, %v3467
      %v3556 = vadd.f32 %v3081, %v3470
      %v3557 = vadd.f32 %v3082, %v3475
      %v3558 = vadd.f32 %v3083, %v3478
      %v3559 = vadd.f32 %v3084, %v3483
      %v3560 = vadd.f32 %v3085, %v3486
      %v3561 = vadd.f32 %v3086, %v3491
      %v3562 = vadd.f32 %v3087, %v3494
      %v3563 = vadd.f32 %v3088, %v3499
      %v3564 = vadd.f32 %v3089, %v3502
      %v3565 = vadd.f32 %v3090, %v3507
      %v3566 = vadd.f32 %v3091, %v3510
      %v3567 = vadd.f32 %v3092, %v3515
      %v3568 = vadd.f32 %v3093, %v3518
      %v3569 = vadd.f32 %v3094, %v3523
      %v3570 = vadd.f32 %v3095, %v3526
      %v3571 = vadd.f32 %v3096, %v3531
      %v3572 = vadd.f32 %v3097, %v3534
      %v3573 = vld [vmem:[%s203 + $0x10] sm:$0x8]
      %s3574 = scalar_lea.vmem %s1, 256
      %v3575 = vld [vmem:[%s3574] sm:$0xf]
      %v3576 = vld [vmem:[%s3574 + $0x4] sm:$0xf]
      %v3577 = vld [vmem:[%s3574 + $0x8] sm:$0xf]
      %v3578 = vld [vmem:[%s3574 + $0xc] sm:$0xf]
      %v3579 = vld [vmem:[%s3574 + $0x10] sm:$0xf]
      %v3580 = vld [vmem:[%s3574 + $0x14] sm:$0xf]
      %v3581 = vld [vmem:[%s3574 + $0x18] sm:$0xf]
      %v3582 = vld [vmem:[%s3574 + $0x1c] sm:$0xf]
      %v3584 = vunpack.c.l.b16 %v3573
      %v3585 = vpack.c.b16 %v2715, %v3584
      %vm3586 = vcmask 1044480
      %v3587 = vrot.slane %v3585, 3
      %v3588 = vrot.slane %v2752, 3
      %v3589 = vsel %vm3586, %v3587, %v3588
      %v3590 = vrot.slane %v2753, 3
      %v3591 = vsel %vm3586, %v3588, %v3590
      %v3592 = vrot.slane %v2754, 3
      %v3593 = vsel %vm3586, %v3590, %v3592
      %v3594 = vrot.slane %v2755, 3
      %v3595 = vsel %vm3586, %v3592, %v3594
      %v3596 = vrot.slane %v2756, 3
      %v3597 = vsel %vm3586, %v3594, %v3596
      %v3598 = vrot.slane %v2757, 3
      %v3599 = vsel %vm3586, %v3596, %v3598
      %v3600 = vrot.slane %v2758, 3
      %v3601 = vsel %vm3586, %v3598, %v3600
      %v3602 = vrot.slane %v2759, 3
      %v3603 = vsel %vm3586, %v3600, %v3602
      %v3604 = vrot.slane %v2760, 3
      %v3605 = vsel %vm3586, %v3602, %v3604
      %v3606 = vrot.slane %v2761, 3
      %v3607 = vsel %vm3586, %v3604, %v3606
      %v3608 = vrot.slane %v2762, 3
      %v3609 = vsel %vm3586, %v3606, %v3608
      %v3610 = vrot.slane %v2763, 3
      %v3611 = vsel %vm3586, %v3608, %v3610
      %v3612 = vrot.slane %v2764, 3
      %v3613 = vsel %vm3586, %v3610, %v3612
      %v3614 = vrot.slane %v2765, 3
      %v3615 = vsel %vm3586, %v3612, %v3614
      %v3616 = vrot.slane %v2766, 3
      %v3617 = vsel %vm3586, %v3614, %v3616
      %v3618 = vrot.slane %v2767, 3
      %v3619 = vsel %vm3586, %v3616, %v3618
      %v3620 = vrot.slane %v2768, 3
      %v3621 = vsel %vm3586, %v3618, %v3620
      %v3622 = vrot.slane %v3110, 3
      %v3623 = vsel %vm3586, %v3620, %v3622
      %v3632 = vunpack.c.l.b16 %v3575
      %v3633 = vunpack.c.l.b16 %v3576
      %v3634 = vunpack.c.l.b16 %v3577
      %v3635 = vunpack.c.l.b16 %v3578
      %v3636 = vunpack.c.l.b16 %v3579
      %v3637 = vunpack.c.l.b16 %v3580
      %v3638 = vunpack.c.l.b16 %v3581
      %v3639 = vunpack.c.l.b16 %v3582
      %v3640 = vpack.c.b16 %v3633, %v3632
      %v3641 = vpack.c.b16 %v3635, %v3634
      %v3642 = vpack.c.b16 %v3637, %v3636
      %v3643 = vpack.c.b16 %v3639, %v3638
      %v3649 = vsel %vm536, %v3589, 0
      %v3652 = vsel %vm536, %v3591, 0
      %v3655 = vsel %vm536, %v3593, 0
      %v3658 = vsel %vm536, %v3595, 0
      %v3661 = vsel %vm536, %v3597, 0
      %v3664 = vsel %vm536, %v3599, 0
      %v3667 = vsel %vm536, %v3601, 0
      %v3670 = vsel %vm536, %v3603, 0
      %v3673 = vsel %vm536, %v3605, 0
      %v3676 = vsel %vm536, %v3607, 0
      %v3679 = vsel %vm536, %v3609, 0
      %v3682 = vsel %vm536, %v3611, 0
      %v3685 = vsel %vm536, %v3613, 0
      %v3688 = vsel %vm536, %v3615, 0
      %v3691 = vsel %vm536, %v3617, 0
      %v3694 = vsel %vm536, %v3619, 0
      %v3697 = vsel %vm536, %v3621, 0
      %v3700 = vsel %vm536, %v3623, 0
      %3702 = vmatprep.subr.bf16.mxu0 0
      %3703 = vmatpush1.bf16.msra.mxu0 0
      %3704 = vmatprep.subr.bf16.mxu0 0
      %3705 = vmatpush1.bf16.msra.mxu0 0
      %3706 = vmatprep.subr.bf16.mxu0 0
      %3707 = vmatpush1.bf16.msra.mxu0 0
      %3708 = vmatprep.subr.bf16.mxu0 0
      %3709 = vmatpush1.bf16.msra.mxu0 0
      %3710 = vmatprep.subr.bf16.mxu0 0
      %3711 = vmatpush1.bf16.msra.mxu0 %v3643
      %3712 = vmatprep.subr.bf16.mxu0 0
      %3713 = vmatpush1.bf16.msra.mxu0 %v3642
      %3714 = vmatprep.subr.bf16.mxu0 0
      %3715 = vmatpush1.bf16.msra.mxu0 %v3641
      %3716 = vmatprep.subr.bf16.mxu0 0
      %3717 = vmatpush1.bf16.msra.mxu0 %v3640
      %3718 = vmatprep.subr.bf16.mxu0 0
      %3719 = vmatpush2.bf16.msra.mxu0 0
      %3720 = vmatprep.subr.bf16.mxu0 0
      %3721 = vmatpush2.bf16.msra.mxu0 0
      %3722 = vmatprep.subr.bf16.mxu0 0
      %3723 = vmatpush2.bf16.msra.mxu0 0
      %3724 = vmatprep.subr.bf16.mxu0 0
      %3725 = vmatpush2.bf16.msra.mxu0 0
      %3726 = vmatprep.subr.bf16.mxu0 0
      %3727 = vmatpush2.bf16.msra.mxu0 0
      %3728 = vmatprep.subr.bf16.mxu0 0
      %3729 = vmatpush2.bf16.msra.mxu0 0
      %3730 = vmatprep.subr.bf16.mxu0 0
      %3731 = vmatpush2.bf16.msra.mxu0 0
      %3732 = vmatprep.subr.bf16.mxu0 0
      %3733 = vmatpush2.bf16.msra.mxu0 0
      %3734 = vmatprep.mubr.bf16.mxu0 0
      %3735 = vmatmul.mubr.bf16.gmra.mxu0 %v3649
      %v3736 = vpop.f32.mrf.mxu0
      %v3737 = vadd.f32 0.0, %v3736
      %v3738 = vpop.f32.mrf.mxu0
      %v3739 = vpop.f32.mrf.mxu0
      %v3740 = vadd.f32 0.0, %v3739
      %v3741 = vpop.f32.mrf.mxu0
      %3742 = vmatprep.mubr.bf16.mxu0 0
      %3743 = vmatmul.mubr.bf16.gmra.mxu0 %v3652
      %v3744 = vpop.f32.mrf.mxu0
      %v3745 = vadd.f32 0.0, %v3744
      %v3746 = vpop.f32.mrf.mxu0
      %v3747 = vpop.f32.mrf.mxu0
      %v3748 = vadd.f32 0.0, %v3747
      %v3749 = vpop.f32.mrf.mxu0
      %3750 = vmatprep.mubr.bf16.mxu0 0
      %3751 = vmatmul.mubr.bf16.gmra.mxu0 %v3655
      %v3752 = vpop.f32.mrf.mxu0
      %v3753 = vadd.f32 0.0, %v3752
      %v3754 = vpop.f32.mrf.mxu0
      %v3755 = vpop.f32.mrf.mxu0
      %v3756 = vadd.f32 0.0, %v3755
      %v3757 = vpop.f32.mrf.mxu0
      %3758 = vmatprep.mubr.bf16.mxu0 0
      %3759 = vmatmul.mubr.bf16.gmra.mxu0 %v3658
      %v3760 = vpop.f32.mrf.mxu0
      %v3761 = vadd.f32 0.0, %v3760
      %v3762 = vpop.f32.mrf.mxu0
      %v3763 = vpop.f32.mrf.mxu0
      %v3764 = vadd.f32 0.0, %v3763
      %v3765 = vpop.f32.mrf.mxu0
      %3766 = vmatprep.mubr.bf16.mxu0 0
      %3767 = vmatmul.mubr.bf16.gmra.mxu0 %v3661
      %v3768 = vpop.f32.mrf.mxu0
      %v3769 = vadd.f32 0.0, %v3768
      %v3770 = vpop.f32.mrf.mxu0
      %v3771 = vpop.f32.mrf.mxu0
      %v3772 = vadd.f32 0.0, %v3771
      %v3773 = vpop.f32.mrf.mxu0
      %3774 = vmatprep.mubr.bf16.mxu0 0
      %3775 = vmatmul.mubr.bf16.gmra.mxu0 %v3664
      %v3776 = vpop.f32.mrf.mxu0
      %v3777 = vadd.f32 0.0, %v3776
      %v3778 = vpop.f32.mrf.mxu0
      %v3779 = vpop.f32.mrf.mxu0
      %v3780 = vadd.f32 0.0, %v3779
      %v3781 = vpop.f32.mrf.mxu0
      %3782 = vmatprep.mubr.bf16.mxu0 0
      %3783 = vmatmul.mubr.bf16.gmra.mxu0 %v3667
      %v3784 = vpop.f32.mrf.mxu0
      %v3785 = vadd.f32 0.0, %v3784
      %v3786 = vpop.f32.mrf.mxu0
      %v3787 = vpop.f32.mrf.mxu0
      %v3788 = vadd.f32 0.0, %v3787
      %v3789 = vpop.f32.mrf.mxu0
      %3790 = vmatprep.mubr.bf16.mxu0 0
      %3791 = vmatmul.mubr.bf16.gmra.mxu0 %v3670
      %v3792 = vpop.f32.mrf.mxu0
      %v3793 = vadd.f32 0.0, %v3792
      %v3794 = vpop.f32.mrf.mxu0
      %v3795 = vpop.f32.mrf.mxu0
      %v3796 = vadd.f32 0.0, %v3795
      %v3797 = vpop.f32.mrf.mxu0
      %3798 = vmatprep.mubr.bf16.mxu0 0
      %3799 = vmatmul.mubr.bf16.gmra.mxu0 %v3673
      %v3800 = vpop.f32.mrf.mxu0
      %v3801 = vadd.f32 0.0, %v3800
      %v3802 = vpop.f32.mrf.mxu0
      %v3803 = vpop.f32.mrf.mxu0
      %v3804 = vadd.f32 0.0, %v3803
      %v3805 = vpop.f32.mrf.mxu0
      %3806 = vmatprep.mubr.bf16.mxu0 0
      %3807 = vmatmul.mubr.bf16.gmra.mxu0 %v3676
      %v3808 = vpop.f32.mrf.mxu0
      %v3809 = vadd.f32 0.0, %v3808
      %v3810 = vpop.f32.mrf.mxu0
      %v3811 = vpop.f32.mrf.mxu0
      %v3812 = vadd.f32 0.0, %v3811
      %v3813 = vpop.f32.mrf.mxu0
      %3814 = vmatprep.mubr.bf16.mxu0 0
      %3815 = vmatmul.mubr.bf16.gmra.mxu0 %v3679
      %v3816 = vpop.f32.mrf.mxu0
      %v3817 = vadd.f32 0.0, %v3816
      %v3818 = vpop.f32.mrf.mxu0
      %v3819 = vpop.f32.mrf.mxu0
      %v3820 = vadd.f32 0.0, %v3819
      %v3821 = vpop.f32.mrf.mxu0
      %3822 = vmatprep.mubr.bf16.mxu0 0
      %3823 = vmatmul.mubr.bf16.gmra.mxu0 %v3682
      %v3824 = vpop.f32.mrf.mxu0
      %v3825 = vadd.f32 0.0, %v3824
      %v3826 = vpop.f32.mrf.mxu0
      %v3827 = vpop.f32.mrf.mxu0
      %v3828 = vadd.f32 0.0, %v3827
      %v3829 = vpop.f32.mrf.mxu0
      %3830 = vmatprep.mubr.bf16.mxu0 0
      %3831 = vmatmul.mubr.bf16.gmra.mxu0 %v3685
      %v3832 = vpop.f32.mrf.mxu0
      %v3833 = vadd.f32 0.0, %v3832
      %v3834 = vpop.f32.mrf.mxu0
      %v3835 = vpop.f32.mrf.mxu0
      %v3836 = vadd.f32 0.0, %v3835
      %v3837 = vpop.f32.mrf.mxu0
      %3838 = vmatprep.mubr.bf16.mxu0 0
      %3839 = vmatmul.mubr.bf16.gmra.mxu0 %v3688
      %v3840 = vpop.f32.mrf.mxu0
      %v3841 = vadd.f32 0.0, %v3840
      %v3842 = vpop.f32.mrf.mxu0
      %v3843 = vpop.f32.mrf.mxu0
      %v3844 = vadd.f32 0.0, %v3843
      %v3845 = vpop.f32.mrf.mxu0
      %3846 = vmatprep.mubr.bf16.mxu0 0
      %3847 = vmatmul.mubr.bf16.gmra.mxu0 %v3691
      %v3848 = vpop.f32.mrf.mxu0
      %v3849 = vadd.f32 0.0, %v3848
      %v3850 = vpop.f32.mrf.mxu0
      %v3851 = vpop.f32.mrf.mxu0
      %v3852 = vadd.f32 0.0, %v3851
      %v3853 = vpop.f32.mrf.mxu0
      %3854 = vmatprep.mubr.bf16.mxu0 0
      %3855 = vmatmul.mubr.bf16.gmra.mxu0 %v3694
      %v3856 = vpop.f32.mrf.mxu0
      %v3857 = vadd.f32 0.0, %v3856
      %v3858 = vpop.f32.mrf.mxu0
      %v3859 = vpop.f32.mrf.mxu0
      %v3860 = vadd.f32 0.0, %v3859
      %v3861 = vpop.f32.mrf.mxu0
      %3862 = vmatprep.mubr.bf16.mxu0 0
      %3863 = vmatmul.mubr.bf16.gmra.mxu0 %v3697
      %v3864 = vpop.f32.mrf.mxu0
      %v3865 = vadd.f32 0.0, %v3864
      %v3866 = vpop.f32.mrf.mxu0
      %v3867 = vpop.f32.mrf.mxu0
      %v3868 = vadd.f32 0.0, %v3867
      %v3869 = vpop.f32.mrf.mxu0
      %3870 = vmatprep.mubr.bf16.mxu0 0
      %3871 = vmatmul.mubr.bf16.gmra.mxu0 %v3700
      %v3872 = vpop.f32.mrf.mxu0
      %v3873 = vadd.f32 0.0, %v3872
      %v3874 = vpop.f32.mrf.mxu0
      %v3875 = vpop.f32.mrf.mxu0
      %v3876 = vadd.f32 0.0, %v3875
      %v3877 = vpop.f32.mrf.mxu0
      %3878 = vdwg.mxu0
      %v3879 = vadd.f32 %v3537, %v3737
      %v3880 = vadd.f32 %v3538, %v3740
      %v3881 = vadd.f32 %v3539, %v3745
      %v3882 = vadd.f32 %v3540, %v3748
      %v3883 = vadd.f32 %v3541, %v3753
      %v3884 = vadd.f32 %v3542, %v3756
      %v3885 = vadd.f32 %v3543, %v3761
      %v3886 = vadd.f32 %v3544, %v3764
      %v3887 = vadd.f32 %v3545, %v3769
      %v3888 = vadd.f32 %v3546, %v3772
      %v3889 = vadd.f32 %v3547, %v3777
      %v3890 = vadd.f32 %v3548, %v3780
      %v3891 = vadd.f32 %v3549, %v3785
      %v3892 = vadd.f32 %v3550, %v3788
      %v3893 = vadd.f32 %v3551, %v3793
      %v3894 = vadd.f32 %v3552, %v3796
      %v3895 = vadd.f32 %v3553, %v3801
      %v3896 = vadd.f32 %v3554, %v3804
      %v3897 = vadd.f32 %v3555, %v3809
      %v3898 = vadd.f32 %v3556, %v3812
      %v3899 = vadd.f32 %v3557, %v3817
      %v3900 = vadd.f32 %v3558, %v3820
      %v3901 = vadd.f32 %v3559, %v3825
      %v3902 = vadd.f32 %v3560, %v3828
      %v3903 = vadd.f32 %v3561, %v3833
      %v3904 = vadd.f32 %v3562, %v3836
      %v3905 = vadd.f32 %v3563, %v3841
      %v3906 = vadd.f32 %v3564, %v3844
      %v3907 = vadd.f32 %v3565, %v3849
      %v3908 = vadd.f32 %v3566, %v3852
      %v3909 = vadd.f32 %v3567, %v3857
      %v3910 = vadd.f32 %v3568, %v3860
      %v3911 = vadd.f32 %v3569, %v3865
      %v3912 = vadd.f32 %v3570, %v3868
      %v3913 = vadd.f32 %v3571, %v3873
      %v3914 = vadd.f32 %v3572, %v3876
      %v3915 = vpack.c.bf16 %v3880, %v3879
      %v3916 = vpack.c.bf16 %v3882, %v3881
      %v3917 = vpack.c.bf16 %v3884, %v3883
      %v3918 = vpack.c.bf16 %v3886, %v3885
      %v3919 = vpack.c.bf16 %v3888, %v3887
      %v3920 = vpack.c.bf16 %v3890, %v3889
      %v3921 = vpack.c.bf16 %v3892, %v3891
      %v3922 = vpack.c.bf16 %v3894, %v3893
      %v3923 = vpack.c.bf16 %v3896, %v3895
      %v3924 = vpack.c.bf16 %v3898, %v3897
      %v3925 = vpack.c.bf16 %v3900, %v3899
      %v3926 = vpack.c.bf16 %v3902, %v3901
      %v3927 = vpack.c.bf16 %v3904, %v3903
      %v3928 = vpack.c.bf16 %v3906, %v3905
      %v3929 = vpack.c.bf16 %v3908, %v3907
      %v3930 = vpack.c.bf16 %v3910, %v3909
      %v3931 = vpack.c.bf16 %v3912, %v3911
      %v3932 = vpack.c.bf16 %v3914, %v3913
      %v3951 = vunpack.c.l.b16 %v3915
      %v3952 = vunpack.c.h.b16 %v3915
      %v3953 = vunpack.c.l.b16 %v3916
      %v3954 = vunpack.c.h.b16 %v3916
      %v3955 = vunpack.c.l.b16 %v3917
      %v3956 = vunpack.c.h.b16 %v3917
      %v3957 = vunpack.c.l.b16 %v3918
      %v3958 = vunpack.c.h.b16 %v3918
      %v3959 = vunpack.c.l.b16 %v3919
      %v3960 = vunpack.c.h.b16 %v3919
      %v3961 = vunpack.c.l.b16 %v3920
      %v3962 = vunpack.c.h.b16 %v3920
      %v3963 = vunpack.c.l.b16 %v3921
      %v3964 = vunpack.c.h.b16 %v3921
      %v3965 = vunpack.c.l.b16 %v3922
      %v3966 = vunpack.c.h.b16 %v3922
      %v3967 = vunpack.c.l.b16 %v3923
      %v3968 = vunpack.c.h.b16 %v3923
      %v3969 = vunpack.c.l.b16 %v3924
      %v3970 = vunpack.c.h.b16 %v3924
      %v3971 = vunpack.c.l.b16 %v3925
      %v3972 = vunpack.c.h.b16 %v3925
      %v3973 = vunpack.c.l.b16 %v3926
      %v3974 = vunpack.c.h.b16 %v3926
      %v3975 = vunpack.c.l.b16 %v3927
      %v3976 = vunpack.c.h.b16 %v3927
      %v3977 = vunpack.c.l.b16 %v3928
      %v3978 = vunpack.c.h.b16 %v3928
      %v3979 = vunpack.c.l.b16 %v3929
      %v3980 = vunpack.c.h.b16 %v3929
      %v3981 = vunpack.c.l.b16 %v3930
      %v3982 = vunpack.c.h.b16 %v3930
      %v3983 = vunpack.c.l.b16 %v3931
      %v3984 = vunpack.c.h.b16 %v3931
      %v3985 = vunpack.c.l.b16 %v3932
      %v3986 = vunpack.c.h.b16 %v3932
      %v3987 = vpack.c.b16 %v3951, %v3951
      %v3988 = vpack.c.b16 %v3952, %v3952
      %v3989 = vpack.c.b16 %v3953, %v3953
      %v3990 = vpack.c.b16 %v3954, %v3954
      %v3991 = vpack.c.b16 %v3955, %v3955
      %v3992 = vpack.c.b16 %v3956, %v3956
      %v3993 = vpack.c.b16 %v3957, %v3957
      %v3994 = vpack.c.b16 %v3958, %v3958
      %v3995 = vpack.c.b16 %v3959, %v3959
      %v3996 = vpack.c.b16 %v3960, %v3960
      %v3997 = vpack.c.b16 %v3961, %v3961
      %v3998 = vpack.c.b16 %v3962, %v3962
      %v3999 = vpack.c.b16 %v3963, %v3963
      %v4000 = vpack.c.b16 %v3964, %v3964
      %v4001 = vpack.c.b16 %v3965, %v3965
      %v4002 = vpack.c.b16 %v3966, %v3966
      %v4003 = vpack.c.b16 %v3967, %v3967
      %v4004 = vpack.c.b16 %v3968, %v3968
      %v4005 = vpack.c.b16 %v3969, %v3969
      %v4006 = vpack.c.b16 %v3970, %v3970
      %v4007 = vpack.c.b16 %v3971, %v3971
      %v4008 = vpack.c.b16 %v3972, %v3972
      %v4009 = vpack.c.b16 %v3973, %v3973
      %v4010 = vpack.c.b16 %v3974, %v3974
      %v4011 = vpack.c.b16 %v3975, %v3975
      %v4012 = vpack.c.b16 %v3976, %v3976
      %v4013 = vpack.c.b16 %v3977, %v3977
      %v4014 = vpack.c.b16 %v3978, %v3978
      %v4015 = vpack.c.b16 %v3979, %v3979
      %v4016 = vpack.c.b16 %v3980, %v3980
      %v4017 = vpack.c.b16 %v3981, %v3981
      %v4018 = vpack.c.b16 %v3982, %v3982
      %v4019 = vpack.c.b16 %v3983, %v3983
      %v4020 = vpack.c.b16 %v3984, %v3984
      %v4021 = vpack.c.b16 %v3985, %v3985
      %v4022 = vpack.c.b16 %v3986, %v3986
      %vm4059 = vcmask 519168
      %4060 = vst.msk [vmem:[%s208] sm:$0xf] %vm4059, %v3987
      %4061 = vst.msk [vmem:[%s208 + $0x4] sm:$0xf] %vm4059, %v3988
      %4062 = vst.msk [vmem:[%s208 + $0x8] sm:$0xf] %vm4059, %v3989
      %4063 = vst.msk [vmem:[%s208 + $0xc] sm:$0xf] %vm4059, %v3990
      %4064 = vst.msk [vmem:[%s208 + $0x10] sm:$0xf] %vm4059, %v3991
      %4065 = vst.msk [vmem:[%s208 + $0x14] sm:$0xf] %vm4059, %v3992
      %4066 = vst.msk [vmem:[%s208 + $0x18] sm:$0xf] %vm4059, %v3993
      %4067 = vst.msk [vmem:[%s208 + $0x1c] sm:$0xf] %vm4059, %v3994
      %4068 = vst.msk [vmem:[%s208 + $0x20] sm:$0xf] %vm4059, %v3995
      %4069 = vst.msk [vmem:[%s208 + $0x24] sm:$0xf] %vm4059, %v3996
      %4070 = vst.msk [vmem:[%s208 + $0x28] sm:$0xf] %vm4059, %v3997
      %4071 = vst.msk [vmem:[%s208 + $0x2c] sm:$0xf] %vm4059, %v3998
      %4072 = vst.msk [vmem:[%s208 + $0x30] sm:$0xf] %vm4059, %v3999
      %4073 = vst.msk [vmem:[%s208 + $0x34] sm:$0xf] %vm4059, %v4000
      %4074 = vst.msk [vmem:[%s208 + $0x38] sm:$0xf] %vm4059, %v4001
      %4075 = vst.msk [vmem:[%s208 + $0x3c] sm:$0xf] %vm4059, %v4002
      %4076 = vst.msk [vmem:[%s208 + $0x40] sm:$0xf] %vm4059, %v4003
      %4077 = vst.msk [vmem:[%s208 + $0x44] sm:$0xf] %vm4059, %v4004
      %4078 = vst.msk [vmem:[%s208 + $0x48] sm:$0xf] %vm4059, %v4005
      %4079 = vst.msk [vmem:[%s208 + $0x4c] sm:$0xf] %vm4059, %v4006
      %4080 = vst.msk [vmem:[%s208 + $0x50] sm:$0xf] %vm4059, %v4007
      %4081 = vst.msk [vmem:[%s208 + $0x54] sm:$0xf] %vm4059, %v4008
      %4082 = vst.msk [vmem:[%s208 + $0x58] sm:$0xf] %vm4059, %v4009
      %4083 = vst.msk [vmem:[%s208 + $0x5c] sm:$0xf] %vm4059, %v4010
      %4084 = vst.msk [vmem:[%s208 + $0x60] sm:$0xf] %vm4059, %v4011
      %4085 = vst.msk [vmem:[%s208 + $0x64] sm:$0xf] %vm4059, %v4012
      %4086 = vst.msk [vmem:[%s208 + $0x68] sm:$0xf] %vm4059, %v4013
      %4087 = vst.msk [vmem:[%s208 + $0x6c] sm:$0xf] %vm4059, %v4014
      %4088 = vst.msk [vmem:[%s208 + $0x70] sm:$0xf] %vm4059, %v4015
      %4089 = vst.msk [vmem:[%s208 + $0x74] sm:$0xf] %vm4059, %v4016
      %4090 = vst.msk [vmem:[%s208 + $0x78] sm:$0xf] %vm4059, %v4017
      %4091 = vst.msk [vmem:[%s208 + $0x7c] sm:$0xf] %vm4059, %v4018
      %4092 = vst.msk [vmem:[%s208 + $0x80] sm:$0xf] %vm4059, %v4019
      %4093 = vst.msk [vmem:[%s208 + $0x84] sm:$0xf] %vm4059, %v4020
      %4094 = vst.msk [vmem:[%s208 + $0x88] sm:$0xf] %vm4059, %v4021
      %4095 = vst.msk [vmem:[%s208 + $0x8c] sm:$0xf] %vm4059, %v4022
      %v4096 = vlaneseq
      %v4097 = vshrl.u32 %v4096, 7
      %v4098 = vadd.s32 %v4097, 8
      %v4099 = vadd.s32 %v4097, 16
      %v4100 = vadd.s32 %v4097, 24
      %v4101 = vadd.s32 %v4097, 32
      %v4102 = vadd.s32 %v4097, 40
      %v4103 = vadd.s32 %v4097, 48
      %v4104 = vadd.s32 %v4097, 56
      %v4105 = vadd.s32 %v4097, 64
      %v4106 = vadd.s32 %v4097, 72
      %v4107 = vadd.s32 %v4097, 80
      %v4108 = vadd.s32 %v4097, 88
      %v4109 = vadd.s32 %v4097, 96
      %v4110 = vadd.s32 %v4097, 104
      %v4111 = vadd.s32 %v4097, 112
      %v4112 = vadd.s32 %v4097, 120
      %v4113 = vadd.s32 %v4097, 128
      %v4114 = vadd.s32 %v4097, 136
      %v4115 = vadd.s32 %v4097, 144
      %v4116 = vadd.s32 %v4097, 152
      %v4117 = vadd.s32 %v4097, 160
      %v4118 = vadd.s32 %v4097, 168
      %v4119 = vadd.s32 %v4097, 176
      %v4120 = vadd.s32 %v4097, 184
      %v4121 = vadd.s32 %v4097, 192
      %v4122 = vadd.s32 %v4097, 200
      %v4123 = vadd.s32 %v4097, 208
      %v4124 = vadd.s32 %v4097, 216
      %v4125 = vadd.s32 %v4097, 224
      %v4126 = vadd.s32 %v4097, 232
      %v4127 = vadd.s32 %v4097, 240
      %v4128 = vadd.s32 %v4097, 248
      %v4129 = vadd.s32 %v4097, 256
      %v4130 = vadd.s32 %v4097, 264
      %v4131 = vadd.s32 %v4097, 272
      %v4132 = vadd.s32 %v4097, 280
      %vm4133 = vcmp.lt.s32.totalorder %v4097, 0
      %v4134 = vsub.s32 0, %v4097
      %v4135 = vsel %vm4133, %v4134, %v4097
      %v4136 = vmul.u32.u64.compose %v4135, 3817748708
      %v4137 = vextract.low.u32 %v4136
      %v4138 = vextract.high.u32 %v4136
      %v4139 = vshrl.u32 %v4138, 4
      %v4140 = vmul.u32 %v4139, 18
      %v4141 = vsub.s32 %v4135, %v4140
      %v4142 = vsub.s32 0, %v4141
      %v4143 = vsel %vm4133, %v4142, %v4141
      %vm4144 = vcmp.lt.s32.totalorder %v4098, 0
      %v4145 = vsub.s32 0, %v4098
      %v4146 = vsel %vm4144, %v4145, %v4098
      %v4147 = vmul.u32.u64.compose %v4146, 3817748708
      %v4148 = vextract.low.u32 %v4147
      %v4149 = vextract.high.u32 %v4147
      %v4150 = vshrl.u32 %v4149, 4
      %v4151 = vmul.u32 %v4150, 18
      %v4152 = vsub.s32 %v4146, %v4151
      %v4153 = vsub.s32 0, %v4152
      %v4154 = vsel %vm4144, %v4153, %v4152
      %vm4155 = vcmp.lt.s32.totalorder %v4099, 0
      %v4156 = vsub.s32 0, %v4099
      %v4157 = vsel %vm4155, %v4156, %v4099
      %v4158 = vmul.u32.u64.compose %v4157, 3817748708
      %v4159 = vextract.low.u32 %v4158
      %v4160 = vextract.high.u32 %v4158
      %v4161 = vshrl.u32 %v4160, 4
      %v4162 = vmul.u32 %v4161, 18
      %v4163 = vsub.s32 %v4157, %v4162
      %v4164 = vsub.s32 0, %v4163
      %v4165 = vsel %vm4155, %v4164, %v4163
      %vm4166 = vcmp.lt.s32.totalorder %v4100, 0
      %v4167 = vsub.s32 0, %v4100
      %v4168 = vsel %vm4166, %v4167, %v4100
      %v4169 = vmul.u32.u64.compose %v4168, 3817748708
      %v4170 = vextract.low.u32 %v4169
      %v4171 = vextract.high.u32 %v4169
      %v4172 = vshrl.u32 %v4171, 4
      %v4173 = vmul.u32 %v4172, 18
      %v4174 = vsub.s32 %v4168, %v4173
      %v4175 = vsub.s32 0, %v4174
      %v4176 = vsel %vm4166, %v4175, %v4174
      %vm4177 = vcmp.lt.s32.totalorder %v4101, 0
      %v4178 = vsub.s32 0, %v4101
      %v4179 = vsel %vm4177, %v4178, %v4101
      %v4180 = vmul.u32.u64.compose %v4179, 3817748708
      %v4181 = vextract.low.u32 %v4180
      %v4182 = vextract.high.u32 %v4180
      %v4183 = vshrl.u32 %v4182, 4
      %v4184 = vmul.u32 %v4183, 18
      %v4185 = vsub.s32 %v4179, %v4184
      %v4186 = vsub.s32 0, %v4185
      %v4187 = vsel %vm4177, %v4186, %v4185
      %vm4188 = vcmp.lt.s32.totalorder %v4102, 0
      %v4189 = vsub.s32 0, %v4102
      %v4190 = vsel %vm4188, %v4189, %v4102
      %v4191 = vmul.u32.u64.compose %v4190, 3817748708
      %v4192 = vextract.low.u32 %v4191
      %v4193 = vextract.high.u32 %v4191
      %v4194 = vshrl.u32 %v4193, 4
      %v4195 = vmul.u32 %v4194, 18
      %v4196 = vsub.s32 %v4190, %v4195
      %v4197 = vsub.s32 0, %v4196
      %v4198 = vsel %vm4188, %v4197, %v4196
      %vm4199 = vcmp.lt.s32.totalorder %v4103, 0
      %v4200 = vsub.s32 0, %v4103
      %v4201 = vsel %vm4199, %v4200, %v4103
      %v4202 = vmul.u32.u64.compose %v4201, 3817748708
      %v4203 = vextract.low.u32 %v4202
      %v4204 = vextract.high.u32 %v4202
      %v4205 = vshrl.u32 %v4204, 4
      %v4206 = vmul.u32 %v4205, 18
      %v4207 = vsub.s32 %v4201, %v4206
      %v4208 = vsub.s32 0, %v4207
      %v4209 = vsel %vm4199, %v4208, %v4207
      %vm4210 = vcmp.lt.s32.totalorder %v4104, 0
      %v4211 = vsub.s32 0, %v4104
      %v4212 = vsel %vm4210, %v4211, %v4104
      %v4213 = vmul.u32.u64.compose %v4212, 3817748708
      %v4214 = vextract.low.u32 %v4213
      %v4215 = vextract.high.u32 %v4213
      %v4216 = vshrl.u32 %v4215, 4
      %v4217 = vmul.u32 %v4216, 18
      %v4218 = vsub.s32 %v4212, %v4217
      %v4219 = vsub.s32 0, %v4218
      %v4220 = vsel %vm4210, %v4219, %v4218
      %vm4221 = vcmp.lt.s32.totalorder %v4105, 0
      %v4222 = vsub.s32 0, %v4105
      %v4223 = vsel %vm4221, %v4222, %v4105
      %v4224 = vmul.u32.u64.compose %v4223, 3817748708
      %v4225 = vextract.low.u32 %v4224
      %v4226 = vextract.high.u32 %v4224
      %v4227 = vshrl.u32 %v4226, 4
      %v4228 = vmul.u32 %v4227, 18
      %v4229 = vsub.s32 %v4223, %v4228
      %v4230 = vsub.s32 0, %v4229
      %v4231 = vsel %vm4221, %v4230, %v4229
      %vm4232 = vcmp.lt.s32.totalorder %v4106, 0
      %v4233 = vsub.s32 0, %v4106
      %v4234 = vsel %vm4232, %v4233, %v4106
      %v4235 = vmul.u32.u64.compose %v4234, 3817748708
      %v4236 = vextract.low.u32 %v4235
      %v4237 = vextract.high.u32 %v4235
      %v4238 = vshrl.u32 %v4237, 4
      %v4239 = vmul.u32 %v4238, 18
      %v4240 = vsub.s32 %v4234, %v4239
      %v4241 = vsub.s32 0, %v4240
      %v4242 = vsel %vm4232, %v4241, %v4240
      %vm4243 = vcmp.lt.s32.totalorder %v4107, 0
      %v4244 = vsub.s32 0, %v4107
      %v4245 = vsel %vm4243, %v4244, %v4107
      %v4246 = vmul.u32.u64.compose %v4245, 3817748708
      %v4247 = vextract.low.u32 %v4246
      %v4248 = vextract.high.u32 %v4246
      %v4249 = vshrl.u32 %v4248, 4
      %v4250 = vmul.u32 %v4249, 18
      %v4251 = vsub.s32 %v4245, %v4250
      %v4252 = vsub.s32 0, %v4251
      %v4253 = vsel %vm4243, %v4252, %v4251
      %vm4254 = vcmp.lt.s32.totalorder %v4108, 0
      %v4255 = vsub.s32 0, %v4108
      %v4256 = vsel %vm4254, %v4255, %v4108
      %v4257 = vmul.u32.u64.compose %v4256, 3817748708
      %v4258 = vextract.low.u32 %v4257
      %v4259 = vextract.high.u32 %v4257
      %v4260 = vshrl.u32 %v4259, 4
      %v4261 = vmul.u32 %v4260, 18
      %v4262 = vsub.s32 %v4256, %v4261
      %v4263 = vsub.s32 0, %v4262
      %v4264 = vsel %vm4254, %v4263, %v4262
      %vm4265 = vcmp.lt.s32.totalorder %v4109, 0
      %v4266 = vsub.s32 0, %v4109
      %v4267 = vsel %vm4265, %v4266, %v4109
      %v4268 = vmul.u32.u64.compose %v4267, 3817748708
      %v4269 = vextract.low.u32 %v4268
      %v4270 = vextract.high.u32 %v4268
      %v4271 = vshrl.u32 %v4270, 4
      %v4272 = vmul.u32 %v4271, 18
      %v4273 = vsub.s32 %v4267, %v4272
      %v4274 = vsub.s32 0, %v4273
      %v4275 = vsel %vm4265, %v4274, %v4273
      %vm4276 = vcmp.lt.s32.totalorder %v4110, 0
      %v4277 = vsub.s32 0, %v4110
      %v4278 = vsel %vm4276, %v4277, %v4110
      %v4279 = vmul.u32.u64.compose %v4278, 3817748708
      %v4280 = vextract.low.u32 %v4279
      %v4281 = vextract.high.u32 %v4279
      %v4282 = vshrl.u32 %v4281, 4
      %v4283 = vmul.u32 %v4282, 18
      %v4284 = vsub.s32 %v4278, %v4283
      %v4285 = vsub.s32 0, %v4284
      %v4286 = vsel %vm4276, %v4285, %v4284
      %vm4287 = vcmp.lt.s32.totalorder %v4111, 0
      %v4288 = vsub.s32 0, %v4111
      %v4289 = vsel %vm4287, %v4288, %v4111
      %v4290 = vmul.u32.u64.compose %v4289, 3817748708
      %v4291 = vextract.low.u32 %v4290
      %v4292 = vextract.high.u32 %v4290
      %v4293 = vshrl.u32 %v4292, 4
      %v4294 = vmul.u32 %v4293, 18
      %v4295 = vsub.s32 %v4289, %v4294
      %v4296 = vsub.s32 0, %v4295
      %v4297 = vsel %vm4287, %v4296, %v4295
      %vm4298 = vcmp.lt.s32.totalorder %v4112, 0
      %v4299 = vsub.s32 0, %v4112
      %v4300 = vsel %vm4298, %v4299, %v4112
      %v4301 = vmul.u32.u64.compose %v4300, 3817748708
      %v4302 = vextract.low.u32 %v4301
      %v4303 = vextract.high.u32 %v4301
      %v4304 = vshrl.u32 %v4303, 4
      %v4305 = vmul.u32 %v4304, 18
      %v4306 = vsub.s32 %v4300, %v4305
      %v4307 = vsub.s32 0, %v4306
      %v4308 = vsel %vm4298, %v4307, %v4306
      %vm4309 = vcmp.lt.s32.totalorder %v4113, 0
      %v4310 = vsub.s32 0, %v4113
      %v4311 = vsel %vm4309, %v4310, %v4113
      %v4312 = vmul.u32.u64.compose %v4311, 3817748708
      %v4313 = vextract.low.u32 %v4312
      %v4314 = vextract.high.u32 %v4312
      %v4315 = vshrl.u32 %v4314, 4
      %v4316 = vmul.u32 %v4315, 18
      %v4317 = vsub.s32 %v4311, %v4316
      %v4318 = vsub.s32 0, %v4317
      %v4319 = vsel %vm4309, %v4318, %v4317
      %vm4320 = vcmp.lt.s32.totalorder %v4114, 0
      %v4321 = vsub.s32 0, %v4114
      %v4322 = vsel %vm4320, %v4321, %v4114
      %v4323 = vmul.u32.u64.compose %v4322, 3817748708
      %v4324 = vextract.low.u32 %v4323
      %v4325 = vextract.high.u32 %v4323
      %v4326 = vshrl.u32 %v4325, 4
      %v4327 = vmul.u32 %v4326, 18
      %v4328 = vsub.s32 %v4322, %v4327
      %v4329 = vsub.s32 0, %v4328
      %v4330 = vsel %vm4320, %v4329, %v4328
      %vm4331 = vcmp.lt.s32.totalorder %v4115, 0
      %v4332 = vsub.s32 0, %v4115
      %v4333 = vsel %vm4331, %v4332, %v4115
      %v4334 = vmul.u32.u64.compose %v4333, 3817748708
      %v4335 = vextract.low.u32 %v4334
      %v4336 = vextract.high.u32 %v4334
      %v4337 = vshrl.u32 %v4336, 4
      %v4338 = vmul.u32 %v4337, 18
      %v4339 = vsub.s32 %v4333, %v4338
      %v4340 = vsub.s32 0, %v4339
      %v4341 = vsel %vm4331, %v4340, %v4339
      %vm4342 = vcmp.lt.s32.totalorder %v4116, 0
      %v4343 = vsub.s32 0, %v4116
      %v4344 = vsel %vm4342, %v4343, %v4116
      %v4345 = vmul.u32.u64.compose %v4344, 3817748708
      %v4346 = vextract.low.u32 %v4345
      %v4347 = vextract.high.u32 %v4345
      %v4348 = vshrl.u32 %v4347, 4
      %v4349 = vmul.u32 %v4348, 18
      %v4350 = vsub.s32 %v4344, %v4349
      %v4351 = vsub.s32 0, %v4350
      %v4352 = vsel %vm4342, %v4351, %v4350
      %vm4353 = vcmp.lt.s32.totalorder %v4117, 0
      %v4354 = vsub.s32 0, %v4117
      %v4355 = vsel %vm4353, %v4354, %v4117
      %v4356 = vmul.u32.u64.compose %v4355, 3817748708
      %v4357 = vextract.low.u32 %v4356
      %v4358 = vextract.high.u32 %v4356
      %v4359 = vshrl.u32 %v4358, 4
      %v4360 = vmul.u32 %v4359, 18
      %v4361 = vsub.s32 %v4355, %v4360
      %v4362 = vsub.s32 0, %v4361
      %v4363 = vsel %vm4353, %v4362, %v4361
      %vm4364 = vcmp.lt.s32.totalorder %v4118, 0
      %v4365 = vsub.s32 0, %v4118
      %v4366 = vsel %vm4364, %v4365, %v4118
      %v4367 = vmul.u32.u64.compose %v4366, 3817748708
      %v4368 = vextract.low.u32 %v4367
      %v4369 = vextract.high.u32 %v4367
      %v4370 = vshrl.u32 %v4369, 4
      %v4371 = vmul.u32 %v4370, 18
      %v4372 = vsub.s32 %v4366, %v4371
      %v4373 = vsub.s32 0, %v4372
      %v4374 = vsel %vm4364, %v4373, %v4372
      %vm4375 = vcmp.lt.s32.totalorder %v4119, 0
      %v4376 = vsub.s32 0, %v4119
      %v4377 = vsel %vm4375, %v4376, %v4119
      %v4378 = vmul.u32.u64.compose %v4377, 3817748708
      %v4379 = vextract.low.u32 %v4378
      %v4380 = vextract.high.u32 %v4378
      %v4381 = vshrl.u32 %v4380, 4
      %v4382 = vmul.u32 %v4381, 18
      %v4383 = vsub.s32 %v4377, %v4382
      %v4384 = vsub.s32 0, %v4383
      %v4385 = vsel %vm4375, %v4384, %v4383
      %vm4386 = vcmp.lt.s32.totalorder %v4120, 0
      %v4387 = vsub.s32 0, %v4120
      %v4388 = vsel %vm4386, %v4387, %v4120
      %v4389 = vmul.u32.u64.compose %v4388, 3817748708
      %v4390 = vextract.low.u32 %v4389
      %v4391 = vextract.high.u32 %v4389
      %v4392 = vshrl.u32 %v4391, 4
      %v4393 = vmul.u32 %v4392, 18
      %v4394 = vsub.s32 %v4388, %v4393
      %v4395 = vsub.s32 0, %v4394
      %v4396 = vsel %vm4386, %v4395, %v4394
      %vm4397 = vcmp.lt.s32.totalorder %v4121, 0
      %v4398 = vsub.s32 0, %v4121
      %v4399 = vsel %vm4397, %v4398, %v4121
      %v4400 = vmul.u32.u64.compose %v4399, 3817748708
      %v4401 = vextract.low.u32 %v4400
      %v4402 = vextract.high.u32 %v4400
      %v4403 = vshrl.u32 %v4402, 4
      %v4404 = vmul.u32 %v4403, 18
      %v4405 = vsub.s32 %v4399, %v4404
      %v4406 = vsub.s32 0, %v4405
      %v4407 = vsel %vm4397, %v4406, %v4405
      %vm4408 = vcmp.lt.s32.totalorder %v4122, 0
      %v4409 = vsub.s32 0, %v4122
      %v4410 = vsel %vm4408, %v4409, %v4122
      %v4411 = vmul.u32.u64.compose %v4410, 3817748708
      %v4412 = vextract.low.u32 %v4411
      %v4413 = vextract.high.u32 %v4411
      %v4414 = vshrl.u32 %v4413, 4
      %v4415 = vmul.u32 %v4414, 18
      %v4416 = vsub.s32 %v4410, %v4415
      %v4417 = vsub.s32 0, %v4416
      %v4418 = vsel %vm4408, %v4417, %v4416
      %vm4419 = vcmp.lt.s32.totalorder %v4123, 0
      %v4420 = vsub.s32 0, %v4123
      %v4421 = vsel %vm4419, %v4420, %v4123
      %v4422 = vmul.u32.u64.compose %v4421, 3817748708
      %v4423 = vextract.low.u32 %v4422
      %v4424 = vextract.high.u32 %v4422
      %v4425 = vshrl.u32 %v4424, 4
      %v4426 = vmul.u32 %v4425, 18
      %v4427 = vsub.s32 %v4421, %v4426
      %v4428 = vsub.s32 0, %v4427
      %v4429 = vsel %vm4419, %v4428, %v4427
      %vm4430 = vcmp.lt.s32.totalorder %v4124, 0
      %v4431 = vsub.s32 0, %v4124
      %v4432 = vsel %vm4430, %v4431, %v4124
      %v4433 = vmul.u32.u64.compose %v4432, 3817748708
      %v4434 = vextract.low.u32 %v4433
      %v4435 = vextract.high.u32 %v4433
      %v4436 = vshrl.u32 %v4435, 4
      %v4437 = vmul.u32 %v4436, 18
      %v4438 = vsub.s32 %v4432, %v4437
      %v4439 = vsub.s32 0, %v4438
      %v4440 = vsel %vm4430, %v4439, %v4438
      %vm4441 = vcmp.lt.s32.totalorder %v4125, 0
      %v4442 = vsub.s32 0, %v4125
      %v4443 = vsel %vm4441, %v4442, %v4125
      %v4444 = vmul.u32.u64.compose %v4443, 3817748708
      %v4445 = vextract.low.u32 %v4444
      %v4446 = vextract.high.u32 %v4444
      %v4447 = vshrl.u32 %v4446, 4
      %v4448 = vmul.u32 %v4447, 18
      %v4449 = vsub.s32 %v4443, %v4448
      %v4450 = vsub.s32 0, %v4449
      %v4451 = vsel %vm4441, %v4450, %v4449
      %vm4452 = vcmp.lt.s32.totalorder %v4126, 0
      %v4453 = vsub.s32 0, %v4126
      %v4454 = vsel %vm4452, %v4453, %v4126
      %v4455 = vmul.u32.u64.compose %v4454, 3817748708
      %v4456 = vextract.low.u32 %v4455
      %v4457 = vextract.high.u32 %v4455
      %v4458 = vshrl.u32 %v4457, 4
      %v4459 = vmul.u32 %v4458, 18
      %v4460 = vsub.s32 %v4454, %v4459
      %v4461 = vsub.s32 0, %v4460
      %v4462 = vsel %vm4452, %v4461, %v4460
      %vm4463 = vcmp.lt.s32.totalorder %v4127, 0
      %v4464 = vsub.s32 0, %v4127
      %v4465 = vsel %vm4463, %v4464, %v4127
      %v4466 = vmul.u32.u64.compose %v4465, 3817748708
      %v4467 = vextract.low.u32 %v4466
      %v4468 = vextract.high.u32 %v4466
      %v4469 = vshrl.u32 %v4468, 4
      %v4470 = vmul.u32 %v4469, 18
      %v4471 = vsub.s32 %v4465, %v4470
      %v4472 = vsub.s32 0, %v4471
      %v4473 = vsel %vm4463, %v4472, %v4471
      %vm4474 = vcmp.lt.s32.totalorder %v4128, 0
      %v4475 = vsub.s32 0, %v4128
      %v4476 = vsel %vm4474, %v4475, %v4128
      %v4477 = vmul.u32.u64.compose %v4476, 3817748708
      %v4478 = vextract.low.u32 %v4477
      %v4479 = vextract.high.u32 %v4477
      %v4480 = vshrl.u32 %v4479, 4
      %v4481 = vmul.u32 %v4480, 18
      %v4482 = vsub.s32 %v4476, %v4481
      %v4483 = vsub.s32 0, %v4482
      %v4484 = vsel %vm4474, %v4483, %v4482
      %vm4485 = vcmp.lt.s32.totalorder %v4129, 0
      %v4486 = vsub.s32 0, %v4129
      %v4487 = vsel %vm4485, %v4486, %v4129
      %v4488 = vmul.u32.u64.compose %v4487, 3817748708
      %v4489 = vextract.low.u32 %v4488
      %v4490 = vextract.high.u32 %v4488
      %v4491 = vshrl.u32 %v4490, 4
      %v4492 = vmul.u32 %v4491, 18
      %v4493 = vsub.s32 %v4487, %v4492
      %v4494 = vsub.s32 0, %v4493
      %v4495 = vsel %vm4485, %v4494, %v4493
      %vm4496 = vcmp.lt.s32.totalorder %v4130, 0
      %v4497 = vsub.s32 0, %v4130
      %v4498 = vsel %vm4496, %v4497, %v4130
      %v4499 = vmul.u32.u64.compose %v4498, 3817748708
      %v4500 = vextract.low.u32 %v4499
      %v4501 = vextract.high.u32 %v4499
      %v4502 = vshrl.u32 %v4501, 4
      %v4503 = vmul.u32 %v4502, 18
      %v4504 = vsub.s32 %v4498, %v4503
      %v4505 = vsub.s32 0, %v4504
      %v4506 = vsel %vm4496, %v4505, %v4504
      %vm4507 = vcmp.lt.s32.totalorder %v4131, 0
      %v4508 = vsub.s32 0, %v4131
      %v4509 = vsel %vm4507, %v4508, %v4131
      %v4510 = vmul.u32.u64.compose %v4509, 3817748708
      %v4511 = vextract.low.u32 %v4510
      %v4512 = vextract.high.u32 %v4510
      %v4513 = vshrl.u32 %v4512, 4
      %v4514 = vmul.u32 %v4513, 18
      %v4515 = vsub.s32 %v4509, %v4514
      %v4516 = vsub.s32 0, %v4515
      %v4517 = vsel %vm4507, %v4516, %v4515
      %vm4518 = vcmp.lt.s32.totalorder %v4132, 0
      %v4519 = vsub.s32 0, %v4132
      %v4520 = vsel %vm4518, %v4519, %v4132
      %v4521 = vmul.u32.u64.compose %v4520, 3817748708
      %v4522 = vextract.low.u32 %v4521
      %v4523 = vextract.high.u32 %v4521
      %v4524 = vshrl.u32 %v4523, 4
      %v4525 = vmul.u32 %v4524, 18
      %v4526 = vsub.s32 %v4520, %v4525
      %v4527 = vsub.s32 0, %v4526
      %v4528 = vsel %vm4518, %v4527, %v4526
      %vm4529 = vcmp.ne.s32.totalorder %v4143, 0
      %vm4530 = vcmp.ne.s32.totalorder %v4154, 0
      %vm4531 = vcmp.ne.s32.totalorder %v4165, 0
      %vm4532 = vcmp.ne.s32.totalorder %v4176, 0
      %vm4533 = vcmp.ne.s32.totalorder %v4187, 0
      %vm4534 = vcmp.ne.s32.totalorder %v4198, 0
      %vm4535 = vcmp.ne.s32.totalorder %v4209, 0
      %vm4536 = vcmp.ne.s32.totalorder %v4220, 0
      %vm4537 = vcmp.ne.s32.totalorder %v4231, 0
      %vm4538 = vcmp.ne.s32.totalorder %v4242, 0
      %vm4539 = vcmp.ne.s32.totalorder %v4253, 0
      %vm4540 = vcmp.ne.s32.totalorder %v4264, 0
      %vm4541 = vcmp.ne.s32.totalorder %v4275, 0
      %vm4542 = vcmp.ne.s32.totalorder %v4286, 0
      %vm4543 = vcmp.ne.s32.totalorder %v4297, 0
      %vm4544 = vcmp.ne.s32.totalorder %v4308, 0
      %vm4545 = vcmp.ne.s32.totalorder %v4319, 0
      %vm4546 = vcmp.ne.s32.totalorder %v4330, 0
      %vm4547 = vcmp.ne.s32.totalorder %v4341, 0
      %vm4548 = vcmp.ne.s32.totalorder %v4352, 0
      %vm4549 = vcmp.ne.s32.totalorder %v4363, 0
      %vm4550 = vcmp.ne.s32.totalorder %v4374, 0
      %vm4551 = vcmp.ne.s32.totalorder %v4385, 0
      %vm4552 = vcmp.ne.s32.totalorder %v4396, 0
      %vm4553 = vcmp.ne.s32.totalorder %v4407, 0
      %vm4554 = vcmp.ne.s32.totalorder %v4418, 0
      %vm4555 = vcmp.ne.s32.totalorder %v4429, 0
      %vm4556 = vcmp.ne.s32.totalorder %v4440, 0
      %vm4557 = vcmp.ne.s32.totalorder %v4451, 0
      %vm4558 = vcmp.ne.s32.totalorder %v4462, 0
      %vm4559 = vcmp.ne.s32.totalorder %v4473, 0
      %vm4560 = vcmp.ne.s32.totalorder %v4484, 0
      %vm4561 = vcmp.ne.s32.totalorder %v4495, 0
      %vm4562 = vcmp.ne.s32.totalorder %v4506, 0
      %vm4563 = vcmp.ne.s32.totalorder %v4517, 0
      %vm4564 = vcmp.ne.s32.totalorder %v4528, 0
      %vm4565 = vcmp.lt.s32.totalorder %v4143, 0
      %vm4566 = vcmp.lt.s32.totalorder %v4154, 0
      %vm4567 = vcmp.lt.s32.totalorder %v4165, 0
      %vm4568 = vcmp.lt.s32.totalorder %v4176, 0
      %vm4569 = vcmp.lt.s32.totalorder %v4187, 0
      %vm4570 = vcmp.lt.s32.totalorder %v4198, 0
      %vm4571 = vcmp.lt.s32.totalorder %v4209, 0
      %vm4572 = vcmp.lt.s32.totalorder %v4220, 0
      %vm4573 = vcmp.lt.s32.totalorder %v4231, 0
      %vm4574 = vcmp.lt.s32.totalorder %v4242, 0
      %vm4575 = vcmp.lt.s32.totalorder %v4253, 0
      %vm4576 = vcmp.lt.s32.totalorder %v4264, 0
      %vm4577 = vcmp.lt.s32.totalorder %v4275, 0
      %vm4578 = vcmp.lt.s32.totalorder %v4286, 0
      %vm4579 = vcmp.lt.s32.totalorder %v4297, 0
      %vm4580 = vcmp.lt.s32.totalorder %v4308, 0
      %vm4581 = vcmp.lt.s32.totalorder %v4319, 0
      %vm4582 = vcmp.lt.s32.totalorder %v4330, 0
      %vm4583 = vcmp.lt.s32.totalorder %v4341, 0
      %vm4584 = vcmp.lt.s32.totalorder %v4352, 0
      %vm4585 = vcmp.lt.s32.totalorder %v4363, 0
      %vm4586 = vcmp.lt.s32.totalorder %v4374, 0
      %vm4587 = vcmp.lt.s32.totalorder %v4385, 0
      %vm4588 = vcmp.lt.s32.totalorder %v4396, 0
      %vm4589 = vcmp.lt.s32.totalorder %v4407, 0
      %vm4590 = vcmp.lt.s32.totalorder %v4418, 0
      %vm4591 = vcmp.lt.s32.totalorder %v4429, 0
      %vm4592 = vcmp.lt.s32.totalorder %v4440, 0
      %vm4593 = vcmp.lt.s32.totalorder %v4451, 0
      %vm4594 = vcmp.lt.s32.totalorder %v4462, 0
      %vm4595 = vcmp.lt.s32.totalorder %v4473, 0
      %vm4596 = vcmp.lt.s32.totalorder %v4484, 0
      %vm4597 = vcmp.lt.s32.totalorder %v4495, 0
      %vm4598 = vcmp.lt.s32.totalorder %v4506, 0
      %vm4599 = vcmp.lt.s32.totalorder %v4517, 0
      %vm4600 = vcmp.lt.s32.totalorder %v4528, 0
      %vm4601 = vmand %vm4565, %vm4529
      %vm4602 = vmand %vm4566, %vm4530
      %vm4603 = vmand %vm4567, %vm4531
      %vm4604 = vmand %vm4568, %vm4532
      %vm4605 = vmand %vm4569, %vm4533
      %vm4606 = vmand %vm4570, %vm4534
      %vm4607 = vmand %vm4571, %vm4535
      %vm4608 = vmand %vm4572, %vm4536
      %vm4609 = vmand %vm4573, %vm4537
      %vm4610 = vmand %vm4574, %vm4538
      %vm4611 = vmand %vm4575, %vm4539
      %vm4612 = vmand %vm4576, %vm4540
      %vm4613 = vmand %vm4577, %vm4541
      %vm4614 = vmand %vm4578, %vm4542
      %vm4615 = vmand %vm4579, %vm4543
      %vm4616 = vmand %vm4580, %vm4544
      %vm4617 = vmand %vm4581, %vm4545
      %vm4618 = vmand %vm4582, %vm4546
      %vm4619 = vmand %vm4583, %vm4547
      %vm4620 = vmand %vm4584, %vm4548
      %vm4621 = vmand %vm4585, %vm4549
      %vm4622 = vmand %vm4586, %vm4550
      %vm4623 = vmand %vm4587, %vm4551
      %vm4624 = vmand %vm4588, %vm4552
      %vm4625 = vmand %vm4589, %vm4553
      %vm4626 = vmand %vm4590, %vm4554
      %vm4627 = vmand %vm4591, %vm4555
      %vm4628 = vmand %vm4592, %vm4556
      %vm4629 = vmand %vm4593, %vm4557
      %vm4630 = vmand %vm4594, %vm4558
      %vm4631 = vmand %vm4595, %vm4559
      %vm4632 = vmand %vm4596, %vm4560
      %vm4633 = vmand %vm4597, %vm4561
      %vm4634 = vmand %vm4598, %vm4562
      %vm4635 = vmand %vm4599, %vm4563
      %vm4636 = vmand %vm4600, %vm4564
      %v4637 = vadd.s32 %v4143, 18
      %v4638 = vadd.s32 %v4154, 18
      %v4639 = vadd.s32 %v4165, 18
      %v4640 = vadd.s32 %v4176, 18
      %v4641 = vadd.s32 %v4187, 18
      %v4642 = vadd.s32 %v4198, 18
      %v4643 = vadd.s32 %v4209, 18
      %v4644 = vadd.s32 %v4220, 18
      %v4645 = vadd.s32 %v4231, 18
      %v4646 = vadd.s32 %v4242, 18
      %v4647 = vadd.s32 %v4253, 18
      %v4648 = vadd.s32 %v4264, 18
      %v4649 = vadd.s32 %v4275, 18
      %v4650 = vadd.s32 %v4286, 18
      %v4651 = vadd.s32 %v4297, 18
      %v4652 = vadd.s32 %v4308, 18
      %v4653 = vadd.s32 %v4319, 18
      %v4654 = vadd.s32 %v4330, 18
      %v4655 = vadd.s32 %v4341, 18
      %v4656 = vadd.s32 %v4352, 18
      %v4657 = vadd.s32 %v4363, 18
      %v4658 = vadd.s32 %v4374, 18
      %v4659 = vadd.s32 %v4385, 18
      %v4660 = vadd.s32 %v4396, 18
      %v4661 = vadd.s32 %v4407, 18
      %v4662 = vadd.s32 %v4418, 18
      %v4663 = vadd.s32 %v4429, 18
      %v4664 = vadd.s32 %v4440, 18
      %v4665 = vadd.s32 %v4451, 18
      %v4666 = vadd.s32 %v4462, 18
      %v4667 = vadd.s32 %v4473, 18
      %v4668 = vadd.s32 %v4484, 18
      %v4669 = vadd.s32 %v4495, 18
      %v4670 = vadd.s32 %v4506, 18
      %v4671 = vadd.s32 %v4517, 18
      %v4672 = vadd.s32 %v4528, 18
      %v4673 = vsel %vm4601, %v4637, %v4143
      %v4674 = vsel %vm4602, %v4638, %v4154
      %v4675 = vsel %vm4603, %v4639, %v4165
      %v4676 = vsel %vm4604, %v4640, %v4176
      %v4677 = vsel %vm4605, %v4641, %v4187
      %v4678 = vsel %vm4606, %v4642, %v4198
      %v4679 = vsel %vm4607, %v4643, %v4209
      %v4680 = vsel %vm4608, %v4644, %v4220
      %v4681 = vsel %vm4609, %v4645, %v4231
      %v4682 = vsel %vm4610, %v4646, %v4242
      %v4683 = vsel %vm4611, %v4647, %v4253
      %v4684 = vsel %vm4612, %v4648, %v4264
      %v4685 = vsel %vm4613, %v4649, %v4275
      %v4686 = vsel %vm4614, %v4650, %v4286
      %v4687 = vsel %vm4615, %v4651, %v4297
      %v4688 = vsel %vm4616, %v4652, %v4308
      %v4689 = vsel %vm4617, %v4653, %v4319
      %v4690 = vsel %vm4618, %v4654, %v4330
      %v4691 = vsel %vm4619, %v4655, %v4341
      %v4692 = vsel %vm4620, %v4656, %v4352
      %v4693 = vsel %vm4621, %v4657, %v4363
      %v4694 = vsel %vm4622, %v4658, %v4374
      %v4695 = vsel %vm4623, %v4659, %v4385
      %v4696 = vsel %vm4624, %v4660, %v4396
      %v4697 = vsel %vm4625, %v4661, %v4407
      %v4698 = vsel %vm4626, %v4662, %v4418
      %v4699 = vsel %vm4627, %v4663, %v4429
      %v4700 = vsel %vm4628, %v4664, %v4440
      %v4701 = vsel %vm4629, %v4665, %v4451
      %v4702 = vsel %vm4630, %v4666, %v4462
      %v4703 = vsel %vm4631, %v4667, %v4473
      %v4704 = vsel %vm4632, %v4668, %v4484
      %v4705 = vsel %vm4633, %v4669, %v4495
      %v4706 = vsel %vm4634, %v4670, %v4506
      %v4707 = vsel %vm4635, %v4671, %v4517
      %v4708 = vsel %vm4636, %v4672, %v4528
      %vm4709 = vcmp.lt.s32.totalorder %v4673, 16
      %vm4710 = vcmp.lt.s32.totalorder %v4674, 16
      %vm4711 = vcmp.lt.s32.totalorder %v4675, 16
      %vm4712 = vcmp.lt.s32.totalorder %v4676, 16
      %vm4713 = vcmp.lt.s32.totalorder %v4677, 16
      %vm4714 = vcmp.lt.s32.totalorder %v4678, 16
      %vm4715 = vcmp.lt.s32.totalorder %v4679, 16
      %vm4716 = vcmp.lt.s32.totalorder %v4680, 16
      %vm4717 = vcmp.lt.s32.totalorder %v4681, 16
      %vm4718 = vcmp.lt.s32.totalorder %v4682, 16
      %vm4719 = vcmp.lt.s32.totalorder %v4683, 16
      %vm4720 = vcmp.lt.s32.totalorder %v4684, 16
      %vm4721 = vcmp.lt.s32.totalorder %v4685, 16
      %vm4722 = vcmp.lt.s32.totalorder %v4686, 16
      %vm4723 = vcmp.lt.s32.totalorder %v4687, 16
      %vm4724 = vcmp.lt.s32.totalorder %v4688, 16
      %vm4725 = vcmp.lt.s32.totalorder %v4689, 16
      %vm4726 = vcmp.lt.s32.totalorder %v4690, 16
      %vm4727 = vcmp.lt.s32.totalorder %v4691, 16
      %vm4728 = vcmp.lt.s32.totalorder %v4692, 16
      %vm4729 = vcmp.lt.s32.totalorder %v4693, 16
      %vm4730 = vcmp.lt.s32.totalorder %v4694, 16
      %vm4731 = vcmp.lt.s32.totalorder %v4695, 16
      %vm4732 = vcmp.lt.s32.totalorder %v4696, 16
      %vm4733 = vcmp.lt.s32.totalorder %v4697, 16
      %vm4734 = vcmp.lt.s32.totalorder %v4698, 16
      %vm4735 = vcmp.lt.s32.totalorder %v4699, 16
      %vm4736 = vcmp.lt.s32.totalorder %v4700, 16
      %vm4737 = vcmp.lt.s32.totalorder %v4701, 16
      %vm4738 = vcmp.lt.s32.totalorder %v4702, 16
      %vm4739 = vcmp.lt.s32.totalorder %v4703, 16
      %vm4740 = vcmp.lt.s32.totalorder %v4704, 16
      %vm4741 = vcmp.lt.s32.totalorder %v4705, 16
      %vm4742 = vcmp.lt.s32.totalorder %v4706, 16
      %vm4743 = vcmp.lt.s32.totalorder %v4707, 16
      %vm4744 = vcmp.lt.s32.totalorder %v4708, 16
      %v4745 = vsel %vm4709, 1, 0
      %v4746 = vsel %vm4710, 1, 0
      %v4747 = vsel %vm4711, 1, 0
      %v4748 = vsel %vm4712, 1, 0
      %v4749 = vsel %vm4713, 1, 0
      %v4750 = vsel %vm4714, 1, 0
      %v4751 = vsel %vm4715, 1, 0
      %v4752 = vsel %vm4716, 1, 0
      %v4753 = vsel %vm4717, 1, 0
      %v4754 = vsel %vm4718, 1, 0
      %v4755 = vsel %vm4719, 1, 0
      %v4756 = vsel %vm4720, 1, 0
      %v4757 = vsel %vm4721, 1, 0
      %v4758 = vsel %vm4722, 1, 0
      %v4759 = vsel %vm4723, 1, 0
      %v4760 = vsel %vm4724, 1, 0
      %v4761 = vsel %vm4725, 1, 0
      %v4762 = vsel %vm4726, 1, 0
      %v4763 = vsel %vm4727, 1, 0
      %v4764 = vsel %vm4728, 1, 0
      %v4765 = vsel %vm4729, 1, 0
      %v4766 = vsel %vm4730, 1, 0
      %v4767 = vsel %vm4731, 1, 0
      %v4768 = vsel %vm4732, 1, 0
      %v4769 = vsel %vm4733, 1, 0
      %v4770 = vsel %vm4734, 1, 0
      %v4771 = vsel %vm4735, 1, 0
      %v4772 = vsel %vm4736, 1, 0
      %v4773 = vsel %vm4737, 1, 0
      %v4774 = vsel %vm4738, 1, 0
      %v4775 = vsel %vm4739, 1, 0
      %v4776 = vsel %vm4740, 1, 0
      %v4777 = vsel %vm4741, 1, 0
      %v4778 = vsel %vm4742, 1, 0
      %v4779 = vsel %vm4743, 1, 0
      %v4780 = vsel %vm4744, 1, 0
      %v4781 = vcvt.s32.f32 %v4745
      %v4782 = vcvt.s32.f32 %v4746
      %v4783 = vcvt.s32.f32 %v4747
      %v4784 = vcvt.s32.f32 %v4748
      %v4785 = vcvt.s32.f32 %v4749
      %v4786 = vcvt.s32.f32 %v4750
      %v4787 = vcvt.s32.f32 %v4751
      %v4788 = vcvt.s32.f32 %v4752
      %v4789 = vcvt.s32.f32 %v4753
      %v4790 = vcvt.s32.f32 %v4754
      %v4791 = vcvt.s32.f32 %v4755
      %v4792 = vcvt.s32.f32 %v4756
      %v4793 = vcvt.s32.f32 %v4757
      %v4794 = vcvt.s32.f32 %v4758
      %v4795 = vcvt.s32.f32 %v4759
      %v4796 = vcvt.s32.f32 %v4760
      %v4797 = vcvt.s32.f32 %v4761
      %v4798 = vcvt.s32.f32 %v4762
      %v4799 = vcvt.s32.f32 %v4763
      %v4800 = vcvt.s32.f32 %v4764
      %v4801 = vcvt.s32.f32 %v4765
      %v4802 = vcvt.s32.f32 %v4766
      %v4803 = vcvt.s32.f32 %v4767
      %v4804 = vcvt.s32.f32 %v4768
      %v4805 = vcvt.s32.f32 %v4769
      %v4806 = vcvt.s32.f32 %v4770
      %v4807 = vcvt.s32.f32 %v4771
      %v4808 = vcvt.s32.f32 %v4772
      %v4809 = vcvt.s32.f32 %v4773
      %v4810 = vcvt.s32.f32 %v4774
      %v4811 = vcvt.s32.f32 %v4775
      %v4812 = vcvt.s32.f32 %v4776
      %v4813 = vcvt.s32.f32 %v4777
      %v4814 = vcvt.s32.f32 %v4778
      %v4815 = vcvt.s32.f32 %v4779
      %v4816 = vcvt.s32.f32 %v4780
      %v4817 = vmul.f32 %v3879, %v4781
      %v4818 = vmul.f32 %v3880, %v4782
      %v4819 = vmul.f32 %v3881, %v4783
      %v4820 = vmul.f32 %v3882, %v4784
      %v4821 = vmul.f32 %v3883, %v4785
      %v4822 = vmul.f32 %v3884, %v4786
      %v4823 = vmul.f32 %v3885, %v4787
      %v4824 = vmul.f32 %v3886, %v4788
      %v4825 = vmul.f32 %v3887, %v4789
      %v4826 = vmul.f32 %v3888, %v4790
      %v4827 = vmul.f32 %v3889, %v4791
      %v4828 = vmul.f32 %v3890, %v4792
      %v4829 = vmul.f32 %v3891, %v4793
      %v4830 = vmul.f32 %v3892, %v4794
      %v4831 = vmul.f32 %v3893, %v4795
      %v4832 = vmul.f32 %v3894, %v4796
      %v4833 = vmul.f32 %v3895, %v4797
      %v4834 = vmul.f32 %v3896, %v4798
      %v4835 = vmul.f32 %v3897, %v4799
      %v4836 = vmul.f32 %v3898, %v4800
      %v4837 = vmul.f32 %v3899, %v4801
      %v4838 = vmul.f32 %v3900, %v4802
      %v4839 = vmul.f32 %v3901, %v4803
      %v4840 = vmul.f32 %v3902, %v4804
      %v4841 = vmul.f32 %v3903, %v4805
      %v4842 = vmul.f32 %v3904, %v4806
      %v4843 = vmul.f32 %v3905, %v4807
      %v4844 = vmul.f32 %v3906, %v4808
      %v4845 = vmul.f32 %v3907, %v4809
      %v4846 = vmul.f32 %v3908, %v4810
      %v4847 = vmul.f32 %v3909, %v4811
      %v4848 = vmul.f32 %v3910, %v4812
      %v4849 = vmul.f32 %v3911, %v4813
      %v4850 = vmul.f32 %v3912, %v4814
      %v4851 = vmul.f32 %v3913, %v4815
      %v4852 = vmul.f32 %v3914, %v4816
      %v4853 = vsel %vm536, %v4817, 0.0
      %v4854 = vsel %vm536, %v4818, 0.0
      %v4855 = vadd.f32 %v4853, %v4854
      %v4856 = vsel %vm536, %v4819, 0.0
      %v4857 = vadd.f32 %v4855, %v4856
      %v4858 = vsel %vm536, %v4820, 0.0
      %v4859 = vadd.f32 %v4857, %v4858
      %v4860 = vsel %vm536, %v4821, 0.0
      %v4861 = vadd.f32 %v4859, %v4860
      %v4862 = vsel %vm536, %v4822, 0.0
      %v4863 = vadd.f32 %v4861, %v4862
      %v4864 = vsel %vm536, %v4823, 0.0
      %v4865 = vadd.f32 %v4863, %v4864
      %v4866 = vsel %vm536, %v4824, 0.0
      %v4867 = vadd.f32 %v4865, %v4866
      %v4868 = vsel %vm536, %v4825, 0.0
      %v4869 = vadd.f32 %v4867, %v4868
      %v4870 = vsel %vm536, %v4826, 0.0
      %v4871 = vadd.f32 %v4869, %v4870
      %v4872 = vsel %vm536, %v4827, 0.0
      %v4873 = vadd.f32 %v4871, %v4872
      %v4874 = vsel %vm536, %v4828, 0.0
      %v4875 = vadd.f32 %v4873, %v4874
      %v4876 = vsel %vm536, %v4829, 0.0
      %v4877 = vadd.f32 %v4875, %v4876
      %v4878 = vsel %vm536, %v4830, 0.0
      %v4879 = vadd.f32 %v4877, %v4878
      %v4880 = vsel %vm536, %v4831, 0.0
      %v4881 = vadd.f32 %v4879, %v4880
      %v4882 = vsel %vm536, %v4832, 0.0
      %v4883 = vadd.f32 %v4881, %v4882
      %v4884 = vsel %vm536, %v4833, 0.0
      %v4885 = vadd.f32 %v4883, %v4884
      %v4886 = vsel %vm536, %v4834, 0.0
      %v4887 = vadd.f32 %v4885, %v4886
      %v4888 = vsel %vm536, %v4835, 0.0
      %v4889 = vadd.f32 %v4887, %v4888
      %v4890 = vsel %vm536, %v4836, 0.0
      %v4891 = vadd.f32 %v4889, %v4890
      %v4892 = vsel %vm536, %v4837, 0.0
      %v4893 = vadd.f32 %v4891, %v4892
      %v4894 = vsel %vm536, %v4838, 0.0
      %v4895 = vadd.f32 %v4893, %v4894
      %v4896 = vsel %vm536, %v4839, 0.0
      %v4897 = vadd.f32 %v4895, %v4896
      %v4898 = vsel %vm536, %v4840, 0.0
      %v4899 = vadd.f32 %v4897, %v4898
      %v4900 = vsel %vm536, %v4841, 0.0
      %v4901 = vadd.f32 %v4899, %v4900
      %v4902 = vsel %vm536, %v4842, 0.0
      %v4903 = vadd.f32 %v4901, %v4902
      %v4904 = vsel %vm536, %v4843, 0.0
      %v4905 = vadd.f32 %v4903, %v4904
      %v4906 = vsel %vm536, %v4844, 0.0
      %v4907 = vadd.f32 %v4905, %v4906
      %v4908 = vsel %vm536, %v4845, 0.0
      %v4909 = vadd.f32 %v4907, %v4908
      %v4910 = vsel %vm536, %v4846, 0.0
      %v4911 = vadd.f32 %v4909, %v4910
      %v4912 = vsel %vm536, %v4847, 0.0
      %v4913 = vadd.f32 %v4911, %v4912
      %v4914 = vsel %vm536, %v4848, 0.0
      %v4915 = vadd.f32 %v4913, %v4914
      %v4916 = vsel %vm536, %v4849, 0.0
      %v4917 = vadd.f32 %v4915, %v4916
      %v4918 = vsel %vm536, %v4850, 0.0
      %v4919 = vadd.f32 %v4917, %v4918
      %v4920 = vsel %vm536, %v4851, 0.0
      %v4921 = vadd.f32 %v4919, %v4920
      %v4922 = vsel %vm536, %v4852, 0.0
      %v4923 = vadd.f32 %v4921, %v4922
      %v4924 = vrot.slane %v4923, 4
      %v4925 = vadd.f32 %v4923, %v4924
      %v4926 = vrot.slane %v4925, 2
      %v4927 = vadd.f32 %v4925, %v4926
      %v4928 = vrot.slane %v4927, 1
      %v4929 = vadd.f32 %v4927, %v4928
      %vm4930 = vcmask 516096
      %4931 = vst.msk [vmem:[%s211] sm:$0x1] %vm4930, %v4929
      %v4932 = vmul.f32 %v4817, %v3879
      %v4933 = vmul.f32 %v4818, %v3880
      %v4934 = vmul.f32 %v4819, %v3881
      %v4935 = vmul.f32 %v4820, %v3882
      %v4936 = vmul.f32 %v4821, %v3883
      %v4937 = vmul.f32 %v4822, %v3884
      %v4938 = vmul.f32 %v4823, %v3885
      %v4939 = vmul.f32 %v4824, %v3886
      %v4940 = vmul.f32 %v4825, %v3887
      %v4941 = vmul.f32 %v4826, %v3888
      %v4942 = vmul.f32 %v4827, %v3889
      %v4943 = vmul.f32 %v4828, %v3890
      %v4944 = vmul.f32 %v4829, %v3891
      %v4945 = vmul.f32 %v4830, %v3892
      %v4946 = vmul.f32 %v4831, %v3893
      %v4947 = vmul.f32 %v4832, %v3894
      %v4948 = vmul.f32 %v4833, %v3895
      %v4949 = vmul.f32 %v4834, %v3896
      %v4950 = vmul.f32 %v4835, %v3897
      %v4951 = vmul.f32 %v4836, %v3898
      %v4952 = vmul.f32 %v4837, %v3899
      %v4953 = vmul.f32 %v4838, %v3900
      %v4954 = vmul.f32 %v4839, %v3901
      %v4955 = vmul.f32 %v4840, %v3902
      %v4956 = vmul.f32 %v4841, %v3903
      %v4957 = vmul.f32 %v4842, %v3904
      %v4958 = vmul.f32 %v4843, %v3905
      %v4959 = vmul.f32 %v4844, %v3906
      %v4960 = vmul.f32 %v4845, %v3907
      %v4961 = vmul.f32 %v4846, %v3908
      %v4962 = vmul.f32 %v4847, %v3909
      %v4963 = vmul.f32 %v4848, %v3910
      %v4964 = vmul.f32 %v4849, %v3911
      %v4965 = vmul.f32 %v4850, %v3912
      %v4966 = vmul.f32 %v4851, %v3913
      %v4967 = vmul.f32 %v4852, %v3914
      %v4968 = vsel %vm536, %v4932, 0.0
      %v4969 = vsel %vm536, %v4933, 0.0
      %v4970 = vadd.f32 %v4968, %v4969
      %v4971 = vsel %vm536, %v4934, 0.0
      %v4972 = vadd.f32 %v4970, %v4971
      %v4973 = vsel %vm536, %v4935, 0.0
      %v4974 = vadd.f32 %v4972, %v4973
      %v4975 = vsel %vm536, %v4936, 0.0
      %v4976 = vadd.f32 %v4974, %v4975
      %v4977 = vsel %vm536, %v4937, 0.0
      %v4978 = vadd.f32 %v4976, %v4977
      %v4979 = vsel %vm536, %v4938, 0.0
      %v4980 = vadd.f32 %v4978, %v4979
      %v4981 = vsel %vm536, %v4939, 0.0
      %v4982 = vadd.f32 %v4980, %v4981
      %v4983 = vsel %vm536, %v4940, 0.0
      %v4984 = vadd.f32 %v4982, %v4983
      %v4985 = vsel %vm536, %v4941, 0.0
      %v4986 = vadd.f32 %v4984, %v4985
      %v4987 = vsel %vm536, %v4942, 0.0
      %v4988 = vadd.f32 %v4986, %v4987
      %v4989 = vsel %vm536, %v4943, 0.0
      %v4990 = vadd.f32 %v4988, %v4989
      %v4991 = vsel %vm536, %v4944, 0.0
      %v4992 = vadd.f32 %v4990, %v4991
      %v4993 = vsel %vm536, %v4945, 0.0
      %v4994 = vadd.f32 %v4992, %v4993
      %v4995 = vsel %vm536, %v4946, 0.0
      %v4996 = vadd.f32 %v4994, %v4995
      %v4997 = vsel %vm536, %v4947, 0.0
      %v4998 = vadd.f32 %v4996, %v4997
      %v4999 = vsel %vm536, %v4948, 0.0
      %v5000 = vadd.f32 %v4998, %v4999
      %v5001 = vsel %vm536, %v4949, 0.0
      %v5002 = vadd.f32 %v5000, %v5001
      %v5003 = vsel %vm536, %v4950, 0.0
      %v5004 = vadd.f32 %v5002, %v5003
      %v5005 = vsel %vm536, %v4951, 0.0
      %v5006 = vadd.f32 %v5004, %v5005
      %v5007 = vsel %vm536, %v4952, 0.0
      %v5008 = vadd.f32 %v5006, %v5007
      %v5009 = vsel %vm536, %v4953, 0.0
      %v5010 = vadd.f32 %v5008, %v5009
      %v5011 = vsel %vm536, %v4954, 0.0
      %v5012 = vadd.f32 %v5010, %v5011
      %v5013 = vsel %vm536, %v4955, 0.0
      %v5014 = vadd.f32 %v5012, %v5013
      %v5015 = vsel %vm536, %v4956, 0.0
      %v5016 = vadd.f32 %v5014, %v5015
      %v5017 = vsel %vm536, %v4957, 0.0
      %v5018 = vadd.f32 %v5016, %v5017
      %v5019 = vsel %vm536, %v4958, 0.0
      %v5020 = vadd.f32 %v5018, %v5019
      %v5021 = vsel %vm536, %v4959, 0.0
      %v5022 = vadd.f32 %v5020, %v5021
      %v5023 = vsel %vm536, %v4960, 0.0
      %v5024 = vadd.f32 %v5022, %v5023
      %v5025 = vsel %vm536, %v4961, 0.0
      %v5026 = vadd.f32 %v5024, %v5025
      %v5027 = vsel %vm536, %v4962, 0.0
      %v5028 = vadd.f32 %v5026, %v5027
      %v5029 = vsel %vm536, %v4963, 0.0
      %v5030 = vadd.f32 %v5028, %v5029
      %v5031 = vsel %vm536, %v4964, 0.0
      %v5032 = vadd.f32 %v5030, %v5031
      %v5033 = vsel %vm536, %v4965, 0.0
      %v5034 = vadd.f32 %v5032, %v5033
      %v5035 = vsel %vm536, %v4966, 0.0
      %v5036 = vadd.f32 %v5034, %v5035
      %v5037 = vsel %vm536, %v4967, 0.0
      %v5038 = vadd.f32 %v5036, %v5037
      %v5039 = vrot.slane %v5038, 4
      %v5040 = vadd.f32 %v5038, %v5039
      %v5041 = vrot.slane %v5040, 2
      %v5042 = vadd.f32 %v5040, %v5041
      %v5043 = vrot.slane %v5042, 1
      %v5044 = vadd.f32 %v5042, %v5043
      %5045 = vst.msk [vmem:[%s214] sm:$0x1] %vm4930, %v5044
      %p5046 = scmp.lt.s32.totalorder %s16, 1
      %s5047 = scalar_select %p5046, %s16, 1
      %s5048 = smul.addr %s5047, 36
      %s5049 = smul.addr %s5048, 4
      %s5050 = scalar_lea.vmem %s2, %s5049
      %p5051 = scmp.lt.s32.totalorder %s16, 1
      %s5052 = scalar_select %p5051, %s16, 1
      %s5053 = scalar_lea.vmem %s3, %s5052
      %p5054 = scmp.lt.s32.totalorder %s16, 1
      %s5055 = scalar_select %p5054, %s16, 1
      %s5056 = scalar_lea.vmem %s4, %s5055
      // Predicated region
      $region29: #{_lambda_.3} parent=27 // pred_check
        %p5057 = pneg %p81
      $region30: #{_lambda_.3} parent=27 // pred_check_branch
        %5059 = sbr.rel (%p5057) target = $region32
      $region31: #{_lambda_.3} parent=27 // pred_region
        _
      $region32: #{_lambda_.3} parent=27 // pred_fallthru
        _
      // Predicated region
      $region33: #{_lambda_.3} parent=27 // pred_check
        %p5060 = pneg %p107
      $region34: #{_lambda_.3} parent=27 // pred_check_branch
        %5062 = sbr.rel (%p5060) target = $region36
      $region35: #{_lambda_.3} parent=27 // pred_region
        _
      $region36: #{_lambda_.3} parent=27 // pred_fallthru
        _
      // Predicated region
      $region37: #{_lambda_.3} parent=27 // pred_check
        %p5063 = pneg %p133
      $region38: #{_lambda_.3} parent=27 // pred_check_branch
        %5065 = sbr.rel (%p5063) target = $region40
      $region39: #{_lambda_.3} parent=27 // pred_region
        _
      $region40: #{_lambda_.3} parent=27 // pred_fallthru
        _
    $region28: #{_lambda_.3} parent=5 // pred_fallthru
      _
    %p5066 = scmp.le.s32.totalorder 2, %s11
    // Predicated region
    $region41: #{_lambda_.3} parent=5 // pred_check
      %p5067 = pneg %p5066
    $region42: #{_lambda_.3} parent=5 // pred_check_branch
      %5069 = sbr.rel (%p5067) target = $region44
    $region43: #{_lambda_.3} parent=5 // pred_region
      %s5070 = ssub.s32 %s11, 2
      // Predicated region
      $region45: #{_lambda_.3} parent=43 // pred_check
        %p5071 = pneg %p87
      $region46: #{_lambda_.3} parent=43 // pred_check_branch
        %5073 = sbr.rel (%p5071) target = $region48
      $region47: #{_lambda_.3} parent=43 // pred_region
        %p5074 = scmp.lt.s32.totalorder %s17, 1
        %s5075 = scalar_select %p5074, %s17, 1
        %s5076 = smul.addr %s5075, 36
        %s5077 = smul.addr %s5076, 4
        %s5078 = scalar_lea.vmem %s2, %s5077
      $region48: #{_lambda_.3} parent=43 // pred_fallthru
        _
      // Predicated region
      $region49: #{_lambda_.3} parent=43 // pred_check
        %p5079 = pneg %p113
      $region50: #{_lambda_.3} parent=43 // pred_check_branch
        %5081 = sbr.rel (%p5079) target = $region52
      $region51: #{_lambda_.3} parent=43 // pred_region
        %p5082 = scmp.lt.s32.totalorder %s17, 1
        %s5083 = scalar_select %p5082, %s17, 1
        %s5084 = scalar_lea.vmem %s3, %s5083
      $region52: #{_lambda_.3} parent=43 // pred_fallthru
        _
      // Predicated region
      $region53: #{_lambda_.3} parent=43 // pred_check
        %p5085 = pneg %p139
      $region54: #{_lambda_.3} parent=43 // pred_check_branch
        %5087 = sbr.rel (%p5085) target = $region56
      $region55: #{_lambda_.3} parent=43 // pred_region
        %p5088 = scmp.lt.s32.totalorder %s17, 1
        %s5089 = scalar_select %p5088, %s17, 1
        %s5090 = scalar_lea.vmem %s4, %s5089
      $region56: #{_lambda_.3} parent=43 // pred_fallthru
        _
    $region44: #{_lambda_.3} parent=5 // pred_fallthru
      _
  $region6: #{_lambda_.3} parent=0 // loop_footer
    %s15 = sadd.s32 1, %s11
  $region7: #{_lambda_.3} parent=0 // loop_footer_branch
    %10 = sbr.rel target = $region3
  $region8: #{_lambda_.3} parent=0 // loop_exit
    _

// kernel: _lambda_.4
$region0: #{_lambda_.4}
  #allocation0 [shape = 'u32[]', space=smem, size = 0x4, offset = 0x4, fixed_abs, tag = 'smem constant byte address 0x4 - core index']
  #allocation1 [shape = 'u32[144,128]{1,0:T(1,128)}', space=vmem, size = 0x12000, scoped, tag = 'internal scratch']
  #allocation2 [shape = 'bf16[342,64]{1,0:T(8,128)(2,1)}', space=vmem, size = 0x15800, scoped, tag = 'scratch operand']
  %s0 = inlined_call_operand.vmem [shape: bf16[2,288,64], index: 0, kind: input, shape index: {}]
  %s1 = inlined_call_operand.vmem [shape: f32[1,64], index: 1, kind: input, shape index: {}]
  %s2 = inlined_call_operand.vmem [shape: f32[1,64], index: 2, kind: input, shape index: {}]
  %s3 = inlined_call_operand.vmem [shape: bf16[9,64,64], index: 3, kind: input, shape index: {}]
  %s4 = inlined_call_operand.vmem [shape: bf16[2,288,64], index: 4, kind: output, shape index: {0}]
  %s5 = inlined_call_operand.vmem [shape: f32[2,1,64], index: 5, kind: output, shape index: {1}]
  %s6 = inlined_call_operand.vmem [shape: f32[2,1,64], index: 6, kind: output, shape index: {2}]
  %7 = xla_tuple %s4, %s5, %s6
  %s8 = sld [smem:[#allocation0]]
  $region65: #{_lambda_.4} parent=0
    _
  %s10 = ssub.s32 1, %s8
  %s11 = scalar_select 0, %s10, %s8
  loop: start=0, step=1, limit=4
  $region2: #{_lambda_.4} parent=0 // loop_pre_header
    _
  $region3: #{_lambda_.4} parent=0 // loop_header
    %s13 = sphi 0, %s17
    %p14 = scmp.ge.s32.totalorder %s13, 4
    %s23 = sphi 0, %s25
    %s26 = sphi 0, %s23
    %s27 = sphi 0, %s26
    %s43 = sphi 0, %s27
    %s47 = sphi 0, %s47
    %s49 = sphi 0, %s47
    %s50 = sphi 0, %s49
    %s64 = sphi 0, %s50
    %s68 = sphi 0, %s68
    %s70 = sphi 0, %s68
    %s71 = sphi 0, %s70
    %s85 = sphi 0, %s71
    %s89 = sphi 0, %s89
    %s91 = sphi 0, %s89
    %s92 = sphi 0, %s91
    %s106 = sphi 0, %s92
    %s112 = sphi 0, %s114
    %s115 = sphi 0, %s112
    %s116 = sphi 0, %s115
    %s132 = sphi 0, %s116
    %s138 = sphi 0, %s140
    %s141 = sphi 0, %s138
    %s142 = sphi 0, %s141
    %s158 = sphi 0, %s142
    %s164 = sphi 0, %s166
    %s167 = sphi 0, %s164
    %s168 = sphi 0, %s167
    %s184 = sphi 0, %s168
  $region4: #{_lambda_.4} parent=0 // loop_header_branch
    %16 = sbr.rel (%p14) target = $region8
  $region5: #{_lambda_.4} parent=0 // loop_body
    %s18 = ssub.s32 %s13, 1
    %s19 = ssub.s32 %s13, 2
    %s20 = sadd.s32 %s13, 1
    %s21 = ssub.s32 %s13, %s20
    %p22 = scmp.eq.s32.totalorder %s21, 0
    %s24 = sadd.s32 %s23, 1
    %s25 = scalar_select %p22, %s23, %s24
    %p28 = pneg %p22
    %p29 = scmp.eq.s32.totalorder %s13, 1
    %p30 = por %p28, %p29
    %p31 = scmp.ne.s32.totalorder %s23, %s26
    %p32 = scmp.eq.s32.totalorder %s13, 0
    %p33 = por %p31, %p32
    %p34 = scmp.ne.s32.totalorder %s23, %s26
    %p35 = scmp.eq.s32.totalorder %s18, 1
    %p36 = por %p34, %p35
    %p37 = scmp.ne.s32.totalorder %s26, %s27
    %p38 = scmp.eq.s32.totalorder %s18, 0
    %p39 = por %p37, %p38
    %p40 = scmp.ne.s32.totalorder %s26, %s27
    %p41 = scmp.eq.s32.totalorder %s19, 1
    %p42 = por %p40, %p41
    %p44 = scmp.ne.s32.totalorder %s27, %s43
    %p45 = scmp.eq.s32.totalorder %s19, 0
    %p46 = por %p44, %p45
    %s48 = sadd.s32 %s47, 1
    %p51 = scmp.eq.s32.totalorder %s13, 1
    %p52 = scmp.ne.s32.totalorder %s47, %s49
    %p53 = scmp.eq.s32.totalorder %s13, 0
    %p54 = por %p52, %p53
    %p55 = scmp.ne.s32.totalorder %s47, %s49
    %p56 = scmp.eq.s32.totalorder %s18, 1
    %p57 = por %p55, %p56
    %p58 = scmp.ne.s32.totalorder %s49, %s50
    %p59 = scmp.eq.s32.totalorder %s18, 0
    %p60 = por %p58, %p59
    %p61 = scmp.ne.s32.totalorder %s49, %s50
    %p62 = scmp.eq.s32.totalorder %s19, 1
    %p63 = por %p61, %p62
    %p65 = scmp.ne.s32.totalorder %s50, %s64
    %p66 = scmp.eq.s32.totalorder %s19, 0
    %p67 = por %p65, %p66
    %s69 = sadd.s32 %s68, 1
    %p72 = scmp.eq.s32.totalorder %s13, 1
    %p73 = scmp.ne.s32.totalorder %s68, %s70
    %p74 = scmp.eq.s32.totalorder %s13, 0
    %p75 = por %p73, %p74
    %p76 = scmp.ne.s32.totalorder %s68, %s70
    %p77 = scmp.eq.s32.totalorder %s18, 1
    %p78 = por %p76, %p77
    %p79 = scmp.ne.s32.totalorder %s70, %s71
    %p80 = scmp.eq.s32.totalorder %s18, 0
    %p81 = por %p79, %p80
    %p82 = scmp.ne.s32.totalorder %s70, %s71
    %p83 = scmp.eq.s32.totalorder %s19, 1
    %p84 = por %p82, %p83
    %p86 = scmp.ne.s32.totalorder %s71, %s85
    %p87 = scmp.eq.s32.totalorder %s19, 0
    %p88 = por %p86, %p87
    %s90 = sadd.s32 %s89, 1
    %p93 = scmp.eq.s32.totalorder %s13, 1
    %p94 = scmp.ne.s32.totalorder %s89, %s91
    %p95 = scmp.eq.s32.totalorder %s13, 0
    %p96 = por %p94, %p95
    %p97 = scmp.ne.s32.totalorder %s89, %s91
    %p98 = scmp.eq.s32.totalorder %s18, 1
    %p99 = por %p97, %p98
    %p100 = scmp.ne.s32.totalorder %s91, %s92
    %p101 = scmp.eq.s32.totalorder %s18, 0
    %p102 = por %p100, %p101
    %p103 = scmp.ne.s32.totalorder %s91, %s92
    %p104 = scmp.eq.s32.totalorder %s19, 1
    %p105 = por %p103, %p104
    %p107 = scmp.ne.s32.totalorder %s92, %s106
    %p108 = scmp.eq.s32.totalorder %s19, 0
    %p109 = por %p107, %p108
    %s110 = ssub.s32 %s13, %s20
    %p111 = scmp.eq.s32.totalorder %s110, 0
    %s113 = sadd.s32 %s112, 1
    %s114 = scalar_select %p111, %s112, %s113
    %p117 = pneg %p111
    %p118 = scmp.eq.s32.totalorder %s13, 1
    %p119 = por %p117, %p118
    %p120 = scmp.ne.s32.totalorder %s112, %s115
    %p121 = scmp.eq.s32.totalorder %s13, 0
    %p122 = por %p120, %p121
    %p123 = scmp.ne.s32.totalorder %s112, %s115
    %p124 = scmp.eq.s32.totalorder %s18, 1
    %p125 = por %p123, %p124
    %p126 = scmp.ne.s32.totalorder %s115, %s116
    %p127 = scmp.eq.s32.totalorder %s18, 0
    %p128 = por %p126, %p127
    %p129 = scmp.ne.s32.totalorder %s115, %s116
    %p130 = scmp.eq.s32.totalorder %s19, 1
    %p131 = por %p129, %p130
    %p133 = scmp.ne.s32.totalorder %s116, %s132
    %p134 = scmp.eq.s32.totalorder %s19, 0
    %p135 = por %p133, %p134
    %s136 = ssub.s32 %s13, %s20
    %p137 = scmp.eq.s32.totalorder %s136, 0
    %s139 = sadd.s32 %s138, 1
    %s140 = scalar_select %p137, %s138, %s139
    %p143 = pneg %p137
    %p144 = scmp.eq.s32.totalorder %s13, 1
    %p145 = por %p143, %p144
    %p146 = scmp.ne.s32.totalorder %s138, %s141
    %p147 = scmp.eq.s32.totalorder %s13, 0
    %p148 = por %p146, %p147
    %p149 = scmp.ne.s32.totalorder %s138, %s141
    %p150 = scmp.eq.s32.totalorder %s18, 1
    %p151 = por %p149, %p150
    %p152 = scmp.ne.s32.totalorder %s141, %s142
    %p153 = scmp.eq.s32.totalorder %s18, 0
    %p154 = por %p152, %p153
    %p155 = scmp.ne.s32.totalorder %s141, %s142
    %p156 = scmp.eq.s32.totalorder %s19, 1
    %p157 = por %p155, %p156
    %p159 = scmp.ne.s32.totalorder %s142, %s158
    %p160 = scmp.eq.s32.totalorder %s19, 0
    %p161 = por %p159, %p160
    %s162 = ssub.s32 %s13, %s20
    %p163 = scmp.eq.s32.totalorder %s162, 0
    %s165 = sadd.s32 %s164, 1
    %s166 = scalar_select %p163, %s164, %s165
    %p169 = pneg %p163
    %p170 = scmp.eq.s32.totalorder %s13, 1
    %p171 = por %p169, %p170
    %p172 = scmp.ne.s32.totalorder %s164, %s167
    %p173 = scmp.eq.s32.totalorder %s13, 0
    %p174 = por %p172, %p173
    %p175 = scmp.ne.s32.totalorder %s164, %s167
    %p176 = scmp.eq.s32.totalorder %s18, 1
    %p177 = por %p175, %p176
    %p178 = scmp.ne.s32.totalorder %s167, %s168
    %p179 = scmp.eq.s32.totalorder %s18, 0
    %p180 = por %p178, %p179
    %p181 = scmp.ne.s32.totalorder %s167, %s168
    %p182 = scmp.eq.s32.totalorder %s19, 1
    %p183 = por %p181, %p182
    %p185 = scmp.ne.s32.totalorder %s168, %s184
    %p186 = scmp.eq.s32.totalorder %s19, 0
    %p187 = por %p185, %p186
    %p188 = scmp.le.s32.totalorder 1, %s13
    %p189 = scmp.lt.s32.totalorder %s13, 3
    %p190 = pnand %p188, %p189
    %p191 = pneg %p190
    // Predicated region
    $region9: #{_lambda_.4} parent=5 // pred_check
      _
    $region10: #{_lambda_.4} parent=5 // pred_check_branch
      %193 = sbr.rel (%p190) target = $region12
    $region11: #{_lambda_.4} parent=5 // pred_region
      %s194 = ssub.s32 %s13, 1
      // Predicated region
      $region13: #{_lambda_.4} parent=11 // pred_check
        %p195 = pneg %p60
      $region14: #{_lambda_.4} parent=11 // pred_check_branch
        %197 = sbr.rel (%p195) target = $region16
      $region15: #{_lambda_.4} parent=11 // pred_region
        _
      $region16: #{_lambda_.4} parent=11 // pred_fallthru
        _
      // Predicated region
      $region17: #{_lambda_.4} parent=11 // pred_check
        %p198 = pneg %p81
      $region18: #{_lambda_.4} parent=11 // pred_check_branch
        %200 = sbr.rel (%p198) target = $region20
      $region19: #{_lambda_.4} parent=11 // pred_region
        _
      $region20: #{_lambda_.4} parent=11 // pred_fallthru
        _
      // Predicated region
      $region21: #{_lambda_.4} parent=11 // pred_check
        %p201 = pneg %p102
      $region22: #{_lambda_.4} parent=11 // pred_check_branch
        %203 = sbr.rel (%p201) target = $region24
      $region23: #{_lambda_.4} parent=11 // pred_region
        _
      $region24: #{_lambda_.4} parent=11 // pred_fallthru
        _
    $region12: #{_lambda_.4} parent=5 // pred_fallthru
      _
    %p204 = scmp.lt.s32.totalorder %s13, 2
    // Predicated region
    $region25: #{_lambda_.4} parent=5 // pred_check
      %p205 = pneg %p204
    $region26: #{_lambda_.4} parent=5 // pred_check_branch
      %207 = sbr.rel (%p205) target = $region28
    $region27: #{_lambda_.4} parent=5 // pred_region
      // Predicated region
      $region29: #{_lambda_.4} parent=27 // pred_check
        %p208 = pneg %p33
      $region30: #{_lambda_.4} parent=27 // pred_check_branch
        %210 = sbr.rel (%p208) target = $region32
      $region31: #{_lambda_.4} parent=27 // pred_region
        %p211 = scmp.lt.s32.totalorder %s13, 1
        %s212 = scalar_select %p211, %s13, 1
        %s213 = smul.addr %s212, 36
        %s214 = smul.addr %s213, 4
        %s215 = scalar_lea.vmem %s0, %s214
      $region32: #{_lambda_.4} parent=27 // pred_fallthru
        _
    $region28: #{_lambda_.4} parent=5 // pred_fallthru
      _
    %p216 = scmp.le.s32.totalorder 1, %s13
    %p217 = scmp.lt.s32.totalorder %s13, 3
    %p218 = pnand %p216, %p217
    %p219 = pneg %p218
    // Predicated region
    $region33: #{_lambda_.4} parent=5 // pred_check
      _
    $region34: #{_lambda_.4} parent=5 // pred_check_branch
      %221 = sbr.rel (%p218) target = $region36
    $region35: #{_lambda_.4} parent=5 // pred_region
      %s222 = ssub.s32 %s13, 1
      %p223 = scmp.lt.s32.totalorder %s18, 1
      %s224 = scalar_select %p223, %s18, 1
      %s225 = smul.addr %s224, 36
      %s226 = smul.addr %s225, 4
      %s227 = scalar_lea.vmem %s0, %s226
      %p228 = pneg %p39
      %p229 = pneg %p36
      %p230 = pneg %p60
      %p231 = pneg %p57
      %p232 = pneg %p81
      %p233 = pneg %p78
      %p234 = pneg %p102
      %p235 = pneg %p99
      %p236 = pneg %p128
      %p237 = pneg %p125
      %p238 = scmp.lt.s32.totalorder %s18, 1
      %s239 = scalar_select %p238, %s18, 1
      %s240 = smul.addr %s239, 36
      %s241 = smul.addr %s240, 4
      %s242 = scalar_lea.vmem %s4, %s241
      %p243 = pneg %p154
      %p244 = pneg %p151
      %p245 = scmp.lt.s32.totalorder %s18, 1
      %s246 = scalar_select %p245, %s18, 1
      %s247 = scalar_lea.vmem %s5, %s246
      %p248 = pneg %p180
      %p249 = pneg %p177
      %p250 = scmp.lt.s32.totalorder %s18, 1
      %s251 = scalar_select %p250, %s18, 1
      %s252 = scalar_lea.vmem %s6, %s251
      %p253 = scmp.lt.s32.totalorder %s18, 1
      %s254 = scalar_select %p253, %s18, 1
      %s255 = smul.addr %s254, 36
      %s256 = smul.addr %s255, 4
      %s257 = scalar_lea.vmem %s0, %s256
      %p258 = scmp.lt.s32.totalorder %s18, 1
      %s259 = scalar_select %p258, %s18, 1
      %s260 = smul.addr %s259, 36
      %s261 = smul.addr %s260, 4
      %s262 = scalar_lea.vmem %s4, %s261
      %p263 = scmp.lt.s32.totalorder %s18, 1
      %s264 = scalar_select %p263, %s18, 1
      %s265 = scalar_lea.vmem %s5, %s264
      %p266 = scmp.lt.s32.totalorder %s18, 1
      %s267 = scalar_select %p266, %s18, 1
      %s268 = scalar_lea.vmem %s6, %s267
      %v270 = vld [vmem:[%s257] sm:$0xf]
      %v271 = vld [vmem:[%s257 + $0x4] sm:$0xf]
      %v272 = vld [vmem:[%s257 + $0x8] sm:$0xf]
      %v273 = vld [vmem:[%s257 + $0xc] sm:$0xf]
      %v274 = vld [vmem:[%s257 + $0x10] sm:$0xf]
      %v275 = vld [vmem:[%s257 + $0x14] sm:$0xf]
      %v276 = vld [vmem:[%s257 + $0x18] sm:$0xf]
      %v277 = vld [vmem:[%s257 + $0x1c] sm:$0xf]
      %v278 = vld [vmem:[%s257 + $0x20] sm:$0xf]
      %v279 = vld [vmem:[%s257 + $0x24] sm:$0xf]
      %v280 = vld [vmem:[%s257 + $0x28] sm:$0xf]
      %v281 = vld [vmem:[%s257 + $0x2c] sm:$0xf]
      %v282 = vld [vmem:[%s257 + $0x30] sm:$0xf]
      %v283 = vld [vmem:[%s257 + $0x34] sm:$0xf]
      %v284 = vld [vmem:[%s257 + $0x38] sm:$0xf]
      %v285 = vld [vmem:[%s257 + $0x3c] sm:$0xf]
      %v286 = vld [vmem:[%s257 + $0x40] sm:$0xf]
      %v287 = vld [vmem:[%s257 + $0x44] sm:$0xf]
      %v288 = vld [vmem:[%s257 + $0x48] sm:$0xf]
      %v289 = vld [vmem:[%s257 + $0x4c] sm:$0xf]
      %v290 = vld [vmem:[%s257 + $0x50] sm:$0xf]
      %v291 = vld [vmem:[%s257 + $0x54] sm:$0xf]
      %v292 = vld [vmem:[%s257 + $0x58] sm:$0xf]
      %v293 = vld [vmem:[%s257 + $0x5c] sm:$0xf]
      %v294 = vld [vmem:[%s257 + $0x60] sm:$0xf]
      %v295 = vld [vmem:[%s257 + $0x64] sm:$0xf]
      %v296 = vld [vmem:[%s257 + $0x68] sm:$0xf]
      %v297 = vld [vmem:[%s257 + $0x6c] sm:$0xf]
      %v298 = vld [vmem:[%s257 + $0x70] sm:$0xf]
      %v299 = vld [vmem:[%s257 + $0x74] sm:$0xf]
      %v300 = vld [vmem:[%s257 + $0x78] sm:$0xf]
      %v301 = vld [vmem:[%s257 + $0x7c] sm:$0xf]
      %v302 = vld [vmem:[%s257 + $0x80] sm:$0xf]
      %v303 = vld [vmem:[%s257 + $0x84] sm:$0xf]
      %v304 = vld [vmem:[%s257 + $0x88] sm:$0xf]
      %v305 = vld [vmem:[%s257 + $0x8c] sm:$0xf]
      %v306 = vunpack.c.l.bf16 %v270
      %v307 = vunpack.c.l.bf16 %v271
      %v308 = vunpack.c.l.bf16 %v272
      %v309 = vunpack.c.l.bf16 %v273
      %v310 = vunpack.c.l.bf16 %v274
      %v311 = vunpack.c.l.bf16 %v275
      %v312 = vunpack.c.l.bf16 %v276
      %v313 = vunpack.c.l.bf16 %v277
      %v314 = vunpack.c.l.bf16 %v278
      %v315 = vunpack.c.l.bf16 %v279
      %v316 = vunpack.c.l.bf16 %v280
      %v317 = vunpack.c.l.bf16 %v281
      %v318 = vunpack.c.l.bf16 %v282
      %v319 = vunpack.c.l.bf16 %v283
      %v320 = vunpack.c.l.bf16 %v284
      %v321 = vunpack.c.l.bf16 %v285
      %v322 = vunpack.c.l.bf16 %v286
      %v323 = vunpack.c.l.bf16 %v287
      %v324 = vunpack.c.l.bf16 %v288
      %v325 = vunpack.c.l.bf16 %v289
      %v326 = vunpack.c.l.bf16 %v290
      %v327 = vunpack.c.l.bf16 %v291
      %v328 = vunpack.c.l.bf16 %v292
      %v329 = vunpack.c.l.bf16 %v293
      %v330 = vunpack.c.l.bf16 %v294
      %v331 = vunpack.c.l.bf16 %v295
      %v332 = vunpack.c.l.bf16 %v296
      %v333 = vunpack.c.l.bf16 %v297
      %v334 = vunpack.c.l.bf16 %v298
      %v335 = vunpack.c.l.bf16 %v299
      %v336 = vunpack.c.l.bf16 %v300
      %v337 = vunpack.c.l.bf16 %v301
      %v338 = vunpack.c.l.bf16 %v302
      %v339 = vunpack.c.l.bf16 %v303
      %v340 = vunpack.c.l.bf16 %v304
      %v341 = vunpack.c.l.bf16 %v305
      %v342 = vld [vmem:[%s1] sm:$0x1]
      %v344 = vlaneseq
      %v345 = vshrl.u32 %v344, 7
      %v346 = vsub.s32 0, %v345
      %v347 = vrot.slane %v342, %v346
      %v349 = vmul.f32 %v306, %v347
      %v350 = vmul.f32 %v307, %v347
      %v351 = vmul.f32 %v308, %v347
      %v352 = vmul.f32 %v309, %v347
      %v353 = vmul.f32 %v310, %v347
      %v354 = vmul.f32 %v311, %v347
      %v355 = vmul.f32 %v312, %v347
      %v356 = vmul.f32 %v313, %v347
      %v357 = vmul.f32 %v314, %v347
      %v358 = vmul.f32 %v315, %v347
      %v359 = vmul.f32 %v316, %v347
      %v360 = vmul.f32 %v317, %v347
      %v361 = vmul.f32 %v318, %v347
      %v362 = vmul.f32 %v319, %v347
      %v363 = vmul.f32 %v320, %v347
      %v364 = vmul.f32 %v321, %v347
      %v365 = vmul.f32 %v322, %v347
      %v366 = vmul.f32 %v323, %v347
      %v367 = vmul.f32 %v324, %v347
      %v368 = vmul.f32 %v325, %v347
      %v369 = vmul.f32 %v326, %v347
      %v370 = vmul.f32 %v327, %v347
      %v371 = vmul.f32 %v328, %v347
      %v372 = vmul.f32 %v329, %v347
      %v373 = vmul.f32 %v330, %v347
      %v374 = vmul.f32 %v331, %v347
      %v375 = vmul.f32 %v332, %v347
      %v376 = vmul.f32 %v333, %v347
      %v377 = vmul.f32 %v334, %v347
      %v378 = vmul.f32 %v335, %v347
      %v379 = vmul.f32 %v336, %v347
      %v380 = vmul.f32 %v337, %v347
      %v381 = vmul.f32 %v338, %v347
      %v382 = vmul.f32 %v339, %v347
      %v383 = vmul.f32 %v340, %v347
      %v384 = vmul.f32 %v341, %v347
      %v385 = vld [vmem:[%s2] sm:$0x1]
      %v387 = vlaneseq
      %v388 = vshrl.u32 %v387, 7
      %v389 = vsub.s32 0, %v388
      %v390 = vrot.slane %v385, %v389
      %v392 = vadd.f32 %v349, %v390
      %v393 = vadd.f32 %v350, %v390
      %v394 = vadd.f32 %v351, %v390
      %v395 = vadd.f32 %v352, %v390
      %v396 = vadd.f32 %v353, %v390
      %v397 = vadd.f32 %v354, %v390
      %v398 = vadd.f32 %v355, %v390
      %v399 = vadd.f32 %v356, %v390
      %v400 = vadd.f32 %v357, %v390
      %v401 = vadd.f32 %v358, %v390
      %v402 = vadd.f32 %v359, %v390
      %v403 = vadd.f32 %v360, %v390
      %v404 = vadd.f32 %v361, %v390
      %v405 = vadd.f32 %v362, %v390
      %v406 = vadd.f32 %v363, %v390
      %v407 = vadd.f32 %v364, %v390
      %v408 = vadd.f32 %v365, %v390
      %v409 = vadd.f32 %v366, %v390
      %v410 = vadd.f32 %v367, %v390
      %v411 = vadd.f32 %v368, %v390
      %v412 = vadd.f32 %v369, %v390
      %v413 = vadd.f32 %v370, %v390
      %v414 = vadd.f32 %v371, %v390
      %v415 = vadd.f32 %v372, %v390
      %v416 = vadd.f32 %v373, %v390
      %v417 = vadd.f32 %v374, %v390
      %v418 = vadd.f32 %v375, %v390
      %v419 = vadd.f32 %v376, %v390
      %v420 = vadd.f32 %v377, %v390
      %v421 = vadd.f32 %v378, %v390
      %v422 = vadd.f32 %v379, %v390
      %v423 = vadd.f32 %v380, %v390
      %v424 = vadd.f32 %v381, %v390
      %v425 = vadd.f32 %v382, %v390
      %v426 = vadd.f32 %v383, %v390
      %v427 = vadd.f32 %v384, %v390
      %v428 = vmax.f32 %v392, 0.0
      %v429 = vmax.f32 %v393, 0.0
      %v430 = vmax.f32 %v394, 0.0
      %v431 = vmax.f32 %v395, 0.0
      %v432 = vmax.f32 %v396, 0.0
      %v433 = vmax.f32 %v397, 0.0
      %v434 = vmax.f32 %v398, 0.0
      %v435 = vmax.f32 %v399, 0.0
      %v436 = vmax.f32 %v400, 0.0
      %v437 = vmax.f32 %v401, 0.0
      %v438 = vmax.f32 %v402, 0.0
      %v439 = vmax.f32 %v403, 0.0
      %v440 = vmax.f32 %v404, 0.0
      %v441 = vmax.f32 %v405, 0.0
      %v442 = vmax.f32 %v406, 0.0
      %v443 = vmax.f32 %v407, 0.0
      %v444 = vmax.f32 %v408, 0.0
      %v445 = vmax.f32 %v409, 0.0
      %v446 = vmax.f32 %v410, 0.0
      %v447 = vmax.f32 %v411, 0.0
      %v448 = vmax.f32 %v412, 0.0
      %v449 = vmax.f32 %v413, 0.0
      %v450 = vmax.f32 %v414, 0.0
      %v451 = vmax.f32 %v415, 0.0
      %v452 = vmax.f32 %v416, 0.0
      %v453 = vmax.f32 %v417, 0.0
      %v454 = vmax.f32 %v418, 0.0
      %v455 = vmax.f32 %v419, 0.0
      %v456 = vmax.f32 %v420, 0.0
      %v457 = vmax.f32 %v421, 0.0
      %v458 = vmax.f32 %v422, 0.0
      %v459 = vmax.f32 %v423, 0.0
      %v460 = vmax.f32 %v424, 0.0
      %v461 = vmax.f32 %v425, 0.0
      %v462 = vmax.f32 %v426, 0.0
      %v463 = vmax.f32 %v427, 0.0
      %v464 = vlaneseq
      %v465 = vshrl.u32 %v464, 7
      %v466 = vadd.s32 %v465, 8
      %v467 = vadd.s32 %v465, 16
      %v468 = vadd.s32 %v465, 24
      %v469 = vadd.s32 %v465, 32
      %v470 = vadd.s32 %v465, 40
      %v471 = vadd.s32 %v465, 48
      %v472 = vadd.s32 %v465, 56
      %v473 = vadd.s32 %v465, 64
      %v474 = vadd.s32 %v465, 72
      %v475 = vadd.s32 %v465, 80
      %v476 = vadd.s32 %v465, 88
      %v477 = vadd.s32 %v465, 96
      %v478 = vadd.s32 %v465, 104
      %v479 = vadd.s32 %v465, 112
      %v480 = vadd.s32 %v465, 120
      %v481 = vadd.s32 %v465, 128
      %v482 = vadd.s32 %v465, 136
      %v483 = vadd.s32 %v465, 144
      %v484 = vadd.s32 %v465, 152
      %v485 = vadd.s32 %v465, 160
      %v486 = vadd.s32 %v465, 168
      %v487 = vadd.s32 %v465, 176
      %v488 = vadd.s32 %v465, 184
      %v489 = vadd.s32 %v465, 192
      %v490 = vadd.s32 %v465, 200
      %v491 = vadd.s32 %v465, 208
      %v492 = vadd.s32 %v465, 216
      %v493 = vadd.s32 %v465, 224
      %v494 = vadd.s32 %v465, 232
      %v495 = vadd.s32 %v465, 240
      %v496 = vadd.s32 %v465, 248
      %v497 = vadd.s32 %v465, 256
      %v498 = vadd.s32 %v465, 264
      %v499 = vadd.s32 %v465, 272
      %v500 = vadd.s32 %v465, 280
      %vm501 = vcmp.lt.s32.totalorder %v465, 0
      %v502 = vsub.s32 0, %v465
      %v503 = vsel %vm501, %v502, %v465
      %v504 = vmul.u32.u64.compose %v503, 3817748708
      %v505 = vextract.low.u32 %v504
      %v506 = vextract.high.u32 %v504
      %v507 = vshrl.u32 %v506, 4
      %v508 = vmul.u32 %v507, 18
      %v509 = vsub.s32 %v503, %v508
      %v510 = vsub.s32 0, %v509
      %v511 = vsel %vm501, %v510, %v509
      %vm512 = vcmp.lt.s32.totalorder %v466, 0
      %v513 = vsub.s32 0, %v466
      %v514 = vsel %vm512, %v513, %v466
      %v515 = vmul.u32.u64.compose %v514, 3817748708
      %v516 = vextract.low.u32 %v515
      %v517 = vextract.high.u32 %v515
      %v518 = vshrl.u32 %v517, 4
      %v519 = vmul.u32 %v518, 18
      %v520 = vsub.s32 %v514, %v519
      %v521 = vsub.s32 0, %v520
      %v522 = vsel %vm512, %v521, %v520
      %vm523 = vcmp.lt.s32.totalorder %v467, 0
      %v524 = vsub.s32 0, %v467
      %v525 = vsel %vm523, %v524, %v467
      %v526 = vmul.u32.u64.compose %v525, 3817748708
      %v527 = vextract.low.u32 %v526
      %v528 = vextract.high.u32 %v526
      %v529 = vshrl.u32 %v528, 4
      %v530 = vmul.u32 %v529, 18
      %v531 = vsub.s32 %v525, %v530
      %v532 = vsub.s32 0, %v531
      %v533 = vsel %vm523, %v532, %v531
      %vm534 = vcmp.lt.s32.totalorder %v468, 0
      %v535 = vsub.s32 0, %v468
      %v536 = vsel %vm534, %v535, %v468
      %v537 = vmul.u32.u64.compose %v536, 3817748708
      %v538 = vextract.low.u32 %v537
      %v539 = vextract.high.u32 %v537
      %v540 = vshrl.u32 %v539, 4
      %v541 = vmul.u32 %v540, 18
      %v542 = vsub.s32 %v536, %v541
      %v543 = vsub.s32 0, %v542
      %v544 = vsel %vm534, %v543, %v542
      %vm545 = vcmp.lt.s32.totalorder %v469, 0
      %v546 = vsub.s32 0, %v469
      %v547 = vsel %vm545, %v546, %v469
      %v548 = vmul.u32.u64.compose %v547, 3817748708
      %v549 = vextract.low.u32 %v548
      %v550 = vextract.high.u32 %v548
      %v551 = vshrl.u32 %v550, 4
      %v552 = vmul.u32 %v551, 18
      %v553 = vsub.s32 %v547, %v552
      %v554 = vsub.s32 0, %v553
      %v555 = vsel %vm545, %v554, %v553
      %vm556 = vcmp.lt.s32.totalorder %v470, 0
      %v557 = vsub.s32 0, %v470
      %v558 = vsel %vm556, %v557, %v470
      %v559 = vmul.u32.u64.compose %v558, 3817748708
      %v560 = vextract.low.u32 %v559
      %v561 = vextract.high.u32 %v559
      %v562 = vshrl.u32 %v561, 4
      %v563 = vmul.u32 %v562, 18
      %v564 = vsub.s32 %v558, %v563
      %v565 = vsub.s32 0, %v564
      %v566 = vsel %vm556, %v565, %v564
      %vm567 = vcmp.lt.s32.totalorder %v471, 0
      %v568 = vsub.s32 0, %v471
      %v569 = vsel %vm567, %v568, %v471
      %v570 = vmul.u32.u64.compose %v569, 3817748708
      %v571 = vextract.low.u32 %v570
      %v572 = vextract.high.u32 %v570
      %v573 = vshrl.u32 %v572, 4
      %v574 = vmul.u32 %v573, 18
      %v575 = vsub.s32 %v569, %v574
      %v576 = vsub.s32 0, %v575
      %v577 = vsel %vm567, %v576, %v575
      %vm578 = vcmp.lt.s32.totalorder %v472, 0
      %v579 = vsub.s32 0, %v472
      %v580 = vsel %vm578, %v579, %v472
      %v581 = vmul.u32.u64.compose %v580, 3817748708
      %v582 = vextract.low.u32 %v581
      %v583 = vextract.high.u32 %v581
      %v584 = vshrl.u32 %v583, 4
      %v585 = vmul.u32 %v584, 18
      %v586 = vsub.s32 %v580, %v585
      %v587 = vsub.s32 0, %v586
      %v588 = vsel %vm578, %v587, %v586
      %vm589 = vcmp.lt.s32.totalorder %v473, 0
      %v590 = vsub.s32 0, %v473
      %v591 = vsel %vm589, %v590, %v473
      %v592 = vmul.u32.u64.compose %v591, 3817748708
      %v593 = vextract.low.u32 %v592
      %v594 = vextract.high.u32 %v592
      %v595 = vshrl.u32 %v594, 4
      %v596 = vmul.u32 %v595, 18
      %v597 = vsub.s32 %v591, %v596
      %v598 = vsub.s32 0, %v597
      %v599 = vsel %vm589, %v598, %v597
      %vm600 = vcmp.lt.s32.totalorder %v474, 0
      %v601 = vsub.s32 0, %v474
      %v602 = vsel %vm600, %v601, %v474
      %v603 = vmul.u32.u64.compose %v602, 3817748708
      %v604 = vextract.low.u32 %v603
      %v605 = vextract.high.u32 %v603
      %v606 = vshrl.u32 %v605, 4
      %v607 = vmul.u32 %v606, 18
      %v608 = vsub.s32 %v602, %v607
      %v609 = vsub.s32 0, %v608
      %v610 = vsel %vm600, %v609, %v608
      %vm611 = vcmp.lt.s32.totalorder %v475, 0
      %v612 = vsub.s32 0, %v475
      %v613 = vsel %vm611, %v612, %v475
      %v614 = vmul.u32.u64.compose %v613, 3817748708
      %v615 = vextract.low.u32 %v614
      %v616 = vextract.high.u32 %v614
      %v617 = vshrl.u32 %v616, 4
      %v618 = vmul.u32 %v617, 18
      %v619 = vsub.s32 %v613, %v618
      %v620 = vsub.s32 0, %v619
      %v621 = vsel %vm611, %v620, %v619
      %vm622 = vcmp.lt.s32.totalorder %v476, 0
      %v623 = vsub.s32 0, %v476
      %v624 = vsel %vm622, %v623, %v476
      %v625 = vmul.u32.u64.compose %v624, 3817748708
      %v626 = vextract.low.u32 %v625
      %v627 = vextract.high.u32 %v625
      %v628 = vshrl.u32 %v627, 4
      %v629 = vmul.u32 %v628, 18
      %v630 = vsub.s32 %v624, %v629
      %v631 = vsub.s32 0, %v630
      %v632 = vsel %vm622, %v631, %v630
      %vm633 = vcmp.lt.s32.totalorder %v477, 0
      %v634 = vsub.s32 0, %v477
      %v635 = vsel %vm633, %v634, %v477
      %v636 = vmul.u32.u64.compose %v635, 3817748708
      %v637 = vextract.low.u32 %v636
      %v638 = vextract.high.u32 %v636
      %v639 = vshrl.u32 %v638, 4
      %v640 = vmul.u32 %v639, 18
      %v641 = vsub.s32 %v635, %v640
      %v642 = vsub.s32 0, %v641
      %v643 = vsel %vm633, %v642, %v641
      %vm644 = vcmp.lt.s32.totalorder %v478, 0
      %v645 = vsub.s32 0, %v478
      %v646 = vsel %vm644, %v645, %v478
      %v647 = vmul.u32.u64.compose %v646, 3817748708
      %v648 = vextract.low.u32 %v647
      %v649 = vextract.high.u32 %v647
      %v650 = vshrl.u32 %v649, 4
      %v651 = vmul.u32 %v650, 18
      %v652 = vsub.s32 %v646, %v651
      %v653 = vsub.s32 0, %v652
      %v654 = vsel %vm644, %v653, %v652
      %vm655 = vcmp.lt.s32.totalorder %v479, 0
      %v656 = vsub.s32 0, %v479
      %v657 = vsel %vm655, %v656, %v479
      %v658 = vmul.u32.u64.compose %v657, 3817748708
      %v659 = vextract.low.u32 %v658
      %v660 = vextract.high.u32 %v658
      %v661 = vshrl.u32 %v660, 4
      %v662 = vmul.u32 %v661, 18
      %v663 = vsub.s32 %v657, %v662
      %v664 = vsub.s32 0, %v663
      %v665 = vsel %vm655, %v664, %v663
      %vm666 = vcmp.lt.s32.totalorder %v480, 0
      %v667 = vsub.s32 0, %v480
      %v668 = vsel %vm666, %v667, %v480
      %v669 = vmul.u32.u64.compose %v668, 3817748708
      %v670 = vextract.low.u32 %v669
      %v671 = vextract.high.u32 %v669
      %v672 = vshrl.u32 %v671, 4
      %v673 = vmul.u32 %v672, 18
      %v674 = vsub.s32 %v668, %v673
      %v675 = vsub.s32 0, %v674
      %v676 = vsel %vm666, %v675, %v674
      %vm677 = vcmp.lt.s32.totalorder %v481, 0
      %v678 = vsub.s32 0, %v481
      %v679 = vsel %vm677, %v678, %v481
      %v680 = vmul.u32.u64.compose %v679, 3817748708
      %v681 = vextract.low.u32 %v680
      %v682 = vextract.high.u32 %v680
      %v683 = vshrl.u32 %v682, 4
      %v684 = vmul.u32 %v683, 18
      %v685 = vsub.s32 %v679, %v684
      %v686 = vsub.s32 0, %v685
      %v687 = vsel %vm677, %v686, %v685
      %vm688 = vcmp.lt.s32.totalorder %v482, 0
      %v689 = vsub.s32 0, %v482
      %v690 = vsel %vm688, %v689, %v482
      %v691 = vmul.u32.u64.compose %v690, 3817748708
      %v692 = vextract.low.u32 %v691
      %v693 = vextract.high.u32 %v691
      %v694 = vshrl.u32 %v693, 4
      %v695 = vmul.u32 %v694, 18
      %v696 = vsub.s32 %v690, %v695
      %v697 = vsub.s32 0, %v696
      %v698 = vsel %vm688, %v697, %v696
      %vm699 = vcmp.lt.s32.totalorder %v483, 0
      %v700 = vsub.s32 0, %v483
      %v701 = vsel %vm699, %v700, %v483
      %v702 = vmul.u32.u64.compose %v701, 3817748708
      %v703 = vextract.low.u32 %v702
      %v704 = vextract.high.u32 %v702
      %v705 = vshrl.u32 %v704, 4
      %v706 = vmul.u32 %v705, 18
      %v707 = vsub.s32 %v701, %v706
      %v708 = vsub.s32 0, %v707
      %v709 = vsel %vm699, %v708, %v707
      %vm710 = vcmp.lt.s32.totalorder %v484, 0
      %v711 = vsub.s32 0, %v484
      %v712 = vsel %vm710, %v711, %v484
      %v713 = vmul.u32.u64.compose %v712, 3817748708
      %v714 = vextract.low.u32 %v713
      %v715 = vextract.high.u32 %v713
      %v716 = vshrl.u32 %v715, 4
      %v717 = vmul.u32 %v716, 18
      %v718 = vsub.s32 %v712, %v717
      %v719 = vsub.s32 0, %v718
      %v720 = vsel %vm710, %v719, %v718
      %vm721 = vcmp.lt.s32.totalorder %v485, 0
      %v722 = vsub.s32 0, %v485
      %v723 = vsel %vm721, %v722, %v485
      %v724 = vmul.u32.u64.compose %v723, 3817748708
      %v725 = vextract.low.u32 %v724
      %v726 = vextract.high.u32 %v724
      %v727 = vshrl.u32 %v726, 4
      %v728 = vmul.u32 %v727, 18
      %v729 = vsub.s32 %v723, %v728
      %v730 = vsub.s32 0, %v729
      %v731 = vsel %vm721, %v730, %v729
      %vm732 = vcmp.lt.s32.totalorder %v486, 0
      %v733 = vsub.s32 0, %v486
      %v734 = vsel %vm732, %v733, %v486
      %v735 = vmul.u32.u64.compose %v734, 3817748708
      %v736 = vextract.low.u32 %v735
      %v737 = vextract.high.u32 %v735
      %v738 = vshrl.u32 %v737, 4
      %v739 = vmul.u32 %v738, 18
      %v740 = vsub.s32 %v734, %v739
      %v741 = vsub.s32 0, %v740
      %v742 = vsel %vm732, %v741, %v740
      %vm743 = vcmp.lt.s32.totalorder %v487, 0
      %v744 = vsub.s32 0, %v487
      %v745 = vsel %vm743, %v744, %v487
      %v746 = vmul.u32.u64.compose %v745, 3817748708
      %v747 = vextract.low.u32 %v746
      %v748 = vextract.high.u32 %v746
      %v749 = vshrl.u32 %v748, 4
      %v750 = vmul.u32 %v749, 18
      %v751 = vsub.s32 %v745, %v750
      %v752 = vsub.s32 0, %v751
      %v753 = vsel %vm743, %v752, %v751
      %vm754 = vcmp.lt.s32.totalorder %v488, 0
      %v755 = vsub.s32 0, %v488
      %v756 = vsel %vm754, %v755, %v488
      %v757 = vmul.u32.u64.compose %v756, 3817748708
      %v758 = vextract.low.u32 %v757
      %v759 = vextract.high.u32 %v757
      %v760 = vshrl.u32 %v759, 4
      %v761 = vmul.u32 %v760, 18
      %v762 = vsub.s32 %v756, %v761
      %v763 = vsub.s32 0, %v762
      %v764 = vsel %vm754, %v763, %v762
      %vm765 = vcmp.lt.s32.totalorder %v489, 0
      %v766 = vsub.s32 0, %v489
      %v767 = vsel %vm765, %v766, %v489
      %v768 = vmul.u32.u64.compose %v767, 3817748708
      %v769 = vextract.low.u32 %v768
      %v770 = vextract.high.u32 %v768
      %v771 = vshrl.u32 %v770, 4
      %v772 = vmul.u32 %v771, 18
      %v773 = vsub.s32 %v767, %v772
      %v774 = vsub.s32 0, %v773
      %v775 = vsel %vm765, %v774, %v773
      %vm776 = vcmp.lt.s32.totalorder %v490, 0
      %v777 = vsub.s32 0, %v490
      %v778 = vsel %vm776, %v777, %v490
      %v779 = vmul.u32.u64.compose %v778, 3817748708
      %v780 = vextract.low.u32 %v779
      %v781 = vextract.high.u32 %v779
      %v782 = vshrl.u32 %v781, 4
      %v783 = vmul.u32 %v782, 18
      %v784 = vsub.s32 %v778, %v783
      %v785 = vsub.s32 0, %v784
      %v786 = vsel %vm776, %v785, %v784
      %vm787 = vcmp.lt.s32.totalorder %v491, 0
      %v788 = vsub.s32 0, %v491
      %v789 = vsel %vm787, %v788, %v491
      %v790 = vmul.u32.u64.compose %v789, 3817748708
      %v791 = vextract.low.u32 %v790
      %v792 = vextract.high.u32 %v790
      %v793 = vshrl.u32 %v792, 4
      %v794 = vmul.u32 %v793, 18
      %v795 = vsub.s32 %v789, %v794
      %v796 = vsub.s32 0, %v795
      %v797 = vsel %vm787, %v796, %v795
      %vm798 = vcmp.lt.s32.totalorder %v492, 0
      %v799 = vsub.s32 0, %v492
      %v800 = vsel %vm798, %v799, %v492
      %v801 = vmul.u32.u64.compose %v800, 3817748708
      %v802 = vextract.low.u32 %v801
      %v803 = vextract.high.u32 %v801
      %v804 = vshrl.u32 %v803, 4
      %v805 = vmul.u32 %v804, 18
      %v806 = vsub.s32 %v800, %v805
      %v807 = vsub.s32 0, %v806
      %v808 = vsel %vm798, %v807, %v806
      %vm809 = vcmp.lt.s32.totalorder %v493, 0
      %v810 = vsub.s32 0, %v493
      %v811 = vsel %vm809, %v810, %v493
      %v812 = vmul.u32.u64.compose %v811, 3817748708
      %v813 = vextract.low.u32 %v812
      %v814 = vextract.high.u32 %v812
      %v815 = vshrl.u32 %v814, 4
      %v816 = vmul.u32 %v815, 18
      %v817 = vsub.s32 %v811, %v816
      %v818 = vsub.s32 0, %v817
      %v819 = vsel %vm809, %v818, %v817
      %vm820 = vcmp.lt.s32.totalorder %v494, 0
      %v821 = vsub.s32 0, %v494
      %v822 = vsel %vm820, %v821, %v494
      %v823 = vmul.u32.u64.compose %v822, 3817748708
      %v824 = vextract.low.u32 %v823
      %v825 = vextract.high.u32 %v823
      %v826 = vshrl.u32 %v825, 4
      %v827 = vmul.u32 %v826, 18
      %v828 = vsub.s32 %v822, %v827
      %v829 = vsub.s32 0, %v828
      %v830 = vsel %vm820, %v829, %v828
      %vm831 = vcmp.lt.s32.totalorder %v495, 0
      %v832 = vsub.s32 0, %v495
      %v833 = vsel %vm831, %v832, %v495
      %v834 = vmul.u32.u64.compose %v833, 3817748708
      %v835 = vextract.low.u32 %v834
      %v836 = vextract.high.u32 %v834
      %v837 = vshrl.u32 %v836, 4
      %v838 = vmul.u32 %v837, 18
      %v839 = vsub.s32 %v833, %v838
      %v840 = vsub.s32 0, %v839
      %v841 = vsel %vm831, %v840, %v839
      %vm842 = vcmp.lt.s32.totalorder %v496, 0
      %v843 = vsub.s32 0, %v496
      %v844 = vsel %vm842, %v843, %v496
      %v845 = vmul.u32.u64.compose %v844, 3817748708
      %v846 = vextract.low.u32 %v845
      %v847 = vextract.high.u32 %v845
      %v848 = vshrl.u32 %v847, 4
      %v849 = vmul.u32 %v848, 18
      %v850 = vsub.s32 %v844, %v849
      %v851 = vsub.s32 0, %v850
      %v852 = vsel %vm842, %v851, %v850
      %vm853 = vcmp.lt.s32.totalorder %v497, 0
      %v854 = vsub.s32 0, %v497
      %v855 = vsel %vm853, %v854, %v497
      %v856 = vmul.u32.u64.compose %v855, 3817748708
      %v857 = vextract.low.u32 %v856
      %v858 = vextract.high.u32 %v856
      %v859 = vshrl.u32 %v858, 4
      %v860 = vmul.u32 %v859, 18
      %v861 = vsub.s32 %v855, %v860
      %v862 = vsub.s32 0, %v861
      %v863 = vsel %vm853, %v862, %v861
      %vm864 = vcmp.lt.s32.totalorder %v498, 0
      %v865 = vsub.s32 0, %v498
      %v866 = vsel %vm864, %v865, %v498
      %v867 = vmul.u32.u64.compose %v866, 3817748708
      %v868 = vextract.low.u32 %v867
      %v869 = vextract.high.u32 %v867
      %v870 = vshrl.u32 %v869, 4
      %v871 = vmul.u32 %v870, 18
      %v872 = vsub.s32 %v866, %v871
      %v873 = vsub.s32 0, %v872
      %v874 = vsel %vm864, %v873, %v872
      %vm875 = vcmp.lt.s32.totalorder %v499, 0
      %v876 = vsub.s32 0, %v499
      %v877 = vsel %vm875, %v876, %v499
      %v878 = vmul.u32.u64.compose %v877, 3817748708
      %v879 = vextract.low.u32 %v878
      %v880 = vextract.high.u32 %v878
      %v881 = vshrl.u32 %v880, 4
      %v882 = vmul.u32 %v881, 18
      %v883 = vsub.s32 %v877, %v882
      %v884 = vsub.s32 0, %v883
      %v885 = vsel %vm875, %v884, %v883
      %vm886 = vcmp.lt.s32.totalorder %v500, 0
      %v887 = vsub.s32 0, %v500
      %v888 = vsel %vm886, %v887, %v500
      %v889 = vmul.u32.u64.compose %v888, 3817748708
      %v890 = vextract.low.u32 %v889
      %v891 = vextract.high.u32 %v889
      %v892 = vshrl.u32 %v891, 4
      %v893 = vmul.u32 %v892, 18
      %v894 = vsub.s32 %v888, %v893
      %v895 = vsub.s32 0, %v894
      %v896 = vsel %vm886, %v895, %v894
      %vm897 = vcmp.ne.s32.totalorder %v511, 0
      %vm898 = vcmp.ne.s32.totalorder %v522, 0
      %vm899 = vcmp.ne.s32.totalorder %v533, 0
      %vm900 = vcmp.ne.s32.totalorder %v544, 0
      %vm901 = vcmp.ne.s32.totalorder %v555, 0
      %vm902 = vcmp.ne.s32.totalorder %v566, 0
      %vm903 = vcmp.ne.s32.totalorder %v577, 0
      %vm904 = vcmp.ne.s32.totalorder %v588, 0
      %vm905 = vcmp.ne.s32.totalorder %v599, 0
      %vm906 = vcmp.ne.s32.totalorder %v610, 0
      %vm907 = vcmp.ne.s32.totalorder %v621, 0
      %vm908 = vcmp.ne.s32.totalorder %v632, 0
      %vm909 = vcmp.ne.s32.totalorder %v643, 0
      %vm910 = vcmp.ne.s32.totalorder %v654, 0
      %vm911 = vcmp.ne.s32.totalorder %v665, 0
      %vm912 = vcmp.ne.s32.totalorder %v676, 0
      %vm913 = vcmp.ne.s32.totalorder %v687, 0
      %vm914 = vcmp.ne.s32.totalorder %v698, 0
      %vm915 = vcmp.ne.s32.totalorder %v709, 0
      %vm916 = vcmp.ne.s32.totalorder %v720, 0
      %vm917 = vcmp.ne.s32.totalorder %v731, 0
      %vm918 = vcmp.ne.s32.totalorder %v742, 0
      %vm919 = vcmp.ne.s32.totalorder %v753, 0
      %vm920 = vcmp.ne.s32.totalorder %v764, 0
      %vm921 = vcmp.ne.s32.totalorder %v775, 0
      %vm922 = vcmp.ne.s32.totalorder %v786, 0
      %vm923 = vcmp.ne.s32.totalorder %v797, 0
      %vm924 = vcmp.ne.s32.totalorder %v808, 0
      %vm925 = vcmp.ne.s32.totalorder %v819, 0
      %vm926 = vcmp.ne.s32.totalorder %v830, 0
      %vm927 = vcmp.ne.s32.totalorder %v841, 0
      %vm928 = vcmp.ne.s32.totalorder %v852, 0
      %vm929 = vcmp.ne.s32.totalorder %v863, 0
      %vm930 = vcmp.ne.s32.totalorder %v874, 0
      %vm931 = vcmp.ne.s32.totalorder %v885, 0
      %vm932 = vcmp.ne.s32.totalorder %v896, 0
      %vm933 = vcmp.lt.s32.totalorder %v511, 0
      %vm934 = vcmp.lt.s32.totalorder %v522, 0
      %vm935 = vcmp.lt.s32.totalorder %v533, 0
      %vm936 = vcmp.lt.s32.totalorder %v544, 0
      %vm937 = vcmp.lt.s32.totalorder %v555, 0
      %vm938 = vcmp.lt.s32.totalorder %v566, 0
      %vm939 = vcmp.lt.s32.totalorder %v577, 0
      %vm940 = vcmp.lt.s32.totalorder %v588, 0
      %vm941 = vcmp.lt.s32.totalorder %v599, 0
      %vm942 = vcmp.lt.s32.totalorder %v610, 0
      %vm943 = vcmp.lt.s32.totalorder %v621, 0
      %vm944 = vcmp.lt.s32.totalorder %v632, 0
      %vm945 = vcmp.lt.s32.totalorder %v643, 0
      %vm946 = vcmp.lt.s32.totalorder %v654, 0
      %vm947 = vcmp.lt.s32.totalorder %v665, 0
      %vm948 = vcmp.lt.s32.totalorder %v676, 0
      %vm949 = vcmp.lt.s32.totalorder %v687, 0
      %vm950 = vcmp.lt.s32.totalorder %v698, 0
      %vm951 = vcmp.lt.s32.totalorder %v709, 0
      %vm952 = vcmp.lt.s32.totalorder %v720, 0
      %vm953 = vcmp.lt.s32.totalorder %v731, 0
      %vm954 = vcmp.lt.s32.totalorder %v742, 0
      %vm955 = vcmp.lt.s32.totalorder %v753, 0
      %vm956 = vcmp.lt.s32.totalorder %v764, 0
      %vm957 = vcmp.lt.s32.totalorder %v775, 0
      %vm958 = vcmp.lt.s32.totalorder %v786, 0
      %vm959 = vcmp.lt.s32.totalorder %v797, 0
      %vm960 = vcmp.lt.s32.totalorder %v808, 0
      %vm961 = vcmp.lt.s32.totalorder %v819, 0
      %vm962 = vcmp.lt.s32.totalorder %v830, 0
      %vm963 = vcmp.lt.s32.totalorder %v841, 0
      %vm964 = vcmp.lt.s32.totalorder %v852, 0
      %vm965 = vcmp.lt.s32.totalorder %v863, 0
      %vm966 = vcmp.lt.s32.totalorder %v874, 0
      %vm967 = vcmp.lt.s32.totalorder %v885, 0
      %vm968 = vcmp.lt.s32.totalorder %v896, 0
      %vm969 = vmand %vm933, %vm897
      %vm970 = vmand %vm934, %vm898
      %vm971 = vmand %vm935, %vm899
      %vm972 = vmand %vm936, %vm900
      %vm973 = vmand %vm937, %vm901
      %vm974 = vmand %vm938, %vm902
      %vm975 = vmand %vm939, %vm903
      %vm976 = vmand %vm940, %vm904
      %vm977 = vmand %vm941, %vm905
      %vm978 = vmand %vm942, %vm906
      %vm979 = vmand %vm943, %vm907
      %vm980 = vmand %vm944, %vm908
      %vm981 = vmand %vm945, %vm909
      %vm982 = vmand %vm946, %vm910
      %vm983 = vmand %vm947, %vm911
      %vm984 = vmand %vm948, %vm912
      %vm985 = vmand %vm949, %vm913
      %vm986 = vmand %vm950, %vm914
      %vm987 = vmand %vm951, %vm915
      %vm988 = vmand %vm952, %vm916
      %vm989 = vmand %vm953, %vm917
      %vm990 = vmand %vm954, %vm918
      %vm991 = vmand %vm955, %vm919
      %vm992 = vmand %vm956, %vm920
      %vm993 = vmand %vm957, %vm921
      %vm994 = vmand %vm958, %vm922
      %vm995 = vmand %vm959, %vm923
      %vm996 = vmand %vm960, %vm924
      %vm997 = vmand %vm961, %vm925
      %vm998 = vmand %vm962, %vm926
      %vm999 = vmand %vm963, %vm927
      %vm1000 = vmand %vm964, %vm928
      %vm1001 = vmand %vm965, %vm929
      %vm1002 = vmand %vm966, %vm930
      %vm1003 = vmand %vm967, %vm931
      %vm1004 = vmand %vm968, %vm932
      %v1005 = vadd.s32 %v511, 18
      %v1006 = vadd.s32 %v522, 18
      %v1007 = vadd.s32 %v533, 18
      %v1008 = vadd.s32 %v544, 18
      %v1009 = vadd.s32 %v555, 18
      %v1010 = vadd.s32 %v566, 18
      %v1011 = vadd.s32 %v577, 18
      %v1012 = vadd.s32 %v588, 18
      %v1013 = vadd.s32 %v599, 18
      %v1014 = vadd.s32 %v610, 18
      %v1015 = vadd.s32 %v621, 18
      %v1016 = vadd.s32 %v632, 18
      %v1017 = vadd.s32 %v643, 18
      %v1018 = vadd.s32 %v654, 18
      %v1019 = vadd.s32 %v665, 18
      %v1020 = vadd.s32 %v676, 18
      %v1021 = vadd.s32 %v687, 18
      %v1022 = vadd.s32 %v698, 18
      %v1023 = vadd.s32 %v709, 18
      %v1024 = vadd.s32 %v720, 18
      %v1025 = vadd.s32 %v731, 18
      %v1026 = vadd.s32 %v742, 18
      %v1027 = vadd.s32 %v753, 18
      %v1028 = vadd.s32 %v764, 18
      %v1029 = vadd.s32 %v775, 18
      %v1030 = vadd.s32 %v786, 18
      %v1031 = vadd.s32 %v797, 18
      %v1032 = vadd.s32 %v808, 18
      %v1033 = vadd.s32 %v819, 18
      %v1034 = vadd.s32 %v830, 18
      %v1035 = vadd.s32 %v841, 18
      %v1036 = vadd.s32 %v852, 18
      %v1037 = vadd.s32 %v863, 18
      %v1038 = vadd.s32 %v874, 18
      %v1039 = vadd.s32 %v885, 18
      %v1040 = vadd.s32 %v896, 18
      %v1041 = vsel %vm969, %v1005, %v511
      %v1042 = vsel %vm970, %v1006, %v522
      %v1043 = vsel %vm971, %v1007, %v533
      %v1044 = vsel %vm972, %v1008, %v544
      %v1045 = vsel %vm973, %v1009, %v555
      %v1046 = vsel %vm974, %v1010, %v566
      %v1047 = vsel %vm975, %v1011, %v577
      %v1048 = vsel %vm976, %v1012, %v588
      %v1049 = vsel %vm977, %v1013, %v599
      %v1050 = vsel %vm978, %v1014, %v610
      %v1051 = vsel %vm979, %v1015, %v621
      %v1052 = vsel %vm980, %v1016, %v632
      %v1053 = vsel %vm981, %v1017, %v643
      %v1054 = vsel %vm982, %v1018, %v654
      %v1055 = vsel %vm983, %v1019, %v665
      %v1056 = vsel %vm984, %v1020, %v676
      %v1057 = vsel %vm985, %v1021, %v687
      %v1058 = vsel %vm986, %v1022, %v698
      %v1059 = vsel %vm987, %v1023, %v709
      %v1060 = vsel %vm988, %v1024, %v720
      %v1061 = vsel %vm989, %v1025, %v731
      %v1062 = vsel %vm990, %v1026, %v742
      %v1063 = vsel %vm991, %v1027, %v753
      %v1064 = vsel %vm992, %v1028, %v764
      %v1065 = vsel %vm993, %v1029, %v775
      %v1066 = vsel %vm994, %v1030, %v786
      %v1067 = vsel %vm995, %v1031, %v797
      %v1068 = vsel %vm996, %v1032, %v808
      %v1069 = vsel %vm997, %v1033, %v819
      %v1070 = vsel %vm998, %v1034, %v830
      %v1071 = vsel %vm999, %v1035, %v841
      %v1072 = vsel %vm1000, %v1036, %v852
      %v1073 = vsel %vm1001, %v1037, %v863
      %v1074 = vsel %vm1002, %v1038, %v874
      %v1075 = vsel %vm1003, %v1039, %v885
      %v1076 = vsel %vm1004, %v1040, %v896
      %vm1077 = vcmp.lt.s32.totalorder %v1041, 16
      %vm1078 = vcmp.lt.s32.totalorder %v1042, 16
      %vm1079 = vcmp.lt.s32.totalorder %v1043, 16
      %vm1080 = vcmp.lt.s32.totalorder %v1044, 16
      %vm1081 = vcmp.lt.s32.totalorder %v1045, 16
      %vm1082 = vcmp.lt.s32.totalorder %v1046, 16
      %vm1083 = vcmp.lt.s32.totalorder %v1047, 16
      %vm1084 = vcmp.lt.s32.totalorder %v1048, 16
      %vm1085 = vcmp.lt.s32.totalorder %v1049, 16
      %vm1086 = vcmp.lt.s32.totalorder %v1050, 16
      %vm1087 = vcmp.lt.s32.totalorder %v1051, 16
      %vm1088 = vcmp.lt.s32.totalorder %v1052, 16
      %vm1089 = vcmp.lt.s32.totalorder %v1053, 16
      %vm1090 = vcmp.lt.s32.totalorder %v1054, 16
      %vm1091 = vcmp.lt.s32.totalorder %v1055, 16
      %vm1092 = vcmp.lt.s32.totalorder %v1056, 16
      %vm1093 = vcmp.lt.s32.totalorder %v1057, 16
      %vm1094 = vcmp.lt.s32.totalorder %v1058, 16
      %vm1095 = vcmp.lt.s32.totalorder %v1059, 16
      %vm1096 = vcmp.lt.s32.totalorder %v1060, 16
      %vm1097 = vcmp.lt.s32.totalorder %v1061, 16
      %vm1098 = vcmp.lt.s32.totalorder %v1062, 16
      %vm1099 = vcmp.lt.s32.totalorder %v1063, 16
      %vm1100 = vcmp.lt.s32.totalorder %v1064, 16
      %vm1101 = vcmp.lt.s32.totalorder %v1065, 16
      %vm1102 = vcmp.lt.s32.totalorder %v1066, 16
      %vm1103 = vcmp.lt.s32.totalorder %v1067, 16
      %vm1104 = vcmp.lt.s32.totalorder %v1068, 16
      %vm1105 = vcmp.lt.s32.totalorder %v1069, 16
      %vm1106 = vcmp.lt.s32.totalorder %v1070, 16
      %vm1107 = vcmp.lt.s32.totalorder %v1071, 16
      %vm1108 = vcmp.lt.s32.totalorder %v1072, 16
      %vm1109 = vcmp.lt.s32.totalorder %v1073, 16
      %vm1110 = vcmp.lt.s32.totalorder %v1074, 16
      %vm1111 = vcmp.lt.s32.totalorder %v1075, 16
      %vm1112 = vcmp.lt.s32.totalorder %v1076, 16
      %v1113 = vsel %vm1077, 1, 0
      %v1114 = vsel %vm1078, 1, 0
      %v1115 = vsel %vm1079, 1, 0
      %v1116 = vsel %vm1080, 1, 0
      %v1117 = vsel %vm1081, 1, 0
      %v1118 = vsel %vm1082, 1, 0
      %v1119 = vsel %vm1083, 1, 0
      %v1120 = vsel %vm1084, 1, 0
      %v1121 = vsel %vm1085, 1, 0
      %v1122 = vsel %vm1086, 1, 0
      %v1123 = vsel %vm1087, 1, 0
      %v1124 = vsel %vm1088, 1, 0
      %v1125 = vsel %vm1089, 1, 0
      %v1126 = vsel %vm1090, 1, 0
      %v1127 = vsel %vm1091, 1, 0
      %v1128 = vsel %vm1092, 1, 0
      %v1129 = vsel %vm1093, 1, 0
      %v1130 = vsel %vm1094, 1, 0
      %v1131 = vsel %vm1095, 1, 0
      %v1132 = vsel %vm1096, 1, 0
      %v1133 = vsel %vm1097, 1, 0
      %v1134 = vsel %vm1098, 1, 0
      %v1135 = vsel %vm1099, 1, 0
      %v1136 = vsel %vm1100, 1, 0
      %v1137 = vsel %vm1101, 1, 0
      %v1138 = vsel %vm1102, 1, 0
      %v1139 = vsel %vm1103, 1, 0
      %v1140 = vsel %vm1104, 1, 0
      %v1141 = vsel %vm1105, 1, 0
      %v1142 = vsel %vm1106, 1, 0
      %v1143 = vsel %vm1107, 1, 0
      %v1144 = vsel %vm1108, 1, 0
      %v1145 = vsel %vm1109, 1, 0
      %v1146 = vsel %vm1110, 1, 0
      %v1147 = vsel %vm1111, 1, 0
      %v1148 = vsel %vm1112, 1, 0
      %vm1149 = vcmp.eq.s32.totalorder %v1113, 1
      %vm1150 = vcmp.eq.s32.totalorder %v1114, 1
      %vm1151 = vcmp.eq.s32.totalorder %v1115, 1
      %vm1152 = vcmp.eq.s32.totalorder %v1116, 1
      %vm1153 = vcmp.eq.s32.totalorder %v1117, 1
      %vm1154 = vcmp.eq.s32.totalorder %v1118, 1
      %vm1155 = vcmp.eq.s32.totalorder %v1119, 1
      %vm1156 = vcmp.eq.s32.totalorder %v1120, 1
      %vm1157 = vcmp.eq.s32.totalorder %v1121, 1
      %vm1158 = vcmp.eq.s32.totalorder %v1122, 1
      %vm1159 = vcmp.eq.s32.totalorder %v1123, 1
      %vm1160 = vcmp.eq.s32.totalorder %v1124, 1
      %vm1161 = vcmp.eq.s32.totalorder %v1125, 1
      %vm1162 = vcmp.eq.s32.totalorder %v1126, 1
      %vm1163 = vcmp.eq.s32.totalorder %v1127, 1
      %vm1164 = vcmp.eq.s32.totalorder %v1128, 1
      %vm1165 = vcmp.eq.s32.totalorder %v1129, 1
      %vm1166 = vcmp.eq.s32.totalorder %v1130, 1
      %vm1167 = vcmp.eq.s32.totalorder %v1131, 1
      %vm1168 = vcmp.eq.s32.totalorder %v1132, 1
      %vm1169 = vcmp.eq.s32.totalorder %v1133, 1
      %vm1170 = vcmp.eq.s32.totalorder %v1134, 1
      %vm1171 = vcmp.eq.s32.totalorder %v1135, 1
      %vm1172 = vcmp.eq.s32.totalorder %v1136, 1
      %vm1173 = vcmp.eq.s32.totalorder %v1137, 1
      %vm1174 = vcmp.eq.s32.totalorder %v1138, 1
      %vm1175 = vcmp.eq.s32.totalorder %v1139, 1
      %vm1176 = vcmp.eq.s32.totalorder %v1140, 1
      %vm1177 = vcmp.eq.s32.totalorder %v1141, 1
      %vm1178 = vcmp.eq.s32.totalorder %v1142, 1
      %vm1179 = vcmp.eq.s32.totalorder %v1143, 1
      %vm1180 = vcmp.eq.s32.totalorder %v1144, 1
      %vm1181 = vcmp.eq.s32.totalorder %v1145, 1
      %vm1182 = vcmp.eq.s32.totalorder %v1146, 1
      %vm1183 = vcmp.eq.s32.totalorder %v1147, 1
      %vm1184 = vcmp.eq.s32.totalorder %v1148, 1
      %v1185 = vsel %vm1149, %v428, 0.0
      %v1186 = vsel %vm1150, %v429, 0.0
      %v1187 = vsel %vm1151, %v430, 0.0
      %v1188 = vsel %vm1152, %v431, 0.0
      %v1189 = vsel %vm1153, %v432, 0.0
      %v1190 = vsel %vm1154, %v433, 0.0
      %v1191 = vsel %vm1155, %v434, 0.0
      %v1192 = vsel %vm1156, %v435, 0.0
      %v1193 = vsel %vm1157, %v436, 0.0
      %v1194 = vsel %vm1158, %v437, 0.0
      %v1195 = vsel %vm1159, %v438, 0.0
      %v1196 = vsel %vm1160, %v439, 0.0
      %v1197 = vsel %vm1161, %v440, 0.0
      %v1198 = vsel %vm1162, %v441, 0.0
      %v1199 = vsel %vm1163, %v442, 0.0
      %v1200 = vsel %vm1164, %v443, 0.0
      %v1201 = vsel %vm1165, %v444, 0.0
      %v1202 = vsel %vm1166, %v445, 0.0
      %v1203 = vsel %vm1167, %v446, 0.0
      %v1204 = vsel %vm1168, %v447, 0.0
      %v1205 = vsel %vm1169, %v448, 0.0
      %v1206 = vsel %vm1170, %v449, 0.0
      %v1207 = vsel %vm1171, %v450, 0.0
      %v1208 = vsel %vm1172, %v451, 0.0
      %v1209 = vsel %vm1173, %v452, 0.0
      %v1210 = vsel %vm1174, %v453, 0.0
      %v1211 = vsel %vm1175, %v454, 0.0
      %v1212 = vsel %vm1176, %v455, 0.0
      %v1213 = vsel %vm1177, %v456, 0.0
      %v1214 = vsel %vm1178, %v457, 0.0
      %v1215 = vsel %vm1179, %v458, 0.0
      %v1216 = vsel %vm1180, %v459, 0.0
      %v1217 = vsel %vm1181, %v460, 0.0
      %v1218 = vsel %vm1182, %v461, 0.0
      %v1219 = vsel %vm1183, %v462, 0.0
      %v1220 = vsel %vm1184, %v463, 0.0
      %vm1221 = vcmask 519168
      %1222 = vst.msk [vmem:[#allocation2] sm:$0xf] %vm1221, 0
      %1223 = vst.msk [vmem:[#allocation2 + $0x4] sm:$0xf] %vm1221, 0
      %1224 = vst.msk [vmem:[#allocation2 + $0x8] sm:$0xf] %vm1221, 0
      %1225 = vst.msk [vmem:[#allocation2 + $0xc] sm:$0xf] %vm1221, 0
      %1226 = vst.msk [vmem:[#allocation2 + $0x10] sm:$0xf] %vm1221, 0
      %1227 = vst.msk [vmem:[#allocation2 + $0x14] sm:$0xf] %vm1221, 0
      %1228 = vst.msk [vmem:[#allocation2 + $0x18] sm:$0xf] %vm1221, 0
      %1229 = vst.msk [vmem:[#allocation2 + $0x1c] sm:$0xf] %vm1221, 0
      %1230 = vst.msk [vmem:[#allocation2 + $0x20] sm:$0xf] %vm1221, 0
      %1231 = vst.msk [vmem:[#allocation2 + $0x24] sm:$0xf] %vm1221, 0
      %1232 = vst.msk [vmem:[#allocation2 + $0x28] sm:$0xf] %vm1221, 0
      %1233 = vst.msk [vmem:[#allocation2 + $0x2c] sm:$0xf] %vm1221, 0
      %1234 = vst.msk [vmem:[#allocation2 + $0x30] sm:$0xf] %vm1221, 0
      %1235 = vst.msk [vmem:[#allocation2 + $0x34] sm:$0xf] %vm1221, 0
      %1236 = vst.msk [vmem:[#allocation2 + $0x38] sm:$0xf] %vm1221, 0
      %1237 = vst.msk [vmem:[#allocation2 + $0x3c] sm:$0xf] %vm1221, 0
      %1238 = vst.msk [vmem:[#allocation2 + $0x40] sm:$0xf] %vm1221, 0
      %1239 = vst.msk [vmem:[#allocation2 + $0x44] sm:$0xf] %vm1221, 0
      %1240 = vst.msk [vmem:[#allocation2 + $0x48] sm:$0xf] %vm1221, 0
      %1241 = vst.msk [vmem:[#allocation2 + $0x4c] sm:$0xf] %vm1221, 0
      %1242 = vst.msk [vmem:[#allocation2 + $0x50] sm:$0xf] %vm1221, 0
      %1243 = vst.msk [vmem:[#allocation2 + $0x54] sm:$0xf] %vm1221, 0
      %1244 = vst.msk [vmem:[#allocation2 + $0x58] sm:$0xf] %vm1221, 0
      %1245 = vst.msk [vmem:[#allocation2 + $0x5c] sm:$0xf] %vm1221, 0
      %1246 = vst.msk [vmem:[#allocation2 + $0x60] sm:$0xf] %vm1221, 0
      %1247 = vst.msk [vmem:[#allocation2 + $0x64] sm:$0xf] %vm1221, 0
      %1248 = vst.msk [vmem:[#allocation2 + $0x68] sm:$0xf] %vm1221, 0
      %1249 = vst.msk [vmem:[#allocation2 + $0x6c] sm:$0xf] %vm1221, 0
      %1250 = vst.msk [vmem:[#allocation2 + $0x70] sm:$0xf] %vm1221, 0
      %1251 = vst.msk [vmem:[#allocation2 + $0x74] sm:$0xf] %vm1221, 0
      %1252 = vst.msk [vmem:[#allocation2 + $0x78] sm:$0xf] %vm1221, 0
      %1253 = vst.msk [vmem:[#allocation2 + $0x7c] sm:$0xf] %vm1221, 0
      %1254 = vst.msk [vmem:[#allocation2 + $0x80] sm:$0xf] %vm1221, 0
      %1255 = vst.msk [vmem:[#allocation2 + $0x84] sm:$0xf] %vm1221, 0
      %1256 = vst.msk [vmem:[#allocation2 + $0x88] sm:$0xf] %vm1221, 0
      %1257 = vst.msk [vmem:[#allocation2 + $0x8c] sm:$0xf] %vm1221, 0
      %1258 = vst.msk [vmem:[#allocation2 + $0x90] sm:$0xf] %vm1221, 0
      %1259 = vst.msk [vmem:[#allocation2 + $0x94] sm:$0xf] %vm1221, 0
      %1260 = vst.msk [vmem:[#allocation2 + $0x98] sm:$0xf] %vm1221, 0
      %1261 = vst.msk [vmem:[#allocation2 + $0x9c] sm:$0xf] %vm1221, 0
      %1262 = vst.msk [vmem:[#allocation2 + $0xa0] sm:$0xf] %vm1221, 0
      %1263 = vst.msk [vmem:[#allocation2 + $0xa4] sm:$0xf] %vm1221, 0
      %vm1264 = vcmask 518144
      %1265 = vst.msk [vmem:[#allocation2 + $0xa8] sm:$0x7] %vm1264, 0
      %v1266 = vpack.c.bf16 %v1186, %v1185
      %v1267 = vpack.c.bf16 %v1188, %v1187
      %v1268 = vpack.c.bf16 %v1190, %v1189
      %v1269 = vpack.c.bf16 %v1192, %v1191
      %v1270 = vpack.c.bf16 %v1194, %v1193
      %v1271 = vpack.c.bf16 %v1196, %v1195
      %v1272 = vpack.c.bf16 %v1198, %v1197
      %v1273 = vpack.c.bf16 %v1200, %v1199
      %v1274 = vpack.c.bf16 %v1202, %v1201
      %v1275 = vpack.c.bf16 %v1204, %v1203
      %v1276 = vpack.c.bf16 %v1206, %v1205
      %v1277 = vpack.c.bf16 %v1208, %v1207
      %v1278 = vpack.c.bf16 %v1210, %v1209
      %v1279 = vpack.c.bf16 %v1212, %v1211
      %v1280 = vpack.c.bf16 %v1214, %v1213
      %v1281 = vpack.c.bf16 %v1216, %v1215
      %v1282 = vpack.c.bf16 %v1218, %v1217
      %v1283 = vpack.c.bf16 %v1220, %v1219
      %v1302 = vunpack.c.l.b16 %v1266
      %v1303 = vunpack.c.h.b16 %v1266
      %v1304 = vunpack.c.l.b16 %v1267
      %v1305 = vunpack.c.h.b16 %v1267
      %v1306 = vunpack.c.l.b16 %v1268
      %v1307 = vunpack.c.h.b16 %v1268
      %v1308 = vunpack.c.l.b16 %v1269
      %v1309 = vunpack.c.h.b16 %v1269
      %v1310 = vunpack.c.l.b16 %v1270
      %v1311 = vunpack.c.h.b16 %v1270
      %v1312 = vunpack.c.l.b16 %v1271
      %v1313 = vunpack.c.h.b16 %v1271
      %v1314 = vunpack.c.l.b16 %v1272
      %v1315 = vunpack.c.h.b16 %v1272
      %v1316 = vunpack.c.l.b16 %v1273
      %v1317 = vunpack.c.h.b16 %v1273
      %v1318 = vunpack.c.l.b16 %v1274
      %v1319 = vunpack.c.h.b16 %v1274
      %v1320 = vunpack.c.l.b16 %v1275
      %v1321 = vunpack.c.h.b16 %v1275
      %v1322 = vunpack.c.l.b16 %v1276
      %v1323 = vunpack.c.h.b16 %v1276
      %v1324 = vunpack.c.l.b16 %v1277
      %v1325 = vunpack.c.h.b16 %v1277
      %v1326 = vunpack.c.l.b16 %v1278
      %v1327 = vunpack.c.h.b16 %v1278
      %v1328 = vunpack.c.l.b16 %v1279
      %v1329 = vunpack.c.h.b16 %v1279
      %v1330 = vunpack.c.l.b16 %v1280
      %v1331 = vunpack.c.h.b16 %v1280
      %v1332 = vunpack.c.l.b16 %v1281
      %v1333 = vunpack.c.h.b16 %v1281
      %v1334 = vunpack.c.l.b16 %v1282
      %v1335 = vunpack.c.h.b16 %v1282
      %v1336 = vunpack.c.l.b16 %v1283
      %v1337 = vunpack.c.h.b16 %v1283
      %v1338 = vpack.c.b16 %v1302, %v1302
      %v1339 = vpack.c.b16 %v1303, %v1303
      %v1340 = vpack.c.b16 %v1304, %v1304
      %v1341 = vpack.c.b16 %v1305, %v1305
      %v1342 = vpack.c.b16 %v1306, %v1306
      %v1343 = vpack.c.b16 %v1307, %v1307
      %v1344 = vpack.c.b16 %v1308, %v1308
      %v1345 = vpack.c.b16 %v1309, %v1309
      %v1346 = vpack.c.b16 %v1310, %v1310
      %v1347 = vpack.c.b16 %v1311, %v1311
      %v1348 = vpack.c.b16 %v1312, %v1312
      %v1349 = vpack.c.b16 %v1313, %v1313
      %v1350 = vpack.c.b16 %v1314, %v1314
      %v1351 = vpack.c.b16 %v1315, %v1315
      %v1352 = vpack.c.b16 %v1316, %v1316
      %v1353 = vpack.c.b16 %v1317, %v1317
      %v1354 = vpack.c.b16 %v1318, %v1318
      %v1355 = vpack.c.b16 %v1319, %v1319
      %v1356 = vpack.c.b16 %v1320, %v1320
      %v1357 = vpack.c.b16 %v1321, %v1321
      %v1358 = vpack.c.b16 %v1322, %v1322
      %v1359 = vpack.c.b16 %v1323, %v1323
      %v1360 = vpack.c.b16 %v1324, %v1324
      %v1361 = vpack.c.b16 %v1325, %v1325
      %v1362 = vpack.c.b16 %v1326, %v1326
      %v1363 = vpack.c.b16 %v1327, %v1327
      %v1364 = vpack.c.b16 %v1328, %v1328
      %v1365 = vpack.c.b16 %v1329, %v1329
      %v1366 = vpack.c.b16 %v1330, %v1330
      %v1367 = vpack.c.b16 %v1331, %v1331
      %v1368 = vpack.c.b16 %v1332, %v1332
      %v1369 = vpack.c.b16 %v1333, %v1333
      %v1370 = vpack.c.b16 %v1334, %v1334
      %v1371 = vpack.c.b16 %v1335, %v1335
      %v1372 = vpack.c.b16 %v1336, %v1336
      %v1373 = vpack.c.b16 %v1337, %v1337
      %vm1374 = vsmask.f32 1280
      %vm1375 = vsmask.f32 5392
      %vm1376 = vmor %vm1374, %vm1375
      %v1378 = vshrl.u32 %v1338, 16
      %v1380 = vrot.slane %v1378, 6
      %v1381 = vshll.u32 %v1338, 16
      %v1383 = vrot.slane %v1381, 7
      %v1384 = vor.u32 %v1380, %v1383
      %v1385 = vrot.slane %v1384, 4
      %v1387 = vshrl.u32 %v1339, 16
      %v1389 = vrot.slane %v1387, 6
      %v1390 = vshll.u32 %v1339, 16
      %v1392 = vrot.slane %v1390, 7
      %v1393 = vor.u32 %v1389, %v1392
      %v1394 = vsel %vm1376, %v1385, %v1393
      %v1395 = vrot.slane %v1393, 4
      %v1397 = vshrl.u32 %v1340, 16
      %v1399 = vrot.slane %v1397, 6
      %v1400 = vshll.u32 %v1340, 16
      %v1402 = vrot.slane %v1400, 7
      %v1403 = vor.u32 %v1399, %v1402
      %v1404 = vsel %vm1376, %v1395, %v1403
      %v1405 = vrot.slane %v1403, 4
      %v1407 = vshrl.u32 %v1341, 16
      %v1409 = vrot.slane %v1407, 6
      %v1410 = vshll.u32 %v1341, 16
      %v1412 = vrot.slane %v1410, 7
      %v1413 = vor.u32 %v1409, %v1412
      %v1414 = vsel %vm1376, %v1405, %v1413
      %v1415 = vrot.slane %v1413, 4
      %v1417 = vshrl.u32 %v1342, 16
      %v1419 = vrot.slane %v1417, 6
      %v1420 = vshll.u32 %v1342, 16
      %v1422 = vrot.slane %v1420, 7
      %v1423 = vor.u32 %v1419, %v1422
      %v1424 = vsel %vm1376, %v1415, %v1423
      %v1425 = vrot.slane %v1423, 4
      %v1427 = vshrl.u32 %v1343, 16
      %v1429 = vrot.slane %v1427, 6
      %v1430 = vshll.u32 %v1343, 16
      %v1432 = vrot.slane %v1430, 7
      %v1433 = vor.u32 %v1429, %v1432
      %v1434 = vsel %vm1376, %v1425, %v1433
      %v1435 = vrot.slane %v1433, 4
      %v1437 = vshrl.u32 %v1344, 16
      %v1439 = vrot.slane %v1437, 6
      %v1440 = vshll.u32 %v1344, 16
      %v1442 = vrot.slane %v1440, 7
      %v1443 = vor.u32 %v1439, %v1442
      %v1444 = vsel %vm1376, %v1435, %v1443
      %v1445 = vrot.slane %v1443, 4
      %v1447 = vshrl.u32 %v1345, 16
      %v1449 = vrot.slane %v1447, 6
      %v1450 = vshll.u32 %v1345, 16
      %v1452 = vrot.slane %v1450, 7
      %v1453 = vor.u32 %v1449, %v1452
      %v1454 = vsel %vm1376, %v1445, %v1453
      %v1455 = vrot.slane %v1453, 4
      %v1457 = vshrl.u32 %v1346, 16
      %v1459 = vrot.slane %v1457, 6
      %v1460 = vshll.u32 %v1346, 16
      %v1462 = vrot.slane %v1460, 7
      %v1463 = vor.u32 %v1459, %v1462
      %v1464 = vsel %vm1376, %v1455, %v1463
      %v1465 = vrot.slane %v1463, 4
      %v1467 = vshrl.u32 %v1347, 16
      %v1469 = vrot.slane %v1467, 6
      %v1470 = vshll.u32 %v1347, 16
      %v1472 = vrot.slane %v1470, 7
      %v1473 = vor.u32 %v1469, %v1472
      %v1474 = vsel %vm1376, %v1465, %v1473
      %v1475 = vrot.slane %v1473, 4
      %v1477 = vshrl.u32 %v1348, 16
      %v1479 = vrot.slane %v1477, 6
      %v1480 = vshll.u32 %v1348, 16
      %v1482 = vrot.slane %v1480, 7
      %v1483 = vor.u32 %v1479, %v1482
      %v1484 = vsel %vm1376, %v1475, %v1483
      %v1485 = vrot.slane %v1483, 4
      %v1487 = vshrl.u32 %v1349, 16
      %v1489 = vrot.slane %v1487, 6
      %v1490 = vshll.u32 %v1349, 16
      %v1492 = vrot.slane %v1490, 7
      %v1493 = vor.u32 %v1489, %v1492
      %v1494 = vsel %vm1376, %v1485, %v1493
      %v1495 = vrot.slane %v1493, 4
      %v1497 = vshrl.u32 %v1350, 16
      %v1499 = vrot.slane %v1497, 6
      %v1500 = vshll.u32 %v1350, 16
      %v1502 = vrot.slane %v1500, 7
      %v1503 = vor.u32 %v1499, %v1502
      %v1504 = vsel %vm1376, %v1495, %v1503
      %v1505 = vrot.slane %v1503, 4
      %v1507 = vshrl.u32 %v1351, 16
      %v1509 = vrot.slane %v1507, 6
      %v1510 = vshll.u32 %v1351, 16
      %v1512 = vrot.slane %v1510, 7
      %v1513 = vor.u32 %v1509, %v1512
      %v1514 = vsel %vm1376, %v1505, %v1513
      %v1515 = vrot.slane %v1513, 4
      %v1517 = vshrl.u32 %v1352, 16
      %v1519 = vrot.slane %v1517, 6
      %v1520 = vshll.u32 %v1352, 16
      %v1522 = vrot.slane %v1520, 7
      %v1523 = vor.u32 %v1519, %v1522
      %v1524 = vsel %vm1376, %v1515, %v1523
      %v1525 = vrot.slane %v1523, 4
      %v1527 = vshrl.u32 %v1353, 16
      %v1529 = vrot.slane %v1527, 6
      %v1530 = vshll.u32 %v1353, 16
      %v1532 = vrot.slane %v1530, 7
      %v1533 = vor.u32 %v1529, %v1532
      %v1534 = vsel %vm1376, %v1525, %v1533
      %v1535 = vrot.slane %v1533, 4
      %v1537 = vshrl.u32 %v1354, 16
      %v1539 = vrot.slane %v1537, 6
      %v1540 = vshll.u32 %v1354, 16
      %v1542 = vrot.slane %v1540, 7
      %v1543 = vor.u32 %v1539, %v1542
      %v1544 = vsel %vm1376, %v1535, %v1543
      %v1545 = vrot.slane %v1543, 4
      %v1547 = vshrl.u32 %v1355, 16
      %v1549 = vrot.slane %v1547, 6
      %v1550 = vshll.u32 %v1355, 16
      %v1552 = vrot.slane %v1550, 7
      %v1553 = vor.u32 %v1549, %v1552
      %v1554 = vsel %vm1376, %v1545, %v1553
      %v1555 = vrot.slane %v1553, 4
      %v1557 = vshrl.u32 %v1356, 16
      %v1559 = vrot.slane %v1557, 6
      %v1560 = vshll.u32 %v1356, 16
      %v1562 = vrot.slane %v1560, 7
      %v1563 = vor.u32 %v1559, %v1562
      %v1564 = vsel %vm1376, %v1555, %v1563
      %v1565 = vrot.slane %v1563, 4
      %v1567 = vshrl.u32 %v1357, 16
      %v1569 = vrot.slane %v1567, 6
      %v1570 = vshll.u32 %v1357, 16
      %v1572 = vrot.slane %v1570, 7
      %v1573 = vor.u32 %v1569, %v1572
      %v1574 = vsel %vm1376, %v1565, %v1573
      %v1575 = vrot.slane %v1573, 4
      %v1577 = vshrl.u32 %v1358, 16
      %v1579 = vrot.slane %v1577, 6
      %v1580 = vshll.u32 %v1358, 16
      %v1582 = vrot.slane %v1580, 7
      %v1583 = vor.u32 %v1579, %v1582
      %v1584 = vsel %vm1376, %v1575, %v1583
      %v1585 = vrot.slane %v1583, 4
      %v1587 = vshrl.u32 %v1359, 16
      %v1589 = vrot.slane %v1587, 6
      %v1590 = vshll.u32 %v1359, 16
      %v1592 = vrot.slane %v1590, 7
      %v1593 = vor.u32 %v1589, %v1592
      %v1594 = vsel %vm1376, %v1585, %v1593
      %v1595 = vrot.slane %v1593, 4
      %v1597 = vshrl.u32 %v1360, 16
      %v1599 = vrot.slane %v1597, 6
      %v1600 = vshll.u32 %v1360, 16
      %v1602 = vrot.slane %v1600, 7
      %v1603 = vor.u32 %v1599, %v1602
      %v1604 = vsel %vm1376, %v1595, %v1603
      %v1605 = vrot.slane %v1603, 4
      %v1607 = vshrl.u32 %v1361, 16
      %v1609 = vrot.slane %v1607, 6
      %v1610 = vshll.u32 %v1361, 16
      %v1612 = vrot.slane %v1610, 7
      %v1613 = vor.u32 %v1609, %v1612
      %v1614 = vsel %vm1376, %v1605, %v1613
      %v1615 = vrot.slane %v1613, 4
      %v1617 = vshrl.u32 %v1362, 16
      %v1619 = vrot.slane %v1617, 6
      %v1620 = vshll.u32 %v1362, 16
      %v1622 = vrot.slane %v1620, 7
      %v1623 = vor.u32 %v1619, %v1622
      %v1624 = vsel %vm1376, %v1615, %v1623
      %v1625 = vrot.slane %v1623, 4
      %v1627 = vshrl.u32 %v1363, 16
      %v1629 = vrot.slane %v1627, 6
      %v1630 = vshll.u32 %v1363, 16
      %v1632 = vrot.slane %v1630, 7
      %v1633 = vor.u32 %v1629, %v1632
      %v1634 = vsel %vm1376, %v1625, %v1633
      %v1635 = vrot.slane %v1633, 4
      %v1637 = vshrl.u32 %v1364, 16
      %v1639 = vrot.slane %v1637, 6
      %v1640 = vshll.u32 %v1364, 16
      %v1642 = vrot.slane %v1640, 7
      %v1643 = vor.u32 %v1639, %v1642
      %v1644 = vsel %vm1376, %v1635, %v1643
      %v1645 = vrot.slane %v1643, 4
      %v1647 = vshrl.u32 %v1365, 16
      %v1649 = vrot.slane %v1647, 6
      %v1650 = vshll.u32 %v1365, 16
      %v1652 = vrot.slane %v1650, 7
      %v1653 = vor.u32 %v1649, %v1652
      %v1654 = vsel %vm1376, %v1645, %v1653
      %v1655 = vrot.slane %v1653, 4
      %v1657 = vshrl.u32 %v1366, 16
      %v1659 = vrot.slane %v1657, 6
      %v1660 = vshll.u32 %v1366, 16
      %v1662 = vrot.slane %v1660, 7
      %v1663 = vor.u32 %v1659, %v1662
      %v1664 = vsel %vm1376, %v1655, %v1663
      %v1665 = vrot.slane %v1663, 4
      %v1667 = vshrl.u32 %v1367, 16
      %v1669 = vrot.slane %v1667, 6
      %v1670 = vshll.u32 %v1367, 16
      %v1672 = vrot.slane %v1670, 7
      %v1673 = vor.u32 %v1669, %v1672
      %v1674 = vsel %vm1376, %v1665, %v1673
      %v1675 = vrot.slane %v1673, 4
      %v1677 = vshrl.u32 %v1368, 16
      %v1679 = vrot.slane %v1677, 6
      %v1680 = vshll.u32 %v1368, 16
      %v1682 = vrot.slane %v1680, 7
      %v1683 = vor.u32 %v1679, %v1682
      %v1684 = vsel %vm1376, %v1675, %v1683
      %v1685 = vrot.slane %v1683, 4
      %v1687 = vshrl.u32 %v1369, 16
      %v1689 = vrot.slane %v1687, 6
      %v1690 = vshll.u32 %v1369, 16
      %v1692 = vrot.slane %v1690, 7
      %v1693 = vor.u32 %v1689, %v1692
      %v1694 = vsel %vm1376, %v1685, %v1693
      %v1695 = vrot.slane %v1693, 4
      %v1697 = vshrl.u32 %v1370, 16
      %v1699 = vrot.slane %v1697, 6
      %v1700 = vshll.u32 %v1370, 16
      %v1702 = vrot.slane %v1700, 7
      %v1703 = vor.u32 %v1699, %v1702
      %v1704 = vsel %vm1376, %v1695, %v1703
      %v1705 = vrot.slane %v1703, 4
      %v1707 = vshrl.u32 %v1371, 16
      %v1709 = vrot.slane %v1707, 6
      %v1710 = vshll.u32 %v1371, 16
      %v1712 = vrot.slane %v1710, 7
      %v1713 = vor.u32 %v1709, %v1712
      %v1714 = vsel %vm1376, %v1705, %v1713
      %v1715 = vrot.slane %v1713, 4
      %v1717 = vshrl.u32 %v1372, 16
      %v1719 = vrot.slane %v1717, 6
      %v1720 = vshll.u32 %v1372, 16
      %v1722 = vrot.slane %v1720, 7
      %v1723 = vor.u32 %v1719, %v1722
      %v1724 = vsel %vm1376, %v1715, %v1723
      %v1725 = vrot.slane %v1723, 4
      %v1727 = vshrl.u32 %v1373, 16
      %v1729 = vrot.slane %v1727, 6
      %v1730 = vshll.u32 %v1373, 16
      %v1732 = vrot.slane %v1730, 7
      %v1733 = vor.u32 %v1729, %v1732
      %v1734 = vsel %vm1376, %v1725, %v1733
      %v1735 = vrot.slane %v1733, 4
      %vm1773 = vcmask 519169
      %vm1774 = vsmask.f32 7942
      %vm1775 = vmand %vm1773, %vm1774
      %v1776 = vld [vmem:[#allocation2 + $0x8] sm:$0xe]
      %v1777 = vsel %vm1775, %v1384, %v1776
      %1778 = vst [vmem:[#allocation2 + $0x8] sm:$0xe] %v1777
      %1779 = vst.msk [vmem:[#allocation2 + $0xc] sm:$0xf] %vm1221, %v1394
      %1780 = vst.msk [vmem:[#allocation2 + $0x10] sm:$0xf] %vm1221, %v1404
      %1781 = vst.msk [vmem:[#allocation2 + $0x14] sm:$0xf] %vm1221, %v1414
      %1782 = vst.msk [vmem:[#allocation2 + $0x18] sm:$0xf] %vm1221, %v1424
      %1783 = vst.msk [vmem:[#allocation2 + $0x1c] sm:$0xf] %vm1221, %v1434
      %1784 = vst.msk [vmem:[#allocation2 + $0x20] sm:$0xf] %vm1221, %v1444
      %1785 = vst.msk [vmem:[#allocation2 + $0x24] sm:$0xf] %vm1221, %v1454
      %1786 = vst.msk [vmem:[#allocation2 + $0x28] sm:$0xf] %vm1221, %v1464
      %1787 = vst.msk [vmem:[#allocation2 + $0x2c] sm:$0xf] %vm1221, %v1474
      %1788 = vst.msk [vmem:[#allocation2 + $0x30] sm:$0xf] %vm1221, %v1484
      %1789 = vst.msk [vmem:[#allocation2 + $0x34] sm:$0xf] %vm1221, %v1494
      %1790 = vst.msk [vmem:[#allocation2 + $0x38] sm:$0xf] %vm1221, %v1504
      %1791 = vst.msk [vmem:[#allocation2 + $0x3c] sm:$0xf] %vm1221, %v1514
      %1792 = vst.msk [vmem:[#allocation2 + $0x40] sm:$0xf] %vm1221, %v1524
      %1793 = vst.msk [vmem:[#allocation2 + $0x44] sm:$0xf] %vm1221, %v1534
      %1794 = vst.msk [vmem:[#allocation2 + $0x48] sm:$0xf] %vm1221, %v1544
      %1795 = vst.msk [vmem:[#allocation2 + $0x4c] sm:$0xf] %vm1221, %v1554
      %1796 = vst.msk [vmem:[#allocation2 + $0x50] sm:$0xf] %vm1221, %v1564
      %1797 = vst.msk [vmem:[#allocation2 + $0x54] sm:$0xf] %vm1221, %v1574
      %1798 = vst.msk [vmem:[#allocation2 + $0x58] sm:$0xf] %vm1221, %v1584
      %1799 = vst.msk [vmem:[#allocation2 + $0x5c] sm:$0xf] %vm1221, %v1594
      %1800 = vst.msk [vmem:[#allocation2 + $0x60] sm:$0xf] %vm1221, %v1604
      %1801 = vst.msk [vmem:[#allocation2 + $0x64] sm:$0xf] %vm1221, %v1614
      %1802 = vst.msk [vmem:[#allocation2 + $0x68] sm:$0xf] %vm1221, %v1624
      %1803 = vst.msk [vmem:[#allocation2 + $0x6c] sm:$0xf] %vm1221, %v1634
      %1804 = vst.msk [vmem:[#allocation2 + $0x70] sm:$0xf] %vm1221, %v1644
      %1805 = vst.msk [vmem:[#allocation2 + $0x74] sm:$0xf] %vm1221, %v1654
      %1806 = vst.msk [vmem:[#allocation2 + $0x78] sm:$0xf] %vm1221, %v1664
      %1807 = vst.msk [vmem:[#allocation2 + $0x7c] sm:$0xf] %vm1221, %v1674
      %1808 = vst.msk [vmem:[#allocation2 + $0x80] sm:$0xf] %vm1221, %v1684
      %1809 = vst.msk [vmem:[#allocation2 + $0x84] sm:$0xf] %vm1221, %v1694
      %1810 = vst.msk [vmem:[#allocation2 + $0x88] sm:$0xf] %vm1221, %v1704
      %1811 = vst.msk [vmem:[#allocation2 + $0x8c] sm:$0xf] %vm1221, %v1714
      %1812 = vst.msk [vmem:[#allocation2 + $0x90] sm:$0xf] %vm1221, %v1724
      %1813 = vst.msk [vmem:[#allocation2 + $0x94] sm:$0xf] %vm1221, %v1734
      %vm1814 = vcmask 517120
      %vm1815 = vmand %vm1814, %vm1374
      %v1816 = vld [vmem:[#allocation2 + $0x98] sm:$0x3]
      %v1817 = vsel %vm1815, %v1735, %v1816
      %1818 = vst [vmem:[#allocation2 + $0x98] sm:$0x3] %v1817
      %v1819 = vld [vmem:[#allocation2] sm:$0xf]
      %v1820 = vld [vmem:[#allocation2 + $0x4] sm:$0xf]
      %v1821 = vld [vmem:[#allocation2 + $0x8] sm:$0xf]
      %v1822 = vld [vmem:[#allocation2 + $0xc] sm:$0xf]
      %v1823 = vld [vmem:[#allocation2 + $0x10] sm:$0xf]
      %v1824 = vld [vmem:[#allocation2 + $0x14] sm:$0xf]
      %v1825 = vld [vmem:[#allocation2 + $0x18] sm:$0xf]
      %v1826 = vld [vmem:[#allocation2 + $0x1c] sm:$0xf]
      %v1827 = vld [vmem:[#allocation2 + $0x20] sm:$0xf]
      %v1828 = vld [vmem:[#allocation2 + $0x24] sm:$0xf]
      %v1829 = vld [vmem:[#allocation2 + $0x28] sm:$0xf]
      %v1830 = vld [vmem:[#allocation2 + $0x2c] sm:$0xf]
      %v1831 = vld [vmem:[#allocation2 + $0x30] sm:$0xf]
      %v1832 = vld [vmem:[#allocation2 + $0x34] sm:$0xf]
      %v1833 = vld [vmem:[#allocation2 + $0x38] sm:$0xf]
      %v1834 = vld [vmem:[#allocation2 + $0x3c] sm:$0xf]
      %v1835 = vld [vmem:[#allocation2 + $0x40] sm:$0xf]
      %v1836 = vld [vmem:[#allocation2 + $0x44] sm:$0xf]
      %v1837 = vld [vmem:[#allocation2 + $0x48] sm:$0xf]
      %v1838 = vld [vmem:[#allocation2 + $0x4c] sm:$0xf]
      %v1839 = vld [vmem:[#allocation2 + $0x50] sm:$0xf]
      %v1840 = vld [vmem:[#allocation2 + $0x54] sm:$0xf]
      %v1841 = vld [vmem:[#allocation2 + $0x58] sm:$0xf]
      %v1842 = vld [vmem:[#allocation2 + $0x5c] sm:$0xf]
      %v1843 = vld [vmem:[#allocation2 + $0x60] sm:$0xf]
      %v1844 = vld [vmem:[#allocation2 + $0x64] sm:$0xf]
      %v1845 = vld [vmem:[#allocation2 + $0x68] sm:$0xf]
      %v1846 = vld [vmem:[#allocation2 + $0x6c] sm:$0xf]
      %v1847 = vld [vmem:[#allocation2 + $0x70] sm:$0xf]
      %v1848 = vld [vmem:[#allocation2 + $0x74] sm:$0xf]
      %v1849 = vld [vmem:[#allocation2 + $0x78] sm:$0xf]
      %v1850 = vld [vmem:[#allocation2 + $0x7c] sm:$0xf]
      %v1851 = vld [vmem:[#allocation2 + $0x80] sm:$0xf]
      %v1852 = vld [vmem:[#allocation2 + $0x84] sm:$0xf]
      %v1853 = vld [vmem:[#allocation2 + $0x88] sm:$0xf]
      %v1854 = vld [vmem:[#allocation2 + $0x8c] sm:$0xf]
      %v1855 = vld [vmem:[%s3] sm:$0xf]
      %v1856 = vld [vmem:[%s3 + $0x4] sm:$0xf]
      %v1857 = vld [vmem:[%s3 + $0x8] sm:$0xf]
      %v1858 = vld [vmem:[%s3 + $0xc] sm:$0xf]
      %v1859 = vld [vmem:[%s3 + $0x10] sm:$0xf]
      %v1860 = vld [vmem:[%s3 + $0x14] sm:$0xf]
      %v1861 = vld [vmem:[%s3 + $0x18] sm:$0xf]
      %v1862 = vld [vmem:[%s3 + $0x1c] sm:$0xf]
      %v1863 = vld [vmem:[#allocation2 + $0x90] sm:$0x1]
      %s1864 = scalar_lea.vmem %s3, 32
      %v1865 = vld [vmem:[%s1864] sm:$0xf]
      %v1866 = vld [vmem:[%s1864 + $0x4] sm:$0xf]
      %v1867 = vld [vmem:[%s1864 + $0x8] sm:$0xf]
      %v1868 = vld [vmem:[%s1864 + $0xc] sm:$0xf]
      %v1869 = vld [vmem:[%s1864 + $0x10] sm:$0xf]
      %v1870 = vld [vmem:[%s1864 + $0x14] sm:$0xf]
      %v1871 = vld [vmem:[%s1864 + $0x18] sm:$0xf]
      %v1872 = vld [vmem:[%s1864 + $0x1c] sm:$0xf]
      %v1910 = vunpack.c.l.b16 %v1819
      %v1911 = vunpack.c.l.b16 %v1820
      %v1912 = vunpack.c.l.b16 %v1821
      %v1913 = vunpack.c.l.b16 %v1822
      %v1914 = vunpack.c.l.b16 %v1823
      %v1915 = vunpack.c.l.b16 %v1824
      %v1916 = vunpack.c.l.b16 %v1825
      %v1917 = vunpack.c.l.b16 %v1826
      %v1918 = vunpack.c.l.b16 %v1827
      %v1919 = vunpack.c.l.b16 %v1828
      %v1920 = vunpack.c.l.b16 %v1829
      %v1921 = vunpack.c.l.b16 %v1830
      %v1922 = vunpack.c.l.b16 %v1831
      %v1923 = vunpack.c.l.b16 %v1832
      %v1924 = vunpack.c.l.b16 %v1833
      %v1925 = vunpack.c.l.b16 %v1834
      %v1926 = vunpack.c.l.b16 %v1835
      %v1927 = vunpack.c.l.b16 %v1836
      %v1928 = vunpack.c.l.b16 %v1837
      %v1929 = vunpack.c.l.b16 %v1838
      %v1930 = vunpack.c.l.b16 %v1839
      %v1931 = vunpack.c.l.b16 %v1840
      %v1932 = vunpack.c.l.b16 %v1841
      %v1933 = vunpack.c.l.b16 %v1842
      %v1934 = vunpack.c.l.b16 %v1843
      %v1935 = vunpack.c.l.b16 %v1844
      %v1936 = vunpack.c.l.b16 %v1845
      %v1937 = vunpack.c.l.b16 %v1846
      %v1938 = vunpack.c.l.b16 %v1847
      %v1939 = vunpack.c.l.b16 %v1848
      %v1940 = vunpack.c.l.b16 %v1849
      %v1941 = vunpack.c.l.b16 %v1850
      %v1942 = vunpack.c.l.b16 %v1851
      %v1943 = vunpack.c.l.b16 %v1852
      %v1944 = vunpack.c.l.b16 %v1853
      %v1945 = vunpack.c.l.b16 %v1854
      %v1946 = vunpack.c.l.b16 %v1863
      %v1947 = vpack.c.b16 %v1911, %v1910
      %v1948 = vpack.c.b16 %v1913, %v1912
      %v1949 = vpack.c.b16 %v1915, %v1914
      %v1950 = vpack.c.b16 %v1917, %v1916
      %v1951 = vpack.c.b16 %v1919, %v1918
      %v1952 = vpack.c.b16 %v1921, %v1920
      %v1953 = vpack.c.b16 %v1923, %v1922
      %v1954 = vpack.c.b16 %v1925, %v1924
      %v1955 = vpack.c.b16 %v1927, %v1926
      %v1956 = vpack.c.b16 %v1929, %v1928
      %v1957 = vpack.c.b16 %v1931, %v1930
      %v1958 = vpack.c.b16 %v1933, %v1932
      %v1959 = vpack.c.b16 %v1935, %v1934
      %v1960 = vpack.c.b16 %v1937, %v1936
      %v1961 = vpack.c.b16 %v1939, %v1938
      %v1962 = vpack.c.b16 %v1941, %v1940
      %v1963 = vpack.c.b16 %v1943, %v1942
      %v1964 = vpack.c.b16 %v1945, %v1944
      %v1965 = vpack.c.b16 %v1946, %v1946
      %vm1966 = vsmask.f32 7424
      %v1968 = vshrl.u32 %v1947, 16
      %v1970 = vshll.u32 %v1947, 16
      %v1972 = vrot.slane %v1970, 1
      %v1973 = vor.u32 %v1968, %v1972
      %v1975 = vshll.u32 %v1948, 16
      %v1977 = vrot.slane %v1975, 1
      %v1978 = vsel %vm1966, %v1973, %v1977
      %v1979 = vshrl.u32 %v1948, 16
      %v1981 = vor.u32 %v1979, %v1977
      %v1983 = vshll.u32 %v1949, 16
      %v1985 = vrot.slane %v1983, 1
      %v1986 = vsel %vm1966, %v1981, %v1985
      %v1987 = vshrl.u32 %v1949, 16
      %v1989 = vor.u32 %v1987, %v1985
      %v1991 = vshll.u32 %v1950, 16
      %v1993 = vrot.slane %v1991, 1
      %v1994 = vsel %vm1966, %v1989, %v1993
      %v1995 = vshrl.u32 %v1950, 16
      %v1997 = vor.u32 %v1995, %v1993
      %v1999 = vshll.u32 %v1951, 16
      %v2001 = vrot.slane %v1999, 1
      %v2002 = vsel %vm1966, %v1997, %v2001
      %v2003 = vshrl.u32 %v1951, 16
      %v2005 = vor.u32 %v2003, %v2001
      %v2007 = vshll.u32 %v1952, 16
      %v2009 = vrot.slane %v2007, 1
      %v2010 = vsel %vm1966, %v2005, %v2009
      %v2011 = vshrl.u32 %v1952, 16
      %v2013 = vor.u32 %v2011, %v2009
      %v2015 = vshll.u32 %v1953, 16
      %v2017 = vrot.slane %v2015, 1
      %v2018 = vsel %vm1966, %v2013, %v2017
      %v2019 = vshrl.u32 %v1953, 16
      %v2021 = vor.u32 %v2019, %v2017
      %v2023 = vshll.u32 %v1954, 16
      %v2025 = vrot.slane %v2023, 1
      %v2026 = vsel %vm1966, %v2021, %v2025
      %v2027 = vshrl.u32 %v1954, 16
      %v2029 = vor.u32 %v2027, %v2025
      %v2031 = vshll.u32 %v1955, 16
      %v2033 = vrot.slane %v2031, 1
      %v2034 = vsel %vm1966, %v2029, %v2033
      %v2035 = vshrl.u32 %v1955, 16
      %v2037 = vor.u32 %v2035, %v2033
      %v2039 = vshll.u32 %v1956, 16
      %v2041 = vrot.slane %v2039, 1
      %v2042 = vsel %vm1966, %v2037, %v2041
      %v2043 = vshrl.u32 %v1956, 16
      %v2045 = vor.u32 %v2043, %v2041
      %v2047 = vshll.u32 %v1957, 16
      %v2049 = vrot.slane %v2047, 1
      %v2050 = vsel %vm1966, %v2045, %v2049
      %v2051 = vshrl.u32 %v1957, 16
      %v2053 = vor.u32 %v2051, %v2049
      %v2055 = vshll.u32 %v1958, 16
      %v2057 = vrot.slane %v2055, 1
      %v2058 = vsel %vm1966, %v2053, %v2057
      %v2059 = vshrl.u32 %v1958, 16
      %v2061 = vor.u32 %v2059, %v2057
      %v2063 = vshll.u32 %v1959, 16
      %v2065 = vrot.slane %v2063, 1
      %v2066 = vsel %vm1966, %v2061, %v2065
      %v2067 = vshrl.u32 %v1959, 16
      %v2069 = vor.u32 %v2067, %v2065
      %v2071 = vshll.u32 %v1960, 16
      %v2073 = vrot.slane %v2071, 1
      %v2074 = vsel %vm1966, %v2069, %v2073
      %v2075 = vshrl.u32 %v1960, 16
      %v2077 = vor.u32 %v2075, %v2073
      %v2079 = vshll.u32 %v1961, 16
      %v2081 = vrot.slane %v2079, 1
      %v2082 = vsel %vm1966, %v2077, %v2081
      %v2083 = vshrl.u32 %v1961, 16
      %v2085 = vor.u32 %v2083, %v2081
      %v2087 = vshll.u32 %v1962, 16
      %v2089 = vrot.slane %v2087, 1
      %v2090 = vsel %vm1966, %v2085, %v2089
      %v2091 = vshrl.u32 %v1962, 16
      %v2093 = vor.u32 %v2091, %v2089
      %v2095 = vshll.u32 %v1963, 16
      %v2097 = vrot.slane %v2095, 1
      %v2098 = vsel %vm1966, %v2093, %v2097
      %v2099 = vshrl.u32 %v1963, 16
      %v2101 = vor.u32 %v2099, %v2097
      %v2103 = vshll.u32 %v1964, 16
      %v2105 = vrot.slane %v2103, 1
      %v2106 = vsel %vm1966, %v2101, %v2105
      %v2107 = vshrl.u32 %v1964, 16
      %v2109 = vor.u32 %v2107, %v2105
      %v2111 = vshll.u32 %v1965, 16
      %v2113 = vrot.slane %v2111, 1
      %v2114 = vsel %vm1966, %v2109, %v2113
      %v2123 = vunpack.c.l.b16 %v1865
      %v2124 = vunpack.c.l.b16 %v1866
      %v2125 = vunpack.c.l.b16 %v1867
      %v2126 = vunpack.c.l.b16 %v1868
      %v2127 = vunpack.c.l.b16 %v1869
      %v2128 = vunpack.c.l.b16 %v1870
      %v2129 = vunpack.c.l.b16 %v1871
      %v2130 = vunpack.c.l.b16 %v1872
      %v2131 = vpack.c.b16 %v2124, %v2123
      %v2132 = vpack.c.b16 %v2126, %v2125
      %v2133 = vpack.c.b16 %v2128, %v2127
      %v2134 = vpack.c.b16 %v2130, %v2129
      %vm2139 = vcmask 523264
      %v2141 = vsel %vm2139, %v1978, 0
      %v2144 = vsel %vm2139, %v1986, 0
      %v2147 = vsel %vm2139, %v1994, 0
      %v2150 = vsel %vm2139, %v2002, 0
      %v2153 = vsel %vm2139, %v2010, 0
      %v2156 = vsel %vm2139, %v2018, 0
      %v2159 = vsel %vm2139, %v2026, 0
      %v2162 = vsel %vm2139, %v2034, 0
      %v2165 = vsel %vm2139, %v2042, 0
      %v2168 = vsel %vm2139, %v2050, 0
      %v2171 = vsel %vm2139, %v2058, 0
      %v2174 = vsel %vm2139, %v2066, 0
      %v2177 = vsel %vm2139, %v2074, 0
      %v2180 = vsel %vm2139, %v2082, 0
      %v2183 = vsel %vm2139, %v2090, 0
      %v2186 = vsel %vm2139, %v2098, 0
      %v2189 = vsel %vm2139, %v2106, 0
      %v2192 = vsel %vm2139, %v2114, 0
      %2194 = vmatprep.subr.bf16.mxu0 0
      %2195 = vmatpush1.bf16.msra.mxu0 0
      %2196 = vmatprep.subr.bf16.mxu0 0
      %2197 = vmatpush1.bf16.msra.mxu0 0
      %2198 = vmatprep.subr.bf16.mxu0 0
      %2199 = vmatpush1.bf16.msra.mxu0 0
      %2200 = vmatprep.subr.bf16.mxu0 0
      %2201 = vmatpush1.bf16.msra.mxu0 0
      %2202 = vmatprep.subr.bf16.mxu0 0
      %2203 = vmatpush1.bf16.msra.mxu0 %v2134
      %2204 = vmatprep.subr.bf16.mxu0 0
      %2205 = vmatpush1.bf16.msra.mxu0 %v2133
      %2206 = vmatprep.subr.bf16.mxu0 0
      %2207 = vmatpush1.bf16.msra.mxu0 %v2132
      %2208 = vmatprep.subr.bf16.mxu0 0
      %2209 = vmatpush1.bf16.msra.mxu0 %v2131
      %2210 = vmatprep.subr.bf16.mxu0 0
      %2211 = vmatpush2.bf16.msra.mxu0 0
      %2212 = vmatprep.subr.bf16.mxu0 0
      %2213 = vmatpush2.bf16.msra.mxu0 0
      %2214 = vmatprep.subr.bf16.mxu0 0
      %2215 = vmatpush2.bf16.msra.mxu0 0
      %2216 = vmatprep.subr.bf16.mxu0 0
      %2217 = vmatpush2.bf16.msra.mxu0 0
      %2218 = vmatprep.subr.bf16.mxu0 0
      %2219 = vmatpush2.bf16.msra.mxu0 0
      %2220 = vmatprep.subr.bf16.mxu0 0
      %2221 = vmatpush2.bf16.msra.mxu0 0
      %2222 = vmatprep.subr.bf16.mxu0 0
      %2223 = vmatpush2.bf16.msra.mxu0 0
      %2224 = vmatprep.subr.bf16.mxu0 0
      %2225 = vmatpush2.bf16.msra.mxu0 0
      %2226 = vmatprep.mubr.bf16.mxu0 0
      %2227 = vmatmul.mubr.bf16.gmra.mxu0 %v2141
      %v2228 = vpop.f32.mrf.mxu0
      %v2229 = vadd.f32 0.0, %v2228
      %v2230 = vpop.f32.mrf.mxu0
      %v2231 = vpop.f32.mrf.mxu0
      %v2232 = vadd.f32 0.0, %v2231
      %v2233 = vpop.f32.mrf.mxu0
      %2234 = vmatprep.mubr.bf16.mxu0 0
      %2235 = vmatmul.mubr.bf16.gmra.mxu0 %v2144
      %v2236 = vpop.f32.mrf.mxu0
      %v2237 = vadd.f32 0.0, %v2236
      %v2238 = vpop.f32.mrf.mxu0
      %v2239 = vpop.f32.mrf.mxu0
      %v2240 = vadd.f32 0.0, %v2239
      %v2241 = vpop.f32.mrf.mxu0
      %2242 = vmatprep.mubr.bf16.mxu0 0
      %2243 = vmatmul.mubr.bf16.gmra.mxu0 %v2147
      %v2244 = vpop.f32.mrf.mxu0
      %v2245 = vadd.f32 0.0, %v2244
      %v2246 = vpop.f32.mrf.mxu0
      %v2247 = vpop.f32.mrf.mxu0
      %v2248 = vadd.f32 0.0, %v2247
      %v2249 = vpop.f32.mrf.mxu0
      %2250 = vmatprep.mubr.bf16.mxu0 0
      %2251 = vmatmul.mubr.bf16.gmra.mxu0 %v2150
      %v2252 = vpop.f32.mrf.mxu0
      %v2253 = vadd.f32 0.0, %v2252
      %v2254 = vpop.f32.mrf.mxu0
      %v2255 = vpop.f32.mrf.mxu0
      %v2256 = vadd.f32 0.0, %v2255
      %v2257 = vpop.f32.mrf.mxu0
      %2258 = vmatprep.mubr.bf16.mxu0 0
      %2259 = vmatmul.mubr.bf16.gmra.mxu0 %v2153
      %v2260 = vpop.f32.mrf.mxu0
      %v2261 = vadd.f32 0.0, %v2260
      %v2262 = vpop.f32.mrf.mxu0
      %v2263 = vpop.f32.mrf.mxu0
      %v2264 = vadd.f32 0.0, %v2263
      %v2265 = vpop.f32.mrf.mxu0
      %2266 = vmatprep.mubr.bf16.mxu0 0
      %2267 = vmatmul.mubr.bf16.gmra.mxu0 %v2156
      %v2268 = vpop.f32.mrf.mxu0
      %v2269 = vadd.f32 0.0, %v2268
      %v2270 = vpop.f32.mrf.mxu0
      %v2271 = vpop.f32.mrf.mxu0
      %v2272 = vadd.f32 0.0, %v2271
      %v2273 = vpop.f32.mrf.mxu0
      %2274 = vmatprep.mubr.bf16.mxu0 0
      %2275 = vmatmul.mubr.bf16.gmra.mxu0 %v2159
      %v2276 = vpop.f32.mrf.mxu0
      %v2277 = vadd.f32 0.0, %v2276
      %v2278 = vpop.f32.mrf.mxu0
      %v2279 = vpop.f32.mrf.mxu0
      %v2280 = vadd.f32 0.0, %v2279
      %v2281 = vpop.f32.mrf.mxu0
      %2282 = vmatprep.mubr.bf16.mxu0 0
      %2283 = vmatmul.mubr.bf16.gmra.mxu0 %v2162
      %v2284 = vpop.f32.mrf.mxu0
      %v2285 = vadd.f32 0.0, %v2284
      %v2286 = vpop.f32.mrf.mxu0
      %v2287 = vpop.f32.mrf.mxu0
      %v2288 = vadd.f32 0.0, %v2287
      %v2289 = vpop.f32.mrf.mxu0
      %2290 = vmatprep.mubr.bf16.mxu0 0
      %2291 = vmatmul.mubr.bf16.gmra.mxu0 %v2165
      %v2292 = vpop.f32.mrf.mxu0
      %v2293 = vadd.f32 0.0, %v2292
      %v2294 = vpop.f32.mrf.mxu0
      %v2295 = vpop.f32.mrf.mxu0
      %v2296 = vadd.f32 0.0, %v2295
      %v2297 = vpop.f32.mrf.mxu0
      %2298 = vmatprep.mubr.bf16.mxu0 0
      %2299 = vmatmul.mubr.bf16.gmra.mxu0 %v2168
      %v2300 = vpop.f32.mrf.mxu0
      %v2301 = vadd.f32 0.0, %v2300
      %v2302 = vpop.f32.mrf.mxu0
      %v2303 = vpop.f32.mrf.mxu0
      %v2304 = vadd.f32 0.0, %v2303
      %v2305 = vpop.f32.mrf.mxu0
      %2306 = vmatprep.mubr.bf16.mxu0 0
      %2307 = vmatmul.mubr.bf16.gmra.mxu0 %v2171
      %v2308 = vpop.f32.mrf.mxu0
      %v2309 = vadd.f32 0.0, %v2308
      %v2310 = vpop.f32.mrf.mxu0
      %v2311 = vpop.f32.mrf.mxu0
      %v2312 = vadd.f32 0.0, %v2311
      %v2313 = vpop.f32.mrf.mxu0
      %2314 = vmatprep.mubr.bf16.mxu0 0
      %2315 = vmatmul.mubr.bf16.gmra.mxu0 %v2174
      %v2316 = vpop.f32.mrf.mxu0
      %v2317 = vadd.f32 0.0, %v2316
      %v2318 = vpop.f32.mrf.mxu0
      %v2319 = vpop.f32.mrf.mxu0
      %v2320 = vadd.f32 0.0, %v2319
      %v2321 = vpop.f32.mrf.mxu0
      %2322 = vmatprep.mubr.bf16.mxu0 0
      %2323 = vmatmul.mubr.bf16.gmra.mxu0 %v2177
      %v2324 = vpop.f32.mrf.mxu0
      %v2325 = vadd.f32 0.0, %v2324
      %v2326 = vpop.f32.mrf.mxu0
      %v2327 = vpop.f32.mrf.mxu0
      %v2328 = vadd.f32 0.0, %v2327
      %v2329 = vpop.f32.mrf.mxu0
      %2330 = vmatprep.mubr.bf16.mxu0 0
      %2331 = vmatmul.mubr.bf16.gmra.mxu0 %v2180
      %v2332 = vpop.f32.mrf.mxu0
      %v2333 = vadd.f32 0.0, %v2332
      %v2334 = vpop.f32.mrf.mxu0
      %v2335 = vpop.f32.mrf.mxu0
      %v2336 = vadd.f32 0.0, %v2335
      %v2337 = vpop.f32.mrf.mxu0
      %2338 = vmatprep.mubr.bf16.mxu0 0
      %2339 = vmatmul.mubr.bf16.gmra.mxu0 %v2183
      %v2340 = vpop.f32.mrf.mxu0
      %v2341 = vadd.f32 0.0, %v2340
      %v2342 = vpop.f32.mrf.mxu0
      %v2343 = vpop.f32.mrf.mxu0
      %v2344 = vadd.f32 0.0, %v2343
      %v2345 = vpop.f32.mrf.mxu0
      %2346 = vmatprep.mubr.bf16.mxu0 0
      %2347 = vmatmul.mubr.bf16.gmra.mxu0 %v2186
      %v2348 = vpop.f32.mrf.mxu0
      %v2349 = vadd.f32 0.0, %v2348
      %v2350 = vpop.f32.mrf.mxu0
      %v2351 = vpop.f32.mrf.mxu0
      %v2352 = vadd.f32 0.0, %v2351
      %v2353 = vpop.f32.mrf.mxu0
      %2354 = vmatprep.mubr.bf16.mxu0 0
      %2355 = vmatmul.mubr.bf16.gmra.mxu0 %v2189
      %v2356 = vpop.f32.mrf.mxu0
      %v2357 = vadd.f32 0.0, %v2356
      %v2358 = vpop.f32.mrf.mxu0
      %v2359 = vpop.f32.mrf.mxu0
      %v2360 = vadd.f32 0.0, %v2359
      %v2361 = vpop.f32.mrf.mxu0
      %2362 = vmatprep.mubr.bf16.mxu0 0
      %2363 = vmatmul.mubr.bf16.gmra.mxu0 %v2192
      %v2364 = vpop.f32.mrf.mxu0
      %v2365 = vadd.f32 0.0, %v2364
      %v2366 = vpop.f32.mrf.mxu0
      %v2367 = vpop.f32.mrf.mxu0
      %v2368 = vadd.f32 0.0, %v2367
      %v2369 = vpop.f32.mrf.mxu0
      %2370 = vdwg.mxu0
      %v2379 = vunpack.c.l.b16 %v1855
      %v2380 = vunpack.c.l.b16 %v1856
      %v2381 = vunpack.c.l.b16 %v1857
      %v2382 = vunpack.c.l.b16 %v1858
      %v2383 = vunpack.c.l.b16 %v1859
      %v2384 = vunpack.c.l.b16 %v1860
      %v2385 = vunpack.c.l.b16 %v1861
      %v2386 = vunpack.c.l.b16 %v1862
      %v2387 = vpack.c.b16 %v2380, %v2379
      %v2388 = vpack.c.b16 %v2382, %v2381
      %v2389 = vpack.c.b16 %v2384, %v2383
      %v2390 = vpack.c.b16 %v2386, %v2385
      %v2395 = vsel %vm2139, %v1947, 0
      %v2397 = vsel %vm2139, %v1948, 0
      %v2399 = vsel %vm2139, %v1949, 0
      %v2401 = vsel %vm2139, %v1950, 0
      %v2403 = vsel %vm2139, %v1951, 0
      %v2405 = vsel %vm2139, %v1952, 0
      %v2407 = vsel %vm2139, %v1953, 0
      %v2409 = vsel %vm2139, %v1954, 0
      %v2411 = vsel %vm2139, %v1955, 0
      %v2413 = vsel %vm2139, %v1956, 0
      %v2415 = vsel %vm2139, %v1957, 0
      %v2417 = vsel %vm2139, %v1958, 0
      %v2419 = vsel %vm2139, %v1959, 0
      %v2421 = vsel %vm2139, %v1960, 0
      %v2423 = vsel %vm2139, %v1961, 0
      %v2425 = vsel %vm2139, %v1962, 0
      %v2427 = vsel %vm2139, %v1963, 0
      %v2429 = vsel %vm2139, %v1964, 0
      %2431 = vmatprep.subr.bf16.mxu0 0
      %2432 = vmatpush1.bf16.msra.mxu0 0
      %2433 = vmatprep.subr.bf16.mxu0 0
      %2434 = vmatpush1.bf16.msra.mxu0 0
      %2435 = vmatprep.subr.bf16.mxu0 0
      %2436 = vmatpush1.bf16.msra.mxu0 0
      %2437 = vmatprep.subr.bf16.mxu0 0
      %2438 = vmatpush1.bf16.msra.mxu0 0
      %2439 = vmatprep.subr.bf16.mxu0 0
      %2440 = vmatpush1.bf16.msra.mxu0 %v2390
      %2441 = vmatprep.subr.bf16.mxu0 0
      %2442 = vmatpush1.bf16.msra.mxu0 %v2389
      %2443 = vmatprep.subr.bf16.mxu0 0
      %2444 = vmatpush1.bf16.msra.mxu0 %v2388
      %2445 = vmatprep.subr.bf16.mxu0 0
      %2446 = vmatpush1.bf16.msra.mxu0 %v2387
      %2447 = vmatprep.subr.bf16.mxu0 0
      %2448 = vmatpush2.bf16.msra.mxu0 0
      %2449 = vmatprep.subr.bf16.mxu0 0
      %2450 = vmatpush2.bf16.msra.mxu0 0
      %2451 = vmatprep.subr.bf16.mxu0 0
      %2452 = vmatpush2.bf16.msra.mxu0 0
      %2453 = vmatprep.subr.bf16.mxu0 0
      %2454 = vmatpush2.bf16.msra.mxu0 0
      %2455 = vmatprep.subr.bf16.mxu0 0
      %2456 = vmatpush2.bf16.msra.mxu0 0
      %2457 = vmatprep.subr.bf16.mxu0 0
      %2458 = vmatpush2.bf16.msra.mxu0 0
      %2459 = vmatprep.subr.bf16.mxu0 0
      %2460 = vmatpush2.bf16.msra.mxu0 0
      %2461 = vmatprep.subr.bf16.mxu0 0
      %2462 = vmatpush2.bf16.msra.mxu0 0
      %2463 = vmatprep.mubr.bf16.mxu0 0
      %2464 = vmatmul.mubr.bf16.gmra.mxu0 %v2395
      %v2465 = vpop.f32.mrf.mxu0
      %v2466 = vadd.f32 %v2229, %v2465
      %v2467 = vpop.f32.mrf.mxu0
      %v2468 = vpop.f32.mrf.mxu0
      %v2469 = vadd.f32 %v2232, %v2468
      %v2470 = vpop.f32.mrf.mxu0
      %2471 = vmatprep.mubr.bf16.mxu0 0
      %2472 = vmatmul.mubr.bf16.gmra.mxu0 %v2397
      %v2473 = vpop.f32.mrf.mxu0
      %v2474 = vadd.f32 %v2237, %v2473
      %v2475 = vpop.f32.mrf.mxu0
      %v2476 = vpop.f32.mrf.mxu0
      %v2477 = vadd.f32 %v2240, %v2476
      %v2478 = vpop.f32.mrf.mxu0
      %2479 = vmatprep.mubr.bf16.mxu0 0
      %2480 = vmatmul.mubr.bf16.gmra.mxu0 %v2399
      %v2481 = vpop.f32.mrf.mxu0
      %v2482 = vadd.f32 %v2245, %v2481
      %v2483 = vpop.f32.mrf.mxu0
      %v2484 = vpop.f32.mrf.mxu0
      %v2485 = vadd.f32 %v2248, %v2484
      %v2486 = vpop.f32.mrf.mxu0
      %2487 = vmatprep.mubr.bf16.mxu0 0
      %2488 = vmatmul.mubr.bf16.gmra.mxu0 %v2401
      %v2489 = vpop.f32.mrf.mxu0
      %v2490 = vadd.f32 %v2253, %v2489
      %v2491 = vpop.f32.mrf.mxu0
      %v2492 = vpop.f32.mrf.mxu0
      %v2493 = vadd.f32 %v2256, %v2492
      %v2494 = vpop.f32.mrf.mxu0
      %2495 = vmatprep.mubr.bf16.mxu0 0
      %2496 = vmatmul.mubr.bf16.gmra.mxu0 %v2403
      %v2497 = vpop.f32.mrf.mxu0
      %v2498 = vadd.f32 %v2261, %v2497
      %v2499 = vpop.f32.mrf.mxu0
      %v2500 = vpop.f32.mrf.mxu0
      %v2501 = vadd.f32 %v2264, %v2500
      %v2502 = vpop.f32.mrf.mxu0
      %2503 = vmatprep.mubr.bf16.mxu0 0
      %2504 = vmatmul.mubr.bf16.gmra.mxu0 %v2405
      %v2505 = vpop.f32.mrf.mxu0
      %v2506 = vadd.f32 %v2269, %v2505
      %v2507 = vpop.f32.mrf.mxu0
      %v2508 = vpop.f32.mrf.mxu0
      %v2509 = vadd.f32 %v2272, %v2508
      %v2510 = vpop.f32.mrf.mxu0
      %2511 = vmatprep.mubr.bf16.mxu0 0
      %2512 = vmatmul.mubr.bf16.gmra.mxu0 %v2407
      %v2513 = vpop.f32.mrf.mxu0
      %v2514 = vadd.f32 %v2277, %v2513
      %v2515 = vpop.f32.mrf.mxu0
      %v2516 = vpop.f32.mrf.mxu0
      %v2517 = vadd.f32 %v2280, %v2516
      %v2518 = vpop.f32.mrf.mxu0
      %2519 = vmatprep.mubr.bf16.mxu0 0
      %2520 = vmatmul.mubr.bf16.gmra.mxu0 %v2409
      %v2521 = vpop.f32.mrf.mxu0
      %v2522 = vadd.f32 %v2285, %v2521
      %v2523 = vpop.f32.mrf.mxu0
      %v2524 = vpop.f32.mrf.mxu0
      %v2525 = vadd.f32 %v2288, %v2524
      %v2526 = vpop.f32.mrf.mxu0
      %2527 = vmatprep.mubr.bf16.mxu0 0
      %2528 = vmatmul.mubr.bf16.gmra.mxu0 %v2411
      %v2529 = vpop.f32.mrf.mxu0
      %v2530 = vadd.f32 %v2293, %v2529
      %v2531 = vpop.f32.mrf.mxu0
      %v2532 = vpop.f32.mrf.mxu0
      %v2533 = vadd.f32 %v2296, %v2532
      %v2534 = vpop.f32.mrf.mxu0
      %2535 = vmatprep.mubr.bf16.mxu0 0
      %2536 = vmatmul.mubr.bf16.gmra.mxu0 %v2413
      %v2537 = vpop.f32.mrf.mxu0
      %v2538 = vadd.f32 %v2301, %v2537
      %v2539 = vpop.f32.mrf.mxu0
      %v2540 = vpop.f32.mrf.mxu0
      %v2541 = vadd.f32 %v2304, %v2540
      %v2542 = vpop.f32.mrf.mxu0
      %2543 = vmatprep.mubr.bf16.mxu0 0
      %2544 = vmatmul.mubr.bf16.gmra.mxu0 %v2415
      %v2545 = vpop.f32.mrf.mxu0
      %v2546 = vadd.f32 %v2309, %v2545
      %v2547 = vpop.f32.mrf.mxu0
      %v2548 = vpop.f32.mrf.mxu0
      %v2549 = vadd.f32 %v2312, %v2548
      %v2550 = vpop.f32.mrf.mxu0
      %2551 = vmatprep.mubr.bf16.mxu0 0
      %2552 = vmatmul.mubr.bf16.gmra.mxu0 %v2417
      %v2553 = vpop.f32.mrf.mxu0
      %v2554 = vadd.f32 %v2317, %v2553
      %v2555 = vpop.f32.mrf.mxu0
      %v2556 = vpop.f32.mrf.mxu0
      %v2557 = vadd.f32 %v2320, %v2556
      %v2558 = vpop.f32.mrf.mxu0
      %2559 = vmatprep.mubr.bf16.mxu0 0
      %2560 = vmatmul.mubr.bf16.gmra.mxu0 %v2419
      %v2561 = vpop.f32.mrf.mxu0
      %v2562 = vadd.f32 %v2325, %v2561
      %v2563 = vpop.f32.mrf.mxu0
      %v2564 = vpop.f32.mrf.mxu0
      %v2565 = vadd.f32 %v2328, %v2564
      %v2566 = vpop.f32.mrf.mxu0
      %2567 = vmatprep.mubr.bf16.mxu0 0
      %2568 = vmatmul.mubr.bf16.gmra.mxu0 %v2421
      %v2569 = vpop.f32.mrf.mxu0
      %v2570 = vadd.f32 %v2333, %v2569
      %v2571 = vpop.f32.mrf.mxu0
      %v2572 = vpop.f32.mrf.mxu0
      %v2573 = vadd.f32 %v2336, %v2572
      %v2574 = vpop.f32.mrf.mxu0
      %2575 = vmatprep.mubr.bf16.mxu0 0
      %2576 = vmatmul.mubr.bf16.gmra.mxu0 %v2423
      %v2577 = vpop.f32.mrf.mxu0
      %v2578 = vadd.f32 %v2341, %v2577
      %v2579 = vpop.f32.mrf.mxu0
      %v2580 = vpop.f32.mrf.mxu0
      %v2581 = vadd.f32 %v2344, %v2580
      %v2582 = vpop.f32.mrf.mxu0
      %2583 = vmatprep.mubr.bf16.mxu0 0
      %2584 = vmatmul.mubr.bf16.gmra.mxu0 %v2425
      %v2585 = vpop.f32.mrf.mxu0
      %v2586 = vadd.f32 %v2349, %v2585
      %v2587 = vpop.f32.mrf.mxu0
      %v2588 = vpop.f32.mrf.mxu0
      %v2589 = vadd.f32 %v2352, %v2588
      %v2590 = vpop.f32.mrf.mxu0
      %2591 = vmatprep.mubr.bf16.mxu0 0
      %2592 = vmatmul.mubr.bf16.gmra.mxu0 %v2427
      %v2593 = vpop.f32.mrf.mxu0
      %v2594 = vadd.f32 %v2357, %v2593
      %v2595 = vpop.f32.mrf.mxu0
      %v2596 = vpop.f32.mrf.mxu0
      %v2597 = vadd.f32 %v2360, %v2596
      %v2598 = vpop.f32.mrf.mxu0
      %2599 = vmatprep.mubr.bf16.mxu0 0
      %2600 = vmatmul.mubr.bf16.gmra.mxu0 %v2429
      %v2601 = vpop.f32.mrf.mxu0
      %v2602 = vadd.f32 %v2365, %v2601
      %v2603 = vpop.f32.mrf.mxu0
      %v2604 = vpop.f32.mrf.mxu0
      %v2605 = vadd.f32 %v2368, %v2604
      %v2606 = vpop.f32.mrf.mxu0
      %2607 = vdwg.mxu0
      %v2608 = vld [vmem:[#allocation2] sm:$0xe]
      %s2609 = scalar_lea.vmem %s3, 64
      %v2610 = vld [vmem:[%s2609] sm:$0xf]
      %v2611 = vld [vmem:[%s2609 + $0x4] sm:$0xf]
      %v2612 = vld [vmem:[%s2609 + $0x8] sm:$0xf]
      %v2613 = vld [vmem:[%s2609 + $0xc] sm:$0xf]
      %v2614 = vld [vmem:[%s2609 + $0x10] sm:$0xf]
      %v2615 = vld [vmem:[%s2609 + $0x14] sm:$0xf]
      %v2616 = vld [vmem:[%s2609 + $0x18] sm:$0xf]
      %v2617 = vld [vmem:[%s2609 + $0x1c] sm:$0xf]
      %v2619 = vunpack.c.l.b16 %v2608
      %v2620 = vpack.c.b16 %v1911, %v2619
      %vm2621 = vcmask 1046528
      %v2622 = vrot.slane %v2620, 1
      %v2623 = vrot.slane %v1948, 1
      %v2624 = vsel %vm2621, %v2622, %v2623
      %v2625 = vrot.slane %v1949, 1
      %v2626 = vsel %vm2621, %v2623, %v2625
      %v2627 = vrot.slane %v1950, 1
      %v2628 = vsel %vm2621, %v2625, %v2627
      %v2629 = vrot.slane %v1951, 1
      %v2630 = vsel %vm2621, %v2627, %v2629
      %v2631 = vrot.slane %v1952, 1
      %v2632 = vsel %vm2621, %v2629, %v2631
      %v2633 = vrot.slane %v1953, 1
      %v2634 = vsel %vm2621, %v2631, %v2633
      %v2635 = vrot.slane %v1954, 1
      %v2636 = vsel %vm2621, %v2633, %v2635
      %v2637 = vrot.slane %v1955, 1
      %v2638 = vsel %vm2621, %v2635, %v2637
      %v2639 = vrot.slane %v1956, 1
      %v2640 = vsel %vm2621, %v2637, %v2639
      %v2641 = vrot.slane %v1957, 1
      %v2642 = vsel %vm2621, %v2639, %v2641
      %v2643 = vrot.slane %v1958, 1
      %v2644 = vsel %vm2621, %v2641, %v2643
      %v2645 = vrot.slane %v1959, 1
      %v2646 = vsel %vm2621, %v2643, %v2645
      %v2647 = vrot.slane %v1960, 1
      %v2648 = vsel %vm2621, %v2645, %v2647
      %v2649 = vrot.slane %v1961, 1
      %v2650 = vsel %vm2621, %v2647, %v2649
      %v2651 = vrot.slane %v1962, 1
      %v2652 = vsel %vm2621, %v2649, %v2651
      %v2653 = vrot.slane %v1963, 1
      %v2654 = vsel %vm2621, %v2651, %v2653
      %v2655 = vrot.slane %v1964, 1
      %v2656 = vsel %vm2621, %v2653, %v2655
      %v2657 = vrot.slane %v1965, 1
      %v2658 = vsel %vm2621, %v2655, %v2657
      %v2667 = vunpack.c.l.b16 %v2610
      %v2668 = vunpack.c.l.b16 %v2611
      %v2669 = vunpack.c.l.b16 %v2612
      %v2670 = vunpack.c.l.b16 %v2613
      %v2671 = vunpack.c.l.b16 %v2614
      %v2672 = vunpack.c.l.b16 %v2615
      %v2673 = vunpack.c.l.b16 %v2616
      %v2674 = vunpack.c.l.b16 %v2617
      %v2675 = vpack.c.b16 %v2668, %v2667
      %v2676 = vpack.c.b16 %v2670, %v2669
      %v2677 = vpack.c.b16 %v2672, %v2671
      %v2678 = vpack.c.b16 %v2674, %v2673
      %v2684 = vsel %vm2139, %v2624, 0
      %v2687 = vsel %vm2139, %v2626, 0
      %v2690 = vsel %vm2139, %v2628, 0
      %v2693 = vsel %vm2139, %v2630, 0
      %v2696 = vsel %vm2139, %v2632, 0
      %v2699 = vsel %vm2139, %v2634, 0
      %v2702 = vsel %vm2139, %v2636, 0
      %v2705 = vsel %vm2139, %v2638, 0
      %v2708 = vsel %vm2139, %v2640, 0
      %v2711 = vsel %vm2139, %v2642, 0
      %v2714 = vsel %vm2139, %v2644, 0
      %v2717 = vsel %vm2139, %v2646, 0
      %v2720 = vsel %vm2139, %v2648, 0
      %v2723 = vsel %vm2139, %v2650, 0
      %v2726 = vsel %vm2139, %v2652, 0
      %v2729 = vsel %vm2139, %v2654, 0
      %v2732 = vsel %vm2139, %v2656, 0
      %v2735 = vsel %vm2139, %v2658, 0
      %2737 = vmatprep.subr.bf16.mxu0 0
      %2738 = vmatpush1.bf16.msra.mxu0 0
      %2739 = vmatprep.subr.bf16.mxu0 0
      %2740 = vmatpush1.bf16.msra.mxu0 0
      %2741 = vmatprep.subr.bf16.mxu0 0
      %2742 = vmatpush1.bf16.msra.mxu0 0
      %2743 = vmatprep.subr.bf16.mxu0 0
      %2744 = vmatpush1.bf16.msra.mxu0 0
      %2745 = vmatprep.subr.bf16.mxu0 0
      %2746 = vmatpush1.bf16.msra.mxu0 %v2678
      %2747 = vmatprep.subr.bf16.mxu0 0
      %2748 = vmatpush1.bf16.msra.mxu0 %v2677
      %2749 = vmatprep.subr.bf16.mxu0 0
      %2750 = vmatpush1.bf16.msra.mxu0 %v2676
      %2751 = vmatprep.subr.bf16.mxu0 0
      %2752 = vmatpush1.bf16.msra.mxu0 %v2675
      %2753 = vmatprep.subr.bf16.mxu0 0
      %2754 = vmatpush2.bf16.msra.mxu0 0
      %2755 = vmatprep.subr.bf16.mxu0 0
      %2756 = vmatpush2.bf16.msra.mxu0 0
      %2757 = vmatprep.subr.bf16.mxu0 0
      %2758 = vmatpush2.bf16.msra.mxu0 0
      %2759 = vmatprep.subr.bf16.mxu0 0
      %2760 = vmatpush2.bf16.msra.mxu0 0
      %2761 = vmatprep.subr.bf16.mxu0 0
      %2762 = vmatpush2.bf16.msra.mxu0 0
      %2763 = vmatprep.subr.bf16.mxu0 0
      %2764 = vmatpush2.bf16.msra.mxu0 0
      %2765 = vmatprep.subr.bf16.mxu0 0
      %2766 = vmatpush2.bf16.msra.mxu0 0
      %2767 = vmatprep.subr.bf16.mxu0 0
      %2768 = vmatpush2.bf16.msra.mxu0 0
      %2769 = vmatprep.mubr.bf16.mxu0 0
      %2770 = vmatmul.mubr.bf16.gmra.mxu0 %v2684
      %v2771 = vpop.f32.mrf.mxu0
      %v2772 = vadd.f32 0.0, %v2771
      %v2773 = vpop.f32.mrf.mxu0
      %v2774 = vpop.f32.mrf.mxu0
      %v2775 = vadd.f32 0.0, %v2774
      %v2776 = vpop.f32.mrf.mxu0
      %2777 = vmatprep.mubr.bf16.mxu0 0
      %2778 = vmatmul.mubr.bf16.gmra.mxu0 %v2687
      %v2779 = vpop.f32.mrf.mxu0
      %v2780 = vadd.f32 0.0, %v2779
      %v2781 = vpop.f32.mrf.mxu0
      %v2782 = vpop.f32.mrf.mxu0
      %v2783 = vadd.f32 0.0, %v2782
      %v2784 = vpop.f32.mrf.mxu0
      %2785 = vmatprep.mubr.bf16.mxu0 0
      %2786 = vmatmul.mubr.bf16.gmra.mxu0 %v2690
      %v2787 = vpop.f32.mrf.mxu0
      %v2788 = vadd.f32 0.0, %v2787
      %v2789 = vpop.f32.mrf.mxu0
      %v2790 = vpop.f32.mrf.mxu0
      %v2791 = vadd.f32 0.0, %v2790
      %v2792 = vpop.f32.mrf.mxu0
      %2793 = vmatprep.mubr.bf16.mxu0 0
      %2794 = vmatmul.mubr.bf16.gmra.mxu0 %v2693
      %v2795 = vpop.f32.mrf.mxu0
      %v2796 = vadd.f32 0.0, %v2795
      %v2797 = vpop.f32.mrf.mxu0
      %v2798 = vpop.f32.mrf.mxu0
      %v2799 = vadd.f32 0.0, %v2798
      %v2800 = vpop.f32.mrf.mxu0
      %2801 = vmatprep.mubr.bf16.mxu0 0
      %2802 = vmatmul.mubr.bf16.gmra.mxu0 %v2696
      %v2803 = vpop.f32.mrf.mxu0
      %v2804 = vadd.f32 0.0, %v2803
      %v2805 = vpop.f32.mrf.mxu0
      %v2806 = vpop.f32.mrf.mxu0
      %v2807 = vadd.f32 0.0, %v2806
      %v2808 = vpop.f32.mrf.mxu0
      %2809 = vmatprep.mubr.bf16.mxu0 0
      %2810 = vmatmul.mubr.bf16.gmra.mxu0 %v2699
      %v2811 = vpop.f32.mrf.mxu0
      %v2812 = vadd.f32 0.0, %v2811
      %v2813 = vpop.f32.mrf.mxu0
      %v2814 = vpop.f32.mrf.mxu0
      %v2815 = vadd.f32 0.0, %v2814
      %v2816 = vpop.f32.mrf.mxu0
      %2817 = vmatprep.mubr.bf16.mxu0 0
      %2818 = vmatmul.mubr.bf16.gmra.mxu0 %v2702
      %v2819 = vpop.f32.mrf.mxu0
      %v2820 = vadd.f32 0.0, %v2819
      %v2821 = vpop.f32.mrf.mxu0
      %v2822 = vpop.f32.mrf.mxu0
      %v2823 = vadd.f32 0.0, %v2822
      %v2824 = vpop.f32.mrf.mxu0
      %2825 = vmatprep.mubr.bf16.mxu0 0
      %2826 = vmatmul.mubr.bf16.gmra.mxu0 %v2705
      %v2827 = vpop.f32.mrf.mxu0
      %v2828 = vadd.f32 0.0, %v2827
      %v2829 = vpop.f32.mrf.mxu0
      %v2830 = vpop.f32.mrf.mxu0
      %v2831 = vadd.f32 0.0, %v2830
      %v2832 = vpop.f32.mrf.mxu0
      %2833 = vmatprep.mubr.bf16.mxu0 0
      %2834 = vmatmul.mubr.bf16.gmra.mxu0 %v2708
      %v2835 = vpop.f32.mrf.mxu0
      %v2836 = vadd.f32 0.0, %v2835
      %v2837 = vpop.f32.mrf.mxu0
      %v2838 = vpop.f32.mrf.mxu0
      %v2839 = vadd.f32 0.0, %v2838
      %v2840 = vpop.f32.mrf.mxu0
      %2841 = vmatprep.mubr.bf16.mxu0 0
      %2842 = vmatmul.mubr.bf16.gmra.mxu0 %v2711
      %v2843 = vpop.f32.mrf.mxu0
      %v2844 = vadd.f32 0.0, %v2843
      %v2845 = vpop.f32.mrf.mxu0
      %v2846 = vpop.f32.mrf.mxu0
      %v2847 = vadd.f32 0.0, %v2846
      %v2848 = vpop.f32.mrf.mxu0
      %2849 = vmatprep.mubr.bf16.mxu0 0
      %2850 = vmatmul.mubr.bf16.gmra.mxu0 %v2714
      %v2851 = vpop.f32.mrf.mxu0
      %v2852 = vadd.f32 0.0, %v2851
      %v2853 = vpop.f32.mrf.mxu0
      %v2854 = vpop.f32.mrf.mxu0
      %v2855 = vadd.f32 0.0, %v2854
      %v2856 = vpop.f32.mrf.mxu0
      %2857 = vmatprep.mubr.bf16.mxu0 0
      %2858 = vmatmul.mubr.bf16.gmra.mxu0 %v2717
      %v2859 = vpop.f32.mrf.mxu0
      %v2860 = vadd.f32 0.0, %v2859
      %v2861 = vpop.f32.mrf.mxu0
      %v2862 = vpop.f32.mrf.mxu0
      %v2863 = vadd.f32 0.0, %v2862
      %v2864 = vpop.f32.mrf.mxu0
      %2865 = vmatprep.mubr.bf16.mxu0 0
      %2866 = vmatmul.mubr.bf16.gmra.mxu0 %v2720
      %v2867 = vpop.f32.mrf.mxu0
      %v2868 = vadd.f32 0.0, %v2867
      %v2869 = vpop.f32.mrf.mxu0
      %v2870 = vpop.f32.mrf.mxu0
      %v2871 = vadd.f32 0.0, %v2870
      %v2872 = vpop.f32.mrf.mxu0
      %2873 = vmatprep.mubr.bf16.mxu0 0
      %2874 = vmatmul.mubr.bf16.gmra.mxu0 %v2723
      %v2875 = vpop.f32.mrf.mxu0
      %v2876 = vadd.f32 0.0, %v2875
      %v2877 = vpop.f32.mrf.mxu0
      %v2878 = vpop.f32.mrf.mxu0
      %v2879 = vadd.f32 0.0, %v2878
      %v2880 = vpop.f32.mrf.mxu0
      %2881 = vmatprep.mubr.bf16.mxu0 0
      %2882 = vmatmul.mubr.bf16.gmra.mxu0 %v2726
      %v2883 = vpop.f32.mrf.mxu0
      %v2884 = vadd.f32 0.0, %v2883
      %v2885 = vpop.f32.mrf.mxu0
      %v2886 = vpop.f32.mrf.mxu0
      %v2887 = vadd.f32 0.0, %v2886
      %v2888 = vpop.f32.mrf.mxu0
      %2889 = vmatprep.mubr.bf16.mxu0 0
      %2890 = vmatmul.mubr.bf16.gmra.mxu0 %v2729
      %v2891 = vpop.f32.mrf.mxu0
      %v2892 = vadd.f32 0.0, %v2891
      %v2893 = vpop.f32.mrf.mxu0
      %v2894 = vpop.f32.mrf.mxu0
      %v2895 = vadd.f32 0.0, %v2894
      %v2896 = vpop.f32.mrf.mxu0
      %2897 = vmatprep.mubr.bf16.mxu0 0
      %2898 = vmatmul.mubr.bf16.gmra.mxu0 %v2732
      %v2899 = vpop.f32.mrf.mxu0
      %v2900 = vadd.f32 0.0, %v2899
      %v2901 = vpop.f32.mrf.mxu0
      %v2902 = vpop.f32.mrf.mxu0
      %v2903 = vadd.f32 0.0, %v2902
      %v2904 = vpop.f32.mrf.mxu0
      %2905 = vmatprep.mubr.bf16.mxu0 0
      %2906 = vmatmul.mubr.bf16.gmra.mxu0 %v2735
      %v2907 = vpop.f32.mrf.mxu0
      %v2908 = vadd.f32 0.0, %v2907
      %v2909 = vpop.f32.mrf.mxu0
      %v2910 = vpop.f32.mrf.mxu0
      %v2911 = vadd.f32 0.0, %v2910
      %v2912 = vpop.f32.mrf.mxu0
      %2913 = vdwg.mxu0
      %v2914 = vadd.f32 %v2466, %v2772
      %v2915 = vadd.f32 %v2469, %v2775
      %v2916 = vadd.f32 %v2474, %v2780
      %v2917 = vadd.f32 %v2477, %v2783
      %v2918 = vadd.f32 %v2482, %v2788
      %v2919 = vadd.f32 %v2485, %v2791
      %v2920 = vadd.f32 %v2490, %v2796
      %v2921 = vadd.f32 %v2493, %v2799
      %v2922 = vadd.f32 %v2498, %v2804
      %v2923 = vadd.f32 %v2501, %v2807
      %v2924 = vadd.f32 %v2506, %v2812
      %v2925 = vadd.f32 %v2509, %v2815
      %v2926 = vadd.f32 %v2514, %v2820
      %v2927 = vadd.f32 %v2517, %v2823
      %v2928 = vadd.f32 %v2522, %v2828
      %v2929 = vadd.f32 %v2525, %v2831
      %v2930 = vadd.f32 %v2530, %v2836
      %v2931 = vadd.f32 %v2533, %v2839
      %v2932 = vadd.f32 %v2538, %v2844
      %v2933 = vadd.f32 %v2541, %v2847
      %v2934 = vadd.f32 %v2546, %v2852
      %v2935 = vadd.f32 %v2549, %v2855
      %v2936 = vadd.f32 %v2554, %v2860
      %v2937 = vadd.f32 %v2557, %v2863
      %v2938 = vadd.f32 %v2562, %v2868
      %v2939 = vadd.f32 %v2565, %v2871
      %v2940 = vadd.f32 %v2570, %v2876
      %v2941 = vadd.f32 %v2573, %v2879
      %v2942 = vadd.f32 %v2578, %v2884
      %v2943 = vadd.f32 %v2581, %v2887
      %v2944 = vadd.f32 %v2586, %v2892
      %v2945 = vadd.f32 %v2589, %v2895
      %v2946 = vadd.f32 %v2594, %v2900
      %v2947 = vadd.f32 %v2597, %v2903
      %v2948 = vadd.f32 %v2602, %v2908
      %v2949 = vadd.f32 %v2605, %v2911
      %v2950 = vld [vmem:[#allocation2 + $0x8] sm:$0xe]
      %v2951 = vld [vmem:[#allocation2 + $0xc] sm:$0xf]
      %v2952 = vld [vmem:[#allocation2 + $0x10] sm:$0xf]
      %v2953 = vld [vmem:[#allocation2 + $0x14] sm:$0xf]
      %v2954 = vld [vmem:[#allocation2 + $0x18] sm:$0xf]
      %v2955 = vld [vmem:[#allocation2 + $0x1c] sm:$0xf]
      %v2956 = vld [vmem:[#allocation2 + $0x20] sm:$0xf]
      %v2957 = vld [vmem:[#allocation2 + $0x24] sm:$0xf]
      %v2958 = vld [vmem:[#allocation2 + $0x28] sm:$0xf]
      %v2959 = vld [vmem:[#allocation2 + $0x2c] sm:$0xf]
      %v2960 = vld [vmem:[#allocation2 + $0x30] sm:$0xf]
      %v2961 = vld [vmem:[#allocation2 + $0x34] sm:$0xf]
      %v2962 = vld [vmem:[#allocation2 + $0x38] sm:$0xf]
      %v2963 = vld [vmem:[#allocation2 + $0x3c] sm:$0xf]
      %v2964 = vld [vmem:[#allocation2 + $0x40] sm:$0xf]
      %v2965 = vld [vmem:[#allocation2 + $0x44] sm:$0xf]
      %v2966 = vld [vmem:[#allocation2 + $0x48] sm:$0xf]
      %v2967 = vld [vmem:[#allocation2 + $0x4c] sm:$0xf]
      %v2968 = vld [vmem:[#allocation2 + $0x50] sm:$0xf]
      %v2969 = vld [vmem:[#allocation2 + $0x54] sm:$0xf]
      %v2970 = vld [vmem:[#allocation2 + $0x58] sm:$0xf]
      %v2971 = vld [vmem:[#allocation2 + $0x5c] sm:$0xf]
      %v2972 = vld [vmem:[#allocation2 + $0x60] sm:$0xf]
      %v2973 = vld [vmem:[#allocation2 + $0x64] sm:$0xf]
      %v2974 = vld [vmem:[#allocation2 + $0x68] sm:$0xf]
      %v2975 = vld [vmem:[#allocation2 + $0x6c] sm:$0xf]
      %v2976 = vld [vmem:[#allocation2 + $0x70] sm:$0xf]
      %v2977 = vld [vmem:[#allocation2 + $0x74] sm:$0xf]
      %v2978 = vld [vmem:[#allocation2 + $0x78] sm:$0xf]
      %v2979 = vld [vmem:[#allocation2 + $0x7c] sm:$0xf]
      %v2980 = vld [vmem:[#allocation2 + $0x80] sm:$0xf]
      %v2981 = vld [vmem:[#allocation2 + $0x84] sm:$0xf]
      %v2982 = vld [vmem:[#allocation2 + $0x88] sm:$0xf]
      %v2983 = vld [vmem:[#allocation2 + $0x8c] sm:$0xf]
      %v2984 = vld [vmem:[#allocation2 + $0x90] sm:$0xf]
      %v2985 = vld [vmem:[#allocation2 + $0x94] sm:$0xf]
      %v2986 = vld [vmem:[#allocation2 + $0x98] sm:$0x1]
      %s2987 = scalar_lea.vmem %s3, 96
      %v2988 = vld [vmem:[%s2987] sm:$0xf]
      %v2989 = vld [vmem:[%s2987 + $0x4] sm:$0xf]
      %v2990 = vld [vmem:[%s2987 + $0x8] sm:$0xf]
      %v2991 = vld [vmem:[%s2987 + $0xc] sm:$0xf]
      %v2992 = vld [vmem:[%s2987 + $0x10] sm:$0xf]
      %v2993 = vld [vmem:[%s2987 + $0x14] sm:$0xf]
      %v2994 = vld [vmem:[%s2987 + $0x18] sm:$0xf]
      %v2995 = vld [vmem:[%s2987 + $0x1c] sm:$0xf]
      %v3033 = vunpack.c.l.b16 %v2950
      %v3034 = vunpack.c.l.b16 %v2951
      %v3035 = vunpack.c.l.b16 %v2952
      %v3036 = vunpack.c.l.b16 %v2953
      %v3037 = vunpack.c.l.b16 %v2954
      %v3038 = vunpack.c.l.b16 %v2955
      %v3039 = vunpack.c.l.b16 %v2956
      %v3040 = vunpack.c.l.b16 %v2957
      %v3041 = vunpack.c.l.b16 %v2958
      %v3042 = vunpack.c.l.b16 %v2959
      %v3043 = vunpack.c.l.b16 %v2960
      %v3044 = vunpack.c.l.b16 %v2961
      %v3045 = vunpack.c.l.b16 %v2962
      %v3046 = vunpack.c.l.b16 %v2963
      %v3047 = vunpack.c.l.b16 %v2964
      %v3048 = vunpack.c.l.b16 %v2965
      %v3049 = vunpack.c.l.b16 %v2966
      %v3050 = vunpack.c.l.b16 %v2967
      %v3051 = vunpack.c.l.b16 %v2968
      %v3052 = vunpack.c.l.b16 %v2969
      %v3053 = vunpack.c.l.b16 %v2970
      %v3054 = vunpack.c.l.b16 %v2971
      %v3055 = vunpack.c.l.b16 %v2972
      %v3056 = vunpack.c.l.b16 %v2973
      %v3057 = vunpack.c.l.b16 %v2974
      %v3058 = vunpack.c.l.b16 %v2975
      %v3059 = vunpack.c.l.b16 %v2976
      %v3060 = vunpack.c.l.b16 %v2977
      %v3061 = vunpack.c.l.b16 %v2978
      %v3062 = vunpack.c.l.b16 %v2979
      %v3063 = vunpack.c.l.b16 %v2980
      %v3064 = vunpack.c.l.b16 %v2981
      %v3065 = vunpack.c.l.b16 %v2982
      %v3066 = vunpack.c.l.b16 %v2983
      %v3067 = vunpack.c.l.b16 %v2984
      %v3068 = vunpack.c.l.b16 %v2985
      %v3069 = vunpack.c.l.b16 %v2986
      %v3070 = vpack.c.b16 %v3034, %v3033
      %v3071 = vpack.c.b16 %v3036, %v3035
      %v3072 = vpack.c.b16 %v3038, %v3037
      %v3073 = vpack.c.b16 %v3040, %v3039
      %v3074 = vpack.c.b16 %v3042, %v3041
      %v3075 = vpack.c.b16 %v3044, %v3043
      %v3076 = vpack.c.b16 %v3046, %v3045
      %v3077 = vpack.c.b16 %v3048, %v3047
      %v3078 = vpack.c.b16 %v3050, %v3049
      %v3079 = vpack.c.b16 %v3052, %v3051
      %v3080 = vpack.c.b16 %v3054, %v3053
      %v3081 = vpack.c.b16 %v3056, %v3055
      %v3082 = vpack.c.b16 %v3058, %v3057
      %v3083 = vpack.c.b16 %v3060, %v3059
      %v3084 = vpack.c.b16 %v3062, %v3061
      %v3085 = vpack.c.b16 %v3064, %v3063
      %v3086 = vpack.c.b16 %v3066, %v3065
      %v3087 = vpack.c.b16 %v3068, %v3067
      %v3088 = vpack.c.b16 %v3069, %v3069
      %v3089 = vrot.slane %v3070, 1
      %v3090 = vrot.slane %v3071, 1
      %v3091 = vsel %vm2621, %v3089, %v3090
      %v3092 = vrot.slane %v3072, 1
      %v3093 = vsel %vm2621, %v3090, %v3092
      %v3094 = vrot.slane %v3073, 1
      %v3095 = vsel %vm2621, %v3092, %v3094
      %v3096 = vrot.slane %v3074, 1
      %v3097 = vsel %vm2621, %v3094, %v3096
      %v3098 = vrot.slane %v3075, 1
      %v3099 = vsel %vm2621, %v3096, %v3098
      %v3100 = vrot.slane %v3076, 1
      %v3101 = vsel %vm2621, %v3098, %v3100
      %v3102 = vrot.slane %v3077, 1
      %v3103 = vsel %vm2621, %v3100, %v3102
      %v3104 = vrot.slane %v3078, 1
      %v3105 = vsel %vm2621, %v3102, %v3104
      %v3106 = vrot.slane %v3079, 1
      %v3107 = vsel %vm2621, %v3104, %v3106
      %v3108 = vrot.slane %v3080, 1
      %v3109 = vsel %vm2621, %v3106, %v3108
      %v3110 = vrot.slane %v3081, 1
      %v3111 = vsel %vm2621, %v3108, %v3110
      %v3112 = vrot.slane %v3082, 1
      %v3113 = vsel %vm2621, %v3110, %v3112
      %v3114 = vrot.slane %v3083, 1
      %v3115 = vsel %vm2621, %v3112, %v3114
      %v3116 = vrot.slane %v3084, 1
      %v3117 = vsel %vm2621, %v3114, %v3116
      %v3118 = vrot.slane %v3085, 1
      %v3119 = vsel %vm2621, %v3116, %v3118
      %v3120 = vrot.slane %v3086, 1
      %v3121 = vsel %vm2621, %v3118, %v3120
      %v3122 = vrot.slane %v3087, 1
      %v3123 = vsel %vm2621, %v3120, %v3122
      %v3124 = vrot.slane %v3088, 1
      %v3125 = vsel %vm2621, %v3122, %v3124
      %v3134 = vunpack.c.l.b16 %v2988
      %v3135 = vunpack.c.l.b16 %v2989
      %v3136 = vunpack.c.l.b16 %v2990
      %v3137 = vunpack.c.l.b16 %v2991
      %v3138 = vunpack.c.l.b16 %v2992
      %v3139 = vunpack.c.l.b16 %v2993
      %v3140 = vunpack.c.l.b16 %v2994
      %v3141 = vunpack.c.l.b16 %v2995
      %v3142 = vpack.c.b16 %v3135, %v3134
      %v3143 = vpack.c.b16 %v3137, %v3136
      %v3144 = vpack.c.b16 %v3139, %v3138
      %v3145 = vpack.c.b16 %v3141, %v3140
      %v3151 = vsel %vm2139, %v3091, 0
      %v3154 = vsel %vm2139, %v3093, 0
      %v3157 = vsel %vm2139, %v3095, 0
      %v3160 = vsel %vm2139, %v3097, 0
      %v3163 = vsel %vm2139, %v3099, 0
      %v3166 = vsel %vm2139, %v3101, 0
      %v3169 = vsel %vm2139, %v3103, 0
      %v3172 = vsel %vm2139, %v3105, 0
      %v3175 = vsel %vm2139, %v3107, 0
      %v3178 = vsel %vm2139, %v3109, 0
      %v3181 = vsel %vm2139, %v3111, 0
      %v3184 = vsel %vm2139, %v3113, 0
      %v3187 = vsel %vm2139, %v3115, 0
      %v3190 = vsel %vm2139, %v3117, 0
      %v3193 = vsel %vm2139, %v3119, 0
      %v3196 = vsel %vm2139, %v3121, 0
      %v3199 = vsel %vm2139, %v3123, 0
      %v3202 = vsel %vm2139, %v3125, 0
      %3204 = vmatprep.subr.bf16.mxu0 0
      %3205 = vmatpush1.bf16.msra.mxu0 0
      %3206 = vmatprep.subr.bf16.mxu0 0
      %3207 = vmatpush1.bf16.msra.mxu0 0
      %3208 = vmatprep.subr.bf16.mxu0 0
      %3209 = vmatpush1.bf16.msra.mxu0 0
      %3210 = vmatprep.subr.bf16.mxu0 0
      %3211 = vmatpush1.bf16.msra.mxu0 0
      %3212 = vmatprep.subr.bf16.mxu0 0
      %3213 = vmatpush1.bf16.msra.mxu0 %v3145
      %3214 = vmatprep.subr.bf16.mxu0 0
      %3215 = vmatpush1.bf16.msra.mxu0 %v3144
      %3216 = vmatprep.subr.bf16.mxu0 0
      %3217 = vmatpush1.bf16.msra.mxu0 %v3143
      %3218 = vmatprep.subr.bf16.mxu0 0
      %3219 = vmatpush1.bf16.msra.mxu0 %v3142
      %3220 = vmatprep.subr.bf16.mxu0 0
      %3221 = vmatpush2.bf16.msra.mxu0 0
      %3222 = vmatprep.subr.bf16.mxu0 0
      %3223 = vmatpush2.bf16.msra.mxu0 0
      %3224 = vmatprep.subr.bf16.mxu0 0
      %3225 = vmatpush2.bf16.msra.mxu0 0
      %3226 = vmatprep.subr.bf16.mxu0 0
      %3227 = vmatpush2.bf16.msra.mxu0 0
      %3228 = vmatprep.subr.bf16.mxu0 0
      %3229 = vmatpush2.bf16.msra.mxu0 0
      %3230 = vmatprep.subr.bf16.mxu0 0
      %3231 = vmatpush2.bf16.msra.mxu0 0
      %3232 = vmatprep.subr.bf16.mxu0 0
      %3233 = vmatpush2.bf16.msra.mxu0 0
      %3234 = vmatprep.subr.bf16.mxu0 0
      %3235 = vmatpush2.bf16.msra.mxu0 0
      %3236 = vmatprep.mubr.bf16.mxu0 0
      %3237 = vmatmul.mubr.bf16.gmra.mxu0 %v3151
      %v3238 = vpop.f32.mrf.mxu0
      %v3239 = vadd.f32 0.0, %v3238
      %v3240 = vpop.f32.mrf.mxu0
      %v3241 = vpop.f32.mrf.mxu0
      %v3242 = vadd.f32 0.0, %v3241
      %v3243 = vpop.f32.mrf.mxu0
      %3244 = vmatprep.mubr.bf16.mxu0 0
      %3245 = vmatmul.mubr.bf16.gmra.mxu0 %v3154
      %v3246 = vpop.f32.mrf.mxu0
      %v3247 = vadd.f32 0.0, %v3246
      %v3248 = vpop.f32.mrf.mxu0
      %v3249 = vpop.f32.mrf.mxu0
      %v3250 = vadd.f32 0.0, %v3249
      %v3251 = vpop.f32.mrf.mxu0
      %3252 = vmatprep.mubr.bf16.mxu0 0
      %3253 = vmatmul.mubr.bf16.gmra.mxu0 %v3157
      %v3254 = vpop.f32.mrf.mxu0
      %v3255 = vadd.f32 0.0, %v3254
      %v3256 = vpop.f32.mrf.mxu0
      %v3257 = vpop.f32.mrf.mxu0
      %v3258 = vadd.f32 0.0, %v3257
      %v3259 = vpop.f32.mrf.mxu0
      %3260 = vmatprep.mubr.bf16.mxu0 0
      %3261 = vmatmul.mubr.bf16.gmra.mxu0 %v3160
      %v3262 = vpop.f32.mrf.mxu0
      %v3263 = vadd.f32 0.0, %v3262
      %v3264 = vpop.f32.mrf.mxu0
      %v3265 = vpop.f32.mrf.mxu0
      %v3266 = vadd.f32 0.0, %v3265
      %v3267 = vpop.f32.mrf.mxu0
      %3268 = vmatprep.mubr.bf16.mxu0 0
      %3269 = vmatmul.mubr.bf16.gmra.mxu0 %v3163
      %v3270 = vpop.f32.mrf.mxu0
      %v3271 = vadd.f32 0.0, %v3270
      %v3272 = vpop.f32.mrf.mxu0
      %v3273 = vpop.f32.mrf.mxu0
      %v3274 = vadd.f32 0.0, %v3273
      %v3275 = vpop.f32.mrf.mxu0
      %3276 = vmatprep.mubr.bf16.mxu0 0
      %3277 = vmatmul.mubr.bf16.gmra.mxu0 %v3166
      %v3278 = vpop.f32.mrf.mxu0
      %v3279 = vadd.f32 0.0, %v3278
      %v3280 = vpop.f32.mrf.mxu0
      %v3281 = vpop.f32.mrf.mxu0
      %v3282 = vadd.f32 0.0, %v3281
      %v3283 = vpop.f32.mrf.mxu0
      %3284 = vmatprep.mubr.bf16.mxu0 0
      %3285 = vmatmul.mubr.bf16.gmra.mxu0 %v3169
      %v3286 = vpop.f32.mrf.mxu0
      %v3287 = vadd.f32 0.0, %v3286
      %v3288 = vpop.f32.mrf.mxu0
      %v3289 = vpop.f32.mrf.mxu0
      %v3290 = vadd.f32 0.0, %v3289
      %v3291 = vpop.f32.mrf.mxu0
      %3292 = vmatprep.mubr.bf16.mxu0 0
      %3293 = vmatmul.mubr.bf16.gmra.mxu0 %v3172
      %v3294 = vpop.f32.mrf.mxu0
      %v3295 = vadd.f32 0.0, %v3294
      %v3296 = vpop.f32.mrf.mxu0
      %v3297 = vpop.f32.mrf.mxu0
      %v3298 = vadd.f32 0.0, %v3297
      %v3299 = vpop.f32.mrf.mxu0
      %3300 = vmatprep.mubr.bf16.mxu0 0
      %3301 = vmatmul.mubr.bf16.gmra.mxu0 %v3175
      %v3302 = vpop.f32.mrf.mxu0
      %v3303 = vadd.f32 0.0, %v3302
      %v3304 = vpop.f32.mrf.mxu0
      %v3305 = vpop.f32.mrf.mxu0
      %v3306 = vadd.f32 0.0, %v3305
      %v3307 = vpop.f32.mrf.mxu0
      %3308 = vmatprep.mubr.bf16.mxu0 0
      %3309 = vmatmul.mubr.bf16.gmra.mxu0 %v3178
      %v3310 = vpop.f32.mrf.mxu0
      %v3311 = vadd.f32 0.0, %v3310
      %v3312 = vpop.f32.mrf.mxu0
      %v3313 = vpop.f32.mrf.mxu0
      %v3314 = vadd.f32 0.0, %v3313
      %v3315 = vpop.f32.mrf.mxu0
      %3316 = vmatprep.mubr.bf16.mxu0 0
      %3317 = vmatmul.mubr.bf16.gmra.mxu0 %v3181
      %v3318 = vpop.f32.mrf.mxu0
      %v3319 = vadd.f32 0.0, %v3318
      %v3320 = vpop.f32.mrf.mxu0
      %v3321 = vpop.f32.mrf.mxu0
      %v3322 = vadd.f32 0.0, %v3321
      %v3323 = vpop.f32.mrf.mxu0
      %3324 = vmatprep.mubr.bf16.mxu0 0
      %3325 = vmatmul.mubr.bf16.gmra.mxu0 %v3184
      %v3326 = vpop.f32.mrf.mxu0
      %v3327 = vadd.f32 0.0, %v3326
      %v3328 = vpop.f32.mrf.mxu0
      %v3329 = vpop.f32.mrf.mxu0
      %v3330 = vadd.f32 0.0, %v3329
      %v3331 = vpop.f32.mrf.mxu0
      %3332 = vmatprep.mubr.bf16.mxu0 0
      %3333 = vmatmul.mubr.bf16.gmra.mxu0 %v3187
      %v3334 = vpop.f32.mrf.mxu0
      %v3335 = vadd.f32 0.0, %v3334
      %v3336 = vpop.f32.mrf.mxu0
      %v3337 = vpop.f32.mrf.mxu0
      %v3338 = vadd.f32 0.0, %v3337
      %v3339 = vpop.f32.mrf.mxu0
      %3340 = vmatprep.mubr.bf16.mxu0 0
      %3341 = vmatmul.mubr.bf16.gmra.mxu0 %v3190
      %v3342 = vpop.f32.mrf.mxu0
      %v3343 = vadd.f32 0.0, %v3342
      %v3344 = vpop.f32.mrf.mxu0
      %v3345 = vpop.f32.mrf.mxu0
      %v3346 = vadd.f32 0.0, %v3345
      %v3347 = vpop.f32.mrf.mxu0
      %3348 = vmatprep.mubr.bf16.mxu0 0
      %3349 = vmatmul.mubr.bf16.gmra.mxu0 %v3193
      %v3350 = vpop.f32.mrf.mxu0
      %v3351 = vadd.f32 0.0, %v3350
      %v3352 = vpop.f32.mrf.mxu0
      %v3353 = vpop.f32.mrf.mxu0
      %v3354 = vadd.f32 0.0, %v3353
      %v3355 = vpop.f32.mrf.mxu0
      %3356 = vmatprep.mubr.bf16.mxu0 0
      %3357 = vmatmul.mubr.bf16.gmra.mxu0 %v3196
      %v3358 = vpop.f32.mrf.mxu0
      %v3359 = vadd.f32 0.0, %v3358
      %v3360 = vpop.f32.mrf.mxu0
      %v3361 = vpop.f32.mrf.mxu0
      %v3362 = vadd.f32 0.0, %v3361
      %v3363 = vpop.f32.mrf.mxu0
      %3364 = vmatprep.mubr.bf16.mxu0 0
      %3365 = vmatmul.mubr.bf16.gmra.mxu0 %v3199
      %v3366 = vpop.f32.mrf.mxu0
      %v3367 = vadd.f32 0.0, %v3366
      %v3368 = vpop.f32.mrf.mxu0
      %v3369 = vpop.f32.mrf.mxu0
      %v3370 = vadd.f32 0.0, %v3369
      %v3371 = vpop.f32.mrf.mxu0
      %3372 = vmatprep.mubr.bf16.mxu0 0
      %3373 = vmatmul.mubr.bf16.gmra.mxu0 %v3202
      %v3374 = vpop.f32.mrf.mxu0
      %v3375 = vadd.f32 0.0, %v3374
      %v3376 = vpop.f32.mrf.mxu0
      %v3377 = vpop.f32.mrf.mxu0
      %v3378 = vadd.f32 0.0, %v3377
      %v3379 = vpop.f32.mrf.mxu0
      %3380 = vdwg.mxu0
      %v3381 = vadd.f32 %v2914, %v3239
      %v3382 = vadd.f32 %v2915, %v3242
      %v3383 = vadd.f32 %v2916, %v3247
      %v3384 = vadd.f32 %v2917, %v3250
      %v3385 = vadd.f32 %v2918, %v3255
      %v3386 = vadd.f32 %v2919, %v3258
      %v3387 = vadd.f32 %v2920, %v3263
      %v3388 = vadd.f32 %v2921, %v3266
      %v3389 = vadd.f32 %v2922, %v3271
      %v3390 = vadd.f32 %v2923, %v3274
      %v3391 = vadd.f32 %v2924, %v3279
      %v3392 = vadd.f32 %v2925, %v3282
      %v3393 = vadd.f32 %v2926, %v3287
      %v3394 = vadd.f32 %v2927, %v3290
      %v3395 = vadd.f32 %v2928, %v3295
      %v3396 = vadd.f32 %v2929, %v3298
      %v3397 = vadd.f32 %v2930, %v3303
      %v3398 = vadd.f32 %v2931, %v3306
      %v3399 = vadd.f32 %v2932, %v3311
      %v3400 = vadd.f32 %v2933, %v3314
      %v3401 = vadd.f32 %v2934, %v3319
      %v3402 = vadd.f32 %v2935, %v3322
      %v3403 = vadd.f32 %v2936, %v3327
      %v3404 = vadd.f32 %v2937, %v3330
      %v3405 = vadd.f32 %v2938, %v3335
      %v3406 = vadd.f32 %v2939, %v3338
      %v3407 = vadd.f32 %v2940, %v3343
      %v3408 = vadd.f32 %v2941, %v3346
      %v3409 = vadd.f32 %v2942, %v3351
      %v3410 = vadd.f32 %v2943, %v3354
      %v3411 = vadd.f32 %v2944, %v3359
      %v3412 = vadd.f32 %v2945, %v3362
      %v3413 = vadd.f32 %v2946, %v3367
      %v3414 = vadd.f32 %v2947, %v3370
      %v3415 = vadd.f32 %v2948, %v3375
      %v3416 = vadd.f32 %v2949, %v3378
      %v3417 = vld [vmem:[#allocation2 + $0x98] sm:$0x3]
      %s3418 = scalar_lea.vmem %s3, 128
      %v3419 = vld [vmem:[%s3418] sm:$0xf]
      %v3420 = vld [vmem:[%s3418 + $0x4] sm:$0xf]
      %v3421 = vld [vmem:[%s3418 + $0x8] sm:$0xf]
      %v3422 = vld [vmem:[%s3418 + $0xc] sm:$0xf]
      %v3423 = vld [vmem:[%s3418 + $0x10] sm:$0xf]
      %v3424 = vld [vmem:[%s3418 + $0x14] sm:$0xf]
      %v3425 = vld [vmem:[%s3418 + $0x18] sm:$0xf]
      %v3426 = vld [vmem:[%s3418 + $0x1c] sm:$0xf]
      %v3428 = vunpack.c.l.b16 %v3417
      %v3429 = vpack.c.b16 %v3428, %v3428
      %vm3430 = vsmask.f32 6400
      %v3432 = vshrl.u32 %v3070, 16
      %v3434 = vrot.slane %v3432, 1
      %v3435 = vshll.u32 %v3070, 16
      %v3437 = vrot.slane %v3435, 2
      %v3438 = vor.u32 %v3434, %v3437
      %v3440 = vshrl.u32 %v3071, 16
      %v3442 = vrot.slane %v3440, 1
      %v3443 = vshll.u32 %v3071, 16
      %v3445 = vrot.slane %v3443, 2
      %v3446 = vor.u32 %v3442, %v3445
      %v3447 = vsel %vm3430, %v3438, %v3446
      %v3449 = vshrl.u32 %v3072, 16
      %v3451 = vrot.slane %v3449, 1
      %v3452 = vshll.u32 %v3072, 16
      %v3454 = vrot.slane %v3452, 2
      %v3455 = vor.u32 %v3451, %v3454
      %v3456 = vsel %vm3430, %v3446, %v3455
      %v3458 = vshrl.u32 %v3073, 16
      %v3460 = vrot.slane %v3458, 1
      %v3461 = vshll.u32 %v3073, 16
      %v3463 = vrot.slane %v3461, 2
      %v3464 = vor.u32 %v3460, %v3463
      %v3465 = vsel %vm3430, %v3455, %v3464
      %v3467 = vshrl.u32 %v3074, 16
      %v3469 = vrot.slane %v3467, 1
      %v3470 = vshll.u32 %v3074, 16
      %v3472 = vrot.slane %v3470, 2
      %v3473 = vor.u32 %v3469, %v3472
      %v3474 = vsel %vm3430, %v3464, %v3473
      %v3476 = vshrl.u32 %v3075, 16
      %v3478 = vrot.slane %v3476, 1
      %v3479 = vshll.u32 %v3075, 16
      %v3481 = vrot.slane %v3479, 2
      %v3482 = vor.u32 %v3478, %v3481
      %v3483 = vsel %vm3430, %v3473, %v3482
      %v3485 = vshrl.u32 %v3076, 16
      %v3487 = vrot.slane %v3485, 1
      %v3488 = vshll.u32 %v3076, 16
      %v3490 = vrot.slane %v3488, 2
      %v3491 = vor.u32 %v3487, %v3490
      %v3492 = vsel %vm3430, %v3482, %v3491
      %v3494 = vshrl.u32 %v3077, 16
      %v3496 = vrot.slane %v3494, 1
      %v3497 = vshll.u32 %v3077, 16
      %v3499 = vrot.slane %v3497, 2
      %v3500 = vor.u32 %v3496, %v3499
      %v3501 = vsel %vm3430, %v3491, %v3500
      %v3503 = vshrl.u32 %v3078, 16
      %v3505 = vrot.slane %v3503, 1
      %v3506 = vshll.u32 %v3078, 16
      %v3508 = vrot.slane %v3506, 2
      %v3509 = vor.u32 %v3505, %v3508
      %v3510 = vsel %vm3430, %v3500, %v3509
      %v3512 = vshrl.u32 %v3079, 16
      %v3514 = vrot.slane %v3512, 1
      %v3515 = vshll.u32 %v3079, 16
      %v3517 = vrot.slane %v3515, 2
      %v3518 = vor.u32 %v3514, %v3517
      %v3519 = vsel %vm3430, %v3509, %v3518
      %v3521 = vshrl.u32 %v3080, 16
      %v3523 = vrot.slane %v3521, 1
      %v3524 = vshll.u32 %v3080, 16
      %v3526 = vrot.slane %v3524, 2
      %v3527 = vor.u32 %v3523, %v3526
      %v3528 = vsel %vm3430, %v3518, %v3527
      %v3530 = vshrl.u32 %v3081, 16
      %v3532 = vrot.slane %v3530, 1
      %v3533 = vshll.u32 %v3081, 16
      %v3535 = vrot.slane %v3533, 2
      %v3536 = vor.u32 %v3532, %v3535
      %v3537 = vsel %vm3430, %v3527, %v3536
      %v3539 = vshrl.u32 %v3082, 16
      %v3541 = vrot.slane %v3539, 1
      %v3542 = vshll.u32 %v3082, 16
      %v3544 = vrot.slane %v3542, 2
      %v3545 = vor.u32 %v3541, %v3544
      %v3546 = vsel %vm3430, %v3536, %v3545
      %v3548 = vshrl.u32 %v3083, 16
      %v3550 = vrot.slane %v3548, 1
      %v3551 = vshll.u32 %v3083, 16
      %v3553 = vrot.slane %v3551, 2
      %v3554 = vor.u32 %v3550, %v3553
      %v3555 = vsel %vm3430, %v3545, %v3554
      %v3557 = vshrl.u32 %v3084, 16
      %v3559 = vrot.slane %v3557, 1
      %v3560 = vshll.u32 %v3084, 16
      %v3562 = vrot.slane %v3560, 2
      %v3563 = vor.u32 %v3559, %v3562
      %v3564 = vsel %vm3430, %v3554, %v3563
      %v3566 = vshrl.u32 %v3085, 16
      %v3568 = vrot.slane %v3566, 1
      %v3569 = vshll.u32 %v3085, 16
      %v3571 = vrot.slane %v3569, 2
      %v3572 = vor.u32 %v3568, %v3571
      %v3573 = vsel %vm3430, %v3563, %v3572
      %v3575 = vshrl.u32 %v3086, 16
      %v3577 = vrot.slane %v3575, 1
      %v3578 = vshll.u32 %v3086, 16
      %v3580 = vrot.slane %v3578, 2
      %v3581 = vor.u32 %v3577, %v3580
      %v3582 = vsel %vm3430, %v3572, %v3581
      %v3584 = vshrl.u32 %v3087, 16
      %v3586 = vrot.slane %v3584, 1
      %v3587 = vshll.u32 %v3087, 16
      %v3589 = vrot.slane %v3587, 2
      %v3590 = vor.u32 %v3586, %v3589
      %v3591 = vsel %vm3430, %v3581, %v3590
      %v3593 = vshrl.u32 %v3429, 16
      %v3595 = vrot.slane %v3593, 1
      %v3596 = vshll.u32 %v3429, 16
      %v3598 = vrot.slane %v3596, 2
      %v3599 = vor.u32 %v3595, %v3598
      %v3600 = vsel %vm3430, %v3590, %v3599
      %v3609 = vunpack.c.l.b16 %v3419
      %v3610 = vunpack.c.l.b16 %v3420
      %v3611 = vunpack.c.l.b16 %v3421
      %v3612 = vunpack.c.l.b16 %v3422
      %v3613 = vunpack.c.l.b16 %v3423
      %v3614 = vunpack.c.l.b16 %v3424
      %v3615 = vunpack.c.l.b16 %v3425
      %v3616 = vunpack.c.l.b16 %v3426
      %v3617 = vpack.c.b16 %v3610, %v3609
      %v3618 = vpack.c.b16 %v3612, %v3611
      %v3619 = vpack.c.b16 %v3614, %v3613
      %v3620 = vpack.c.b16 %v3616, %v3615
      %v3626 = vsel %vm2139, %v3447, 0
      %v3629 = vsel %vm2139, %v3456, 0
      %v3632 = vsel %vm2139, %v3465, 0
      %v3635 = vsel %vm2139, %v3474, 0
      %v3638 = vsel %vm2139, %v3483, 0
      %v3641 = vsel %vm2139, %v3492, 0
      %v3644 = vsel %vm2139, %v3501, 0
      %v3647 = vsel %vm2139, %v3510, 0
      %v3650 = vsel %vm2139, %v3519, 0
      %v3653 = vsel %vm2139, %v3528, 0
      %v3656 = vsel %vm2139, %v3537, 0
      %v3659 = vsel %vm2139, %v3546, 0
      %v3662 = vsel %vm2139, %v3555, 0
      %v3665 = vsel %vm2139, %v3564, 0
      %v3668 = vsel %vm2139, %v3573, 0
      %v3671 = vsel %vm2139, %v3582, 0
      %v3674 = vsel %vm2139, %v3591, 0
      %v3677 = vsel %vm2139, %v3600, 0
      %3679 = vmatprep.subr.bf16.mxu0 0
      %3680 = vmatpush1.bf16.msra.mxu0 0
      %3681 = vmatprep.subr.bf16.mxu0 0
      %3682 = vmatpush1.bf16.msra.mxu0 0
      %3683 = vmatprep.subr.bf16.mxu0 0
      %3684 = vmatpush1.bf16.msra.mxu0 0
      %3685 = vmatprep.subr.bf16.mxu0 0
      %3686 = vmatpush1.bf16.msra.mxu0 0
      %3687 = vmatprep.subr.bf16.mxu0 0
      %3688 = vmatpush1.bf16.msra.mxu0 %v3620
      %3689 = vmatprep.subr.bf16.mxu0 0
      %3690 = vmatpush1.bf16.msra.mxu0 %v3619
      %3691 = vmatprep.subr.bf16.mxu0 0
      %3692 = vmatpush1.bf16.msra.mxu0 %v3618
      %3693 = vmatprep.subr.bf16.mxu0 0
      %3694 = vmatpush1.bf16.msra.mxu0 %v3617
      %3695 = vmatprep.subr.bf16.mxu0 0
      %3696 = vmatpush2.bf16.msra.mxu0 0
      %3697 = vmatprep.subr.bf16.mxu0 0
      %3698 = vmatpush2.bf16.msra.mxu0 0
      %3699 = vmatprep.subr.bf16.mxu0 0
      %3700 = vmatpush2.bf16.msra.mxu0 0
      %3701 = vmatprep.subr.bf16.mxu0 0
      %3702 = vmatpush2.bf16.msra.mxu0 0
      %3703 = vmatprep.subr.bf16.mxu0 0
      %3704 = vmatpush2.bf16.msra.mxu0 0
      %3705 = vmatprep.subr.bf16.mxu0 0
      %3706 = vmatpush2.bf16.msra.mxu0 0
      %3707 = vmatprep.subr.bf16.mxu0 0
      %3708 = vmatpush2.bf16.msra.mxu0 0
      %3709 = vmatprep.subr.bf16.mxu0 0
      %3710 = vmatpush2.bf16.msra.mxu0 0
      %3711 = vmatprep.mubr.bf16.mxu0 0
      %3712 = vmatmul.mubr.bf16.gmra.mxu0 %v3626
      %v3713 = vpop.f32.mrf.mxu0
      %v3714 = vadd.f32 0.0, %v3713
      %v3715 = vpop.f32.mrf.mxu0
      %v3716 = vpop.f32.mrf.mxu0
      %v3717 = vadd.f32 0.0, %v3716
      %v3718 = vpop.f32.mrf.mxu0
      %3719 = vmatprep.mubr.bf16.mxu0 0
      %3720 = vmatmul.mubr.bf16.gmra.mxu0 %v3629
      %v3721 = vpop.f32.mrf.mxu0
      %v3722 = vadd.f32 0.0, %v3721
      %v3723 = vpop.f32.mrf.mxu0
      %v3724 = vpop.f32.mrf.mxu0
      %v3725 = vadd.f32 0.0, %v3724
      %v3726 = vpop.f32.mrf.mxu0
      %3727 = vmatprep.mubr.bf16.mxu0 0
      %3728 = vmatmul.mubr.bf16.gmra.mxu0 %v3632
      %v3729 = vpop.f32.mrf.mxu0
      %v3730 = vadd.f32 0.0, %v3729
      %v3731 = vpop.f32.mrf.mxu0
      %v3732 = vpop.f32.mrf.mxu0
      %v3733 = vadd.f32 0.0, %v3732
      %v3734 = vpop.f32.mrf.mxu0
      %3735 = vmatprep.mubr.bf16.mxu0 0
      %3736 = vmatmul.mubr.bf16.gmra.mxu0 %v3635
      %v3737 = vpop.f32.mrf.mxu0
      %v3738 = vadd.f32 0.0, %v3737
      %v3739 = vpop.f32.mrf.mxu0
      %v3740 = vpop.f32.mrf.mxu0
      %v3741 = vadd.f32 0.0, %v3740
      %v3742 = vpop.f32.mrf.mxu0
      %3743 = vmatprep.mubr.bf16.mxu0 0
      %3744 = vmatmul.mubr.bf16.gmra.mxu0 %v3638
      %v3745 = vpop.f32.mrf.mxu0
      %v3746 = vadd.f32 0.0, %v3745
      %v3747 = vpop.f32.mrf.mxu0
      %v3748 = vpop.f32.mrf.mxu0
      %v3749 = vadd.f32 0.0, %v3748
      %v3750 = vpop.f32.mrf.mxu0
      %3751 = vmatprep.mubr.bf16.mxu0 0
      %3752 = vmatmul.mubr.bf16.gmra.mxu0 %v3641
      %v3753 = vpop.f32.mrf.mxu0
      %v3754 = vadd.f32 0.0, %v3753
      %v3755 = vpop.f32.mrf.mxu0
      %v3756 = vpop.f32.mrf.mxu0
      %v3757 = vadd.f32 0.0, %v3756
      %v3758 = vpop.f32.mrf.mxu0
      %3759 = vmatprep.mubr.bf16.mxu0 0
      %3760 = vmatmul.mubr.bf16.gmra.mxu0 %v3644
      %v3761 = vpop.f32.mrf.mxu0
      %v3762 = vadd.f32 0.0, %v3761
      %v3763 = vpop.f32.mrf.mxu0
      %v3764 = vpop.f32.mrf.mxu0
      %v3765 = vadd.f32 0.0, %v3764
      %v3766 = vpop.f32.mrf.mxu0
      %3767 = vmatprep.mubr.bf16.mxu0 0
      %3768 = vmatmul.mubr.bf16.gmra.mxu0 %v3647
      %v3769 = vpop.f32.mrf.mxu0
      %v3770 = vadd.f32 0.0, %v3769
      %v3771 = vpop.f32.mrf.mxu0
      %v3772 = vpop.f32.mrf.mxu0
      %v3773 = vadd.f32 0.0, %v3772
      %v3774 = vpop.f32.mrf.mxu0
      %3775 = vmatprep.mubr.bf16.mxu0 0
      %3776 = vmatmul.mubr.bf16.gmra.mxu0 %v3650
      %v3777 = vpop.f32.mrf.mxu0
      %v3778 = vadd.f32 0.0, %v3777
      %v3779 = vpop.f32.mrf.mxu0
      %v3780 = vpop.f32.mrf.mxu0
      %v3781 = vadd.f32 0.0, %v3780
      %v3782 = vpop.f32.mrf.mxu0
      %3783 = vmatprep.mubr.bf16.mxu0 0
      %3784 = vmatmul.mubr.bf16.gmra.mxu0 %v3653
      %v3785 = vpop.f32.mrf.mxu0
      %v3786 = vadd.f32 0.0, %v3785
      %v3787 = vpop.f32.mrf.mxu0
      %v3788 = vpop.f32.mrf.mxu0
      %v3789 = vadd.f32 0.0, %v3788
      %v3790 = vpop.f32.mrf.mxu0
      %3791 = vmatprep.mubr.bf16.mxu0 0
      %3792 = vmatmul.mubr.bf16.gmra.mxu0 %v3656
      %v3793 = vpop.f32.mrf.mxu0
      %v3794 = vadd.f32 0.0, %v3793
      %v3795 = vpop.f32.mrf.mxu0
      %v3796 = vpop.f32.mrf.mxu0
      %v3797 = vadd.f32 0.0, %v3796
      %v3798 = vpop.f32.mrf.mxu0
      %3799 = vmatprep.mubr.bf16.mxu0 0
      %3800 = vmatmul.mubr.bf16.gmra.mxu0 %v3659
      %v3801 = vpop.f32.mrf.mxu0
      %v3802 = vadd.f32 0.0, %v3801
      %v3803 = vpop.f32.mrf.mxu0
      %v3804 = vpop.f32.mrf.mxu0
      %v3805 = vadd.f32 0.0, %v3804
      %v3806 = vpop.f32.mrf.mxu0
      %3807 = vmatprep.mubr.bf16.mxu0 0
      %3808 = vmatmul.mubr.bf16.gmra.mxu0 %v3662
      %v3809 = vpop.f32.mrf.mxu0
      %v3810 = vadd.f32 0.0, %v3809
      %v3811 = vpop.f32.mrf.mxu0
      %v3812 = vpop.f32.mrf.mxu0
      %v3813 = vadd.f32 0.0, %v3812
      %v3814 = vpop.f32.mrf.mxu0
      %3815 = vmatprep.mubr.bf16.mxu0 0
      %3816 = vmatmul.mubr.bf16.gmra.mxu0 %v3665
      %v3817 = vpop.f32.mrf.mxu0
      %v3818 = vadd.f32 0.0, %v3817
      %v3819 = vpop.f32.mrf.mxu0
      %v3820 = vpop.f32.mrf.mxu0
      %v3821 = vadd.f32 0.0, %v3820
      %v3822 = vpop.f32.mrf.mxu0
      %3823 = vmatprep.mubr.bf16.mxu0 0
      %3824 = vmatmul.mubr.bf16.gmra.mxu0 %v3668
      %v3825 = vpop.f32.mrf.mxu0
      %v3826 = vadd.f32 0.0, %v3825
      %v3827 = vpop.f32.mrf.mxu0
      %v3828 = vpop.f32.mrf.mxu0
      %v3829 = vadd.f32 0.0, %v3828
      %v3830 = vpop.f32.mrf.mxu0
      %3831 = vmatprep.mubr.bf16.mxu0 0
      %3832 = vmatmul.mubr.bf16.gmra.mxu0 %v3671
      %v3833 = vpop.f32.mrf.mxu0
      %v3834 = vadd.f32 0.0, %v3833
      %v3835 = vpop.f32.mrf.mxu0
      %v3836 = vpop.f32.mrf.mxu0
      %v3837 = vadd.f32 0.0, %v3836
      %v3838 = vpop.f32.mrf.mxu0
      %3839 = vmatprep.mubr.bf16.mxu0 0
      %3840 = vmatmul.mubr.bf16.gmra.mxu0 %v3674
      %v3841 = vpop.f32.mrf.mxu0
      %v3842 = vadd.f32 0.0, %v3841
      %v3843 = vpop.f32.mrf.mxu0
      %v3844 = vpop.f32.mrf.mxu0
      %v3845 = vadd.f32 0.0, %v3844
      %v3846 = vpop.f32.mrf.mxu0
      %3847 = vmatprep.mubr.bf16.mxu0 0
      %3848 = vmatmul.mubr.bf16.gmra.mxu0 %v3677
      %v3849 = vpop.f32.mrf.mxu0
      %v3850 = vadd.f32 0.0, %v3849
      %v3851 = vpop.f32.mrf.mxu0
      %v3852 = vpop.f32.mrf.mxu0
      %v3853 = vadd.f32 0.0, %v3852
      %v3854 = vpop.f32.mrf.mxu0
      %3855 = vdwg.mxu0
      %v3856 = vadd.f32 %v3381, %v3714
      %v3857 = vadd.f32 %v3382, %v3717
      %v3858 = vadd.f32 %v3383, %v3722
      %v3859 = vadd.f32 %v3384, %v3725
      %v3860 = vadd.f32 %v3385, %v3730
      %v3861 = vadd.f32 %v3386, %v3733
      %v3862 = vadd.f32 %v3387, %v3738
      %v3863 = vadd.f32 %v3388, %v3741
      %v3864 = vadd.f32 %v3389, %v3746
      %v3865 = vadd.f32 %v3390, %v3749
      %v3866 = vadd.f32 %v3391, %v3754
      %v3867 = vadd.f32 %v3392, %v3757
      %v3868 = vadd.f32 %v3393, %v3762
      %v3869 = vadd.f32 %v3394, %v3765
      %v3870 = vadd.f32 %v3395, %v3770
      %v3871 = vadd.f32 %v3396, %v3773
      %v3872 = vadd.f32 %v3397, %v3778
      %v3873 = vadd.f32 %v3398, %v3781
      %v3874 = vadd.f32 %v3399, %v3786
      %v3875 = vadd.f32 %v3400, %v3789
      %v3876 = vadd.f32 %v3401, %v3794
      %v3877 = vadd.f32 %v3402, %v3797
      %v3878 = vadd.f32 %v3403, %v3802
      %v3879 = vadd.f32 %v3404, %v3805
      %v3880 = vadd.f32 %v3405, %v3810
      %v3881 = vadd.f32 %v3406, %v3813
      %v3882 = vadd.f32 %v3407, %v3818
      %v3883 = vadd.f32 %v3408, %v3821
      %v3884 = vadd.f32 %v3409, %v3826
      %v3885 = vadd.f32 %v3410, %v3829
      %v3886 = vadd.f32 %v3411, %v3834
      %v3887 = vadd.f32 %v3412, %v3837
      %v3888 = vadd.f32 %v3413, %v3842
      %v3889 = vadd.f32 %v3414, %v3845
      %v3890 = vadd.f32 %v3415, %v3850
      %v3891 = vadd.f32 %v3416, %v3853
      %v3892 = vld [vmem:[#allocation2 + $0x8] sm:$0xc]
      %s3893 = scalar_lea.vmem %s3, 160
      %v3894 = vld [vmem:[%s3893] sm:$0xf]
      %v3895 = vld [vmem:[%s3893 + $0x4] sm:$0xf]
      %v3896 = vld [vmem:[%s3893 + $0x8] sm:$0xf]
      %v3897 = vld [vmem:[%s3893 + $0xc] sm:$0xf]
      %v3898 = vld [vmem:[%s3893 + $0x10] sm:$0xf]
      %v3899 = vld [vmem:[%s3893 + $0x14] sm:$0xf]
      %v3900 = vld [vmem:[%s3893 + $0x18] sm:$0xf]
      %v3901 = vld [vmem:[%s3893 + $0x1c] sm:$0xf]
      %v3903 = vunpack.c.l.b16 %v3892
      %v3904 = vpack.c.b16 %v3034, %v3903
      %vm3905 = vcmask 1045504
      %v3906 = vrot.slane %v3904, 2
      %v3907 = vrot.slane %v3071, 2
      %v3908 = vsel %vm3905, %v3906, %v3907
      %v3909 = vrot.slane %v3072, 2
      %v3910 = vsel %vm3905, %v3907, %v3909
      %v3911 = vrot.slane %v3073, 2
      %v3912 = vsel %vm3905, %v3909, %v3911
      %v3913 = vrot.slane %v3074, 2
      %v3914 = vsel %vm3905, %v3911, %v3913
      %v3915 = vrot.slane %v3075, 2
      %v3916 = vsel %vm3905, %v3913, %v3915
      %v3917 = vrot.slane %v3076, 2
      %v3918 = vsel %vm3905, %v3915, %v3917
      %v3919 = vrot.slane %v3077, 2
      %v3920 = vsel %vm3905, %v3917, %v3919
      %v3921 = vrot.slane %v3078, 2
      %v3922 = vsel %vm3905, %v3919, %v3921
      %v3923 = vrot.slane %v3079, 2
      %v3924 = vsel %vm3905, %v3921, %v3923
      %v3925 = vrot.slane %v3080, 2
      %v3926 = vsel %vm3905, %v3923, %v3925
      %v3927 = vrot.slane %v3081, 2
      %v3928 = vsel %vm3905, %v3925, %v3927
      %v3929 = vrot.slane %v3082, 2
      %v3930 = vsel %vm3905, %v3927, %v3929
      %v3931 = vrot.slane %v3083, 2
      %v3932 = vsel %vm3905, %v3929, %v3931
      %v3933 = vrot.slane %v3084, 2
      %v3934 = vsel %vm3905, %v3931, %v3933
      %v3935 = vrot.slane %v3085, 2
      %v3936 = vsel %vm3905, %v3933, %v3935
      %v3937 = vrot.slane %v3086, 2
      %v3938 = vsel %vm3905, %v3935, %v3937
      %v3939 = vrot.slane %v3087, 2
      %v3940 = vsel %vm3905, %v3937, %v3939
      %v3941 = vrot.slane %v3429, 2
      %v3942 = vsel %vm3905, %v3939, %v3941
      %v3951 = vunpack.c.l.b16 %v3894
      %v3952 = vunpack.c.l.b16 %v3895
      %v3953 = vunpack.c.l.b16 %v3896
      %v3954 = vunpack.c.l.b16 %v3897
      %v3955 = vunpack.c.l.b16 %v3898
      %v3956 = vunpack.c.l.b16 %v3899
      %v3957 = vunpack.c.l.b16 %v3900
      %v3958 = vunpack.c.l.b16 %v3901
      %v3959 = vpack.c.b16 %v3952, %v3951
      %v3960 = vpack.c.b16 %v3954, %v3953
      %v3961 = vpack.c.b16 %v3956, %v3955
      %v3962 = vpack.c.b16 %v3958, %v3957
      %v3968 = vsel %vm2139, %v3908, 0
      %v3971 = vsel %vm2139, %v3910, 0
      %v3974 = vsel %vm2139, %v3912, 0
      %v3977 = vsel %vm2139, %v3914, 0
      %v3980 = vsel %vm2139, %v3916, 0
      %v3983 = vsel %vm2139, %v3918, 0
      %v3986 = vsel %vm2139, %v3920, 0
      %v3989 = vsel %vm2139, %v3922, 0
      %v3992 = vsel %vm2139, %v3924, 0
      %v3995 = vsel %vm2139, %v3926, 0
      %v3998 = vsel %vm2139, %v3928, 0
      %v4001 = vsel %vm2139, %v3930, 0
      %v4004 = vsel %vm2139, %v3932, 0
      %v4007 = vsel %vm2139, %v3934, 0
      %v4010 = vsel %vm2139, %v3936, 0
      %v4013 = vsel %vm2139, %v3938, 0
      %v4016 = vsel %vm2139, %v3940, 0
      %v4019 = vsel %vm2139, %v3942, 0
      %4021 = vmatprep.subr.bf16.mxu0 0
      %4022 = vmatpush1.bf16.msra.mxu0 0
      %4023 = vmatprep.subr.bf16.mxu0 0
      %4024 = vmatpush1.bf16.msra.mxu0 0
      %4025 = vmatprep.subr.bf16.mxu0 0
      %4026 = vmatpush1.bf16.msra.mxu0 0
      %4027 = vmatprep.subr.bf16.mxu0 0
      %4028 = vmatpush1.bf16.msra.mxu0 0
      %4029 = vmatprep.subr.bf16.mxu0 0
      %4030 = vmatpush1.bf16.msra.mxu0 %v3962
      %4031 = vmatprep.subr.bf16.mxu0 0
      %4032 = vmatpush1.bf16.msra.mxu0 %v3961
      %4033 = vmatprep.subr.bf16.mxu0 0
      %4034 = vmatpush1.bf16.msra.mxu0 %v3960
      %4035 = vmatprep.subr.bf16.mxu0 0
      %4036 = vmatpush1.bf16.msra.mxu0 %v3959
      %4037 = vmatprep.subr.bf16.mxu0 0
      %4038 = vmatpush2.bf16.msra.mxu0 0
      %4039 = vmatprep.subr.bf16.mxu0 0
      %4040 = vmatpush2.bf16.msra.mxu0 0
      %4041 = vmatprep.subr.bf16.mxu0 0
      %4042 = vmatpush2.bf16.msra.mxu0 0
      %4043 = vmatprep.subr.bf16.mxu0 0
      %4044 = vmatpush2.bf16.msra.mxu0 0
      %4045 = vmatprep.subr.bf16.mxu0 0
      %4046 = vmatpush2.bf16.msra.mxu0 0
      %4047 = vmatprep.subr.bf16.mxu0 0
      %4048 = vmatpush2.bf16.msra.mxu0 0
      %4049 = vmatprep.subr.bf16.mxu0 0
      %4050 = vmatpush2.bf16.msra.mxu0 0
      %4051 = vmatprep.subr.bf16.mxu0 0
      %4052 = vmatpush2.bf16.msra.mxu0 0
      %4053 = vmatprep.mubr.bf16.mxu0 0
      %4054 = vmatmul.mubr.bf16.gmra.mxu0 %v3968
      %v4055 = vpop.f32.mrf.mxu0
      %v4056 = vadd.f32 0.0, %v4055
      %v4057 = vpop.f32.mrf.mxu0
      %v4058 = vpop.f32.mrf.mxu0
      %v4059 = vadd.f32 0.0, %v4058
      %v4060 = vpop.f32.mrf.mxu0
      %4061 = vmatprep.mubr.bf16.mxu0 0
      %4062 = vmatmul.mubr.bf16.gmra.mxu0 %v3971
      %v4063 = vpop.f32.mrf.mxu0
      %v4064 = vadd.f32 0.0, %v4063
      %v4065 = vpop.f32.mrf.mxu0
      %v4066 = vpop.f32.mrf.mxu0
      %v4067 = vadd.f32 0.0, %v4066
      %v4068 = vpop.f32.mrf.mxu0
      %4069 = vmatprep.mubr.bf16.mxu0 0
      %4070 = vmatmul.mubr.bf16.gmra.mxu0 %v3974
      %v4071 = vpop.f32.mrf.mxu0
      %v4072 = vadd.f32 0.0, %v4071
      %v4073 = vpop.f32.mrf.mxu0
      %v4074 = vpop.f32.mrf.mxu0
      %v4075 = vadd.f32 0.0, %v4074
      %v4076 = vpop.f32.mrf.mxu0
      %4077 = vmatprep.mubr.bf16.mxu0 0
      %4078 = vmatmul.mubr.bf16.gmra.mxu0 %v3977
      %v4079 = vpop.f32.mrf.mxu0
      %v4080 = vadd.f32 0.0, %v4079
      %v4081 = vpop.f32.mrf.mxu0
      %v4082 = vpop.f32.mrf.mxu0
      %v4083 = vadd.f32 0.0, %v4082
      %v4084 = vpop.f32.mrf.mxu0
      %4085 = vmatprep.mubr.bf16.mxu0 0
      %4086 = vmatmul.mubr.bf16.gmra.mxu0 %v3980
      %v4087 = vpop.f32.mrf.mxu0
      %v4088 = vadd.f32 0.0, %v4087
      %v4089 = vpop.f32.mrf.mxu0
      %v4090 = vpop.f32.mrf.mxu0
      %v4091 = vadd.f32 0.0, %v4090
      %v4092 = vpop.f32.mrf.mxu0
      %4093 = vmatprep.mubr.bf16.mxu0 0
      %4094 = vmatmul.mubr.bf16.gmra.mxu0 %v3983
      %v4095 = vpop.f32.mrf.mxu0
      %v4096 = vadd.f32 0.0, %v4095
      %v4097 = vpop.f32.mrf.mxu0
      %v4098 = vpop.f32.mrf.mxu0
      %v4099 = vadd.f32 0.0, %v4098
      %v4100 = vpop.f32.mrf.mxu0
      %4101 = vmatprep.mubr.bf16.mxu0 0
      %4102 = vmatmul.mubr.bf16.gmra.mxu0 %v3986
      %v4103 = vpop.f32.mrf.mxu0
      %v4104 = vadd.f32 0.0, %v4103
      %v4105 = vpop.f32.mrf.mxu0
      %v4106 = vpop.f32.mrf.mxu0
      %v4107 = vadd.f32 0.0, %v4106
      %v4108 = vpop.f32.mrf.mxu0
      %4109 = vmatprep.mubr.bf16.mxu0 0
      %4110 = vmatmul.mubr.bf16.gmra.mxu0 %v3989
      %v4111 = vpop.f32.mrf.mxu0
      %v4112 = vadd.f32 0.0, %v4111
      %v4113 = vpop.f32.mrf.mxu0
      %v4114 = vpop.f32.mrf.mxu0
      %v4115 = vadd.f32 0.0, %v4114
      %v4116 = vpop.f32.mrf.mxu0
      %4117 = vmatprep.mubr.bf16.mxu0 0
      %4118 = vmatmul.mubr.bf16.gmra.mxu0 %v3992
      %v4119 = vpop.f32.mrf.mxu0
      %v4120 = vadd.f32 0.0, %v4119
      %v4121 = vpop.f32.mrf.mxu0
      %v4122 = vpop.f32.mrf.mxu0
      %v4123 = vadd.f32 0.0, %v4122
      %v4124 = vpop.f32.mrf.mxu0
      %4125 = vmatprep.mubr.bf16.mxu0 0
      %4126 = vmatmul.mubr.bf16.gmra.mxu0 %v3995
      %v4127 = vpop.f32.mrf.mxu0
      %v4128 = vadd.f32 0.0, %v4127
      %v4129 = vpop.f32.mrf.mxu0
      %v4130 = vpop.f32.mrf.mxu0
      %v4131 = vadd.f32 0.0, %v4130
      %v4132 = vpop.f32.mrf.mxu0
      %4133 = vmatprep.mubr.bf16.mxu0 0
      %4134 = vmatmul.mubr.bf16.gmra.mxu0 %v3998
      %v4135 = vpop.f32.mrf.mxu0
      %v4136 = vadd.f32 0.0, %v4135
      %v4137 = vpop.f32.mrf.mxu0
      %v4138 = vpop.f32.mrf.mxu0
      %v4139 = vadd.f32 0.0, %v4138
      %v4140 = vpop.f32.mrf.mxu0
      %4141 = vmatprep.mubr.bf16.mxu0 0
      %4142 = vmatmul.mubr.bf16.gmra.mxu0 %v4001
      %v4143 = vpop.f32.mrf.mxu0
      %v4144 = vadd.f32 0.0, %v4143
      %v4145 = vpop.f32.mrf.mxu0
      %v4146 = vpop.f32.mrf.mxu0
      %v4147 = vadd.f32 0.0, %v4146
      %v4148 = vpop.f32.mrf.mxu0
      %4149 = vmatprep.mubr.bf16.mxu0 0
      %4150 = vmatmul.mubr.bf16.gmra.mxu0 %v4004
      %v4151 = vpop.f32.mrf.mxu0
      %v4152 = vadd.f32 0.0, %v4151
      %v4153 = vpop.f32.mrf.mxu0
      %v4154 = vpop.f32.mrf.mxu0
      %v4155 = vadd.f32 0.0, %v4154
      %v4156 = vpop.f32.mrf.mxu0
      %4157 = vmatprep.mubr.bf16.mxu0 0
      %4158 = vmatmul.mubr.bf16.gmra.mxu0 %v4007
      %v4159 = vpop.f32.mrf.mxu0
      %v4160 = vadd.f32 0.0, %v4159
      %v4161 = vpop.f32.mrf.mxu0
      %v4162 = vpop.f32.mrf.mxu0
      %v4163 = vadd.f32 0.0, %v4162
      %v4164 = vpop.f32.mrf.mxu0
      %4165 = vmatprep.mubr.bf16.mxu0 0
      %4166 = vmatmul.mubr.bf16.gmra.mxu0 %v4010
      %v4167 = vpop.f32.mrf.mxu0
      %v4168 = vadd.f32 0.0, %v4167
      %v4169 = vpop.f32.mrf.mxu0
      %v4170 = vpop.f32.mrf.mxu0
      %v4171 = vadd.f32 0.0, %v4170
      %v4172 = vpop.f32.mrf.mxu0
      %4173 = vmatprep.mubr.bf16.mxu0 0
      %4174 = vmatmul.mubr.bf16.gmra.mxu0 %v4013
      %v4175 = vpop.f32.mrf.mxu0
      %v4176 = vadd.f32 0.0, %v4175
      %v4177 = vpop.f32.mrf.mxu0
      %v4178 = vpop.f32.mrf.mxu0
      %v4179 = vadd.f32 0.0, %v4178
      %v4180 = vpop.f32.mrf.mxu0
      %4181 = vmatprep.mubr.bf16.mxu0 0
      %4182 = vmatmul.mubr.bf16.gmra.mxu0 %v4016
      %v4183 = vpop.f32.mrf.mxu0
      %v4184 = vadd.f32 0.0, %v4183
      %v4185 = vpop.f32.mrf.mxu0
      %v4186 = vpop.f32.mrf.mxu0
      %v4187 = vadd.f32 0.0, %v4186
      %v4188 = vpop.f32.mrf.mxu0
      %4189 = vmatprep.mubr.bf16.mxu0 0
      %4190 = vmatmul.mubr.bf16.gmra.mxu0 %v4019
      %v4191 = vpop.f32.mrf.mxu0
      %v4192 = vadd.f32 0.0, %v4191
      %v4193 = vpop.f32.mrf.mxu0
      %v4194 = vpop.f32.mrf.mxu0
      %v4195 = vadd.f32 0.0, %v4194
      %v4196 = vpop.f32.mrf.mxu0
      %4197 = vdwg.mxu0
      %v4198 = vadd.f32 %v3856, %v4056
      %v4199 = vadd.f32 %v3857, %v4059
      %v4200 = vadd.f32 %v3858, %v4064
      %v4201 = vadd.f32 %v3859, %v4067
      %v4202 = vadd.f32 %v3860, %v4072
      %v4203 = vadd.f32 %v3861, %v4075
      %v4204 = vadd.f32 %v3862, %v4080
      %v4205 = vadd.f32 %v3863, %v4083
      %v4206 = vadd.f32 %v3864, %v4088
      %v4207 = vadd.f32 %v3865, %v4091
      %v4208 = vadd.f32 %v3866, %v4096
      %v4209 = vadd.f32 %v3867, %v4099
      %v4210 = vadd.f32 %v3868, %v4104
      %v4211 = vadd.f32 %v3869, %v4107
      %v4212 = vadd.f32 %v3870, %v4112
      %v4213 = vadd.f32 %v3871, %v4115
      %v4214 = vadd.f32 %v3872, %v4120
      %v4215 = vadd.f32 %v3873, %v4123
      %v4216 = vadd.f32 %v3874, %v4128
      %v4217 = vadd.f32 %v3875, %v4131
      %v4218 = vadd.f32 %v3876, %v4136
      %v4219 = vadd.f32 %v3877, %v4139
      %v4220 = vadd.f32 %v3878, %v4144
      %v4221 = vadd.f32 %v3879, %v4147
      %v4222 = vadd.f32 %v3880, %v4152
      %v4223 = vadd.f32 %v3881, %v4155
      %v4224 = vadd.f32 %v3882, %v4160
      %v4225 = vadd.f32 %v3883, %v4163
      %v4226 = vadd.f32 %v3884, %v4168
      %v4227 = vadd.f32 %v3885, %v4171
      %v4228 = vadd.f32 %v3886, %v4176
      %v4229 = vadd.f32 %v3887, %v4179
      %v4230 = vadd.f32 %v3888, %v4184
      %v4231 = vadd.f32 %v3889, %v4187
      %v4232 = vadd.f32 %v3890, %v4192
      %v4233 = vadd.f32 %v3891, %v4195
      %v4234 = vld [vmem:[#allocation2 + $0x10] sm:$0xc]
      %v4235 = vld [vmem:[#allocation2 + $0x14] sm:$0xf]
      %v4236 = vld [vmem:[#allocation2 + $0x18] sm:$0xf]
      %v4237 = vld [vmem:[#allocation2 + $0x1c] sm:$0xf]
      %v4238 = vld [vmem:[#allocation2 + $0x20] sm:$0xf]
      %v4239 = vld [vmem:[#allocation2 + $0x24] sm:$0xf]
      %v4240 = vld [vmem:[#allocation2 + $0x28] sm:$0xf]
      %v4241 = vld [vmem:[#allocation2 + $0x2c] sm:$0xf]
      %v4242 = vld [vmem:[#allocation2 + $0x30] sm:$0xf]
      %v4243 = vld [vmem:[#allocation2 + $0x34] sm:$0xf]
      %v4244 = vld [vmem:[#allocation2 + $0x38] sm:$0xf]
      %v4245 = vld [vmem:[#allocation2 + $0x3c] sm:$0xf]
      %v4246 = vld [vmem:[#allocation2 + $0x40] sm:$0xf]
      %v4247 = vld [vmem:[#allocation2 + $0x44] sm:$0xf]
      %v4248 = vld [vmem:[#allocation2 + $0x48] sm:$0xf]
      %v4249 = vld [vmem:[#allocation2 + $0x4c] sm:$0xf]
      %v4250 = vld [vmem:[#allocation2 + $0x50] sm:$0xf]
      %v4251 = vld [vmem:[#allocation2 + $0x54] sm:$0xf]
      %v4252 = vld [vmem:[#allocation2 + $0x58] sm:$0xf]
      %v4253 = vld [vmem:[#allocation2 + $0x5c] sm:$0xf]
      %v4254 = vld [vmem:[#allocation2 + $0x60] sm:$0xf]
      %v4255 = vld [vmem:[#allocation2 + $0x64] sm:$0xf]
      %v4256 = vld [vmem:[#allocation2 + $0x68] sm:$0xf]
      %v4257 = vld [vmem:[#allocation2 + $0x6c] sm:$0xf]
      %v4258 = vld [vmem:[#allocation2 + $0x70] sm:$0xf]
      %v4259 = vld [vmem:[#allocation2 + $0x74] sm:$0xf]
      %v4260 = vld [vmem:[#allocation2 + $0x78] sm:$0xf]
      %v4261 = vld [vmem:[#allocation2 + $0x7c] sm:$0xf]
      %v4262 = vld [vmem:[#allocation2 + $0x80] sm:$0xf]
      %v4263 = vld [vmem:[#allocation2 + $0x84] sm:$0xf]
      %v4264 = vld [vmem:[#allocation2 + $0x88] sm:$0xf]
      %v4265 = vld [vmem:[#allocation2 + $0x8c] sm:$0xf]
      %v4266 = vld [vmem:[#allocation2 + $0x90] sm:$0xf]
      %v4267 = vld [vmem:[#allocation2 + $0x94] sm:$0xf]
      %v4268 = vld [vmem:[#allocation2 + $0x98] sm:$0xf]
      %v4269 = vld [vmem:[#allocation2 + $0x9c] sm:$0xf]
      %v4270 = vld [vmem:[#allocation2 + $0xa0] sm:$0x3]
      %s4271 = scalar_lea.vmem %s3, 192
      %v4272 = vld [vmem:[%s4271] sm:$0xf]
      %v4273 = vld [vmem:[%s4271 + $0x4] sm:$0xf]
      %v4274 = vld [vmem:[%s4271 + $0x8] sm:$0xf]
      %v4275 = vld [vmem:[%s4271 + $0xc] sm:$0xf]
      %v4276 = vld [vmem:[%s4271 + $0x10] sm:$0xf]
      %v4277 = vld [vmem:[%s4271 + $0x14] sm:$0xf]
      %v4278 = vld [vmem:[%s4271 + $0x18] sm:$0xf]
      %v4279 = vld [vmem:[%s4271 + $0x1c] sm:$0xf]
      %v4317 = vunpack.c.l.b16 %v4234
      %v4318 = vunpack.c.l.b16 %v4235
      %v4319 = vunpack.c.l.b16 %v4236
      %v4320 = vunpack.c.l.b16 %v4237
      %v4321 = vunpack.c.l.b16 %v4238
      %v4322 = vunpack.c.l.b16 %v4239
      %v4323 = vunpack.c.l.b16 %v4240
      %v4324 = vunpack.c.l.b16 %v4241
      %v4325 = vunpack.c.l.b16 %v4242
      %v4326 = vunpack.c.l.b16 %v4243
      %v4327 = vunpack.c.l.b16 %v4244
      %v4328 = vunpack.c.l.b16 %v4245
      %v4329 = vunpack.c.l.b16 %v4246
      %v4330 = vunpack.c.l.b16 %v4247
      %v4331 = vunpack.c.l.b16 %v4248
      %v4332 = vunpack.c.l.b16 %v4249
      %v4333 = vunpack.c.l.b16 %v4250
      %v4334 = vunpack.c.l.b16 %v4251
      %v4335 = vunpack.c.l.b16 %v4252
      %v4336 = vunpack.c.l.b16 %v4253
      %v4337 = vunpack.c.l.b16 %v4254
      %v4338 = vunpack.c.l.b16 %v4255
      %v4339 = vunpack.c.l.b16 %v4256
      %v4340 = vunpack.c.l.b16 %v4257
      %v4341 = vunpack.c.l.b16 %v4258
      %v4342 = vunpack.c.l.b16 %v4259
      %v4343 = vunpack.c.l.b16 %v4260
      %v4344 = vunpack.c.l.b16 %v4261
      %v4345 = vunpack.c.l.b16 %v4262
      %v4346 = vunpack.c.l.b16 %v4263
      %v4347 = vunpack.c.l.b16 %v4264
      %v4348 = vunpack.c.l.b16 %v4265
      %v4349 = vunpack.c.l.b16 %v4266
      %v4350 = vunpack.c.l.b16 %v4267
      %v4351 = vunpack.c.l.b16 %v4268
      %v4352 = vunpack.c.l.b16 %v4269
      %v4353 = vunpack.c.l.b16 %v4270
      %v4354 = vpack.c.b16 %v4318, %v4317
      %v4355 = vpack.c.b16 %v4320, %v4319
      %v4356 = vpack.c.b16 %v4322, %v4321
      %v4357 = vpack.c.b16 %v4324, %v4323
      %v4358 = vpack.c.b16 %v4326, %v4325
      %v4359 = vpack.c.b16 %v4328, %v4327
      %v4360 = vpack.c.b16 %v4330, %v4329
      %v4361 = vpack.c.b16 %v4332, %v4331
      %v4362 = vpack.c.b16 %v4334, %v4333
      %v4363 = vpack.c.b16 %v4336, %v4335
      %v4364 = vpack.c.b16 %v4338, %v4337
      %v4365 = vpack.c.b16 %v4340, %v4339
      %v4366 = vpack.c.b16 %v4342, %v4341
      %v4367 = vpack.c.b16 %v4344, %v4343
      %v4368 = vpack.c.b16 %v4346, %v4345
      %v4369 = vpack.c.b16 %v4348, %v4347
      %v4370 = vpack.c.b16 %v4350, %v4349
      %v4371 = vpack.c.b16 %v4352, %v4351
      %v4372 = vpack.c.b16 %v4353, %v4353
      %v4373 = vrot.slane %v4354, 2
      %v4374 = vrot.slane %v4355, 2
      %v4375 = vsel %vm3905, %v4373, %v4374
      %v4376 = vrot.slane %v4356, 2
      %v4377 = vsel %vm3905, %v4374, %v4376
      %v4378 = vrot.slane %v4357, 2
      %v4379 = vsel %vm3905, %v4376, %v4378
      %v4380 = vrot.slane %v4358, 2
      %v4381 = vsel %vm3905, %v4378, %v4380
      %v4382 = vrot.slane %v4359, 2
      %v4383 = vsel %vm3905, %v4380, %v4382
      %v4384 = vrot.slane %v4360, 2
      %v4385 = vsel %vm3905, %v4382, %v4384
      %v4386 = vrot.slane %v4361, 2
      %v4387 = vsel %vm3905, %v4384, %v4386
      %v4388 = vrot.slane %v4362, 2
      %v4389 = vsel %vm3905, %v4386, %v4388
      %v4390 = vrot.slane %v4363, 2
      %v4391 = vsel %vm3905, %v4388, %v4390
      %v4392 = vrot.slane %v4364, 2
      %v4393 = vsel %vm3905, %v4390, %v4392
      %v4394 = vrot.slane %v4365, 2
      %v4395 = vsel %vm3905, %v4392, %v4394
      %v4396 = vrot.slane %v4366, 2
      %v4397 = vsel %vm3905, %v4394, %v4396
      %v4398 = vrot.slane %v4367, 2
      %v4399 = vsel %vm3905, %v4396, %v4398
      %v4400 = vrot.slane %v4368, 2
      %v4401 = vsel %vm3905, %v4398, %v4400
      %v4402 = vrot.slane %v4369, 2
      %v4403 = vsel %vm3905, %v4400, %v4402
      %v4404 = vrot.slane %v4370, 2
      %v4405 = vsel %vm3905, %v4402, %v4404
      %v4406 = vrot.slane %v4371, 2
      %v4407 = vsel %vm3905, %v4404, %v4406
      %v4408 = vrot.slane %v4372, 2
      %v4409 = vsel %vm3905, %v4406, %v4408
      %v4418 = vunpack.c.l.b16 %v4272
      %v4419 = vunpack.c.l.b16 %v4273
      %v4420 = vunpack.c.l.b16 %v4274
      %v4421 = vunpack.c.l.b16 %v4275
      %v4422 = vunpack.c.l.b16 %v4276
      %v4423 = vunpack.c.l.b16 %v4277
      %v4424 = vunpack.c.l.b16 %v4278
      %v4425 = vunpack.c.l.b16 %v4279
      %v4426 = vpack.c.b16 %v4419, %v4418
      %v4427 = vpack.c.b16 %v4421, %v4420
      %v4428 = vpack.c.b16 %v4423, %v4422
      %v4429 = vpack.c.b16 %v4425, %v4424
      %v4435 = vsel %vm2139, %v4375, 0
      %v4438 = vsel %vm2139, %v4377, 0
      %v4441 = vsel %vm2139, %v4379, 0
      %v4444 = vsel %vm2139, %v4381, 0
      %v4447 = vsel %vm2139, %v4383, 0
      %v4450 = vsel %vm2139, %v4385, 0
      %v4453 = vsel %vm2139, %v4387, 0
      %v4456 = vsel %vm2139, %v4389, 0
      %v4459 = vsel %vm2139, %v4391, 0
      %v4462 = vsel %vm2139, %v4393, 0
      %v4465 = vsel %vm2139, %v4395, 0
      %v4468 = vsel %vm2139, %v4397, 0
      %v4471 = vsel %vm2139, %v4399, 0
      %v4474 = vsel %vm2139, %v4401, 0
      %v4477 = vsel %vm2139, %v4403, 0
      %v4480 = vsel %vm2139, %v4405, 0
      %v4483 = vsel %vm2139, %v4407, 0
      %v4486 = vsel %vm2139, %v4409, 0
      %4488 = vmatprep.subr.bf16.mxu0 0
      %4489 = vmatpush1.bf16.msra.mxu0 0
      %4490 = vmatprep.subr.bf16.mxu0 0
      %4491 = vmatpush1.bf16.msra.mxu0 0
      %4492 = vmatprep.subr.bf16.mxu0 0
      %4493 = vmatpush1.bf16.msra.mxu0 0
      %4494 = vmatprep.subr.bf16.mxu0 0
      %4495 = vmatpush1.bf16.msra.mxu0 0
      %4496 = vmatprep.subr.bf16.mxu0 0
      %4497 = vmatpush1.bf16.msra.mxu0 %v4429
      %4498 = vmatprep.subr.bf16.mxu0 0
      %4499 = vmatpush1.bf16.msra.mxu0 %v4428
      %4500 = vmatprep.subr.bf16.mxu0 0
      %4501 = vmatpush1.bf16.msra.mxu0 %v4427
      %4502 = vmatprep.subr.bf16.mxu0 0
      %4503 = vmatpush1.bf16.msra.mxu0 %v4426
      %4504 = vmatprep.subr.bf16.mxu0 0
      %4505 = vmatpush2.bf16.msra.mxu0 0
      %4506 = vmatprep.subr.bf16.mxu0 0
      %4507 = vmatpush2.bf16.msra.mxu0 0
      %4508 = vmatprep.subr.bf16.mxu0 0
      %4509 = vmatpush2.bf16.msra.mxu0 0
      %4510 = vmatprep.subr.bf16.mxu0 0
      %4511 = vmatpush2.bf16.msra.mxu0 0
      %4512 = vmatprep.subr.bf16.mxu0 0
      %4513 = vmatpush2.bf16.msra.mxu0 0
      %4514 = vmatprep.subr.bf16.mxu0 0
      %4515 = vmatpush2.bf16.msra.mxu0 0
      %4516 = vmatprep.subr.bf16.mxu0 0
      %4517 = vmatpush2.bf16.msra.mxu0 0
      %4518 = vmatprep.subr.bf16.mxu0 0
      %4519 = vmatpush2.bf16.msra.mxu0 0
      %4520 = vmatprep.mubr.bf16.mxu0 0
      %4521 = vmatmul.mubr.bf16.gmra.mxu0 %v4435
      %v4522 = vpop.f32.mrf.mxu0
      %v4523 = vadd.f32 0.0, %v4522
      %v4524 = vpop.f32.mrf.mxu0
      %v4525 = vpop.f32.mrf.mxu0
      %v4526 = vadd.f32 0.0, %v4525
      %v4527 = vpop.f32.mrf.mxu0
      %4528 = vmatprep.mubr.bf16.mxu0 0
      %4529 = vmatmul.mubr.bf16.gmra.mxu0 %v4438
      %v4530 = vpop.f32.mrf.mxu0
      %v4531 = vadd.f32 0.0, %v4530
      %v4532 = vpop.f32.mrf.mxu0
      %v4533 = vpop.f32.mrf.mxu0
      %v4534 = vadd.f32 0.0, %v4533
      %v4535 = vpop.f32.mrf.mxu0
      %4536 = vmatprep.mubr.bf16.mxu0 0
      %4537 = vmatmul.mubr.bf16.gmra.mxu0 %v4441
      %v4538 = vpop.f32.mrf.mxu0
      %v4539 = vadd.f32 0.0, %v4538
      %v4540 = vpop.f32.mrf.mxu0
      %v4541 = vpop.f32.mrf.mxu0
      %v4542 = vadd.f32 0.0, %v4541
      %v4543 = vpop.f32.mrf.mxu0
      %4544 = vmatprep.mubr.bf16.mxu0 0
      %4545 = vmatmul.mubr.bf16.gmra.mxu0 %v4444
      %v4546 = vpop.f32.mrf.mxu0
      %v4547 = vadd.f32 0.0, %v4546
      %v4548 = vpop.f32.mrf.mxu0
      %v4549 = vpop.f32.mrf.mxu0
      %v4550 = vadd.f32 0.0, %v4549
      %v4551 = vpop.f32.mrf.mxu0
      %4552 = vmatprep.mubr.bf16.mxu0 0
      %4553 = vmatmul.mubr.bf16.gmra.mxu0 %v4447
      %v4554 = vpop.f32.mrf.mxu0
      %v4555 = vadd.f32 0.0, %v4554
      %v4556 = vpop.f32.mrf.mxu0
      %v4557 = vpop.f32.mrf.mxu0
      %v4558 = vadd.f32 0.0, %v4557
      %v4559 = vpop.f32.mrf.mxu0
      %4560 = vmatprep.mubr.bf16.mxu0 0
      %4561 = vmatmul.mubr.bf16.gmra.mxu0 %v4450
      %v4562 = vpop.f32.mrf.mxu0
      %v4563 = vadd.f32 0.0, %v4562
      %v4564 = vpop.f32.mrf.mxu0
      %v4565 = vpop.f32.mrf.mxu0
      %v4566 = vadd.f32 0.0, %v4565
      %v4567 = vpop.f32.mrf.mxu0
      %4568 = vmatprep.mubr.bf16.mxu0 0
      %4569 = vmatmul.mubr.bf16.gmra.mxu0 %v4453
      %v4570 = vpop.f32.mrf.mxu0
      %v4571 = vadd.f32 0.0, %v4570
      %v4572 = vpop.f32.mrf.mxu0
      %v4573 = vpop.f32.mrf.mxu0
      %v4574 = vadd.f32 0.0, %v4573
      %v4575 = vpop.f32.mrf.mxu0
      %4576 = vmatprep.mubr.bf16.mxu0 0
      %4577 = vmatmul.mubr.bf16.gmra.mxu0 %v4456
      %v4578 = vpop.f32.mrf.mxu0
      %v4579 = vadd.f32 0.0, %v4578
      %v4580 = vpop.f32.mrf.mxu0
      %v4581 = vpop.f32.mrf.mxu0
      %v4582 = vadd.f32 0.0, %v4581
      %v4583 = vpop.f32.mrf.mxu0
      %4584 = vmatprep.mubr.bf16.mxu0 0
      %4585 = vmatmul.mubr.bf16.gmra.mxu0 %v4459
      %v4586 = vpop.f32.mrf.mxu0
      %v4587 = vadd.f32 0.0, %v4586
      %v4588 = vpop.f32.mrf.mxu0
      %v4589 = vpop.f32.mrf.mxu0
      %v4590 = vadd.f32 0.0, %v4589
      %v4591 = vpop.f32.mrf.mxu0
      %4592 = vmatprep.mubr.bf16.mxu0 0
      %4593 = vmatmul.mubr.bf16.gmra.mxu0 %v4462
      %v4594 = vpop.f32.mrf.mxu0
      %v4595 = vadd.f32 0.0, %v4594
      %v4596 = vpop.f32.mrf.mxu0
      %v4597 = vpop.f32.mrf.mxu0
      %v4598 = vadd.f32 0.0, %v4597
      %v4599 = vpop.f32.mrf.mxu0
      %4600 = vmatprep.mubr.bf16.mxu0 0
      %4601 = vmatmul.mubr.bf16.gmra.mxu0 %v4465
      %v4602 = vpop.f32.mrf.mxu0
      %v4603 = vadd.f32 0.0, %v4602
      %v4604 = vpop.f32.mrf.mxu0
      %v4605 = vpop.f32.mrf.mxu0
      %v4606 = vadd.f32 0.0, %v4605
      %v4607 = vpop.f32.mrf.mxu0
      %4608 = vmatprep.mubr.bf16.mxu0 0
      %4609 = vmatmul.mubr.bf16.gmra.mxu0 %v4468
      %v4610 = vpop.f32.mrf.mxu0
      %v4611 = vadd.f32 0.0, %v4610
      %v4612 = vpop.f32.mrf.mxu0
      %v4613 = vpop.f32.mrf.mxu0
      %v4614 = vadd.f32 0.0, %v4613
      %v4615 = vpop.f32.mrf.mxu0
      %4616 = vmatprep.mubr.bf16.mxu0 0
      %4617 = vmatmul.mubr.bf16.gmra.mxu0 %v4471
      %v4618 = vpop.f32.mrf.mxu0
      %v4619 = vadd.f32 0.0, %v4618
      %v4620 = vpop.f32.mrf.mxu0
      %v4621 = vpop.f32.mrf.mxu0
      %v4622 = vadd.f32 0.0, %v4621
      %v4623 = vpop.f32.mrf.mxu0
      %4624 = vmatprep.mubr.bf16.mxu0 0
      %4625 = vmatmul.mubr.bf16.gmra.mxu0 %v4474
      %v4626 = vpop.f32.mrf.mxu0
      %v4627 = vadd.f32 0.0, %v4626
      %v4628 = vpop.f32.mrf.mxu0
      %v4629 = vpop.f32.mrf.mxu0
      %v4630 = vadd.f32 0.0, %v4629
      %v4631 = vpop.f32.mrf.mxu0
      %4632 = vmatprep.mubr.bf16.mxu0 0
      %4633 = vmatmul.mubr.bf16.gmra.mxu0 %v4477
      %v4634 = vpop.f32.mrf.mxu0
      %v4635 = vadd.f32 0.0, %v4634
      %v4636 = vpop.f32.mrf.mxu0
      %v4637 = vpop.f32.mrf.mxu0
      %v4638 = vadd.f32 0.0, %v4637
      %v4639 = vpop.f32.mrf.mxu0
      %4640 = vmatprep.mubr.bf16.mxu0 0
      %4641 = vmatmul.mubr.bf16.gmra.mxu0 %v4480
      %v4642 = vpop.f32.mrf.mxu0
      %v4643 = vadd.f32 0.0, %v4642
      %v4644 = vpop.f32.mrf.mxu0
      %v4645 = vpop.f32.mrf.mxu0
      %v4646 = vadd.f32 0.0, %v4645
      %v4647 = vpop.f32.mrf.mxu0
      %4648 = vmatprep.mubr.bf16.mxu0 0
      %4649 = vmatmul.mubr.bf16.gmra.mxu0 %v4483
      %v4650 = vpop.f32.mrf.mxu0
      %v4651 = vadd.f32 0.0, %v4650
      %v4652 = vpop.f32.mrf.mxu0
      %v4653 = vpop.f32.mrf.mxu0
      %v4654 = vadd.f32 0.0, %v4653
      %v4655 = vpop.f32.mrf.mxu0
      %4656 = vmatprep.mubr.bf16.mxu0 0
      %4657 = vmatmul.mubr.bf16.gmra.mxu0 %v4486
      %v4658 = vpop.f32.mrf.mxu0
      %v4659 = vadd.f32 0.0, %v4658
      %v4660 = vpop.f32.mrf.mxu0
      %v4661 = vpop.f32.mrf.mxu0
      %v4662 = vadd.f32 0.0, %v4661
      %v4663 = vpop.f32.mrf.mxu0
      %4664 = vdwg.mxu0
      %v4665 = vadd.f32 %v4198, %v4523
      %v4666 = vadd.f32 %v4199, %v4526
      %v4667 = vadd.f32 %v4200, %v4531
      %v4668 = vadd.f32 %v4201, %v4534
      %v4669 = vadd.f32 %v4202, %v4539
      %v4670 = vadd.f32 %v4203, %v4542
      %v4671 = vadd.f32 %v4204, %v4547
      %v4672 = vadd.f32 %v4205, %v4550
      %v4673 = vadd.f32 %v4206, %v4555
      %v4674 = vadd.f32 %v4207, %v4558
      %v4675 = vadd.f32 %v4208, %v4563
      %v4676 = vadd.f32 %v4209, %v4566
      %v4677 = vadd.f32 %v4210, %v4571
      %v4678 = vadd.f32 %v4211, %v4574
      %v4679 = vadd.f32 %v4212, %v4579
      %v4680 = vadd.f32 %v4213, %v4582
      %v4681 = vadd.f32 %v4214, %v4587
      %v4682 = vadd.f32 %v4215, %v4590
      %v4683 = vadd.f32 %v4216, %v4595
      %v4684 = vadd.f32 %v4217, %v4598
      %v4685 = vadd.f32 %v4218, %v4603
      %v4686 = vadd.f32 %v4219, %v4606
      %v4687 = vadd.f32 %v4220, %v4611
      %v4688 = vadd.f32 %v4221, %v4614
      %v4689 = vadd.f32 %v4222, %v4619
      %v4690 = vadd.f32 %v4223, %v4622
      %v4691 = vadd.f32 %v4224, %v4627
      %v4692 = vadd.f32 %v4225, %v4630
      %v4693 = vadd.f32 %v4226, %v4635
      %v4694 = vadd.f32 %v4227, %v4638
      %v4695 = vadd.f32 %v4228, %v4643
      %v4696 = vadd.f32 %v4229, %v4646
      %v4697 = vadd.f32 %v4230, %v4651
      %v4698 = vadd.f32 %v4231, %v4654
      %v4699 = vadd.f32 %v4232, %v4659
      %v4700 = vadd.f32 %v4233, %v4662
      %v4701 = vld [vmem:[#allocation2 + $0xa0] sm:$0x7]
      %s4702 = scalar_lea.vmem %s3, 224
      %v4703 = vld [vmem:[%s4702] sm:$0xf]
      %v4704 = vld [vmem:[%s4702 + $0x4] sm:$0xf]
      %v4705 = vld [vmem:[%s4702 + $0x8] sm:$0xf]
      %v4706 = vld [vmem:[%s4702 + $0xc] sm:$0xf]
      %v4707 = vld [vmem:[%s4702 + $0x10] sm:$0xf]
      %v4708 = vld [vmem:[%s4702 + $0x14] sm:$0xf]
      %v4709 = vld [vmem:[%s4702 + $0x18] sm:$0xf]
      %v4710 = vld [vmem:[%s4702 + $0x1c] sm:$0xf]
      %v4712 = vunpack.c.l.b16 %v4701
      %v4713 = vpack.c.b16 %v4712, %v4712
      %vm4714 = vsmask.f32 5376
      %v4716 = vshrl.u32 %v4354, 16
      %v4718 = vrot.slane %v4716, 2
      %v4719 = vshll.u32 %v4354, 16
      %v4721 = vrot.slane %v4719, 3
      %v4722 = vor.u32 %v4718, %v4721
      %v4724 = vshrl.u32 %v4355, 16
      %v4726 = vrot.slane %v4724, 2
      %v4727 = vshll.u32 %v4355, 16
      %v4729 = vrot.slane %v4727, 3
      %v4730 = vor.u32 %v4726, %v4729
      %v4731 = vsel %vm4714, %v4722, %v4730
      %v4733 = vshrl.u32 %v4356, 16
      %v4735 = vrot.slane %v4733, 2
      %v4736 = vshll.u32 %v4356, 16
      %v4738 = vrot.slane %v4736, 3
      %v4739 = vor.u32 %v4735, %v4738
      %v4740 = vsel %vm4714, %v4730, %v4739
      %v4742 = vshrl.u32 %v4357, 16
      %v4744 = vrot.slane %v4742, 2
      %v4745 = vshll.u32 %v4357, 16
      %v4747 = vrot.slane %v4745, 3
      %v4748 = vor.u32 %v4744, %v4747
      %v4749 = vsel %vm4714, %v4739, %v4748
      %v4751 = vshrl.u32 %v4358, 16
      %v4753 = vrot.slane %v4751, 2
      %v4754 = vshll.u32 %v4358, 16
      %v4756 = vrot.slane %v4754, 3
      %v4757 = vor.u32 %v4753, %v4756
      %v4758 = vsel %vm4714, %v4748, %v4757
      %v4760 = vshrl.u32 %v4359, 16
      %v4762 = vrot.slane %v4760, 2
      %v4763 = vshll.u32 %v4359, 16
      %v4765 = vrot.slane %v4763, 3
      %v4766 = vor.u32 %v4762, %v4765
      %v4767 = vsel %vm4714, %v4757, %v4766
      %v4769 = vshrl.u32 %v4360, 16
      %v4771 = vrot.slane %v4769, 2
      %v4772 = vshll.u32 %v4360, 16
      %v4774 = vrot.slane %v4772, 3
      %v4775 = vor.u32 %v4771, %v4774
      %v4776 = vsel %vm4714, %v4766, %v4775
      %v4778 = vshrl.u32 %v4361, 16
      %v4780 = vrot.slane %v4778, 2
      %v4781 = vshll.u32 %v4361, 16
      %v4783 = vrot.slane %v4781, 3
      %v4784 = vor.u32 %v4780, %v4783
      %v4785 = vsel %vm4714, %v4775, %v4784
      %v4787 = vshrl.u32 %v4362, 16
      %v4789 = vrot.slane %v4787, 2
      %v4790 = vshll.u32 %v4362, 16
      %v4792 = vrot.slane %v4790, 3
      %v4793 = vor.u32 %v4789, %v4792
      %v4794 = vsel %vm4714, %v4784, %v4793
      %v4796 = vshrl.u32 %v4363, 16
      %v4798 = vrot.slane %v4796, 2
      %v4799 = vshll.u32 %v4363, 16
      %v4801 = vrot.slane %v4799, 3
      %v4802 = vor.u32 %v4798, %v4801
      %v4803 = vsel %vm4714, %v4793, %v4802
      %v4805 = vshrl.u32 %v4364, 16
      %v4807 = vrot.slane %v4805, 2
      %v4808 = vshll.u32 %v4364, 16
      %v4810 = vrot.slane %v4808, 3
      %v4811 = vor.u32 %v4807, %v4810
      %v4812 = vsel %vm4714, %v4802, %v4811
      %v4814 = vshrl.u32 %v4365, 16
      %v4816 = vrot.slane %v4814, 2
      %v4817 = vshll.u32 %v4365, 16
      %v4819 = vrot.slane %v4817, 3
      %v4820 = vor.u32 %v4816, %v4819
      %v4821 = vsel %vm4714, %v4811, %v4820
      %v4823 = vshrl.u32 %v4366, 16
      %v4825 = vrot.slane %v4823, 2
      %v4826 = vshll.u32 %v4366, 16
      %v4828 = vrot.slane %v4826, 3
      %v4829 = vor.u32 %v4825, %v4828
      %v4830 = vsel %vm4714, %v4820, %v4829
      %v4832 = vshrl.u32 %v4367, 16
      %v4834 = vrot.slane %v4832, 2
      %v4835 = vshll.u32 %v4367, 16
      %v4837 = vrot.slane %v4835, 3
      %v4838 = vor.u32 %v4834, %v4837
      %v4839 = vsel %vm4714, %v4829, %v4838
      %v4841 = vshrl.u32 %v4368, 16
      %v4843 = vrot.slane %v4841, 2
      %v4844 = vshll.u32 %v4368, 16
      %v4846 = vrot.slane %v4844, 3
      %v4847 = vor.u32 %v4843, %v4846
      %v4848 = vsel %vm4714, %v4838, %v4847
      %v4850 = vshrl.u32 %v4369, 16
      %v4852 = vrot.slane %v4850, 2
      %v4853 = vshll.u32 %v4369, 16
      %v4855 = vrot.slane %v4853, 3
      %v4856 = vor.u32 %v4852, %v4855
      %v4857 = vsel %vm4714, %v4847, %v4856
      %v4859 = vshrl.u32 %v4370, 16
      %v4861 = vrot.slane %v4859, 2
      %v4862 = vshll.u32 %v4370, 16
      %v4864 = vrot.slane %v4862, 3
      %v4865 = vor.u32 %v4861, %v4864
      %v4866 = vsel %vm4714, %v4856, %v4865
      %v4868 = vshrl.u32 %v4371, 16
      %v4870 = vrot.slane %v4868, 2
      %v4871 = vshll.u32 %v4371, 16
      %v4873 = vrot.slane %v4871, 3
      %v4874 = vor.u32 %v4870, %v4873
      %v4875 = vsel %vm4714, %v4865, %v4874
      %v4877 = vshrl.u32 %v4713, 16
      %v4879 = vrot.slane %v4877, 2
      %v4880 = vshll.u32 %v4713, 16
      %v4882 = vrot.slane %v4880, 3
      %v4883 = vor.u32 %v4879, %v4882
      %v4884 = vsel %vm4714, %v4874, %v4883
      %v4893 = vunpack.c.l.b16 %v4703
      %v4894 = vunpack.c.l.b16 %v4704
      %v4895 = vunpack.c.l.b16 %v4705
      %v4896 = vunpack.c.l.b16 %v4706
      %v4897 = vunpack.c.l.b16 %v4707
      %v4898 = vunpack.c.l.b16 %v4708
      %v4899 = vunpack.c.l.b16 %v4709
      %v4900 = vunpack.c.l.b16 %v4710
      %v4901 = vpack.c.b16 %v4894, %v4893
      %v4902 = vpack.c.b16 %v4896, %v4895
      %v4903 = vpack.c.b16 %v4898, %v4897
      %v4904 = vpack.c.b16 %v4900, %v4899
      %v4910 = vsel %vm2139, %v4731, 0
      %v4913 = vsel %vm2139, %v4740, 0
      %v4916 = vsel %vm2139, %v4749, 0
      %v4919 = vsel %vm2139, %v4758, 0
      %v4922 = vsel %vm2139, %v4767, 0
      %v4925 = vsel %vm2139, %v4776, 0
      %v4928 = vsel %vm2139, %v4785, 0
      %v4931 = vsel %vm2139, %v4794, 0
      %v4934 = vsel %vm2139, %v4803, 0
      %v4937 = vsel %vm2139, %v4812, 0
      %v4940 = vsel %vm2139, %v4821, 0
      %v4943 = vsel %vm2139, %v4830, 0
      %v4946 = vsel %vm2139, %v4839, 0
      %v4949 = vsel %vm2139, %v4848, 0
      %v4952 = vsel %vm2139, %v4857, 0
      %v4955 = vsel %vm2139, %v4866, 0
      %v4958 = vsel %vm2139, %v4875, 0
      %v4961 = vsel %vm2139, %v4884, 0
      %4963 = vmatprep.subr.bf16.mxu0 0
      %4964 = vmatpush1.bf16.msra.mxu0 0
      %4965 = vmatprep.subr.bf16.mxu0 0
      %4966 = vmatpush1.bf16.msra.mxu0 0
      %4967 = vmatprep.subr.bf16.mxu0 0
      %4968 = vmatpush1.bf16.msra.mxu0 0
      %4969 = vmatprep.subr.bf16.mxu0 0
      %4970 = vmatpush1.bf16.msra.mxu0 0
      %4971 = vmatprep.subr.bf16.mxu0 0
      %4972 = vmatpush1.bf16.msra.mxu0 %v4904
      %4973 = vmatprep.subr.bf16.mxu0 0
      %4974 = vmatpush1.bf16.msra.mxu0 %v4903
      %4975 = vmatprep.subr.bf16.mxu0 0
      %4976 = vmatpush1.bf16.msra.mxu0 %v4902
      %4977 = vmatprep.subr.bf16.mxu0 0
      %4978 = vmatpush1.bf16.msra.mxu0 %v4901
      %4979 = vmatprep.subr.bf16.mxu0 0
      %4980 = vmatpush2.bf16.msra.mxu0 0
      %4981 = vmatprep.subr.bf16.mxu0 0
      %4982 = vmatpush2.bf16.msra.mxu0 0
      %4983 = vmatprep.subr.bf16.mxu0 0
      %4984 = vmatpush2.bf16.msra.mxu0 0
      %4985 = vmatprep.subr.bf16.mxu0 0
      %4986 = vmatpush2.bf16.msra.mxu0 0
      %4987 = vmatprep.subr.bf16.mxu0 0
      %4988 = vmatpush2.bf16.msra.mxu0 0
      %4989 = vmatprep.subr.bf16.mxu0 0
      %4990 = vmatpush2.bf16.msra.mxu0 0
      %4991 = vmatprep.subr.bf16.mxu0 0
      %4992 = vmatpush2.bf16.msra.mxu0 0
      %4993 = vmatprep.subr.bf16.mxu0 0
      %4994 = vmatpush2.bf16.msra.mxu0 0
      %4995 = vmatprep.mubr.bf16.mxu0 0
      %4996 = vmatmul.mubr.bf16.gmra.mxu0 %v4910
      %v4997 = vpop.f32.mrf.mxu0
      %v4998 = vadd.f32 0.0, %v4997
      %v4999 = vpop.f32.mrf.mxu0
      %v5000 = vpop.f32.mrf.mxu0
      %v5001 = vadd.f32 0.0, %v5000
      %v5002 = vpop.f32.mrf.mxu0
      %5003 = vmatprep.mubr.bf16.mxu0 0
      %5004 = vmatmul.mubr.bf16.gmra.mxu0 %v4913
      %v5005 = vpop.f32.mrf.mxu0
      %v5006 = vadd.f32 0.0, %v5005
      %v5007 = vpop.f32.mrf.mxu0
      %v5008 = vpop.f32.mrf.mxu0
      %v5009 = vadd.f32 0.0, %v5008
      %v5010 = vpop.f32.mrf.mxu0
      %5011 = vmatprep.mubr.bf16.mxu0 0
      %5012 = vmatmul.mubr.bf16.gmra.mxu0 %v4916
      %v5013 = vpop.f32.mrf.mxu0
      %v5014 = vadd.f32 0.0, %v5013
      %v5015 = vpop.f32.mrf.mxu0
      %v5016 = vpop.f32.mrf.mxu0
      %v5017 = vadd.f32 0.0, %v5016
      %v5018 = vpop.f32.mrf.mxu0
      %5019 = vmatprep.mubr.bf16.mxu0 0
      %5020 = vmatmul.mubr.bf16.gmra.mxu0 %v4919
      %v5021 = vpop.f32.mrf.mxu0
      %v5022 = vadd.f32 0.0, %v5021
      %v5023 = vpop.f32.mrf.mxu0
      %v5024 = vpop.f32.mrf.mxu0
      %v5025 = vadd.f32 0.0, %v5024
      %v5026 = vpop.f32.mrf.mxu0
      %5027 = vmatprep.mubr.bf16.mxu0 0
      %5028 = vmatmul.mubr.bf16.gmra.mxu0 %v4922
      %v5029 = vpop.f32.mrf.mxu0
      %v5030 = vadd.f32 0.0, %v5029
      %v5031 = vpop.f32.mrf.mxu0
      %v5032 = vpop.f32.mrf.mxu0
      %v5033 = vadd.f32 0.0, %v5032
      %v5034 = vpop.f32.mrf.mxu0
      %5035 = vmatprep.mubr.bf16.mxu0 0
      %5036 = vmatmul.mubr.bf16.gmra.mxu0 %v4925
      %v5037 = vpop.f32.mrf.mxu0
      %v5038 = vadd.f32 0.0, %v5037
      %v5039 = vpop.f32.mrf.mxu0
      %v5040 = vpop.f32.mrf.mxu0
      %v5041 = vadd.f32 0.0, %v5040
      %v5042 = vpop.f32.mrf.mxu0
      %5043 = vmatprep.mubr.bf16.mxu0 0
      %5044 = vmatmul.mubr.bf16.gmra.mxu0 %v4928
      %v5045 = vpop.f32.mrf.mxu0
      %v5046 = vadd.f32 0.0, %v5045
      %v5047 = vpop.f32.mrf.mxu0
      %v5048 = vpop.f32.mrf.mxu0
      %v5049 = vadd.f32 0.0, %v5048
      %v5050 = vpop.f32.mrf.mxu0
      %5051 = vmatprep.mubr.bf16.mxu0 0
      %5052 = vmatmul.mubr.bf16.gmra.mxu0 %v4931
      %v5053 = vpop.f32.mrf.mxu0
      %v5054 = vadd.f32 0.0, %v5053
      %v5055 = vpop.f32.mrf.mxu0
      %v5056 = vpop.f32.mrf.mxu0
      %v5057 = vadd.f32 0.0, %v5056
      %v5058 = vpop.f32.mrf.mxu0
      %5059 = vmatprep.mubr.bf16.mxu0 0
      %5060 = vmatmul.mubr.bf16.gmra.mxu0 %v4934
      %v5061 = vpop.f32.mrf.mxu0
      %v5062 = vadd.f32 0.0, %v5061
      %v5063 = vpop.f32.mrf.mxu0
      %v5064 = vpop.f32.mrf.mxu0
      %v5065 = vadd.f32 0.0, %v5064
      %v5066 = vpop.f32.mrf.mxu0
      %5067 = vmatprep.mubr.bf16.mxu0 0
      %5068 = vmatmul.mubr.bf16.gmra.mxu0 %v4937
      %v5069 = vpop.f32.mrf.mxu0
      %v5070 = vadd.f32 0.0, %v5069
      %v5071 = vpop.f32.mrf.mxu0
      %v5072 = vpop.f32.mrf.mxu0
      %v5073 = vadd.f32 0.0, %v5072
      %v5074 = vpop.f32.mrf.mxu0
      %5075 = vmatprep.mubr.bf16.mxu0 0
      %5076 = vmatmul.mubr.bf16.gmra.mxu0 %v4940
      %v5077 = vpop.f32.mrf.mxu0
      %v5078 = vadd.f32 0.0, %v5077
      %v5079 = vpop.f32.mrf.mxu0
      %v5080 = vpop.f32.mrf.mxu0
      %v5081 = vadd.f32 0.0, %v5080
      %v5082 = vpop.f32.mrf.mxu0
      %5083 = vmatprep.mubr.bf16.mxu0 0
      %5084 = vmatmul.mubr.bf16.gmra.mxu0 %v4943
      %v5085 = vpop.f32.mrf.mxu0
      %v5086 = vadd.f32 0.0, %v5085
      %v5087 = vpop.f32.mrf.mxu0
      %v5088 = vpop.f32.mrf.mxu0
      %v5089 = vadd.f32 0.0, %v5088
      %v5090 = vpop.f32.mrf.mxu0
      %5091 = vmatprep.mubr.bf16.mxu0 0
      %5092 = vmatmul.mubr.bf16.gmra.mxu0 %v4946
      %v5093 = vpop.f32.mrf.mxu0
      %v5094 = vadd.f32 0.0, %v5093
      %v5095 = vpop.f32.mrf.mxu0
      %v5096 = vpop.f32.mrf.mxu0
      %v5097 = vadd.f32 0.0, %v5096
      %v5098 = vpop.f32.mrf.mxu0
      %5099 = vmatprep.mubr.bf16.mxu0 0
      %5100 = vmatmul.mubr.bf16.gmra.mxu0 %v4949
      %v5101 = vpop.f32.mrf.mxu0
      %v5102 = vadd.f32 0.0, %v5101
      %v5103 = vpop.f32.mrf.mxu0
      %v5104 = vpop.f32.mrf.mxu0
      %v5105 = vadd.f32 0.0, %v5104
      %v5106 = vpop.f32.mrf.mxu0
      %5107 = vmatprep.mubr.bf16.mxu0 0
      %5108 = vmatmul.mubr.bf16.gmra.mxu0 %v4952
      %v5109 = vpop.f32.mrf.mxu0
      %v5110 = vadd.f32 0.0, %v5109
      %v5111 = vpop.f32.mrf.mxu0
      %v5112 = vpop.f32.mrf.mxu0
      %v5113 = vadd.f32 0.0, %v5112
      %v5114 = vpop.f32.mrf.mxu0
      %5115 = vmatprep.mubr.bf16.mxu0 0
      %5116 = vmatmul.mubr.bf16.gmra.mxu0 %v4955
      %v5117 = vpop.f32.mrf.mxu0
      %v5118 = vadd.f32 0.0, %v5117
      %v5119 = vpop.f32.mrf.mxu0
      %v5120 = vpop.f32.mrf.mxu0
      %v5121 = vadd.f32 0.0, %v5120
      %v5122 = vpop.f32.mrf.mxu0
      %5123 = vmatprep.mubr.bf16.mxu0 0
      %5124 = vmatmul.mubr.bf16.gmra.mxu0 %v4958
      %v5125 = vpop.f32.mrf.mxu0
      %v5126 = vadd.f32 0.0, %v5125
      %v5127 = vpop.f32.mrf.mxu0
      %v5128 = vpop.f32.mrf.mxu0
      %v5129 = vadd.f32 0.0, %v5128
      %v5130 = vpop.f32.mrf.mxu0
      %5131 = vmatprep.mubr.bf16.mxu0 0
      %5132 = vmatmul.mubr.bf16.gmra.mxu0 %v4961
      %v5133 = vpop.f32.mrf.mxu0
      %v5134 = vadd.f32 0.0, %v5133
      %v5135 = vpop.f32.mrf.mxu0
      %v5136 = vpop.f32.mrf.mxu0
      %v5137 = vadd.f32 0.0, %v5136
      %v5138 = vpop.f32.mrf.mxu0
      %5139 = vdwg.mxu0
      %v5140 = vadd.f32 %v4665, %v4998
      %v5141 = vadd.f32 %v4666, %v5001
      %v5142 = vadd.f32 %v4667, %v5006
      %v5143 = vadd.f32 %v4668, %v5009
      %v5144 = vadd.f32 %v4669, %v5014
      %v5145 = vadd.f32 %v4670, %v5017
      %v5146 = vadd.f32 %v4671, %v5022
      %v5147 = vadd.f32 %v4672, %v5025
      %v5148 = vadd.f32 %v4673, %v5030
      %v5149 = vadd.f32 %v4674, %v5033
      %v5150 = vadd.f32 %v4675, %v5038
      %v5151 = vadd.f32 %v4676, %v5041
      %v5152 = vadd.f32 %v4677, %v5046
      %v5153 = vadd.f32 %v4678, %v5049
      %v5154 = vadd.f32 %v4679, %v5054
      %v5155 = vadd.f32 %v4680, %v5057
      %v5156 = vadd.f32 %v4681, %v5062
      %v5157 = vadd.f32 %v4682, %v5065
      %v5158 = vadd.f32 %v4683, %v5070
      %v5159 = vadd.f32 %v4684, %v5073
      %v5160 = vadd.f32 %v4685, %v5078
      %v5161 = vadd.f32 %v4686, %v5081
      %v5162 = vadd.f32 %v4687, %v5086
      %v5163 = vadd.f32 %v4688, %v5089
      %v5164 = vadd.f32 %v4689, %v5094
      %v5165 = vadd.f32 %v4690, %v5097
      %v5166 = vadd.f32 %v4691, %v5102
      %v5167 = vadd.f32 %v4692, %v5105
      %v5168 = vadd.f32 %v4693, %v5110
      %v5169 = vadd.f32 %v4694, %v5113
      %v5170 = vadd.f32 %v4695, %v5118
      %v5171 = vadd.f32 %v4696, %v5121
      %v5172 = vadd.f32 %v4697, %v5126
      %v5173 = vadd.f32 %v4698, %v5129
      %v5174 = vadd.f32 %v4699, %v5134
      %v5175 = vadd.f32 %v4700, %v5137
      %v5176 = vld [vmem:[#allocation2 + $0x10] sm:$0x8]
      %s5177 = scalar_lea.vmem %s3, 256
      %v5178 = vld [vmem:[%s5177] sm:$0xf]
      %v5179 = vld [vmem:[%s5177 + $0x4] sm:$0xf]
      %v5180 = vld [vmem:[%s5177 + $0x8] sm:$0xf]
      %v5181 = vld [vmem:[%s5177 + $0xc] sm:$0xf]
      %v5182 = vld [vmem:[%s5177 + $0x10] sm:$0xf]
      %v5183 = vld [vmem:[%s5177 + $0x14] sm:$0xf]
      %v5184 = vld [vmem:[%s5177 + $0x18] sm:$0xf]
      %v5185 = vld [vmem:[%s5177 + $0x1c] sm:$0xf]
      %v5187 = vunpack.c.l.b16 %v5176
      %v5188 = vpack.c.b16 %v4318, %v5187
      %vm5189 = vcmask 1044480
      %v5190 = vrot.slane %v5188, 3
      %v5191 = vrot.slane %v4355, 3
      %v5192 = vsel %vm5189, %v5190, %v5191
      %v5193 = vrot.slane %v4356, 3
      %v5194 = vsel %vm5189, %v5191, %v5193
      %v5195 = vrot.slane %v4357, 3
      %v5196 = vsel %vm5189, %v5193, %v5195
      %v5197 = vrot.slane %v4358, 3
      %v5198 = vsel %vm5189, %v5195, %v5197
      %v5199 = vrot.slane %v4359, 3
      %v5200 = vsel %vm5189, %v5197, %v5199
      %v5201 = vrot.slane %v4360, 3
      %v5202 = vsel %vm5189, %v5199, %v5201
      %v5203 = vrot.slane %v4361, 3
      %v5204 = vsel %vm5189, %v5201, %v5203
      %v5205 = vrot.slane %v4362, 3
      %v5206 = vsel %vm5189, %v5203, %v5205
      %v5207 = vrot.slane %v4363, 3
      %v5208 = vsel %vm5189, %v5205, %v5207
      %v5209 = vrot.slane %v4364, 3
      %v5210 = vsel %vm5189, %v5207, %v5209
      %v5211 = vrot.slane %v4365, 3
      %v5212 = vsel %vm5189, %v5209, %v5211
      %v5213 = vrot.slane %v4366, 3
      %v5214 = vsel %vm5189, %v5211, %v5213
      %v5215 = vrot.slane %v4367, 3
      %v5216 = vsel %vm5189, %v5213, %v5215
      %v5217 = vrot.slane %v4368, 3
      %v5218 = vsel %vm5189, %v5215, %v5217
      %v5219 = vrot.slane %v4369, 3
      %v5220 = vsel %vm5189, %v5217, %v5219
      %v5221 = vrot.slane %v4370, 3
      %v5222 = vsel %vm5189, %v5219, %v5221
      %v5223 = vrot.slane %v4371, 3
      %v5224 = vsel %vm5189, %v5221, %v5223
      %v5225 = vrot.slane %v4713, 3
      %v5226 = vsel %vm5189, %v5223, %v5225
      %v5235 = vunpack.c.l.b16 %v5178
      %v5236 = vunpack.c.l.b16 %v5179
      %v5237 = vunpack.c.l.b16 %v5180
      %v5238 = vunpack.c.l.b16 %v5181
      %v5239 = vunpack.c.l.b16 %v5182
      %v5240 = vunpack.c.l.b16 %v5183
      %v5241 = vunpack.c.l.b16 %v5184
      %v5242 = vunpack.c.l.b16 %v5185
      %v5243 = vpack.c.b16 %v5236, %v5235
      %v5244 = vpack.c.b16 %v5238, %v5237
      %v5245 = vpack.c.b16 %v5240, %v5239
      %v5246 = vpack.c.b16 %v5242, %v5241
      %v5252 = vsel %vm2139, %v5192, 0
      %v5255 = vsel %vm2139, %v5194, 0
      %v5258 = vsel %vm2139, %v5196, 0
      %v5261 = vsel %vm2139, %v5198, 0
      %v5264 = vsel %vm2139, %v5200, 0
      %v5267 = vsel %vm2139, %v5202, 0
      %v5270 = vsel %vm2139, %v5204, 0
      %v5273 = vsel %vm2139, %v5206, 0
      %v5276 = vsel %vm2139, %v5208, 0
      %v5279 = vsel %vm2139, %v5210, 0
      %v5282 = vsel %vm2139, %v5212, 0
      %v5285 = vsel %vm2139, %v5214, 0
      %v5288 = vsel %vm2139, %v5216, 0
      %v5291 = vsel %vm2139, %v5218, 0
      %v5294 = vsel %vm2139, %v5220, 0
      %v5297 = vsel %vm2139, %v5222, 0
      %v5300 = vsel %vm2139, %v5224, 0
      %v5303 = vsel %vm2139, %v5226, 0
      %5305 = vmatprep.subr.bf16.mxu0 0
      %5306 = vmatpush1.bf16.msra.mxu0 0
      %5307 = vmatprep.subr.bf16.mxu0 0
      %5308 = vmatpush1.bf16.msra.mxu0 0
      %5309 = vmatprep.subr.bf16.mxu0 0
      %5310 = vmatpush1.bf16.msra.mxu0 0
      %5311 = vmatprep.subr.bf16.mxu0 0
      %5312 = vmatpush1.bf16.msra.mxu0 0
      %5313 = vmatprep.subr.bf16.mxu0 0
      %5314 = vmatpush1.bf16.msra.mxu0 %v5246
      %5315 = vmatprep.subr.bf16.mxu0 0
      %5316 = vmatpush1.bf16.msra.mxu0 %v5245
      %5317 = vmatprep.subr.bf16.mxu0 0
      %5318 = vmatpush1.bf16.msra.mxu0 %v5244
      %5319 = vmatprep.subr.bf16.mxu0 0
      %5320 = vmatpush1.bf16.msra.mxu0 %v5243
      %5321 = vmatprep.subr.bf16.mxu0 0
      %5322 = vmatpush2.bf16.msra.mxu0 0
      %5323 = vmatprep.subr.bf16.mxu0 0
      %5324 = vmatpush2.bf16.msra.mxu0 0
      %5325 = vmatprep.subr.bf16.mxu0 0
      %5326 = vmatpush2.bf16.msra.mxu0 0
      %5327 = vmatprep.subr.bf16.mxu0 0
      %5328 = vmatpush2.bf16.msra.mxu0 0
      %5329 = vmatprep.subr.bf16.mxu0 0
      %5330 = vmatpush2.bf16.msra.mxu0 0
      %5331 = vmatprep.subr.bf16.mxu0 0
      %5332 = vmatpush2.bf16.msra.mxu0 0
      %5333 = vmatprep.subr.bf16.mxu0 0
      %5334 = vmatpush2.bf16.msra.mxu0 0
      %5335 = vmatprep.subr.bf16.mxu0 0
      %5336 = vmatpush2.bf16.msra.mxu0 0
      %5337 = vmatprep.mubr.bf16.mxu0 0
      %5338 = vmatmul.mubr.bf16.gmra.mxu0 %v5252
      %v5339 = vpop.f32.mrf.mxu0
      %v5340 = vadd.f32 0.0, %v5339
      %v5341 = vpop.f32.mrf.mxu0
      %v5342 = vpop.f32.mrf.mxu0
      %v5343 = vadd.f32 0.0, %v5342
      %v5344 = vpop.f32.mrf.mxu0
      %5345 = vmatprep.mubr.bf16.mxu0 0
      %5346 = vmatmul.mubr.bf16.gmra.mxu0 %v5255
      %v5347 = vpop.f32.mrf.mxu0
      %v5348 = vadd.f32 0.0, %v5347
      %v5349 = vpop.f32.mrf.mxu0
      %v5350 = vpop.f32.mrf.mxu0
      %v5351 = vadd.f32 0.0, %v5350
      %v5352 = vpop.f32.mrf.mxu0
      %5353 = vmatprep.mubr.bf16.mxu0 0
      %5354 = vmatmul.mubr.bf16.gmra.mxu0 %v5258
      %v5355 = vpop.f32.mrf.mxu0
      %v5356 = vadd.f32 0.0, %v5355
      %v5357 = vpop.f32.mrf.mxu0
      %v5358 = vpop.f32.mrf.mxu0
      %v5359 = vadd.f32 0.0, %v5358
      %v5360 = vpop.f32.mrf.mxu0
      %5361 = vmatprep.mubr.bf16.mxu0 0
      %5362 = vmatmul.mubr.bf16.gmra.mxu0 %v5261
      %v5363 = vpop.f32.mrf.mxu0
      %v5364 = vadd.f32 0.0, %v5363
      %v5365 = vpop.f32.mrf.mxu0
      %v5366 = vpop.f32.mrf.mxu0
      %v5367 = vadd.f32 0.0, %v5366
      %v5368 = vpop.f32.mrf.mxu0
      %5369 = vmatprep.mubr.bf16.mxu0 0
      %5370 = vmatmul.mubr.bf16.gmra.mxu0 %v5264
      %v5371 = vpop.f32.mrf.mxu0
      %v5372 = vadd.f32 0.0, %v5371
      %v5373 = vpop.f32.mrf.mxu0
      %v5374 = vpop.f32.mrf.mxu0
      %v5375 = vadd.f32 0.0, %v5374
      %v5376 = vpop.f32.mrf.mxu0
      %5377 = vmatprep.mubr.bf16.mxu0 0
      %5378 = vmatmul.mubr.bf16.gmra.mxu0 %v5267
      %v5379 = vpop.f32.mrf.mxu0
      %v5380 = vadd.f32 0.0, %v5379
      %v5381 = vpop.f32.mrf.mxu0
      %v5382 = vpop.f32.mrf.mxu0
      %v5383 = vadd.f32 0.0, %v5382
      %v5384 = vpop.f32.mrf.mxu0
      %5385 = vmatprep.mubr.bf16.mxu0 0
      %5386 = vmatmul.mubr.bf16.gmra.mxu0 %v5270
      %v5387 = vpop.f32.mrf.mxu0
      %v5388 = vadd.f32 0.0, %v5387
      %v5389 = vpop.f32.mrf.mxu0
      %v5390 = vpop.f32.mrf.mxu0
      %v5391 = vadd.f32 0.0, %v5390
      %v5392 = vpop.f32.mrf.mxu0
      %5393 = vmatprep.mubr.bf16.mxu0 0
      %5394 = vmatmul.mubr.bf16.gmra.mxu0 %v5273
      %v5395 = vpop.f32.mrf.mxu0
      %v5396 = vadd.f32 0.0, %v5395
      %v5397 = vpop.f32.mrf.mxu0
      %v5398 = vpop.f32.mrf.mxu0
      %v5399 = vadd.f32 0.0, %v5398
      %v5400 = vpop.f32.mrf.mxu0
      %5401 = vmatprep.mubr.bf16.mxu0 0
      %5402 = vmatmul.mubr.bf16.gmra.mxu0 %v5276
      %v5403 = vpop.f32.mrf.mxu0
      %v5404 = vadd.f32 0.0, %v5403
      %v5405 = vpop.f32.mrf.mxu0
      %v5406 = vpop.f32.mrf.mxu0
      %v5407 = vadd.f32 0.0, %v5406
      %v5408 = vpop.f32.mrf.mxu0
      %5409 = vmatprep.mubr.bf16.mxu0 0
      %5410 = vmatmul.mubr.bf16.gmra.mxu0 %v5279
      %v5411 = vpop.f32.mrf.mxu0
      %v5412 = vadd.f32 0.0, %v5411
      %v5413 = vpop.f32.mrf.mxu0
      %v5414 = vpop.f32.mrf.mxu0
      %v5415 = vadd.f32 0.0, %v5414
      %v5416 = vpop.f32.mrf.mxu0
      %5417 = vmatprep.mubr.bf16.mxu0 0
      %5418 = vmatmul.mubr.bf16.gmra.mxu0 %v5282
      %v5419 = vpop.f32.mrf.mxu0
      %v5420 = vadd.f32 0.0, %v5419
      %v5421 = vpop.f32.mrf.mxu0
      %v5422 = vpop.f32.mrf.mxu0
      %v5423 = vadd.f32 0.0, %v5422
      %v5424 = vpop.f32.mrf.mxu0
      %5425 = vmatprep.mubr.bf16.mxu0 0
      %5426 = vmatmul.mubr.bf16.gmra.mxu0 %v5285
      %v5427 = vpop.f32.mrf.mxu0
      %v5428 = vadd.f32 0.0, %v5427
      %v5429 = vpop.f32.mrf.mxu0
      %v5430 = vpop.f32.mrf.mxu0
      %v5431 = vadd.f32 0.0, %v5430
      %v5432 = vpop.f32.mrf.mxu0
      %5433 = vmatprep.mubr.bf16.mxu0 0
      %5434 = vmatmul.mubr.bf16.gmra.mxu0 %v5288
      %v5435 = vpop.f32.mrf.mxu0
      %v5436 = vadd.f32 0.0, %v5435
      %v5437 = vpop.f32.mrf.mxu0
      %v5438 = vpop.f32.mrf.mxu0
      %v5439 = vadd.f32 0.0, %v5438
      %v5440 = vpop.f32.mrf.mxu0
      %5441 = vmatprep.mubr.bf16.mxu0 0
      %5442 = vmatmul.mubr.bf16.gmra.mxu0 %v5291
      %v5443 = vpop.f32.mrf.mxu0
      %v5444 = vadd.f32 0.0, %v5443
      %v5445 = vpop.f32.mrf.mxu0
      %v5446 = vpop.f32.mrf.mxu0
      %v5447 = vadd.f32 0.0, %v5446
      %v5448 = vpop.f32.mrf.mxu0
      %5449 = vmatprep.mubr.bf16.mxu0 0
      %5450 = vmatmul.mubr.bf16.gmra.mxu0 %v5294
      %v5451 = vpop.f32.mrf.mxu0
      %v5452 = vadd.f32 0.0, %v5451
      %v5453 = vpop.f32.mrf.mxu0
      %v5454 = vpop.f32.mrf.mxu0
      %v5455 = vadd.f32 0.0, %v5454
      %v5456 = vpop.f32.mrf.mxu0
      %5457 = vmatprep.mubr.bf16.mxu0 0
      %5458 = vmatmul.mubr.bf16.gmra.mxu0 %v5297
      %v5459 = vpop.f32.mrf.mxu0
      %v5460 = vadd.f32 0.0, %v5459
      %v5461 = vpop.f32.mrf.mxu0
      %v5462 = vpop.f32.mrf.mxu0
      %v5463 = vadd.f32 0.0, %v5462
      %v5464 = vpop.f32.mrf.mxu0
      %5465 = vmatprep.mubr.bf16.mxu0 0
      %5466 = vmatmul.mubr.bf16.gmra.mxu0 %v5300
      %v5467 = vpop.f32.mrf.mxu0
      %v5468 = vadd.f32 0.0, %v5467
      %v5469 = vpop.f32.mrf.mxu0
      %v5470 = vpop.f32.mrf.mxu0
      %v5471 = vadd.f32 0.0, %v5470
      %v5472 = vpop.f32.mrf.mxu0
      %5473 = vmatprep.mubr.bf16.mxu0 0
      %5474 = vmatmul.mubr.bf16.gmra.mxu0 %v5303
      %v5475 = vpop.f32.mrf.mxu0
      %v5476 = vadd.f32 0.0, %v5475
      %v5477 = vpop.f32.mrf.mxu0
      %v5478 = vpop.f32.mrf.mxu0
      %v5479 = vadd.f32 0.0, %v5478
      %v5480 = vpop.f32.mrf.mxu0
      %5481 = vdwg.mxu0
      %v5482 = vadd.f32 %v5140, %v5340
      %v5483 = vadd.f32 %v5141, %v5343
      %v5484 = vadd.f32 %v5142, %v5348
      %v5485 = vadd.f32 %v5143, %v5351
      %v5486 = vadd.f32 %v5144, %v5356
      %v5487 = vadd.f32 %v5145, %v5359
      %v5488 = vadd.f32 %v5146, %v5364
      %v5489 = vadd.f32 %v5147, %v5367
      %v5490 = vadd.f32 %v5148, %v5372
      %v5491 = vadd.f32 %v5149, %v5375
      %v5492 = vadd.f32 %v5150, %v5380
      %v5493 = vadd.f32 %v5151, %v5383
      %v5494 = vadd.f32 %v5152, %v5388
      %v5495 = vadd.f32 %v5153, %v5391
      %v5496 = vadd.f32 %v5154, %v5396
      %v5497 = vadd.f32 %v5155, %v5399
      %v5498 = vadd.f32 %v5156, %v5404
      %v5499 = vadd.f32 %v5157, %v5407
      %v5500 = vadd.f32 %v5158, %v5412
      %v5501 = vadd.f32 %v5159, %v5415
      %v5502 = vadd.f32 %v5160, %v5420
      %v5503 = vadd.f32 %v5161, %v5423
      %v5504 = vadd.f32 %v5162, %v5428
      %v5505 = vadd.f32 %v5163, %v5431
      %v5506 = vadd.f32 %v5164, %v5436
      %v5507 = vadd.f32 %v5165, %v5439
      %v5508 = vadd.f32 %v5166, %v5444
      %v5509 = vadd.f32 %v5167, %v5447
      %v5510 = vadd.f32 %v5168, %v5452
      %v5511 = vadd.f32 %v5169, %v5455
      %v5512 = vadd.f32 %v5170, %v5460
      %v5513 = vadd.f32 %v5171, %v5463
      %v5514 = vadd.f32 %v5172, %v5468
      %v5515 = vadd.f32 %v5173, %v5471
      %v5516 = vadd.f32 %v5174, %v5476
      %v5517 = vadd.f32 %v5175, %v5479
      %v5518 = vpack.c.bf16 %v5483, %v5482
      %v5519 = vpack.c.bf16 %v5485, %v5484
      %v5520 = vpack.c.bf16 %v5487, %v5486
      %v5521 = vpack.c.bf16 %v5489, %v5488
      %v5522 = vpack.c.bf16 %v5491, %v5490
      %v5523 = vpack.c.bf16 %v5493, %v5492
      %v5524 = vpack.c.bf16 %v5495, %v5494
      %v5525 = vpack.c.bf16 %v5497, %v5496
      %v5526 = vpack.c.bf16 %v5499, %v5498
      %v5527 = vpack.c.bf16 %v5501, %v5500
      %v5528 = vpack.c.bf16 %v5503, %v5502
      %v5529 = vpack.c.bf16 %v5505, %v5504
      %v5530 = vpack.c.bf16 %v5507, %v5506
      %v5531 = vpack.c.bf16 %v5509, %v5508
      %v5532 = vpack.c.bf16 %v5511, %v5510
      %v5533 = vpack.c.bf16 %v5513, %v5512
      %v5534 = vpack.c.bf16 %v5515, %v5514
      %v5535 = vpack.c.bf16 %v5517, %v5516
      %v5554 = vunpack.c.l.b16 %v5518
      %v5555 = vunpack.c.h.b16 %v5518
      %v5556 = vunpack.c.l.b16 %v5519
      %v5557 = vunpack.c.h.b16 %v5519
      %v5558 = vunpack.c.l.b16 %v5520
      %v5559 = vunpack.c.h.b16 %v5520
      %v5560 = vunpack.c.l.b16 %v5521
      %v5561 = vunpack.c.h.b16 %v5521
      %v5562 = vunpack.c.l.b16 %v5522
      %v5563 = vunpack.c.h.b16 %v5522
      %v5564 = vunpack.c.l.b16 %v5523
      %v5565 = vunpack.c.h.b16 %v5523
      %v5566 = vunpack.c.l.b16 %v5524
      %v5567 = vunpack.c.h.b16 %v5524
      %v5568 = vunpack.c.l.b16 %v5525
      %v5569 = vunpack.c.h.b16 %v5525
      %v5570 = vunpack.c.l.b16 %v5526
      %v5571 = vunpack.c.h.b16 %v5526
      %v5572 = vunpack.c.l.b16 %v5527
      %v5573 = vunpack.c.h.b16 %v5527
      %v5574 = vunpack.c.l.b16 %v5528
      %v5575 = vunpack.c.h.b16 %v5528
      %v5576 = vunpack.c.l.b16 %v5529
      %v5577 = vunpack.c.h.b16 %v5529
      %v5578 = vunpack.c.l.b16 %v5530
      %v5579 = vunpack.c.h.b16 %v5530
      %v5580 = vunpack.c.l.b16 %v5531
      %v5581 = vunpack.c.h.b16 %v5531
      %v5582 = vunpack.c.l.b16 %v5532
      %v5583 = vunpack.c.h.b16 %v5532
      %v5584 = vunpack.c.l.b16 %v5533
      %v5585 = vunpack.c.h.b16 %v5533
      %v5586 = vunpack.c.l.b16 %v5534
      %v5587 = vunpack.c.h.b16 %v5534
      %v5588 = vunpack.c.l.b16 %v5535
      %v5589 = vunpack.c.h.b16 %v5535
      %v5590 = vpack.c.b16 %v5554, %v5554
      %v5591 = vpack.c.b16 %v5555, %v5555
      %v5592 = vpack.c.b16 %v5556, %v5556
      %v5593 = vpack.c.b16 %v5557, %v5557
      %v5594 = vpack.c.b16 %v5558, %v5558
      %v5595 = vpack.c.b16 %v5559, %v5559
      %v5596 = vpack.c.b16 %v5560, %v5560
      %v5597 = vpack.c.b16 %v5561, %v5561
      %v5598 = vpack.c.b16 %v5562, %v5562
      %v5599 = vpack.c.b16 %v5563, %v5563
      %v5600 = vpack.c.b16 %v5564, %v5564
      %v5601 = vpack.c.b16 %v5565, %v5565
      %v5602 = vpack.c.b16 %v5566, %v5566
      %v5603 = vpack.c.b16 %v5567, %v5567
      %v5604 = vpack.c.b16 %v5568, %v5568
      %v5605 = vpack.c.b16 %v5569, %v5569
      %v5606 = vpack.c.b16 %v5570, %v5570
      %v5607 = vpack.c.b16 %v5571, %v5571
      %v5608 = vpack.c.b16 %v5572, %v5572
      %v5609 = vpack.c.b16 %v5573, %v5573
      %v5610 = vpack.c.b16 %v5574, %v5574
      %v5611 = vpack.c.b16 %v5575, %v5575
      %v5612 = vpack.c.b16 %v5576, %v5576
      %v5613 = vpack.c.b16 %v5577, %v5577
      %v5614 = vpack.c.b16 %v5578, %v5578
      %v5615 = vpack.c.b16 %v5579, %v5579
      %v5616 = vpack.c.b16 %v5580, %v5580
      %v5617 = vpack.c.b16 %v5581, %v5581
      %v5618 = vpack.c.b16 %v5582, %v5582
      %v5619 = vpack.c.b16 %v5583, %v5583
      %v5620 = vpack.c.b16 %v5584, %v5584
      %v5621 = vpack.c.b16 %v5585, %v5585
      %v5622 = vpack.c.b16 %v5586, %v5586
      %v5623 = vpack.c.b16 %v5587, %v5587
      %v5624 = vpack.c.b16 %v5588, %v5588
      %v5625 = vpack.c.b16 %v5589, %v5589
      %5662 = vst.msk [vmem:[%s262] sm:$0xf] %vm1221, %v5590
      %5663 = vst.msk [vmem:[%s262 + $0x4] sm:$0xf] %vm1221, %v5591
      %5664 = vst.msk [vmem:[%s262 + $0x8] sm:$0xf] %vm1221, %v5592
      %5665 = vst.msk [vmem:[%s262 + $0xc] sm:$0xf] %vm1221, %v5593
      %5666 = vst.msk [vmem:[%s262 + $0x10] sm:$0xf] %vm1221, %v5594
      %5667 = vst.msk [vmem:[%s262 + $0x14] sm:$0xf] %vm1221, %v5595
      %5668 = vst.msk [vmem:[%s262 + $0x18] sm:$0xf] %vm1221, %v5596
      %5669 = vst.msk [vmem:[%s262 + $0x1c] sm:$0xf] %vm1221, %v5597
      %5670 = vst.msk [vmem:[%s262 + $0x20] sm:$0xf] %vm1221, %v5598
      %5671 = vst.msk [vmem:[%s262 + $0x24] sm:$0xf] %vm1221, %v5599
      %5672 = vst.msk [vmem:[%s262 + $0x28] sm:$0xf] %vm1221, %v5600
      %5673 = vst.msk [vmem:[%s262 + $0x2c] sm:$0xf] %vm1221, %v5601
      %5674 = vst.msk [vmem:[%s262 + $0x30] sm:$0xf] %vm1221, %v5602
      %5675 = vst.msk [vmem:[%s262 + $0x34] sm:$0xf] %vm1221, %v5603
      %5676 = vst.msk [vmem:[%s262 + $0x38] sm:$0xf] %vm1221, %v5604
      %5677 = vst.msk [vmem:[%s262 + $0x3c] sm:$0xf] %vm1221, %v5605
      %5678 = vst.msk [vmem:[%s262 + $0x40] sm:$0xf] %vm1221, %v5606
      %5679 = vst.msk [vmem:[%s262 + $0x44] sm:$0xf] %vm1221, %v5607
      %5680 = vst.msk [vmem:[%s262 + $0x48] sm:$0xf] %vm1221, %v5608
      %5681 = vst.msk [vmem:[%s262 + $0x4c] sm:$0xf] %vm1221, %v5609
      %5682 = vst.msk [vmem:[%s262 + $0x50] sm:$0xf] %vm1221, %v5610
      %5683 = vst.msk [vmem:[%s262 + $0x54] sm:$0xf] %vm1221, %v5611
      %5684 = vst.msk [vmem:[%s262 + $0x58] sm:$0xf] %vm1221, %v5612
      %5685 = vst.msk [vmem:[%s262 + $0x5c] sm:$0xf] %vm1221, %v5613
      %5686 = vst.msk [vmem:[%s262 + $0x60] sm:$0xf] %vm1221, %v5614
      %5687 = vst.msk [vmem:[%s262 + $0x64] sm:$0xf] %vm1221, %v5615
      %5688 = vst.msk [vmem:[%s262 + $0x68] sm:$0xf] %vm1221, %v5616
      %5689 = vst.msk [vmem:[%s262 + $0x6c] sm:$0xf] %vm1221, %v5617
      %5690 = vst.msk [vmem:[%s262 + $0x70] sm:$0xf] %vm1221, %v5618
      %5691 = vst.msk [vmem:[%s262 + $0x74] sm:$0xf] %vm1221, %v5619
      %5692 = vst.msk [vmem:[%s262 + $0x78] sm:$0xf] %vm1221, %v5620
      %5693 = vst.msk [vmem:[%s262 + $0x7c] sm:$0xf] %vm1221, %v5621
      %5694 = vst.msk [vmem:[%s262 + $0x80] sm:$0xf] %vm1221, %v5622
      %5695 = vst.msk [vmem:[%s262 + $0x84] sm:$0xf] %vm1221, %v5623
      %5696 = vst.msk [vmem:[%s262 + $0x88] sm:$0xf] %vm1221, %v5624
      %5697 = vst.msk [vmem:[%s262 + $0x8c] sm:$0xf] %vm1221, %v5625
      %v5698 = vcvt.s32.f32 %v1113
      %v5699 = vcvt.s32.f32 %v1114
      %v5700 = vcvt.s32.f32 %v1115
      %v5701 = vcvt.s32.f32 %v1116
      %v5702 = vcvt.s32.f32 %v1117
      %v5703 = vcvt.s32.f32 %v1118
      %v5704 = vcvt.s32.f32 %v1119
      %v5705 = vcvt.s32.f32 %v1120
      %v5706 = vcvt.s32.f32 %v1121
      %v5707 = vcvt.s32.f32 %v1122
      %v5708 = vcvt.s32.f32 %v1123
      %v5709 = vcvt.s32.f32 %v1124
      %v5710 = vcvt.s32.f32 %v1125
      %v5711 = vcvt.s32.f32 %v1126
      %v5712 = vcvt.s32.f32 %v1127
      %v5713 = vcvt.s32.f32 %v1128
      %v5714 = vcvt.s32.f32 %v1129
      %v5715 = vcvt.s32.f32 %v1130
      %v5716 = vcvt.s32.f32 %v1131
      %v5717 = vcvt.s32.f32 %v1132
      %v5718 = vcvt.s32.f32 %v1133
      %v5719 = vcvt.s32.f32 %v1134
      %v5720 = vcvt.s32.f32 %v1135
      %v5721 = vcvt.s32.f32 %v1136
      %v5722 = vcvt.s32.f32 %v1137
      %v5723 = vcvt.s32.f32 %v1138
      %v5724 = vcvt.s32.f32 %v1139
      %v5725 = vcvt.s32.f32 %v1140
      %v5726 = vcvt.s32.f32 %v1141
      %v5727 = vcvt.s32.f32 %v1142
      %v5728 = vcvt.s32.f32 %v1143
      %v5729 = vcvt.s32.f32 %v1144
      %v5730 = vcvt.s32.f32 %v1145
      %v5731 = vcvt.s32.f32 %v1146
      %v5732 = vcvt.s32.f32 %v1147
      %v5733 = vcvt.s32.f32 %v1148
      %v5734 = vmul.f32 %v5482, %v5698
      %v5735 = vmul.f32 %v5483, %v5699
      %v5736 = vmul.f32 %v5484, %v5700
      %v5737 = vmul.f32 %v5485, %v5701
      %v5738 = vmul.f32 %v5486, %v5702
      %v5739 = vmul.f32 %v5487, %v5703
      %v5740 = vmul.f32 %v5488, %v5704
      %v5741 = vmul.f32 %v5489, %v5705
      %v5742 = vmul.f32 %v5490, %v5706
      %v5743 = vmul.f32 %v5491, %v5707
      %v5744 = vmul.f32 %v5492, %v5708
      %v5745 = vmul.f32 %v5493, %v5709
      %v5746 = vmul.f32 %v5494, %v5710
      %v5747 = vmul.f32 %v5495, %v5711
      %v5748 = vmul.f32 %v5496, %v5712
      %v5749 = vmul.f32 %v5497, %v5713
      %v5750 = vmul.f32 %v5498, %v5714
      %v5751 = vmul.f32 %v5499, %v5715
      %v5752 = vmul.f32 %v5500, %v5716
      %v5753 = vmul.f32 %v5501, %v5717
      %v5754 = vmul.f32 %v5502, %v5718
      %v5755 = vmul.f32 %v5503, %v5719
      %v5756 = vmul.f32 %v5504, %v5720
      %v5757 = vmul.f32 %v5505, %v5721
      %v5758 = vmul.f32 %v5506, %v5722
      %v5759 = vmul.f32 %v5507, %v5723
      %v5760 = vmul.f32 %v5508, %v5724
      %v5761 = vmul.f32 %v5509, %v5725
      %v5762 = vmul.f32 %v5510, %v5726
      %v5763 = vmul.f32 %v5511, %v5727
      %v5764 = vmul.f32 %v5512, %v5728
      %v5765 = vmul.f32 %v5513, %v5729
      %v5766 = vmul.f32 %v5514, %v5730
      %v5767 = vmul.f32 %v5515, %v5731
      %v5768 = vmul.f32 %v5516, %v5732
      %v5769 = vmul.f32 %v5517, %v5733
      %v5770 = vsel %vm2139, %v5734, 0.0
      %v5771 = vsel %vm2139, %v5735, 0.0
      %v5772 = vadd.f32 %v5770, %v5771
      %v5773 = vsel %vm2139, %v5736, 0.0
      %v5774 = vadd.f32 %v5772, %v5773
      %v5775 = vsel %vm2139, %v5737, 0.0
      %v5776 = vadd.f32 %v5774, %v5775
      %v5777 = vsel %vm2139, %v5738, 0.0
      %v5778 = vadd.f32 %v5776, %v5777
      %v5779 = vsel %vm2139, %v5739, 0.0
      %v5780 = vadd.f32 %v5778, %v5779
      %v5781 = vsel %vm2139, %v5740, 0.0
      %v5782 = vadd.f32 %v5780, %v5781
      %v5783 = vsel %vm2139, %v5741, 0.0
      %v5784 = vadd.f32 %v5782, %v5783
      %v5785 = vsel %vm2139, %v5742, 0.0
      %v5786 = vadd.f32 %v5784, %v5785
      %v5787 = vsel %vm2139, %v5743, 0.0
      %v5788 = vadd.f32 %v5786, %v5787
      %v5789 = vsel %vm2139, %v5744, 0.0
      %v5790 = vadd.f32 %v5788, %v5789
      %v5791 = vsel %vm2139, %v5745, 0.0
      %v5792 = vadd.f32 %v5790, %v5791
      %v5793 = vsel %vm2139, %v5746, 0.0
      %v5794 = vadd.f32 %v5792, %v5793
      %v5795 = vsel %vm2139, %v5747, 0.0
      %v5796 = vadd.f32 %v5794, %v5795
      %v5797 = vsel %vm2139, %v5748, 0.0
      %v5798 = vadd.f32 %v5796, %v5797
      %v5799 = vsel %vm2139, %v5749, 0.0
      %v5800 = vadd.f32 %v5798, %v5799
      %v5801 = vsel %vm2139, %v5750, 0.0
      %v5802 = vadd.f32 %v5800, %v5801
      %v5803 = vsel %vm2139, %v5751, 0.0
      %v5804 = vadd.f32 %v5802, %v5803
      %v5805 = vsel %vm2139, %v5752, 0.0
      %v5806 = vadd.f32 %v5804, %v5805
      %v5807 = vsel %vm2139, %v5753, 0.0
      %v5808 = vadd.f32 %v5806, %v5807
      %v5809 = vsel %vm2139, %v5754, 0.0
      %v5810 = vadd.f32 %v5808, %v5809
      %v5811 = vsel %vm2139, %v5755, 0.0
      %v5812 = vadd.f32 %v5810, %v5811
      %v5813 = vsel %vm2139, %v5756, 0.0
      %v5814 = vadd.f32 %v5812, %v5813
      %v5815 = vsel %vm2139, %v5757, 0.0
      %v5816 = vadd.f32 %v5814, %v5815
      %v5817 = vsel %vm2139, %v5758, 0.0
      %v5818 = vadd.f32 %v5816, %v5817
      %v5819 = vsel %vm2139, %v5759, 0.0
      %v5820 = vadd.f32 %v5818, %v5819
      %v5821 = vsel %vm2139, %v5760, 0.0
      %v5822 = vadd.f32 %v5820, %v5821
      %v5823 = vsel %vm2139, %v5761, 0.0
      %v5824 = vadd.f32 %v5822, %v5823
      %v5825 = vsel %vm2139, %v5762, 0.0
      %v5826 = vadd.f32 %v5824, %v5825
      %v5827 = vsel %vm2139, %v5763, 0.0
      %v5828 = vadd.f32 %v5826, %v5827
      %v5829 = vsel %vm2139, %v5764, 0.0
      %v5830 = vadd.f32 %v5828, %v5829
      %v5831 = vsel %vm2139, %v5765, 0.0
      %v5832 = vadd.f32 %v5830, %v5831
      %v5833 = vsel %vm2139, %v5766, 0.0
      %v5834 = vadd.f32 %v5832, %v5833
      %v5835 = vsel %vm2139, %v5767, 0.0
      %v5836 = vadd.f32 %v5834, %v5835
      %v5837 = vsel %vm2139, %v5768, 0.0
      %v5838 = vadd.f32 %v5836, %v5837
      %v5839 = vsel %vm2139, %v5769, 0.0
      %v5840 = vadd.f32 %v5838, %v5839
      %v5841 = vrot.slane %v5840, 4
      %v5842 = vadd.f32 %v5840, %v5841
      %v5843 = vrot.slane %v5842, 2
      %v5844 = vadd.f32 %v5842, %v5843
      %v5845 = vrot.slane %v5844, 1
      %v5846 = vadd.f32 %v5844, %v5845
      %vm5847 = vcmask 516096
      %5848 = vst.msk [vmem:[%s265] sm:$0x1] %vm5847, %v5846
      %v5849 = vmul.f32 %v5734, %v5482
      %v5850 = vmul.f32 %v5735, %v5483
      %v5851 = vmul.f32 %v5736, %v5484
      %v5852 = vmul.f32 %v5737, %v5485
      %v5853 = vmul.f32 %v5738, %v5486
      %v5854 = vmul.f32 %v5739, %v5487
      %v5855 = vmul.f32 %v5740, %v5488
      %v5856 = vmul.f32 %v5741, %v5489
      %v5857 = vmul.f32 %v5742, %v5490
      %v5858 = vmul.f32 %v5743, %v5491
      %v5859 = vmul.f32 %v5744, %v5492
      %v5860 = vmul.f32 %v5745, %v5493
      %v5861 = vmul.f32 %v5746, %v5494
      %v5862 = vmul.f32 %v5747, %v5495
      %v5863 = vmul.f32 %v5748, %v5496
      %v5864 = vmul.f32 %v5749, %v5497
      %v5865 = vmul.f32 %v5750, %v5498
      %v5866 = vmul.f32 %v5751, %v5499
      %v5867 = vmul.f32 %v5752, %v5500
      %v5868 = vmul.f32 %v5753, %v5501
      %v5869 = vmul.f32 %v5754, %v5502
      %v5870 = vmul.f32 %v5755, %v5503
      %v5871 = vmul.f32 %v5756, %v5504
      %v5872 = vmul.f32 %v5757, %v5505
      %v5873 = vmul.f32 %v5758, %v5506
      %v5874 = vmul.f32 %v5759, %v5507
      %v5875 = vmul.f32 %v5760, %v5508
      %v5876 = vmul.f32 %v5761, %v5509
      %v5877 = vmul.f32 %v5762, %v5510
      %v5878 = vmul.f32 %v5763, %v5511
      %v5879 = vmul.f32 %v5764, %v5512
      %v5880 = vmul.f32 %v5765, %v5513
      %v5881 = vmul.f32 %v5766, %v5514
      %v5882 = vmul.f32 %v5767, %v5515
      %v5883 = vmul.f32 %v5768, %v5516
      %v5884 = vmul.f32 %v5769, %v5517
      %v5885 = vsel %vm2139, %v5849, 0.0
      %v5886 = vsel %vm2139, %v5850, 0.0
      %v5887 = vadd.f32 %v5885, %v5886
      %v5888 = vsel %vm2139, %v5851, 0.0
      %v5889 = vadd.f32 %v5887, %v5888
      %v5890 = vsel %vm2139, %v5852, 0.0
      %v5891 = vadd.f32 %v5889, %v5890
      %v5892 = vsel %vm2139, %v5853, 0.0
      %v5893 = vadd.f32 %v5891, %v5892
      %v5894 = vsel %vm2139, %v5854, 0.0
      %v5895 = vadd.f32 %v5893, %v5894
      %v5896 = vsel %vm2139, %v5855, 0.0
      %v5897 = vadd.f32 %v5895, %v5896
      %v5898 = vsel %vm2139, %v5856, 0.0
      %v5899 = vadd.f32 %v5897, %v5898
      %v5900 = vsel %vm2139, %v5857, 0.0
      %v5901 = vadd.f32 %v5899, %v5900
      %v5902 = vsel %vm2139, %v5858, 0.0
      %v5903 = vadd.f32 %v5901, %v5902
      %v5904 = vsel %vm2139, %v5859, 0.0
      %v5905 = vadd.f32 %v5903, %v5904
      %v5906 = vsel %vm2139, %v5860, 0.0
      %v5907 = vadd.f32 %v5905, %v5906
      %v5908 = vsel %vm2139, %v5861, 0.0
      %v5909 = vadd.f32 %v5907, %v5908
      %v5910 = vsel %vm2139, %v5862, 0.0
      %v5911 = vadd.f32 %v5909, %v5910
      %v5912 = vsel %vm2139, %v5863, 0.0
      %v5913 = vadd.f32 %v5911, %v5912
      %v5914 = vsel %vm2139, %v5864, 0.0
      %v5915 = vadd.f32 %v5913, %v5914
      %v5916 = vsel %vm2139, %v5865, 0.0
      %v5917 = vadd.f32 %v5915, %v5916
      %v5918 = vsel %vm2139, %v5866, 0.0
      %v5919 = vadd.f32 %v5917, %v5918
      %v5920 = vsel %vm2139, %v5867, 0.0
      %v5921 = vadd.f32 %v5919, %v5920
      %v5922 = vsel %vm2139, %v5868, 0.0
      %v5923 = vadd.f32 %v5921, %v5922
      %v5924 = vsel %vm2139, %v5869, 0.0
      %v5925 = vadd.f32 %v5923, %v5924
      %v5926 = vsel %vm2139, %v5870, 0.0
      %v5927 = vadd.f32 %v5925, %v5926
      %v5928 = vsel %vm2139, %v5871, 0.0
      %v5929 = vadd.f32 %v5927, %v5928
      %v5930 = vsel %vm2139, %v5872, 0.0
      %v5931 = vadd.f32 %v5929, %v5930
      %v5932 = vsel %vm2139, %v5873, 0.0
      %v5933 = vadd.f32 %v5931, %v5932
      %v5934 = vsel %vm2139, %v5874, 0.0
      %v5935 = vadd.f32 %v5933, %v5934
      %v5936 = vsel %vm2139, %v5875, 0.0
      %v5937 = vadd.f32 %v5935, %v5936
      %v5938 = vsel %vm2139, %v5876, 0.0
      %v5939 = vadd.f32 %v5937, %v5938
      %v5940 = vsel %vm2139, %v5877, 0.0
      %v5941 = vadd.f32 %v5939, %v5940
      %v5942 = vsel %vm2139, %v5878, 0.0
      %v5943 = vadd.f32 %v5941, %v5942
      %v5944 = vsel %vm2139, %v5879, 0.0
      %v5945 = vadd.f32 %v5943, %v5944
      %v5946 = vsel %vm2139, %v5880, 0.0
      %v5947 = vadd.f32 %v5945, %v5946
      %v5948 = vsel %vm2139, %v5881, 0.0
      %v5949 = vadd.f32 %v5947, %v5948
      %v5950 = vsel %vm2139, %v5882, 0.0
      %v5951 = vadd.f32 %v5949, %v5950
      %v5952 = vsel %vm2139, %v5883, 0.0
      %v5953 = vadd.f32 %v5951, %v5952
      %v5954 = vsel %vm2139, %v5884, 0.0
      %v5955 = vadd.f32 %v5953, %v5954
      %v5956 = vrot.slane %v5955, 4
      %v5957 = vadd.f32 %v5955, %v5956
      %v5958 = vrot.slane %v5957, 2
      %v5959 = vadd.f32 %v5957, %v5958
      %v5960 = vrot.slane %v5959, 1
      %v5961 = vadd.f32 %v5959, %v5960
      %5962 = vst.msk [vmem:[%s268] sm:$0x1] %vm5847, %v5961
      %p5963 = scmp.lt.s32.totalorder %s18, 1
      %s5964 = scalar_select %p5963, %s18, 1
      %s5965 = smul.addr %s5964, 36
      %s5966 = smul.addr %s5965, 4
      %s5967 = scalar_lea.vmem %s4, %s5966
      %p5968 = scmp.lt.s32.totalorder %s18, 1
      %s5969 = scalar_select %p5968, %s18, 1
      %s5970 = scalar_lea.vmem %s5, %s5969
      %p5971 = scmp.lt.s32.totalorder %s18, 1
      %s5972 = scalar_select %p5971, %s18, 1
      %s5973 = scalar_lea.vmem %s6, %s5972
      // Predicated region
      $region37: #{_lambda_.4} parent=35 // pred_check
        %p5974 = pneg %p125
      $region38: #{_lambda_.4} parent=35 // pred_check_branch
        %5976 = sbr.rel (%p5974) target = $region40
      $region39: #{_lambda_.4} parent=35 // pred_region
        _
      $region40: #{_lambda_.4} parent=35 // pred_fallthru
        _
      // Predicated region
      $region41: #{_lambda_.4} parent=35 // pred_check
        %p5977 = pneg %p151
      $region42: #{_lambda_.4} parent=35 // pred_check_branch
        %5979 = sbr.rel (%p5977) target = $region44
      $region43: #{_lambda_.4} parent=35 // pred_region
        _
      $region44: #{_lambda_.4} parent=35 // pred_fallthru
        _
      // Predicated region
      $region45: #{_lambda_.4} parent=35 // pred_check
        %p5980 = pneg %p177
      $region46: #{_lambda_.4} parent=35 // pred_check_branch
        %5982 = sbr.rel (%p5980) target = $region48
      $region47: #{_lambda_.4} parent=35 // pred_region
        _
      $region48: #{_lambda_.4} parent=35 // pred_fallthru
        _
    $region36: #{_lambda_.4} parent=5 // pred_fallthru
      _
    %p5983 = scmp.le.s32.totalorder 2, %s13
    // Predicated region
    $region49: #{_lambda_.4} parent=5 // pred_check
      %p5984 = pneg %p5983
    $region50: #{_lambda_.4} parent=5 // pred_check_branch
      %5986 = sbr.rel (%p5984) target = $region52
    $region51: #{_lambda_.4} parent=5 // pred_region
      %s5987 = ssub.s32 %s13, 2
      // Predicated region
      $region53: #{_lambda_.4} parent=51 // pred_check
        %p5988 = pneg %p131
      $region54: #{_lambda_.4} parent=51 // pred_check_branch
        %5990 = sbr.rel (%p5988) target = $region56
      $region55: #{_lambda_.4} parent=51 // pred_region
        %p5991 = scmp.lt.s32.totalorder %s19, 1
        %s5992 = scalar_select %p5991, %s19, 1
        %s5993 = smul.addr %s5992, 36
        %s5994 = smul.addr %s5993, 4
        %s5995 = scalar_lea.vmem %s4, %s5994
      $region56: #{_lambda_.4} parent=51 // pred_fallthru
        _
      // Predicated region
      $region57: #{_lambda_.4} parent=51 // pred_check
        %p5996 = pneg %p157
      $region58: #{_lambda_.4} parent=51 // pred_check_branch
        %5998 = sbr.rel (%p5996) target = $region60
      $region59: #{_lambda_.4} parent=51 // pred_region
        %p5999 = scmp.lt.s32.totalorder %s19, 1
        %s6000 = scalar_select %p5999, %s19, 1
        %s6001 = scalar_lea.vmem %s5, %s6000
      $region60: #{_lambda_.4} parent=51 // pred_fallthru
        _
      // Predicated region
      $region61: #{_lambda_.4} parent=51 // pred_check
        %p6002 = pneg %p183
      $region62: #{_lambda_.4} parent=51 // pred_check_branch
        %6004 = sbr.rel (%p6002) target = $region64
      $region63: #{_lambda_.4} parent=51 // pred_region
        %p6005 = scmp.lt.s32.totalorder %s19, 1
        %s6006 = scalar_select %p6005, %s19, 1
        %s6007 = scalar_lea.vmem %s6, %s6006
      $region64: #{_lambda_.4} parent=51 // pred_fallthru
        _
    $region52: #{_lambda_.4} parent=5 // pred_fallthru
      _
  $region6: #{_lambda_.4} parent=0 // loop_footer
    %s17 = sadd.s32 1, %s13
  $region7: #{_lambda_.4} parent=0 // loop_footer_branch
    %12 = sbr.rel target = $region3
  $region8: #{_lambda_.4} parent=0 // loop_exit
    _

</llo_original>
